<compile_context>
chip_gen: v6e
topology: v6e:2x2x1
jax: 0.10.0
libtpu: 0.0.40
codegen_flags: <defaults>
</compile_context>

<pallas_src>
import math

import jax
import jax.numpy as jnp
import numpy as np
from jax.experimental import pallas as pl
from jax.experimental.pallas import tpu as pltpu

# ----------------------------- configuration --------------------------------
NUM_FREQ = 4
DIM_POINT = 3
DIM_ENC = DIM_POINT * 2 * NUM_FREQ          # 24
NUM_LAYERS = 2
DIM_MLP_OUT = 32
DIM_OUT = 4
SKIP_MODE = "concat"
INITIAL_GEOMETRY_BIAS = 0.5

DIM_MLP_IN = DIM_MLP_OUT + DIM_ENC          # 56
DIMS_IN = [DIM_ENC] + [DIM_MLP_IN] * NUM_LAYERS       # [24, 56, 56]
DIMS_OUT = [DIM_MLP_OUT] * NUM_LAYERS + [DIM_OUT]     # [32, 32, 4]

TILE_N = 2048         # points per grid step (lane axis); sweep 2048-4096


# ------------------------------- kernel --------------------------------------
def neural_field_kernel(x_ref, f_ref, p_ref,
                        w0_ref, b0_ref,
                        w1a_ref, w1b_ref, b1_ref,
                        w2a_ref, w2b_ref, b2_ref,
                        o_ref):
    x = x_ref[...]                                                       # (3, T)

    # Fused, lane-dense frequency encoding: enc = sin(F @ x + P)
    # (cos realized as sin(. + pi/2)).
    enc = jnp.sin(
        jnp.dot(f_ref[...], x, preferred_element_type=jnp.float32) + p_ref[...]
    )                                                                    # (24, T)

    # Layer 0 + relu.
    h = jnp.dot(w0_ref[...], enc, preferred_element_type=jnp.float32) + b0_ref[...]
    h = jnp.maximum(h, 0.0)                                              # (32, T)

    # Layer 1: concat skip folded into split-weight matmul accumulation.
    h = (jnp.dot(w1a_ref[...], h, preferred_element_type=jnp.float32)
         + jnp.dot(w1b_ref[...], enc, preferred_element_type=jnp.float32)
         + b1_ref[...])
    h = jnp.maximum(h, 0.0)                                              # (32, T)

    # Layer 2 (final linear, no activation) -> lane-dense (4, T) store.
    out = (jnp.dot(w2a_ref[...], h, preferred_element_type=jnp.float32)
           + jnp.dot(w2b_ref[...], enc, preferred_element_type=jnp.float32)
           + b2_ref[...])                                                # (4, T)
    o_ref[...] = out.astype(o_ref.dtype)


# ----------------------- constant encoding matrices --------------------------
def _encoding_matrices():
    """F (24, 3) and P (24, 1) such that sin(F @ x + P) == [sin,cos] encoding."""
    stride = 2 * DIM_POINT
    f = np.zeros((DIM_ENC, DIM_POINT), np.float32)
    p = np.zeros((DIM_ENC, 1), np.float32)
    for k in range(NUM_FREQ):
        scale = (2.0 ** k) * math.pi
        for c in range(DIM_POINT):
            f[stride * k + c, c] = scale                    # sin rows
            f[stride * k + DIM_POINT + c, c] = scale        # cos rows
        p[stride * k + DIM_POINT: stride * (k + 1), 0] = math.pi / 2.0
    return jnp.asarray(f), jnp.asarray(p)


# ------------------------------- wrapper --------------------------------------
def neural_field_forward(query_points, params, *, tile_n=TILE_N):
    """query_points: (N, 3) float32.  params: list of (W (in,out), b (1,out))."""
    n = query_points.shape[0]
    n_pad = ((n + tile_n - 1) // tile_n) * tile_n

    # Batch on the lane axis: (3, N), padded along lanes to a tile multiple.
    x = query_points.astype(jnp.float32).T
    if n_pad != n:
        x = jnp.pad(x, ((0, 0), (0, n_pad - n)))

    (w0, b0), (w1, b1), (w2, b2) = params
    f_mat, p_col = _encoding_matrices()

    # Transpose params to the (out, in) / (out, 1) kernel layout and split the
    # layer-1/2 weights so the concat skip never materializes in-kernel.
    w0_t = w0.T                          # (32, 24)
    b0_t = b0.T                          # (32, 1)
    w1a_t = w1[:DIM_MLP_OUT].T           # (32, 32)   acts on h
    w1b_t = w1[DIM_MLP_OUT:].T           # (32, 24)   acts on enc (skip)
    b1_t = b1.T                          # (32, 1)
    w2a_t = w2[:DIM_MLP_OUT].T           # (4, 32)
    w2b_t = w2[DIM_MLP_OUT:].T           # (4, 24)
    b2_t = b2.T                          # (4, 1)     geometry bias at b2_t[3, 0]

    full = lambda a: pl.BlockSpec(a.shape, lambda i: (0, 0))

    out = pl.pallas_call(
        neural_field_kernel,
        out_shape=jax.ShapeDtypeStruct((DIM_OUT, n_pad), jnp.float32),
        grid_spec=pltpu.PrefetchScalarGridSpec(
            num_scalar_prefetch=0,
            grid=(n_pad // tile_n,),
            in_specs=[
                pl.BlockSpec((DIM_POINT, tile_n), lambda i: (0, i)),
                full(f_mat), full(p_col),
                full(w0_t), full(b0_t),
                full(w1a_t), full(w1b_t), full(b1_t),
                full(w2a_t), full(w2b_t), full(b2_t),
            ],
            out_specs=pl.BlockSpec((DIM_OUT, tile_n), lambda i: (0, i)),
        ),
        compiler_params=pltpu.CompilerParams(
            dimension_semantics=("parallel",),
        ),
    )(x, f_mat, p_col, w0_t, b0_t, w1a_t, w1b_t, b1_t, w2a_t, w2b_t, b2_t)

    # Layout plumbing only: (4, n_pad) -> (n, 4); 16 B/point each way.
    return out[:, :n].T


# --------------------- deterministic parameter init --------------------------
def init_params(key):
    """Mimic torch.nn.Linear default init: U(-1/sqrt(fan_in), 1/sqrt(fan_in))."""
    params = []
    for li, (d_in, d_out) in enumerate(zip(DIMS_IN, DIMS_OUT)):
        key, kw, kb = jax.random.split(key, 3)
        bound = 1.0 / math.sqrt(d_in)
        # stored as (in, out) == PyTorch weight (out, in) transposed
        w = jax.random.uniform(kw, (d_in, d_out), jnp.float32, -bound, bound)
        b = jax.random.uniform(kb, (1, d_out), jnp.float32, -bound, bound)
        if li == len(DIMS_IN) - 1:
            # reset_parameters(): last linear's last bias element += initial_geometry_bias
            b = b.at[0, -1].add(INITIAL_GEOMETRY_BIAS)
        params.append((w, b))
    return params


# --------------------------- pure-JAX reference -------------------------------
def reference_forward(query_points, params):
    x = query_points.astype(jnp.float32)
    feats = []
    for k in range(NUM_FREQ):
        scaled = x * ((2.0 ** k) * math.pi)
        feats.append(jnp.sin(scaled))
        feats.append(jnp.cos(scaled))
    enc = jnp.concatenate(feats, axis=-1)
    outs = enc
    for i, (w, b) in enumerate(params):
        outs = outs @ w + b
        if i == NUM_LAYERS:
            break
        outs = jax.nn.relu(outs)
        outs = jnp.concatenate([outs, enc], axis=-1)   # skip_mode == "concat"
    return outs


# ---------------------------------- main --------------------------------------
if __name__ == "__main__":
    key = jax.random.PRNGKey(0)
    key, kp = jax.random.split(key)

    N = 8192  # number of query points (small; 4 grid steps at TILE_N=2048)
    query_points = jax.random.uniform(kp, (N, DIM_POINT), jnp.float32, -1.0, 1.0)

    params = init_params(key)

    out = neural_field_forward(query_points, params)
    out = jax.block_until_ready(out)

    ref = jax.block_until_ready(reference_forward(query_points, params))
    np.testing.assert_allclose(np.asarray(out), np.asarray(ref), rtol=1e-4, atol=1e-4)

    print("KERNEL_OK")
</pallas_src>

<mosaic_0001>
module attributes {stable_mosaic.version = 11 : i64} {
  func.func @neural_field_kernel(%arg0: i32, %arg1: memref<3x2048xf32, #tpu.memory_space<vmem>>, %arg2: memref<24x3xf32, #tpu.memory_space<vmem>>, %arg3: memref<24x1xf32, #tpu.memory_space<vmem>>, %arg4: memref<32x24xf32, #tpu.memory_space<vmem>>, %arg5: memref<32x1xf32, #tpu.memory_space<vmem>>, %arg6: memref<32x32xf32, #tpu.memory_space<vmem>>, %arg7: memref<32x24xf32, #tpu.memory_space<vmem>>, %arg8: memref<32x1xf32, #tpu.memory_space<vmem>>, %arg9: memref<4x32xf32, #tpu.memory_space<vmem>>, %arg10: memref<4x24xf32, #tpu.memory_space<vmem>>, %arg11: memref<4x1xf32, #tpu.memory_space<vmem>>, %arg12: memref<4x2048xf32, #tpu.memory_space<vmem>>) attributes {dimension_semantics = [#tpu.dimension_semantics<parallel>], iteration_bounds = array<i64: 4>, scalar_prefetch = 0 : i64, scratch_operands = 0 : i64, tpu.core_type = #tpu.core_type<tc>, window_params = [{transform_indices = @transform_0, window_bounds = array<i64: 3, 2048>}, {pipeline_mode = #tpu.pipeline_mode<synchronous>, transform_indices = @transform_1, window_bounds = array<i64: 24, 3>}, {pipeline_mode = #tpu.pipeline_mode<synchronous>, transform_indices = @transform_2, window_bounds = array<i64: 24, 1>}, {pipeline_mode = #tpu.pipeline_mode<synchronous>, transform_indices = @transform_3, window_bounds = array<i64: 32, 24>}, {pipeline_mode = #tpu.pipeline_mode<synchronous>, transform_indices = @transform_4, window_bounds = array<i64: 32, 1>}, {pipeline_mode = #tpu.pipeline_mode<synchronous>, transform_indices = @transform_5, window_bounds = array<i64: 32, 32>}, {pipeline_mode = #tpu.pipeline_mode<synchronous>, transform_indices = @transform_6, window_bounds = array<i64: 32, 24>}, {pipeline_mode = #tpu.pipeline_mode<synchronous>, transform_indices = @transform_7, window_bounds = array<i64: 32, 1>}, {pipeline_mode = #tpu.pipeline_mode<synchronous>, transform_indices = @transform_8, window_bounds = array<i64: 4, 32>}, {pipeline_mode = #tpu.pipeline_mode<synchronous>, transform_indices = @transform_9, window_bounds = array<i64: 4, 24>}, {pipeline_mode = #tpu.pipeline_mode<synchronous>, transform_indices = @transform_10, window_bounds = array<i64: 4, 1>}, {transform_indices = @transform_11, window_bounds = array<i64: 4, 2048>}]} {
    %c0 = arith.constant 0 : index
    %c0_0 = arith.constant 0 : index
    %0 = vector.load %arg1[%c0, %c0_0] : memref<3x2048xf32, #tpu.memory_space<vmem>>, vector<3x2048xf32>
    %c0_1 = arith.constant 0 : index
    %c0_2 = arith.constant 0 : index
    %1 = vector.load %arg2[%c0_1, %c0_2] : memref<24x3xf32, #tpu.memory_space<vmem>>, vector<24x3xf32>
    %cst = arith.constant dense<0.000000e+00> : vector<24x2048xf32>
    %2 = tpu.matmul %1, %0, %cst {dimension_numbers = #tpu.dot_dimension_numbers<[1], [0], [0], [1], [0, 0, 1, 1], [], []>} : vector<24x3xf32>, vector<3x2048xf32>, vector<24x2048xf32> -> vector<24x2048xf32>
    %c0_3 = arith.constant 0 : index
    %c0_4 = arith.constant 0 : index
    %3 = vector.load %arg3[%c0_3, %c0_4] : memref<24x1xf32, #tpu.memory_space<vmem>>, vector<24x1xf32>
    %4 = vector.broadcast %3 : vector<24x1xf32> to vector<24x2048xf32>
    %5 = arith.addf %2, %4 : vector<24x2048xf32>
    %6 = math.sin %5 : vector<24x2048xf32>
    %c0_5 = arith.constant 0 : index
    %c0_6 = arith.constant 0 : index
    %7 = vector.load %arg4[%c0_5, %c0_6] : memref<32x24xf32, #tpu.memory_space<vmem>>, vector<32x24xf32>
    %cst_7 = arith.constant dense<0.000000e+00> : vector<32x2048xf32>
    %8 = tpu.matmul %7, %6, %cst_7 {dimension_numbers = #tpu.dot_dimension_numbers<[1], [0], [0], [1], [0, 0, 1, 1], [], []>} : vector<32x24xf32>, vector<24x2048xf32>, vector<32x2048xf32> -> vector<32x2048xf32>
    %c0_8 = arith.constant 0 : index
    %c0_9 = arith.constant 0 : index
    %9 = vector.load %arg5[%c0_8, %c0_9] : memref<32x1xf32, #tpu.memory_space<vmem>>, vector<32x1xf32>
    %10 = vector.broadcast %9 : vector<32x1xf32> to vector<32x2048xf32>
    %11 = arith.addf %8, %10 : vector<32x2048xf32>
    %cst_10 = arith.constant 0.000000e+00 : f32
    %12 = vector.broadcast %cst_10 : f32 to vector<32x2048xf32>
    %13 = arith.maximumf %11, %12 : vector<32x2048xf32>
    %c0_11 = arith.constant 0 : index
    %c0_12 = arith.constant 0 : index
    %14 = vector.load %arg6[%c0_11, %c0_12] : memref<32x32xf32, #tpu.memory_space<vmem>>, vector<32x32xf32>
    %cst_13 = arith.constant dense<0.000000e+00> : vector<32x2048xf32>
    %15 = tpu.matmul %14, %13, %cst_13 {dimension_numbers = #tpu.dot_dimension_numbers<[1], [0], [0], [1], [0, 0, 1, 1], [], []>} : vector<32x32xf32>, vector<32x2048xf32>, vector<32x2048xf32> -> vector<32x2048xf32>
    %c0_14 = arith.constant 0 : index
    %c0_15 = arith.constant 0 : index
    %16 = vector.load %arg7[%c0_14, %c0_15] : memref<32x24xf32, #tpu.memory_space<vmem>>, vector<32x24xf32>
    %cst_16 = arith.constant dense<0.000000e+00> : vector<32x2048xf32>
    %17 = tpu.matmul %16, %6, %cst_16 {dimension_numbers = #tpu.dot_dimension_numbers<[1], [0], [0], [1], [0, 0, 1, 1], [], []>} : vector<32x24xf32>, vector<24x2048xf32>, vector<32x2048xf32> -> vector<32x2048xf32>
    %18 = arith.addf %15, %17 : vector<32x2048xf32>
    %c0_17 = arith.constant 0 : index
    %c0_18 = arith.constant 0 : index
    %19 = vector.load %arg8[%c0_17, %c0_18] : memref<32x1xf32, #tpu.memory_space<vmem>>, vector<32x1xf32>
    %20 = vector.broadcast %19 : vector<32x1xf32> to vector<32x2048xf32>
    %21 = arith.addf %18, %20 : vector<32x2048xf32>
    %cst_19 = arith.constant 0.000000e+00 : f32
    %22 = vector.broadcast %cst_19 : f32 to vector<32x2048xf32>
    %23 = arith.maximumf %21, %22 : vector<32x2048xf32>
    %c0_20 = arith.constant 0 : index
    %c0_21 = arith.constant 0 : index
    %24 = vector.load %arg9[%c0_20, %c0_21] : memref<4x32xf32, #tpu.memory_space<vmem>>, vector<4x32xf32>
    %cst_22 = arith.constant dense<0.000000e+00> : vector<4x2048xf32>
    %25 = tpu.matmul %24, %23, %cst_22 {dimension_numbers = #tpu.dot_dimension_numbers<[1], [0], [0], [1], [0, 0, 1, 1], [], []>} : vector<4x32xf32>, vector<32x2048xf32>, vector<4x2048xf32> -> vector<4x2048xf32>
    %c0_23 = arith.constant 0 : index
    %c0_24 = arith.constant 0 : index
    %26 = vector.load %arg10[%c0_23, %c0_24] : memref<4x24xf32, #tpu.memory_space<vmem>>, vector<4x24xf32>
    %cst_25 = arith.constant dense<0.000000e+00> : vector<4x2048xf32>
    %27 = tpu.matmul %26, %6, %cst_25 {dimension_numbers = #tpu.dot_dimension_numbers<[1], [0], [0], [1], [0, 0, 1, 1], [], []>} : vector<4x24xf32>, vector<24x2048xf32>, vector<4x2048xf32> -> vector<4x2048xf32>
    %28 = arith.addf %25, %27 : vector<4x2048xf32>
    %c0_26 = arith.constant 0 : index
    %c0_27 = arith.constant 0 : index
    %29 = vector.load %arg11[%c0_26, %c0_27] : memref<4x1xf32, #tpu.memory_space<vmem>>, vector<4x1xf32>
    %30 = vector.broadcast %29 : vector<4x1xf32> to vector<4x2048xf32>
    %31 = arith.addf %28, %30 : vector<4x2048xf32>
    %c0_28 = arith.constant 0 : index
    %c0_29 = arith.constant 0 : index
    %32 = vector.load %arg12[%c0_28, %c0_29] : memref<4x2048xf32, #tpu.memory_space<vmem>>, vector<4x2048xf32>
    tpu.vector_store %arg12[%c0_28, %c0_29], %31 {strides = array<i32>} : memref<4x2048xf32, #tpu.memory_space<vmem>>, vector<4x2048xf32>,
    return
  }
  func.func @transform_0(%arg0: i32) -> (i32, i32) {
    %c0_i32 = arith.constant 0 : i32
    %c0_i32_0 = arith.constant 0 : i32
    return %c0_i32, %arg0 : i32, i32
  }
  func.func @transform_1(%arg0: i32) -> (i32, i32) {
    %c0_i32 = arith.constant 0 : i32
    %c0_i32_0 = arith.constant 0 : i32
    %c0_i32_1 = arith.constant 0 : i32
    return %c0_i32, %c0_i32_0 : i32, i32
  }
  func.func @transform_2(%arg0: i32) -> (i32, i32) {
    %c0_i32 = arith.constant 0 : i32
    %c0_i32_0 = arith.constant 0 : i32
    %c0_i32_1 = arith.constant 0 : i32
    return %c0_i32, %c0_i32_0 : i32, i32
  }
  func.func @transform_3(%arg0: i32) -> (i32, i32) {
    %c0_i32 = arith.constant 0 : i32
    %c0_i32_0 = arith.constant 0 : i32
    %c0_i32_1 = arith.constant 0 : i32
    return %c0_i32, %c0_i32_0 : i32, i32
  }
  func.func @transform_4(%arg0: i32) -> (i32, i32) {
    %c0_i32 = arith.constant 0 : i32
    %c0_i32_0 = arith.constant 0 : i32
    %c0_i32_1 = arith.constant 0 : i32
    return %c0_i32, %c0_i32_0 : i32, i32
  }
  func.func @transform_5(%arg0: i32) -> (i32, i32) {
    %c0_i32 = arith.constant 0 : i32
    %c0_i32_0 = arith.constant 0 : i32
    %c0_i32_1 = arith.constant 0 : i32
    return %c0_i32, %c0_i32_0 : i32, i32
  }
  func.func @transform_6(%arg0: i32) -> (i32, i32) {
    %c0_i32 = arith.constant 0 : i32
    %c0_i32_0 = arith.constant 0 : i32
    %c0_i32_1 = arith.constant 0 : i32
    return %c0_i32, %c0_i32_0 : i32, i32
  }
  func.func @transform_7(%arg0: i32) -> (i32, i32) {
    %c0_i32 = arith.constant 0 : i32
    %c0_i32_0 = arith.constant 0 : i32
    %c0_i32_1 = arith.constant 0 : i32
    return %c0_i32, %c0_i32_0 : i32, i32
  }
  func.func @transform_8(%arg0: i32) -> (i32, i32) {
    %c0_i32 = arith.constant 0 : i32
    %c0_i32_0 = arith.constant 0 : i32
    %c0_i32_1 = arith.constant 0 : i32
    return %c0_i32, %c0_i32_0 : i32, i32
  }
  func.func @transform_9(%arg0: i32) -> (i32, i32) {
    %c0_i32 = arith.constant 0 : i32
    %c0_i32_0 = arith.constant 0 : i32
    %c0_i32_1 = arith.constant 0 : i32
    return %c0_i32, %c0_i32_0 : i32, i32
  }
  func.func @transform_10(%arg0: i32) -> (i32, i32) {
    %c0_i32 = arith.constant 0 : i32
    %c0_i32_0 = arith.constant 0 : i32
    %c0_i32_1 = arith.constant 0 : i32
    return %c0_i32, %c0_i32_0 : i32, i32
  }
  func.func @transform_11(%arg0: i32) -> (i32, i32) {
    %c0_i32 = arith.constant 0 : i32
    %c0_i32_0 = arith.constant 0 : i32
    return %c0_i32, %arg0 : i32, i32
  }
}

</mosaic_0001>

<llo_original>
// kernel: tpu_custom_call.1
$region0: #{tpu_custom_call.1}
  #allocation0 [shape = 'u32[]', space=smem, size = 0x4, offset = 0x4, fixed_abs, tag = 'smem constant byte address 0x4 - core index']
  #allocation1 [shape = 'u32[144,128]{1,0:T(1,128)}', space=vmem, size = 0x12000, scoped, tag = 'internal scratch']
  %s0 = inlined_call_operand.hbm [shape: f32[3,8192], index: 0, kind: input, shape index: {}]
  %s1 = inlined_call_operand.vmem [shape: f32[24,3], index: 1, kind: input, shape index: {}]
  %s2 = inlined_call_operand.vmem [shape: f32[24,1], index: 2, kind: input, shape index: {}]
  %s3 = inlined_call_operand.vmem [shape: f32[32,24], index: 3, kind: input, shape index: {}]
  %s4 = inlined_call_operand.vmem [shape: f32[32,1], index: 4, kind: input, shape index: {}]
  %s5 = inlined_call_operand.vmem [shape: f32[32,32], index: 5, kind: input, shape index: {}]
  %s6 = inlined_call_operand.vmem [shape: f32[32,24], index: 6, kind: input, shape index: {}]
  %s7 = inlined_call_operand.vmem [shape: f32[32,1], index: 7, kind: input, shape index: {}]
  %s8 = inlined_call_operand.vmem [shape: f32[4,32], index: 8, kind: input, shape index: {}]
  %s9 = inlined_call_operand.vmem [shape: f32[4,24], index: 9, kind: input, shape index: {}]
  %s10 = inlined_call_operand.vmem [shape: f32[4,1], index: 10, kind: input, shape index: {}]
  %s11 = inlined_call_operand.hbm [shape: f32[4,8192], index: 11, kind: output, shape index: {}]
  %s12 = sld [smem:[#allocation0]]
  $region81: #{tpu_custom_call.1} parent=0
    _
  %s14 = ssub.s32 1, %s12
  %s15 = scalar_select 0, %s14, %s12
  $region1: #{tpu_custom_call.1} parent=0
    #allocation2 [shape = 'u8[65536]{0}', space=vmem, size = 0x10000, scoped, tag = 'input window, operand 0']
    #allocation3 [shape = 's32[2]{0}', space=sflag, size = 0x8, scoped, tag = 'scoped memory for tpu_custom_call.1']
    #allocation4 [shape = 's32[2]{0}', space=sflag, size = 0x8, scoped, tag = 'scoped memory for tpu_custom_call.1']
    #allocation5 [shape = 'u8[65536]{0}', space=vmem, size = 0x10000, scoped, tag = 'output window, operand 0']
    %16 = vsyncpa [#allocation3], 0
    %s17 = scalar_lea.sflag [#allocation3], 1
    %18 = vsyncpa %s17, 0
    %19 = vsyncpa [#allocation4], 0
    %s20 = scalar_lea.sflag [#allocation4], 1
    %21 = vsyncpa %s20, 0
    loop: start=0, step=1, limit=6
    $region2: #{tpu_custom_call.1} parent=1 // loop_pre_header
      _
    $region3: #{tpu_custom_call.1} parent=1 // loop_header
      %s23 = sphi 0, %s27
      %p24 = scmp.ge.s32.totalorder %s23, 6
      %s33 = sphi 0, %s35
      %s36 = sphi 0, %s33
      %s37 = sphi 0, %s36
      %s53 = sphi 0, %s37
      %s57 = sphi 0, %s57
      %s59 = sphi 0, %s57
      %s60 = sphi 0, %s59
      %s74 = sphi 0, %s60
      %s78 = sphi 0, %s78
      %s80 = sphi 0, %s78
      %s81 = sphi 0, %s80
      %s95 = sphi 0, %s81
      %s99 = sphi 0, %s99
      %s101 = sphi 0, %s99
      %s102 = sphi 0, %s101
      %s116 = sphi 0, %s102
      %s120 = sphi 0, %s120
      %s122 = sphi 0, %s120
      %s123 = sphi 0, %s122
      %s137 = sphi 0, %s123
      %s141 = sphi 0, %s141
      %s143 = sphi 0, %s141
      %s144 = sphi 0, %s143
      %s158 = sphi 0, %s144
      %s162 = sphi 0, %s162
      %s164 = sphi 0, %s162
      %s165 = sphi 0, %s164
      %s179 = sphi 0, %s165
      %s183 = sphi 0, %s183
      %s185 = sphi 0, %s183
      %s186 = sphi 0, %s185
      %s200 = sphi 0, %s186
      %s204 = sphi 0, %s204
      %s206 = sphi 0, %s204
      %s207 = sphi 0, %s206
      %s221 = sphi 0, %s207
      %s225 = sphi 0, %s225
      %s227 = sphi 0, %s225
      %s228 = sphi 0, %s227
      %s242 = sphi 0, %s228
      %s246 = sphi 0, %s246
      %s248 = sphi 0, %s246
      %s249 = sphi 0, %s248
      %s263 = sphi 0, %s249
      %s269 = sphi 0, %s271
      %s272 = sphi 0, %s269
      %s273 = sphi 0, %s272
      %s289 = sphi 0, %s273
    $region4: #{tpu_custom_call.1} parent=1 // loop_header_branch
      %26 = sbr.rel (%p24) target = $region8
    $region5: #{tpu_custom_call.1} parent=1 // loop_body
      %s28 = ssub.s32 %s23, 1
      %s29 = ssub.s32 %s23, 2
      %s30 = sadd.s32 %s23, 1
      %s31 = ssub.s32 %s23, %s30
      %p32 = scmp.eq.s32.totalorder %s31, 0
      %s34 = sadd.s32 %s33, 1
      %s35 = scalar_select %p32, %s33, %s34
      %p38 = pneg %p32
      %p39 = scmp.eq.s32.totalorder %s23, 3
      %p40 = por %p38, %p39
      %p41 = scmp.ne.s32.totalorder %s33, %s36
      %p42 = scmp.eq.s32.totalorder %s23, 0
      %p43 = por %p41, %p42
      %p44 = scmp.ne.s32.totalorder %s33, %s36
      %p45 = scmp.eq.s32.totalorder %s28, 3
      %p46 = por %p44, %p45
      %p47 = scmp.ne.s32.totalorder %s36, %s37
      %p48 = scmp.eq.s32.totalorder %s28, 0
      %p49 = por %p47, %p48
      %p50 = scmp.ne.s32.totalorder %s36, %s37
      %p51 = scmp.eq.s32.totalorder %s29, 3
      %p52 = por %p50, %p51
      %p54 = scmp.ne.s32.totalorder %s37, %s53
      %p55 = scmp.eq.s32.totalorder %s29, 0
      %p56 = por %p54, %p55
      %s58 = sadd.s32 %s57, 1
      %p61 = scmp.eq.s32.totalorder %s23, 3
      %p62 = scmp.ne.s32.totalorder %s57, %s59
      %p63 = scmp.eq.s32.totalorder %s23, 0
      %p64 = por %p62, %p63
      %p65 = scmp.ne.s32.totalorder %s57, %s59
      %p66 = scmp.eq.s32.totalorder %s28, 3
      %p67 = por %p65, %p66
      %p68 = scmp.ne.s32.totalorder %s59, %s60
      %p69 = scmp.eq.s32.totalorder %s28, 0
      %p70 = por %p68, %p69
      %p71 = scmp.ne.s32.totalorder %s59, %s60
      %p72 = scmp.eq.s32.totalorder %s29, 3
      %p73 = por %p71, %p72
      %p75 = scmp.ne.s32.totalorder %s60, %s74
      %p76 = scmp.eq.s32.totalorder %s29, 0
      %p77 = por %p75, %p76
      %s79 = sadd.s32 %s78, 1
      %p82 = scmp.eq.s32.totalorder %s23, 3
      %p83 = scmp.ne.s32.totalorder %s78, %s80
      %p84 = scmp.eq.s32.totalorder %s23, 0
      %p85 = por %p83, %p84
      %p86 = scmp.ne.s32.totalorder %s78, %s80
      %p87 = scmp.eq.s32.totalorder %s28, 3
      %p88 = por %p86, %p87
      %p89 = scmp.ne.s32.totalorder %s80, %s81
      %p90 = scmp.eq.s32.totalorder %s28, 0
      %p91 = por %p89, %p90
      %p92 = scmp.ne.s32.totalorder %s80, %s81
      %p93 = scmp.eq.s32.totalorder %s29, 3
      %p94 = por %p92, %p93
      %p96 = scmp.ne.s32.totalorder %s81, %s95
      %p97 = scmp.eq.s32.totalorder %s29, 0
      %p98 = por %p96, %p97
      %s100 = sadd.s32 %s99, 1
      %p103 = scmp.eq.s32.totalorder %s23, 3
      %p104 = scmp.ne.s32.totalorder %s99, %s101
      %p105 = scmp.eq.s32.totalorder %s23, 0
      %p106 = por %p104, %p105
      %p107 = scmp.ne.s32.totalorder %s99, %s101
      %p108 = scmp.eq.s32.totalorder %s28, 3
      %p109 = por %p107, %p108
      %p110 = scmp.ne.s32.totalorder %s101, %s102
      %p111 = scmp.eq.s32.totalorder %s28, 0
      %p112 = por %p110, %p111
      %p113 = scmp.ne.s32.totalorder %s101, %s102
      %p114 = scmp.eq.s32.totalorder %s29, 3
      %p115 = por %p113, %p114
      %p117 = scmp.ne.s32.totalorder %s102, %s116
      %p118 = scmp.eq.s32.totalorder %s29, 0
      %p119 = por %p117, %p118
      %s121 = sadd.s32 %s120, 1
      %p124 = scmp.eq.s32.totalorder %s23, 3
      %p125 = scmp.ne.s32.totalorder %s120, %s122
      %p126 = scmp.eq.s32.totalorder %s23, 0
      %p127 = por %p125, %p126
      %p128 = scmp.ne.s32.totalorder %s120, %s122
      %p129 = scmp.eq.s32.totalorder %s28, 3
      %p130 = por %p128, %p129
      %p131 = scmp.ne.s32.totalorder %s122, %s123
      %p132 = scmp.eq.s32.totalorder %s28, 0
      %p133 = por %p131, %p132
      %p134 = scmp.ne.s32.totalorder %s122, %s123
      %p135 = scmp.eq.s32.totalorder %s29, 3
      %p136 = por %p134, %p135
      %p138 = scmp.ne.s32.totalorder %s123, %s137
      %p139 = scmp.eq.s32.totalorder %s29, 0
      %p140 = por %p138, %p139
      %s142 = sadd.s32 %s141, 1
      %p145 = scmp.eq.s32.totalorder %s23, 3
      %p146 = scmp.ne.s32.totalorder %s141, %s143
      %p147 = scmp.eq.s32.totalorder %s23, 0
      %p148 = por %p146, %p147
      %p149 = scmp.ne.s32.totalorder %s141, %s143
      %p150 = scmp.eq.s32.totalorder %s28, 3
      %p151 = por %p149, %p150
      %p152 = scmp.ne.s32.totalorder %s143, %s144
      %p153 = scmp.eq.s32.totalorder %s28, 0
      %p154 = por %p152, %p153
      %p155 = scmp.ne.s32.totalorder %s143, %s144
      %p156 = scmp.eq.s32.totalorder %s29, 3
      %p157 = por %p155, %p156
      %p159 = scmp.ne.s32.totalorder %s144, %s158
      %p160 = scmp.eq.s32.totalorder %s29, 0
      %p161 = por %p159, %p160
      %s163 = sadd.s32 %s162, 1
      %p166 = scmp.eq.s32.totalorder %s23, 3
      %p167 = scmp.ne.s32.totalorder %s162, %s164
      %p168 = scmp.eq.s32.totalorder %s23, 0
      %p169 = por %p167, %p168
      %p170 = scmp.ne.s32.totalorder %s162, %s164
      %p171 = scmp.eq.s32.totalorder %s28, 3
      %p172 = por %p170, %p171
      %p173 = scmp.ne.s32.totalorder %s164, %s165
      %p174 = scmp.eq.s32.totalorder %s28, 0
      %p175 = por %p173, %p174
      %p176 = scmp.ne.s32.totalorder %s164, %s165
      %p177 = scmp.eq.s32.totalorder %s29, 3
      %p178 = por %p176, %p177
      %p180 = scmp.ne.s32.totalorder %s165, %s179
      %p181 = scmp.eq.s32.totalorder %s29, 0
      %p182 = por %p180, %p181
      %s184 = sadd.s32 %s183, 1
      %p187 = scmp.eq.s32.totalorder %s23, 3
      %p188 = scmp.ne.s32.totalorder %s183, %s185
      %p189 = scmp.eq.s32.totalorder %s23, 0
      %p190 = por %p188, %p189
      %p191 = scmp.ne.s32.totalorder %s183, %s185
      %p192 = scmp.eq.s32.totalorder %s28, 3
      %p193 = por %p191, %p192
      %p194 = scmp.ne.s32.totalorder %s185, %s186
      %p195 = scmp.eq.s32.totalorder %s28, 0
      %p196 = por %p194, %p195
      %p197 = scmp.ne.s32.totalorder %s185, %s186
      %p198 = scmp.eq.s32.totalorder %s29, 3
      %p199 = por %p197, %p198
      %p201 = scmp.ne.s32.totalorder %s186, %s200
      %p202 = scmp.eq.s32.totalorder %s29, 0
      %p203 = por %p201, %p202
      %s205 = sadd.s32 %s204, 1
      %p208 = scmp.eq.s32.totalorder %s23, 3
      %p209 = scmp.ne.s32.totalorder %s204, %s206
      %p210 = scmp.eq.s32.totalorder %s23, 0
      %p211 = por %p209, %p210
      %p212 = scmp.ne.s32.totalorder %s204, %s206
      %p213 = scmp.eq.s32.totalorder %s28, 3
      %p214 = por %p212, %p213
      %p215 = scmp.ne.s32.totalorder %s206, %s207
      %p216 = scmp.eq.s32.totalorder %s28, 0
      %p217 = por %p215, %p216
      %p218 = scmp.ne.s32.totalorder %s206, %s207
      %p219 = scmp.eq.s32.totalorder %s29, 3
      %p220 = por %p218, %p219
      %p222 = scmp.ne.s32.totalorder %s207, %s221
      %p223 = scmp.eq.s32.totalorder %s29, 0
      %p224 = por %p222, %p223
      %s226 = sadd.s32 %s225, 1
      %p229 = scmp.eq.s32.totalorder %s23, 3
      %p230 = scmp.ne.s32.totalorder %s225, %s227
      %p231 = scmp.eq.s32.totalorder %s23, 0
      %p232 = por %p230, %p231
      %p233 = scmp.ne.s32.totalorder %s225, %s227
      %p234 = scmp.eq.s32.totalorder %s28, 3
      %p235 = por %p233, %p234
      %p236 = scmp.ne.s32.totalorder %s227, %s228
      %p237 = scmp.eq.s32.totalorder %s28, 0
      %p238 = por %p236, %p237
      %p239 = scmp.ne.s32.totalorder %s227, %s228
      %p240 = scmp.eq.s32.totalorder %s29, 3
      %p241 = por %p239, %p240
      %p243 = scmp.ne.s32.totalorder %s228, %s242
      %p244 = scmp.eq.s32.totalorder %s29, 0
      %p245 = por %p243, %p244
      %s247 = sadd.s32 %s246, 1
      %p250 = scmp.eq.s32.totalorder %s23, 3
      %p251 = scmp.ne.s32.totalorder %s246, %s248
      %p252 = scmp.eq.s32.totalorder %s23, 0
      %p253 = por %p251, %p252
      %p254 = scmp.ne.s32.totalorder %s246, %s248
      %p255 = scmp.eq.s32.totalorder %s28, 3
      %p256 = por %p254, %p255
      %p257 = scmp.ne.s32.totalorder %s248, %s249
      %p258 = scmp.eq.s32.totalorder %s28, 0
      %p259 = por %p257, %p258
      %p260 = scmp.ne.s32.totalorder %s248, %s249
      %p261 = scmp.eq.s32.totalorder %s29, 3
      %p262 = por %p260, %p261
      %p264 = scmp.ne.s32.totalorder %s249, %s263
      %p265 = scmp.eq.s32.totalorder %s29, 0
      %p266 = por %p264, %p265
      %s267 = ssub.s32 %s23, %s30
      %p268 = scmp.eq.s32.totalorder %s267, 0
      %s270 = sadd.s32 %s269, 1
      %s271 = scalar_select %p268, %s269, %s270
      %p274 = pneg %p268
      %p275 = scmp.eq.s32.totalorder %s23, 3
      %p276 = por %p274, %p275
      %p277 = scmp.ne.s32.totalorder %s269, %s272
      %p278 = scmp.eq.s32.totalorder %s23, 0
      %p279 = por %p277, %p278
      %p280 = scmp.ne.s32.totalorder %s269, %s272
      %p281 = scmp.eq.s32.totalorder %s28, 3
      %p282 = por %p280, %p281
      %p283 = scmp.ne.s32.totalorder %s272, %s273
      %p284 = scmp.eq.s32.totalorder %s28, 0
      %p285 = por %p283, %p284
      %p286 = scmp.ne.s32.totalorder %s272, %s273
      %p287 = scmp.eq.s32.totalorder %s29, 3
      %p288 = por %p286, %p287
      %p290 = scmp.ne.s32.totalorder %s273, %s289
      %p291 = scmp.eq.s32.totalorder %s29, 0
      %p292 = por %p290, %p291
      %p293 = scmp.le.s32.totalorder 1, %s23
      %p294 = scmp.lt.s32.totalorder %s23, 5
      %p295 = pnand %p293, %p294
      %p296 = pneg %p295
      // Predicated region
      $region9: #{tpu_custom_call.1} parent=5 // pred_check
        _
      $region10: #{tpu_custom_call.1} parent=5 // pred_check_branch
        %298 = sbr.rel (%p295) target = $region12
      $region11: #{tpu_custom_call.1} parent=5 // pred_region
        %s299 = ssub.s32 %s23, 1
        // Predicated region
        $region13: #{tpu_custom_call.1} parent=11 // pred_check
          %p300 = pneg %p70
        $region14: #{tpu_custom_call.1} parent=11 // pred_check_branch
          %302 = sbr.rel (%p300) target = $region16
        $region15: #{tpu_custom_call.1} parent=11 // pred_region
          _
        $region16: #{tpu_custom_call.1} parent=11 // pred_fallthru
          _
        // Predicated region
        $region17: #{tpu_custom_call.1} parent=11 // pred_check
          %p303 = pneg %p91
        $region18: #{tpu_custom_call.1} parent=11 // pred_check_branch
          %305 = sbr.rel (%p303) target = $region20
        $region19: #{tpu_custom_call.1} parent=11 // pred_region
          _
        $region20: #{tpu_custom_call.1} parent=11 // pred_fallthru
          _
        // Predicated region
        $region21: #{tpu_custom_call.1} parent=11 // pred_check
          %p306 = pneg %p112
        $region22: #{tpu_custom_call.1} parent=11 // pred_check_branch
          %308 = sbr.rel (%p306) target = $region24
        $region23: #{tpu_custom_call.1} parent=11 // pred_region
          _
        $region24: #{tpu_custom_call.1} parent=11 // pred_fallthru
          _
        // Predicated region
        $region25: #{tpu_custom_call.1} parent=11 // pred_check
          %p309 = pneg %p133
        $region26: #{tpu_custom_call.1} parent=11 // pred_check_branch
          %311 = sbr.rel (%p309) target = $region28
        $region27: #{tpu_custom_call.1} parent=11 // pred_region
          _
        $region28: #{tpu_custom_call.1} parent=11 // pred_fallthru
          _
        // Predicated region
        $region29: #{tpu_custom_call.1} parent=11 // pred_check
          %p312 = pneg %p154
        $region30: #{tpu_custom_call.1} parent=11 // pred_check_branch
          %314 = sbr.rel (%p312) target = $region32
        $region31: #{tpu_custom_call.1} parent=11 // pred_region
          _
        $region32: #{tpu_custom_call.1} parent=11 // pred_fallthru
          _
        // Predicated region
        $region33: #{tpu_custom_call.1} parent=11 // pred_check
          %p315 = pneg %p175
        $region34: #{tpu_custom_call.1} parent=11 // pred_check_branch
          %317 = sbr.rel (%p315) target = $region36
        $region35: #{tpu_custom_call.1} parent=11 // pred_region
          _
        $region36: #{tpu_custom_call.1} parent=11 // pred_fallthru
          _
        // Predicated region
        $region37: #{tpu_custom_call.1} parent=11 // pred_check
          %p318 = pneg %p196
        $region38: #{tpu_custom_call.1} parent=11 // pred_check_branch
          %320 = sbr.rel (%p318) target = $region40
        $region39: #{tpu_custom_call.1} parent=11 // pred_region
          _
        $region40: #{tpu_custom_call.1} parent=11 // pred_fallthru
          _
        // Predicated region
        $region41: #{tpu_custom_call.1} parent=11 // pred_check
          %p321 = pneg %p217
        $region42: #{tpu_custom_call.1} parent=11 // pred_check_branch
          %323 = sbr.rel (%p321) target = $region44
        $region43: #{tpu_custom_call.1} parent=11 // pred_region
          _
        $region44: #{tpu_custom_call.1} parent=11 // pred_fallthru
          _
        // Predicated region
        $region45: #{tpu_custom_call.1} parent=11 // pred_check
          %p324 = pneg %p238
        $region46: #{tpu_custom_call.1} parent=11 // pred_check_branch
          %326 = sbr.rel (%p324) target = $region48
        $region47: #{tpu_custom_call.1} parent=11 // pred_region
          _
        $region48: #{tpu_custom_call.1} parent=11 // pred_fallthru
          _
        // Predicated region
        $region49: #{tpu_custom_call.1} parent=11 // pred_check
          %p327 = pneg %p259
        $region50: #{tpu_custom_call.1} parent=11 // pred_check_branch
          %329 = sbr.rel (%p327) target = $region52
        $region51: #{tpu_custom_call.1} parent=11 // pred_region
          _
        $region52: #{tpu_custom_call.1} parent=11 // pred_fallthru
          _
      $region12: #{tpu_custom_call.1} parent=5 // pred_fallthru
        _
      %p330 = scmp.lt.s32.totalorder %s23, 4
      // Predicated region
      $region53: #{tpu_custom_call.1} parent=5 // pred_check
        %p331 = pneg %p330
      $region54: #{tpu_custom_call.1} parent=5 // pred_check_branch
        %333 = sbr.rel (%p331) target = $region56
      $region55: #{tpu_custom_call.1} parent=5 // pred_region
        // Predicated region
        $region57: #{tpu_custom_call.1} parent=55 // pred_check
          %p334 = pneg %p43
        $region58: #{tpu_custom_call.1} parent=55 // pred_check_branch
          %336 = sbr.rel (%p334) target = $region60
        $region59: #{tpu_custom_call.1} parent=55 // pred_region
          %s337 = sand.u32 %s33, 1
          %s338 = scalar_lea.sflag [#allocation3], %s337
          %s339 = sand.u32 %s33, 1
          %s340 = smul.addr %s339, 64
          %s341 = scalar_lea.vmem [#allocation2], %s340
          %s342 = smul.u32 16, %s23
          %s344 = ssub.s32 1024, 1024
          %345 = vsyncadd %s338, %s344
          %s346 = smul.addr %s342, 64
          %s347 = scalar_lea.hbm %s0, %s346
          %s349 = sshll.u32 %s341, 4
          %s350 = int_to_ptr.vmem [resolvable:$true] %s349
          %352 = dma.hbm_to_vmem [thread:$0]  %s347, 1024, %s350, %s338
        $region60: #{tpu_custom_call.1} parent=55 // pred_fallthru
          _
      $region56: #{tpu_custom_call.1} parent=5 // pred_fallthru
        _
      %p353 = scmp.le.s32.totalorder 1, %s23
      %p354 = scmp.lt.s32.totalorder %s23, 5
      %p355 = pnand %p353, %p354
      %p356 = pneg %p355
      // Predicated region
      $region61: #{tpu_custom_call.1} parent=5 // pred_check
        _
      $region62: #{tpu_custom_call.1} parent=5 // pred_check_branch
        %358 = sbr.rel (%p355) target = $region64
      $region63: #{tpu_custom_call.1} parent=5 // pred_region
        %s359 = ssub.s32 %s23, 1
        %s360 = sand.u32 %s36, 1
        %s361 = scalar_lea.sflag [#allocation3], %s360
        %s362 = sand.u32 %s36, 1
        %s363 = smul.addr %s362, 64
        %s364 = scalar_lea.vmem [#allocation2], %s363
        // Predicated region
        $region65: #{tpu_custom_call.1} parent=63 // pred_check
          %p365 = pneg %p49
        $region66: #{tpu_custom_call.1} parent=63 // pred_check_branch
          %367 = sbr.rel (%p365) target = $region68
        $region67: #{tpu_custom_call.1} parent=63 // pred_region
          %368 = dma.done %s361, 1024
        $region68: #{tpu_custom_call.1} parent=63 // pred_fallthru
          _
        %s369 = sand.u32 %s36, 1
        %s370 = scalar_lea.sflag [#allocation3], %s369
        %s371 = sand.u32 %s36, 1
        %s372 = smul.addr %s371, 64
        %s373 = scalar_lea.vmem [#allocation2], %s372
        %p374 = pneg %p49
        %p375 = pneg %p46
        %p376 = pneg %p70
        %p377 = pneg %p67
        %p378 = pneg %p91
        %p379 = pneg %p88
        %p380 = pneg %p112
        %p381 = pneg %p109
        %p382 = pneg %p133
        %p383 = pneg %p130
        %p384 = pneg %p154
        %p385 = pneg %p151
        %p386 = pneg %p175
        %p387 = pneg %p172
        %p388 = pneg %p196
        %p389 = pneg %p193
        %p390 = pneg %p217
        %p391 = pneg %p214
        %p392 = pneg %p238
        %p393 = pneg %p235
        %p394 = pneg %p259
        %p395 = pneg %p256
        %p396 = pneg %p285
        %p397 = pneg %p282
        %s398 = sand.u32 %s272, 1
        %s399 = scalar_lea.sflag [#allocation4], %s398
        %s400 = sand.u32 %s272, 1
        %s401 = smul.addr %s400, 64
        %s402 = scalar_lea.vmem [#allocation5], %s401
        %s403 = smul.u32 16, %s28
        %s404 = smul.u32 16, %s28
        %v405 = vld [vmem:[%s364] sm:$0x77]
        %v406 = vld [vmem:[%s364 + $0x8] sm:$0x77]
        %v407 = vld [vmem:[%s364 + $0x10] sm:$0x77]
        %v408 = vld [vmem:[%s364 + $0x18] sm:$0x77]
        %v409 = vld [vmem:[%s364 + $0x20] sm:$0x77]
        %v410 = vld [vmem:[%s364 + $0x28] sm:$0x77]
        %v411 = vld [vmem:[%s364 + $0x30] sm:$0x77]
        %v412 = vld [vmem:[%s364 + $0x38] sm:$0x77]
        %v413 = vld [vmem:[%s1] sm:$0xff]
        %v414 = vld [vmem:[%s1 + $0x8] sm:$0xff]
        %v415 = vld [vmem:[%s1 + $0x10] sm:$0xff]
        %v416 = vld [vmem:[%s2] sm:$0xff]
        %v417 = vld [vmem:[%s2 + $0x8] sm:$0xff]
        %v418 = vld [vmem:[%s2 + $0x10] sm:$0xff]
        %420 = vset.pattern.permute.xlu0 0
        %421 = vperm.xlu0 %420, %v416
        %v422 = vpop.permute.xlu0 %421
        %425 = vset.pattern.permute.xlu0 0
        %426 = vperm.xlu0 %425, %v417
        %v427 = vpop.permute.xlu0 %426
        %430 = vset.pattern.permute.xlu0 0
        %431 = vperm.xlu0 %430, %v418
        %v432 = vpop.permute.xlu0 %431
        %v442 = vcombine.high %v405, %v405
        %v443 = vcombine.high %v406, %v406
        %v444 = vcombine.high %v407, %v407
        %v445 = vcombine.high %v408, %v408
        %v446 = vcombine.high %v409, %v409
        %v447 = vcombine.high %v410, %v410
        %v448 = vcombine.high %v411, %v411
        %v449 = vcombine.high %v412, %v412
        %vm450 = vcmask 23552
        %v452 = vsel %vm450, %v413, 0
        %v455 = vsel %vm450, %v414, 0
        %v458 = vsel %vm450, %v415, 0
        %vm460 = vcmask 1042432
        %v461 = vsel %vm460, %v405, 0
        %v463 = vsel %vm460, %v442, 0
        %v465 = vsel %vm460, %v406, 0
        %v467 = vsel %vm460, %v443, 0
        %v469 = vsel %vm460, %v407, 0
        %v471 = vsel %vm460, %v444, 0
        %v473 = vsel %vm460, %v408, 0
        %v475 = vsel %vm460, %v445, 0
        %v477 = vsel %vm460, %v409, 0
        %v479 = vsel %vm460, %v446, 0
        %v481 = vsel %vm460, %v410, 0
        %v483 = vsel %vm460, %v447, 0
        %v485 = vsel %vm460, %v411, 0
        %v487 = vsel %vm460, %v448, 0
        %v489 = vsel %vm460, %v412, 0
        %v491 = vsel %vm460, %v449, 0
        %493 = vmatprep.subr.mxu0 0.0
        %494 = vmatpush1.msra.mxu0 0.0
        %495 = vmatprep.subr.mxu0 0.0
        %496 = vmatpush1.msra.mxu0 0.0
        %497 = vmatprep.subr.mxu0 0.0
        %498 = vmatpush1.msra.mxu0 0.0
        %499 = vmatprep.subr.mxu0 0.0
        %500 = vmatpush1.msra.mxu0 0.0
        %501 = vmatprep.subr.mxu0 0.0
        %502 = vmatpush1.msra.mxu0 0.0
        %503 = vmatprep.subr.mxu0 0.0
        %504 = vmatpush1.msra.mxu0 0.0
        %505 = vmatprep.subr.mxu0 0.0
        %506 = vmatpush1.msra.mxu0 0.0
        %507 = vmatprep.subr.mxu0 0.0
        %508 = vmatpush1.msra.mxu0 0.0
        %509 = vmatprep.subr.mxu0 0.0
        %510 = vmatpush1.msra.mxu0 0.0
        %511 = vmatprep.subr.mxu0 0.0
        %512 = vmatpush1.msra.mxu0 0.0
        %513 = vmatprep.subr.mxu0 0.0
        %514 = vmatpush1.msra.mxu0 0.0
        %515 = vmatprep.subr.mxu0 0.0
        %516 = vmatpush1.msra.mxu0 0.0
        %517 = vmatprep.subr.mxu0 0.0
        %518 = vmatpush1.msra.mxu0 0.0
        %519 = vmatprep.subr.mxu0 0.0
        %520 = vmatpush1.msra.mxu0 0.0
        %521 = vmatprep.subr.mxu0 0.0
        %522 = vmatpush1.msra.mxu0 0.0
        %523 = vmatprep.subr.mxu0 %v463
        %524 = vmatpush1.msra.mxu0 %v461
        %525 = vmatprep.subr.mxu0 0.0
        %526 = vmatpush2.msra.mxu0 0.0
        %527 = vmatprep.subr.mxu0 0.0
        %528 = vmatpush2.msra.mxu0 0.0
        %529 = vmatprep.subr.mxu0 0.0
        %530 = vmatpush2.msra.mxu0 0.0
        %531 = vmatprep.subr.mxu0 0.0
        %532 = vmatpush2.msra.mxu0 0.0
        %533 = vmatprep.subr.mxu0 0.0
        %534 = vmatpush2.msra.mxu0 0.0
        %535 = vmatprep.subr.mxu0 0.0
        %536 = vmatpush2.msra.mxu0 0.0
        %537 = vmatprep.subr.mxu0 0.0
        %538 = vmatpush2.msra.mxu0 0.0
        %539 = vmatprep.subr.mxu0 0.0
        %540 = vmatpush2.msra.mxu0 0.0
        %541 = vmatprep.subr.mxu0 0.0
        %542 = vmatpush2.msra.mxu0 0.0
        %543 = vmatprep.subr.mxu0 0.0
        %544 = vmatpush2.msra.mxu0 0.0
        %545 = vmatprep.subr.mxu0 0.0
        %546 = vmatpush2.msra.mxu0 0.0
        %547 = vmatprep.subr.mxu0 0.0
        %548 = vmatpush2.msra.mxu0 0.0
        %549 = vmatprep.subr.mxu0 0.0
        %550 = vmatpush2.msra.mxu0 0.0
        %551 = vmatprep.subr.mxu0 0.0
        %552 = vmatpush2.msra.mxu0 0.0
        %553 = vmatprep.subr.mxu0 0.0
        %554 = vmatpush2.msra.mxu0 0.0
        %555 = vmatprep.subr.mxu0 0.0
        %556 = vmatpush2.msra.mxu0 0.0
        %557 = vmatprep.mubr.f32.mxu0 0.0
        %558 = vmatmul.mubr.f32.gmra.mxu0 %v452
        %v559 = vpop.f32.mrf.mxu0
        %v560 = vadd.f32 %v422, %v559
        %v561 = vpop.f32.mrf.mxu0
        %v562 = vadd.f32 %v422, %v561
        %563 = vmatprep.mubr.f32.mxu0 0.0
        %564 = vmatmul.mubr.f32.gmra.mxu0 %v455
        %v565 = vpop.f32.mrf.mxu0
        %v566 = vadd.f32 %v427, %v565
        %v567 = vpop.f32.mrf.mxu0
        %v568 = vadd.f32 %v427, %v567
        %569 = vmatprep.mubr.f32.mxu0 0.0
        %570 = vmatmul.mubr.f32.gmra.mxu0 %v458
        %v571 = vpop.f32.mrf.mxu0
        %v572 = vadd.f32 %v432, %v571
        %v573 = vpop.f32.mrf.mxu0
        %v574 = vadd.f32 %v432, %v573
        %575 = vdwg.mxu0
        %576 = vmatprep.subr.mxu0 0.0
        %577 = vmatpush1.msra.mxu0 0.0
        %578 = vmatprep.subr.mxu0 0.0
        %579 = vmatpush1.msra.mxu0 0.0
        %580 = vmatprep.subr.mxu0 0.0
        %581 = vmatpush1.msra.mxu0 0.0
        %582 = vmatprep.subr.mxu0 0.0
        %583 = vmatpush1.msra.mxu0 0.0
        %584 = vmatprep.subr.mxu0 0.0
        %585 = vmatpush1.msra.mxu0 0.0
        %586 = vmatprep.subr.mxu0 0.0
        %587 = vmatpush1.msra.mxu0 0.0
        %588 = vmatprep.subr.mxu0 0.0
        %589 = vmatpush1.msra.mxu0 0.0
        %590 = vmatprep.subr.mxu0 0.0
        %591 = vmatpush1.msra.mxu0 0.0
        %592 = vmatprep.subr.mxu0 0.0
        %593 = vmatpush1.msra.mxu0 0.0
        %594 = vmatprep.subr.mxu0 0.0
        %595 = vmatpush1.msra.mxu0 0.0
        %596 = vmatprep.subr.mxu0 0.0
        %597 = vmatpush1.msra.mxu0 0.0
        %598 = vmatprep.subr.mxu0 0.0
        %599 = vmatpush1.msra.mxu0 0.0
        %600 = vmatprep.subr.mxu0 0.0
        %601 = vmatpush1.msra.mxu0 0.0
        %602 = vmatprep.subr.mxu0 0.0
        %603 = vmatpush1.msra.mxu0 0.0
        %604 = vmatprep.subr.mxu0 0.0
        %605 = vmatpush1.msra.mxu0 0.0
        %606 = vmatprep.subr.mxu0 %v467
        %607 = vmatpush1.msra.mxu0 %v465
        %608 = vmatprep.subr.mxu0 0.0
        %609 = vmatpush2.msra.mxu0 0.0
        %610 = vmatprep.subr.mxu0 0.0
        %611 = vmatpush2.msra.mxu0 0.0
        %612 = vmatprep.subr.mxu0 0.0
        %613 = vmatpush2.msra.mxu0 0.0
        %614 = vmatprep.subr.mxu0 0.0
        %615 = vmatpush2.msra.mxu0 0.0
        %616 = vmatprep.subr.mxu0 0.0
        %617 = vmatpush2.msra.mxu0 0.0
        %618 = vmatprep.subr.mxu0 0.0
        %619 = vmatpush2.msra.mxu0 0.0
        %620 = vmatprep.subr.mxu0 0.0
        %621 = vmatpush2.msra.mxu0 0.0
        %622 = vmatprep.subr.mxu0 0.0
        %623 = vmatpush2.msra.mxu0 0.0
        %624 = vmatprep.subr.mxu0 0.0
        %625 = vmatpush2.msra.mxu0 0.0
        %626 = vmatprep.subr.mxu0 0.0
        %627 = vmatpush2.msra.mxu0 0.0
        %628 = vmatprep.subr.mxu0 0.0
        %629 = vmatpush2.msra.mxu0 0.0
        %630 = vmatprep.subr.mxu0 0.0
        %631 = vmatpush2.msra.mxu0 0.0
        %632 = vmatprep.subr.mxu0 0.0
        %633 = vmatpush2.msra.mxu0 0.0
        %634 = vmatprep.subr.mxu0 0.0
        %635 = vmatpush2.msra.mxu0 0.0
        %636 = vmatprep.subr.mxu0 0.0
        %637 = vmatpush2.msra.mxu0 0.0
        %638 = vmatprep.subr.mxu0 0.0
        %639 = vmatpush2.msra.mxu0 0.0
        %640 = vmatprep.mubr.f32.mxu0 0.0
        %641 = vmatmul.mubr.f32.gmra.mxu0 %v452
        %v642 = vpop.f32.mrf.mxu0
        %v643 = vadd.f32 %v422, %v642
        %v644 = vpop.f32.mrf.mxu0
        %v645 = vadd.f32 %v422, %v644
        %646 = vmatprep.mubr.f32.mxu0 0.0
        %647 = vmatmul.mubr.f32.gmra.mxu0 %v455
        %v648 = vpop.f32.mrf.mxu0
        %v649 = vadd.f32 %v427, %v648
        %v650 = vpop.f32.mrf.mxu0
        %v651 = vadd.f32 %v427, %v650
        %652 = vmatprep.mubr.f32.mxu0 0.0
        %653 = vmatmul.mubr.f32.gmra.mxu0 %v458
        %v654 = vpop.f32.mrf.mxu0
        %v655 = vadd.f32 %v432, %v654
        %v656 = vpop.f32.mrf.mxu0
        %v657 = vadd.f32 %v432, %v656
        %658 = vdwg.mxu0
        %659 = vmatprep.subr.mxu0 0.0
        %660 = vmatpush1.msra.mxu0 0.0
        %661 = vmatprep.subr.mxu0 0.0
        %662 = vmatpush1.msra.mxu0 0.0
        %663 = vmatprep.subr.mxu0 0.0
        %664 = vmatpush1.msra.mxu0 0.0
        %665 = vmatprep.subr.mxu0 0.0
        %666 = vmatpush1.msra.mxu0 0.0
        %667 = vmatprep.subr.mxu0 0.0
        %668 = vmatpush1.msra.mxu0 0.0
        %669 = vmatprep.subr.mxu0 0.0
        %670 = vmatpush1.msra.mxu0 0.0
        %671 = vmatprep.subr.mxu0 0.0
        %672 = vmatpush1.msra.mxu0 0.0
        %673 = vmatprep.subr.mxu0 0.0
        %674 = vmatpush1.msra.mxu0 0.0
        %675 = vmatprep.subr.mxu0 0.0
        %676 = vmatpush1.msra.mxu0 0.0
        %677 = vmatprep.subr.mxu0 0.0
        %678 = vmatpush1.msra.mxu0 0.0
        %679 = vmatprep.subr.mxu0 0.0
        %680 = vmatpush1.msra.mxu0 0.0
        %681 = vmatprep.subr.mxu0 0.0
        %682 = vmatpush1.msra.mxu0 0.0
        %683 = vmatprep.subr.mxu0 0.0
        %684 = vmatpush1.msra.mxu0 0.0
        %685 = vmatprep.subr.mxu0 0.0
        %686 = vmatpush1.msra.mxu0 0.0
        %687 = vmatprep.subr.mxu0 0.0
        %688 = vmatpush1.msra.mxu0 0.0
        %689 = vmatprep.subr.mxu0 %v471
        %690 = vmatpush1.msra.mxu0 %v469
        %691 = vmatprep.subr.mxu0 0.0
        %692 = vmatpush2.msra.mxu0 0.0
        %693 = vmatprep.subr.mxu0 0.0
        %694 = vmatpush2.msra.mxu0 0.0
        %695 = vmatprep.subr.mxu0 0.0
        %696 = vmatpush2.msra.mxu0 0.0
        %697 = vmatprep.subr.mxu0 0.0
        %698 = vmatpush2.msra.mxu0 0.0
        %699 = vmatprep.subr.mxu0 0.0
        %700 = vmatpush2.msra.mxu0 0.0
        %701 = vmatprep.subr.mxu0 0.0
        %702 = vmatpush2.msra.mxu0 0.0
        %703 = vmatprep.subr.mxu0 0.0
        %704 = vmatpush2.msra.mxu0 0.0
        %705 = vmatprep.subr.mxu0 0.0
        %706 = vmatpush2.msra.mxu0 0.0
        %707 = vmatprep.subr.mxu0 0.0
        %708 = vmatpush2.msra.mxu0 0.0
        %709 = vmatprep.subr.mxu0 0.0
        %710 = vmatpush2.msra.mxu0 0.0
        %711 = vmatprep.subr.mxu0 0.0
        %712 = vmatpush2.msra.mxu0 0.0
        %713 = vmatprep.subr.mxu0 0.0
        %714 = vmatpush2.msra.mxu0 0.0
        %715 = vmatprep.subr.mxu0 0.0
        %716 = vmatpush2.msra.mxu0 0.0
        %717 = vmatprep.subr.mxu0 0.0
        %718 = vmatpush2.msra.mxu0 0.0
        %719 = vmatprep.subr.mxu0 0.0
        %720 = vmatpush2.msra.mxu0 0.0
        %721 = vmatprep.subr.mxu0 0.0
        %722 = vmatpush2.msra.mxu0 0.0
        %723 = vmatprep.mubr.f32.mxu0 0.0
        %724 = vmatmul.mubr.f32.gmra.mxu0 %v452
        %v725 = vpop.f32.mrf.mxu0
        %v726 = vadd.f32 %v422, %v725
        %v727 = vpop.f32.mrf.mxu0
        %v728 = vadd.f32 %v422, %v727
        %729 = vmatprep.mubr.f32.mxu0 0.0
        %730 = vmatmul.mubr.f32.gmra.mxu0 %v455
        %v731 = vpop.f32.mrf.mxu0
        %v732 = vadd.f32 %v427, %v731
        %v733 = vpop.f32.mrf.mxu0
        %v734 = vadd.f32 %v427, %v733
        %735 = vmatprep.mubr.f32.mxu0 0.0
        %736 = vmatmul.mubr.f32.gmra.mxu0 %v458
        %v737 = vpop.f32.mrf.mxu0
        %v738 = vadd.f32 %v432, %v737
        %v739 = vpop.f32.mrf.mxu0
        %v740 = vadd.f32 %v432, %v739
        %741 = vdwg.mxu0
        %742 = vmatprep.subr.mxu0 0.0
        %743 = vmatpush1.msra.mxu0 0.0
        %744 = vmatprep.subr.mxu0 0.0
        %745 = vmatpush1.msra.mxu0 0.0
        %746 = vmatprep.subr.mxu0 0.0
        %747 = vmatpush1.msra.mxu0 0.0
        %748 = vmatprep.subr.mxu0 0.0
        %749 = vmatpush1.msra.mxu0 0.0
        %750 = vmatprep.subr.mxu0 0.0
        %751 = vmatpush1.msra.mxu0 0.0
        %752 = vmatprep.subr.mxu0 0.0
        %753 = vmatpush1.msra.mxu0 0.0
        %754 = vmatprep.subr.mxu0 0.0
        %755 = vmatpush1.msra.mxu0 0.0
        %756 = vmatprep.subr.mxu0 0.0
        %757 = vmatpush1.msra.mxu0 0.0
        %758 = vmatprep.subr.mxu0 0.0
        %759 = vmatpush1.msra.mxu0 0.0
        %760 = vmatprep.subr.mxu0 0.0
        %761 = vmatpush1.msra.mxu0 0.0
        %762 = vmatprep.subr.mxu0 0.0
        %763 = vmatpush1.msra.mxu0 0.0
        %764 = vmatprep.subr.mxu0 0.0
        %765 = vmatpush1.msra.mxu0 0.0
        %766 = vmatprep.subr.mxu0 0.0
        %767 = vmatpush1.msra.mxu0 0.0
        %768 = vmatprep.subr.mxu0 0.0
        %769 = vmatpush1.msra.mxu0 0.0
        %770 = vmatprep.subr.mxu0 0.0
        %771 = vmatpush1.msra.mxu0 0.0
        %772 = vmatprep.subr.mxu0 %v475
        %773 = vmatpush1.msra.mxu0 %v473
        %774 = vmatprep.subr.mxu0 0.0
        %775 = vmatpush2.msra.mxu0 0.0
        %776 = vmatprep.subr.mxu0 0.0
        %777 = vmatpush2.msra.mxu0 0.0
        %778 = vmatprep.subr.mxu0 0.0
        %779 = vmatpush2.msra.mxu0 0.0
        %780 = vmatprep.subr.mxu0 0.0
        %781 = vmatpush2.msra.mxu0 0.0
        %782 = vmatprep.subr.mxu0 0.0
        %783 = vmatpush2.msra.mxu0 0.0
        %784 = vmatprep.subr.mxu0 0.0
        %785 = vmatpush2.msra.mxu0 0.0
        %786 = vmatprep.subr.mxu0 0.0
        %787 = vmatpush2.msra.mxu0 0.0
        %788 = vmatprep.subr.mxu0 0.0
        %789 = vmatpush2.msra.mxu0 0.0
        %790 = vmatprep.subr.mxu0 0.0
        %791 = vmatpush2.msra.mxu0 0.0
        %792 = vmatprep.subr.mxu0 0.0
        %793 = vmatpush2.msra.mxu0 0.0
        %794 = vmatprep.subr.mxu0 0.0
        %795 = vmatpush2.msra.mxu0 0.0
        %796 = vmatprep.subr.mxu0 0.0
        %797 = vmatpush2.msra.mxu0 0.0
        %798 = vmatprep.subr.mxu0 0.0
        %799 = vmatpush2.msra.mxu0 0.0
        %800 = vmatprep.subr.mxu0 0.0
        %801 = vmatpush2.msra.mxu0 0.0
        %802 = vmatprep.subr.mxu0 0.0
        %803 = vmatpush2.msra.mxu0 0.0
        %804 = vmatprep.subr.mxu0 0.0
        %805 = vmatpush2.msra.mxu0 0.0
        %806 = vmatprep.mubr.f32.mxu0 0.0
        %807 = vmatmul.mubr.f32.gmra.mxu0 %v452
        %v808 = vpop.f32.mrf.mxu0
        %v809 = vadd.f32 %v422, %v808
        %v810 = vpop.f32.mrf.mxu0
        %v811 = vadd.f32 %v422, %v810
        %812 = vmatprep.mubr.f32.mxu0 0.0
        %813 = vmatmul.mubr.f32.gmra.mxu0 %v455
        %v814 = vpop.f32.mrf.mxu0
        %v815 = vadd.f32 %v427, %v814
        %v816 = vpop.f32.mrf.mxu0
        %v817 = vadd.f32 %v427, %v816
        %818 = vmatprep.mubr.f32.mxu0 0.0
        %819 = vmatmul.mubr.f32.gmra.mxu0 %v458
        %v820 = vpop.f32.mrf.mxu0
        %v821 = vadd.f32 %v432, %v820
        %v822 = vpop.f32.mrf.mxu0
        %v823 = vadd.f32 %v432, %v822
        %824 = vdwg.mxu0
        %825 = vmatprep.subr.mxu0 0.0
        %826 = vmatpush1.msra.mxu0 0.0
        %827 = vmatprep.subr.mxu0 0.0
        %828 = vmatpush1.msra.mxu0 0.0
        %829 = vmatprep.subr.mxu0 0.0
        %830 = vmatpush1.msra.mxu0 0.0
        %831 = vmatprep.subr.mxu0 0.0
        %832 = vmatpush1.msra.mxu0 0.0
        %833 = vmatprep.subr.mxu0 0.0
        %834 = vmatpush1.msra.mxu0 0.0
        %835 = vmatprep.subr.mxu0 0.0
        %836 = vmatpush1.msra.mxu0 0.0
        %837 = vmatprep.subr.mxu0 0.0
        %838 = vmatpush1.msra.mxu0 0.0
        %839 = vmatprep.subr.mxu0 0.0
        %840 = vmatpush1.msra.mxu0 0.0
        %841 = vmatprep.subr.mxu0 0.0
        %842 = vmatpush1.msra.mxu0 0.0
        %843 = vmatprep.subr.mxu0 0.0
        %844 = vmatpush1.msra.mxu0 0.0
        %845 = vmatprep.subr.mxu0 0.0
        %846 = vmatpush1.msra.mxu0 0.0
        %847 = vmatprep.subr.mxu0 0.0
        %848 = vmatpush1.msra.mxu0 0.0
        %849 = vmatprep.subr.mxu0 0.0
        %850 = vmatpush1.msra.mxu0 0.0
        %851 = vmatprep.subr.mxu0 0.0
        %852 = vmatpush1.msra.mxu0 0.0
        %853 = vmatprep.subr.mxu0 0.0
        %854 = vmatpush1.msra.mxu0 0.0
        %855 = vmatprep.subr.mxu0 %v479
        %856 = vmatpush1.msra.mxu0 %v477
        %857 = vmatprep.subr.mxu0 0.0
        %858 = vmatpush2.msra.mxu0 0.0
        %859 = vmatprep.subr.mxu0 0.0
        %860 = vmatpush2.msra.mxu0 0.0
        %861 = vmatprep.subr.mxu0 0.0
        %862 = vmatpush2.msra.mxu0 0.0
        %863 = vmatprep.subr.mxu0 0.0
        %864 = vmatpush2.msra.mxu0 0.0
        %865 = vmatprep.subr.mxu0 0.0
        %866 = vmatpush2.msra.mxu0 0.0
        %867 = vmatprep.subr.mxu0 0.0
        %868 = vmatpush2.msra.mxu0 0.0
        %869 = vmatprep.subr.mxu0 0.0
        %870 = vmatpush2.msra.mxu0 0.0
        %871 = vmatprep.subr.mxu0 0.0
        %872 = vmatpush2.msra.mxu0 0.0
        %873 = vmatprep.subr.mxu0 0.0
        %874 = vmatpush2.msra.mxu0 0.0
        %875 = vmatprep.subr.mxu0 0.0
        %876 = vmatpush2.msra.mxu0 0.0
        %877 = vmatprep.subr.mxu0 0.0
        %878 = vmatpush2.msra.mxu0 0.0
        %879 = vmatprep.subr.mxu0 0.0
        %880 = vmatpush2.msra.mxu0 0.0
        %881 = vmatprep.subr.mxu0 0.0
        %882 = vmatpush2.msra.mxu0 0.0
        %883 = vmatprep.subr.mxu0 0.0
        %884 = vmatpush2.msra.mxu0 0.0
        %885 = vmatprep.subr.mxu0 0.0
        %886 = vmatpush2.msra.mxu0 0.0
        %887 = vmatprep.subr.mxu0 0.0
        %888 = vmatpush2.msra.mxu0 0.0
        %889 = vmatprep.mubr.f32.mxu0 0.0
        %890 = vmatmul.mubr.f32.gmra.mxu0 %v452
        %v891 = vpop.f32.mrf.mxu0
        %v892 = vadd.f32 %v422, %v891
        %v893 = vpop.f32.mrf.mxu0
        %v894 = vadd.f32 %v422, %v893
        %895 = vmatprep.mubr.f32.mxu0 0.0
        %896 = vmatmul.mubr.f32.gmra.mxu0 %v455
        %v897 = vpop.f32.mrf.mxu0
        %v898 = vadd.f32 %v427, %v897
        %v899 = vpop.f32.mrf.mxu0
        %v900 = vadd.f32 %v427, %v899
        %901 = vmatprep.mubr.f32.mxu0 0.0
        %902 = vmatmul.mubr.f32.gmra.mxu0 %v458
        %v903 = vpop.f32.mrf.mxu0
        %v904 = vadd.f32 %v432, %v903
        %v905 = vpop.f32.mrf.mxu0
        %v906 = vadd.f32 %v432, %v905
        %907 = vdwg.mxu0
        %908 = vmatprep.subr.mxu0 0.0
        %909 = vmatpush1.msra.mxu0 0.0
        %910 = vmatprep.subr.mxu0 0.0
        %911 = vmatpush1.msra.mxu0 0.0
        %912 = vmatprep.subr.mxu0 0.0
        %913 = vmatpush1.msra.mxu0 0.0
        %914 = vmatprep.subr.mxu0 0.0
        %915 = vmatpush1.msra.mxu0 0.0
        %916 = vmatprep.subr.mxu0 0.0
        %917 = vmatpush1.msra.mxu0 0.0
        %918 = vmatprep.subr.mxu0 0.0
        %919 = vmatpush1.msra.mxu0 0.0
        %920 = vmatprep.subr.mxu0 0.0
        %921 = vmatpush1.msra.mxu0 0.0
        %922 = vmatprep.subr.mxu0 0.0
        %923 = vmatpush1.msra.mxu0 0.0
        %924 = vmatprep.subr.mxu0 0.0
        %925 = vmatpush1.msra.mxu0 0.0
        %926 = vmatprep.subr.mxu0 0.0
        %927 = vmatpush1.msra.mxu0 0.0
        %928 = vmatprep.subr.mxu0 0.0
        %929 = vmatpush1.msra.mxu0 0.0
        %930 = vmatprep.subr.mxu0 0.0
        %931 = vmatpush1.msra.mxu0 0.0
        %932 = vmatprep.subr.mxu0 0.0
        %933 = vmatpush1.msra.mxu0 0.0
        %934 = vmatprep.subr.mxu0 0.0
        %935 = vmatpush1.msra.mxu0 0.0
        %936 = vmatprep.subr.mxu0 0.0
        %937 = vmatpush1.msra.mxu0 0.0
        %938 = vmatprep.subr.mxu0 %v483
        %939 = vmatpush1.msra.mxu0 %v481
        %940 = vmatprep.subr.mxu0 0.0
        %941 = vmatpush2.msra.mxu0 0.0
        %942 = vmatprep.subr.mxu0 0.0
        %943 = vmatpush2.msra.mxu0 0.0
        %944 = vmatprep.subr.mxu0 0.0
        %945 = vmatpush2.msra.mxu0 0.0
        %946 = vmatprep.subr.mxu0 0.0
        %947 = vmatpush2.msra.mxu0 0.0
        %948 = vmatprep.subr.mxu0 0.0
        %949 = vmatpush2.msra.mxu0 0.0
        %950 = vmatprep.subr.mxu0 0.0
        %951 = vmatpush2.msra.mxu0 0.0
        %952 = vmatprep.subr.mxu0 0.0
        %953 = vmatpush2.msra.mxu0 0.0
        %954 = vmatprep.subr.mxu0 0.0
        %955 = vmatpush2.msra.mxu0 0.0
        %956 = vmatprep.subr.mxu0 0.0
        %957 = vmatpush2.msra.mxu0 0.0
        %958 = vmatprep.subr.mxu0 0.0
        %959 = vmatpush2.msra.mxu0 0.0
        %960 = vmatprep.subr.mxu0 0.0
        %961 = vmatpush2.msra.mxu0 0.0
        %962 = vmatprep.subr.mxu0 0.0
        %963 = vmatpush2.msra.mxu0 0.0
        %964 = vmatprep.subr.mxu0 0.0
        %965 = vmatpush2.msra.mxu0 0.0
        %966 = vmatprep.subr.mxu0 0.0
        %967 = vmatpush2.msra.mxu0 0.0
        %968 = vmatprep.subr.mxu0 0.0
        %969 = vmatpush2.msra.mxu0 0.0
        %970 = vmatprep.subr.mxu0 0.0
        %971 = vmatpush2.msra.mxu0 0.0
        %972 = vmatprep.mubr.f32.mxu0 0.0
        %973 = vmatmul.mubr.f32.gmra.mxu0 %v452
        %v974 = vpop.f32.mrf.mxu0
        %v975 = vadd.f32 %v422, %v974
        %v976 = vpop.f32.mrf.mxu0
        %v977 = vadd.f32 %v422, %v976
        %978 = vmatprep.mubr.f32.mxu0 0.0
        %979 = vmatmul.mubr.f32.gmra.mxu0 %v455
        %v980 = vpop.f32.mrf.mxu0
        %v981 = vadd.f32 %v427, %v980
        %v982 = vpop.f32.mrf.mxu0
        %v983 = vadd.f32 %v427, %v982
        %984 = vmatprep.mubr.f32.mxu0 0.0
        %985 = vmatmul.mubr.f32.gmra.mxu0 %v458
        %v986 = vpop.f32.mrf.mxu0
        %v987 = vadd.f32 %v432, %v986
        %v988 = vpop.f32.mrf.mxu0
        %v989 = vadd.f32 %v432, %v988
        %990 = vdwg.mxu0
        %991 = vmatprep.subr.mxu0 0.0
        %992 = vmatpush1.msra.mxu0 0.0
        %993 = vmatprep.subr.mxu0 0.0
        %994 = vmatpush1.msra.mxu0 0.0
        %995 = vmatprep.subr.mxu0 0.0
        %996 = vmatpush1.msra.mxu0 0.0
        %997 = vmatprep.subr.mxu0 0.0
        %998 = vmatpush1.msra.mxu0 0.0
        %999 = vmatprep.subr.mxu0 0.0
        %1000 = vmatpush1.msra.mxu0 0.0
        %1001 = vmatprep.subr.mxu0 0.0
        %1002 = vmatpush1.msra.mxu0 0.0
        %1003 = vmatprep.subr.mxu0 0.0
        %1004 = vmatpush1.msra.mxu0 0.0
        %1005 = vmatprep.subr.mxu0 0.0
        %1006 = vmatpush1.msra.mxu0 0.0
        %1007 = vmatprep.subr.mxu0 0.0
        %1008 = vmatpush1.msra.mxu0 0.0
        %1009 = vmatprep.subr.mxu0 0.0
        %1010 = vmatpush1.msra.mxu0 0.0
        %1011 = vmatprep.subr.mxu0 0.0
        %1012 = vmatpush1.msra.mxu0 0.0
        %1013 = vmatprep.subr.mxu0 0.0
        %1014 = vmatpush1.msra.mxu0 0.0
        %1015 = vmatprep.subr.mxu0 0.0
        %1016 = vmatpush1.msra.mxu0 0.0
        %1017 = vmatprep.subr.mxu0 0.0
        %1018 = vmatpush1.msra.mxu0 0.0
        %1019 = vmatprep.subr.mxu0 0.0
        %1020 = vmatpush1.msra.mxu0 0.0
        %1021 = vmatprep.subr.mxu0 %v487
        %1022 = vmatpush1.msra.mxu0 %v485
        %1023 = vmatprep.subr.mxu0 0.0
        %1024 = vmatpush2.msra.mxu0 0.0
        %1025 = vmatprep.subr.mxu0 0.0
        %1026 = vmatpush2.msra.mxu0 0.0
        %1027 = vmatprep.subr.mxu0 0.0
        %1028 = vmatpush2.msra.mxu0 0.0
        %1029 = vmatprep.subr.mxu0 0.0
        %1030 = vmatpush2.msra.mxu0 0.0
        %1031 = vmatprep.subr.mxu0 0.0
        %1032 = vmatpush2.msra.mxu0 0.0
        %1033 = vmatprep.subr.mxu0 0.0
        %1034 = vmatpush2.msra.mxu0 0.0
        %1035 = vmatprep.subr.mxu0 0.0
        %1036 = vmatpush2.msra.mxu0 0.0
        %1037 = vmatprep.subr.mxu0 0.0
        %1038 = vmatpush2.msra.mxu0 0.0
        %1039 = vmatprep.subr.mxu0 0.0
        %1040 = vmatpush2.msra.mxu0 0.0
        %1041 = vmatprep.subr.mxu0 0.0
        %1042 = vmatpush2.msra.mxu0 0.0
        %1043 = vmatprep.subr.mxu0 0.0
        %1044 = vmatpush2.msra.mxu0 0.0
        %1045 = vmatprep.subr.mxu0 0.0
        %1046 = vmatpush2.msra.mxu0 0.0
        %1047 = vmatprep.subr.mxu0 0.0
        %1048 = vmatpush2.msra.mxu0 0.0
        %1049 = vmatprep.subr.mxu0 0.0
        %1050 = vmatpush2.msra.mxu0 0.0
        %1051 = vmatprep.subr.mxu0 0.0
        %1052 = vmatpush2.msra.mxu0 0.0
        %1053 = vmatprep.subr.mxu0 0.0
        %1054 = vmatpush2.msra.mxu0 0.0
        %1055 = vmatprep.mubr.f32.mxu0 0.0
        %1056 = vmatmul.mubr.f32.gmra.mxu0 %v452
        %v1057 = vpop.f32.mrf.mxu0
        %v1058 = vadd.f32 %v422, %v1057
        %v1059 = vpop.f32.mrf.mxu0
        %v1060 = vadd.f32 %v422, %v1059
        %1061 = vmatprep.mubr.f32.mxu0 0.0
        %1062 = vmatmul.mubr.f32.gmra.mxu0 %v455
        %v1063 = vpop.f32.mrf.mxu0
        %v1064 = vadd.f32 %v427, %v1063
        %v1065 = vpop.f32.mrf.mxu0
        %v1066 = vadd.f32 %v427, %v1065
        %1067 = vmatprep.mubr.f32.mxu0 0.0
        %1068 = vmatmul.mubr.f32.gmra.mxu0 %v458
        %v1069 = vpop.f32.mrf.mxu0
        %v1070 = vadd.f32 %v432, %v1069
        %v1071 = vpop.f32.mrf.mxu0
        %v1072 = vadd.f32 %v432, %v1071
        %1073 = vdwg.mxu0
        %1074 = vmatprep.subr.mxu0 0.0
        %1075 = vmatpush1.msra.mxu0 0.0
        %1076 = vmatprep.subr.mxu0 0.0
        %1077 = vmatpush1.msra.mxu0 0.0
        %1078 = vmatprep.subr.mxu0 0.0
        %1079 = vmatpush1.msra.mxu0 0.0
        %1080 = vmatprep.subr.mxu0 0.0
        %1081 = vmatpush1.msra.mxu0 0.0
        %1082 = vmatprep.subr.mxu0 0.0
        %1083 = vmatpush1.msra.mxu0 0.0
        %1084 = vmatprep.subr.mxu0 0.0
        %1085 = vmatpush1.msra.mxu0 0.0
        %1086 = vmatprep.subr.mxu0 0.0
        %1087 = vmatpush1.msra.mxu0 0.0
        %1088 = vmatprep.subr.mxu0 0.0
        %1089 = vmatpush1.msra.mxu0 0.0
        %1090 = vmatprep.subr.mxu0 0.0
        %1091 = vmatpush1.msra.mxu0 0.0
        %1092 = vmatprep.subr.mxu0 0.0
        %1093 = vmatpush1.msra.mxu0 0.0
        %1094 = vmatprep.subr.mxu0 0.0
        %1095 = vmatpush1.msra.mxu0 0.0
        %1096 = vmatprep.subr.mxu0 0.0
        %1097 = vmatpush1.msra.mxu0 0.0
        %1098 = vmatprep.subr.mxu0 0.0
        %1099 = vmatpush1.msra.mxu0 0.0
        %1100 = vmatprep.subr.mxu0 0.0
        %1101 = vmatpush1.msra.mxu0 0.0
        %1102 = vmatprep.subr.mxu0 0.0
        %1103 = vmatpush1.msra.mxu0 0.0
        %1104 = vmatprep.subr.mxu0 %v491
        %1105 = vmatpush1.msra.mxu0 %v489
        %1106 = vmatprep.subr.mxu0 0.0
        %1107 = vmatpush2.msra.mxu0 0.0
        %1108 = vmatprep.subr.mxu0 0.0
        %1109 = vmatpush2.msra.mxu0 0.0
        %1110 = vmatprep.subr.mxu0 0.0
        %1111 = vmatpush2.msra.mxu0 0.0
        %1112 = vmatprep.subr.mxu0 0.0
        %1113 = vmatpush2.msra.mxu0 0.0
        %1114 = vmatprep.subr.mxu0 0.0
        %1115 = vmatpush2.msra.mxu0 0.0
        %1116 = vmatprep.subr.mxu0 0.0
        %1117 = vmatpush2.msra.mxu0 0.0
        %1118 = vmatprep.subr.mxu0 0.0
        %1119 = vmatpush2.msra.mxu0 0.0
        %1120 = vmatprep.subr.mxu0 0.0
        %1121 = vmatpush2.msra.mxu0 0.0
        %1122 = vmatprep.subr.mxu0 0.0
        %1123 = vmatpush2.msra.mxu0 0.0
        %1124 = vmatprep.subr.mxu0 0.0
        %1125 = vmatpush2.msra.mxu0 0.0
        %1126 = vmatprep.subr.mxu0 0.0
        %1127 = vmatpush2.msra.mxu0 0.0
        %1128 = vmatprep.subr.mxu0 0.0
        %1129 = vmatpush2.msra.mxu0 0.0
        %1130 = vmatprep.subr.mxu0 0.0
        %1131 = vmatpush2.msra.mxu0 0.0
        %1132 = vmatprep.subr.mxu0 0.0
        %1133 = vmatpush2.msra.mxu0 0.0
        %1134 = vmatprep.subr.mxu0 0.0
        %1135 = vmatpush2.msra.mxu0 0.0
        %1136 = vmatprep.subr.mxu0 0.0
        %1137 = vmatpush2.msra.mxu0 0.0
        %1138 = vmatprep.mubr.f32.mxu0 0.0
        %1139 = vmatmul.mubr.f32.gmra.mxu0 %v452
        %v1140 = vpop.f32.mrf.mxu0
        %v1141 = vadd.f32 %v422, %v1140
        %v1142 = vpop.f32.mrf.mxu0
        %v1143 = vadd.f32 %v422, %v1142
        %1144 = vmatprep.mubr.f32.mxu0 0.0
        %1145 = vmatmul.mubr.f32.gmra.mxu0 %v455
        %v1146 = vpop.f32.mrf.mxu0
        %v1147 = vadd.f32 %v427, %v1146
        %v1148 = vpop.f32.mrf.mxu0
        %v1149 = vadd.f32 %v427, %v1148
        %1150 = vmatprep.mubr.f32.mxu0 0.0
        %1151 = vmatmul.mubr.f32.gmra.mxu0 %v458
        %v1152 = vpop.f32.mrf.mxu0
        %v1153 = vadd.f32 %v432, %v1152
        %v1154 = vpop.f32.mrf.mxu0
        %v1155 = vadd.f32 %v432, %v1154
        %1156 = vdwg.mxu0
        %v1157 = vand.u32 2147483647, %v560
        %vm1158 = vcmp.le.f32.partialorder %v1157, 0.7853982
        %vm1159 = vcmp.lt.s32.totalorder %v560, 0
        %v1160 = vand.u32 %v560, 2139095040
        %v1161 = vshrl.u32 %v1160, 23
        %v1162 = vsub.s32 %v1161, 127
        %v1163 = vand.u32 2147483647, %v560
        %v1164 = vand.u32 %v1163, 8388607
        %v1165 = vor.u32 %v1164, 8388608
        %v1166 = vsub.s32 0, %v1165
        %v1167 = vadd.s32 %v1162, 1
        %vm1168 = vcmp.gt.s32.totalorder %v1167, 0
        %v1169 = vsel %vm1168, %v1167, 0
        %v1170 = vshrl.u32 %v1169, 5
        %v1171 = vand.u32 %v1169, 31
        %v1172 = vsub.s32 32, %v1171
        %v1173 = vshrl.u32 683565275, %v1172
        %v1174 = vshll.u32 683565275, %v1171
        %v1175 = vshrl.u32 2475754826, %v1172
        %v1176 = vor.u32 %v1174, %v1175
        %v1177 = vshll.u32 2475754826, %v1171
        %v1178 = vshrl.u32 2131351028, %v1172
        %v1179 = vor.u32 %v1177, %v1178
        %v1180 = vshll.u32 2131351028, %v1171
        %v1181 = vshrl.u32 2102212464, %v1172
        %v1182 = vor.u32 %v1180, %v1181
        %v1183 = vshll.u32 2102212464, %v1171
        %v1184 = vshrl.u32 920167782, %v1172
        %v1185 = vor.u32 %v1183, %v1184
        %v1186 = vshll.u32 920167782, %v1171
        %v1187 = vshrl.u32 1326507024, %v1172
        %v1188 = vor.u32 %v1186, %v1187
        %vm1189 = vcmp.lt.s32.totalorder %v1170, 1
        %vm1190 = vcmp.lt.s32.totalorder %v1170, 2
        %vm1191 = vcmp.lt.s32.totalorder %v1170, 3
        %vm1192 = vcmp.lt.s32.totalorder %v1170, 4
        %v1193 = vsel %vm1189, %v1173, %v1176
        %v1194 = vsel %vm1192, %v1182, 2102212464
        %v1195 = vsel %vm1191, %v1179, %v1194
        %v1196 = vsel %vm1190, %v1193, %v1195
        %v1197 = vsel %vm1189, %v1176, %v1179
        %v1198 = vsel %vm1192, %v1185, 920167782
        %v1199 = vsel %vm1191, %v1182, %v1198
        %v1200 = vsel %vm1190, %v1197, %v1199
        %v1201 = vsel %vm1189, %v1179, %v1182
        %v1202 = vsel %vm1192, %v1188, 1326507024
        %v1203 = vsel %vm1191, %v1185, %v1202
        %v1204 = vsel %vm1190, %v1201, %v1203
        %v1205 = vshll.u32 %v1165, 8
        %v1206 = vmul.u32.u64.compose %v1205, %v1204
        %v1207 = vextract.low.u32 %v1206
        %v1208 = vextract.high.u32 %v1206
        %v1209 = vmul.u32.u64.compose %v1205, %v1200
        %v1210 = vextract.low.u32 %v1209
        %v1211 = vextract.high.u32 %v1209
        %v1212 = vmul.u32 %v1205, %v1196
        %v1213 = vadd.s32 %v1208, %v1210
        %vm1214 = vc.u32 %v1208, %v1210
        %v1215 = vadd.s32 %v1211, 1
        %v1216 = vsel %vm1214, %v1215, %v1211
        %v1217 = vadd.s32 %v1212, %v1216
        %v1218 = vadd.s32 %v1217, 536870912
        %v1219 = vshrl.u32 %v1218, 30
        %v1220 = vshll.u32 %v1219, 30
        %v1221 = vsub.s32 %v1217, %v1220
        %vm1222 = vcmp.lt.s32.totalorder %v1221, 0
        %v1223 = vsub.s32 0, %v1221
        %v1224 = vsel %vm1222, %v1223, %v1221
        %v1225 = vclz %v1224
        %v1226 = vsub.s32 %v1225, 2
        %vm1227 = vcmp.gt.s32.totalorder 0, %v1226
        %v1228 = vsel %vm1227, 0, %v1226
        %v1229 = vsub.s32 32, %v1228
        %v1230 = vshll.u32 %v1221, %v1228
        %v1231 = vshrl.u32 %v1213, %v1229
        %v1232 = vor.u32 %v1230, %v1231
        %v1233 = vsub.s32 4294967266, %v1228
        %v1234 = vadd.s32 %v1233, 127
        %v1235 = vshll.u32 %v1234, 23
        %v1236 = vor.u32 4788187, %v1235
        %v1237 = vand.u32 2147483647, %v1236
        %v1239 = vcvt.s32.f32 %v1232
        %v1240 = vmul.f32 %v1239, %v1237
        %v1241 = vxor.u32 %v1240, 2147483648
        %v1242 = vsel %vm1159, %v1241, %v1240
        %v1243 = vsub.s32 4, %v1219
        %v1244 = vsel %vm1159, %v1243, %v1219
        %v1245 = vsel %vm1158, %v560, %v1242
        %v1246 = vsel %vm1158, 0, %v1244
        %v1247 = vcosq.f32.pop %v1245
        %v1248 = vsinq.f32.pop %v1245
        %vm1249 = vweird.f32 %v560
        %v1250 = vadd.s32 %v1246, 3
        %v1251 = vand.u32 %v1250, 3
        %vm1252 = vcmp.lt.s32.totalorder %v1251, 2
        %vm1253 = vcmp.eq.s32.totalorder %v1251, 0
        %v1254 = vxor.u32 %v1248, 2147483648
        %v1255 = vsel %vm1253, %v1247, %v1254
        %vm1256 = vcmp.eq.s32.totalorder %v1251, 2
        %v1257 = vxor.u32 %v1247, 2147483648
        %v1258 = vsel %vm1256, %v1257, %v1248
        %v1259 = vsel %vm1252, %v1255, %v1258
        %v1260 = vsel %vm1249, nan, %v1259
        %v1261 = vand.u32 2147483647, %v562
        %vm1262 = vcmp.le.f32.partialorder %v1261, 0.7853982
        %vm1263 = vcmp.lt.s32.totalorder %v562, 0
        %v1264 = vand.u32 %v562, 2139095040
        %v1265 = vshrl.u32 %v1264, 23
        %v1266 = vsub.s32 %v1265, 127
        %v1267 = vand.u32 2147483647, %v562
        %v1268 = vand.u32 %v1267, 8388607
        %v1269 = vor.u32 %v1268, 8388608
        %v1270 = vsub.s32 0, %v1269
        %v1271 = vadd.s32 %v1266, 1
        %vm1272 = vcmp.gt.s32.totalorder %v1271, 0
        %v1273 = vsel %vm1272, %v1271, 0
        %v1274 = vshrl.u32 %v1273, 5
        %v1275 = vand.u32 %v1273, 31
        %v1276 = vsub.s32 32, %v1275
        %v1277 = vshrl.u32 683565275, %v1276
        %v1278 = vshll.u32 683565275, %v1275
        %v1279 = vshrl.u32 2475754826, %v1276
        %v1280 = vor.u32 %v1278, %v1279
        %v1281 = vshll.u32 2475754826, %v1275
        %v1282 = vshrl.u32 2131351028, %v1276
        %v1283 = vor.u32 %v1281, %v1282
        %v1284 = vshll.u32 2131351028, %v1275
        %v1285 = vshrl.u32 2102212464, %v1276
        %v1286 = vor.u32 %v1284, %v1285
        %v1287 = vshll.u32 2102212464, %v1275
        %v1288 = vshrl.u32 920167782, %v1276
        %v1289 = vor.u32 %v1287, %v1288
        %v1290 = vshll.u32 920167782, %v1275
        %v1291 = vshrl.u32 1326507024, %v1276
        %v1292 = vor.u32 %v1290, %v1291
        %vm1293 = vcmp.lt.s32.totalorder %v1274, 1
        %vm1294 = vcmp.lt.s32.totalorder %v1274, 2
        %vm1295 = vcmp.lt.s32.totalorder %v1274, 3
        %vm1296 = vcmp.lt.s32.totalorder %v1274, 4
        %v1297 = vsel %vm1293, %v1277, %v1280
        %v1298 = vsel %vm1296, %v1286, 2102212464
        %v1299 = vsel %vm1295, %v1283, %v1298
        %v1300 = vsel %vm1294, %v1297, %v1299
        %v1301 = vsel %vm1293, %v1280, %v1283
        %v1302 = vsel %vm1296, %v1289, 920167782
        %v1303 = vsel %vm1295, %v1286, %v1302
        %v1304 = vsel %vm1294, %v1301, %v1303
        %v1305 = vsel %vm1293, %v1283, %v1286
        %v1306 = vsel %vm1296, %v1292, 1326507024
        %v1307 = vsel %vm1295, %v1289, %v1306
        %v1308 = vsel %vm1294, %v1305, %v1307
        %v1309 = vshll.u32 %v1269, 8
        %v1310 = vmul.u32.u64.compose %v1309, %v1308
        %v1311 = vextract.low.u32 %v1310
        %v1312 = vextract.high.u32 %v1310
        %v1313 = vmul.u32.u64.compose %v1309, %v1304
        %v1314 = vextract.low.u32 %v1313
        %v1315 = vextract.high.u32 %v1313
        %v1316 = vmul.u32 %v1309, %v1300
        %v1317 = vadd.s32 %v1312, %v1314
        %vm1318 = vc.u32 %v1312, %v1314
        %v1319 = vadd.s32 %v1315, 1
        %v1320 = vsel %vm1318, %v1319, %v1315
        %v1321 = vadd.s32 %v1316, %v1320
        %v1322 = vadd.s32 %v1321, 536870912
        %v1323 = vshrl.u32 %v1322, 30
        %v1324 = vshll.u32 %v1323, 30
        %v1325 = vsub.s32 %v1321, %v1324
        %vm1326 = vcmp.lt.s32.totalorder %v1325, 0
        %v1327 = vsub.s32 0, %v1325
        %v1328 = vsel %vm1326, %v1327, %v1325
        %v1329 = vclz %v1328
        %v1330 = vsub.s32 %v1329, 2
        %vm1331 = vcmp.gt.s32.totalorder 0, %v1330
        %v1332 = vsel %vm1331, 0, %v1330
        %v1333 = vsub.s32 32, %v1332
        %v1334 = vshll.u32 %v1325, %v1332
        %v1335 = vshrl.u32 %v1317, %v1333
        %v1336 = vor.u32 %v1334, %v1335
        %v1337 = vsub.s32 4294967266, %v1332
        %v1338 = vadd.s32 %v1337, 127
        %v1339 = vshll.u32 %v1338, 23
        %v1340 = vor.u32 4788187, %v1339
        %v1341 = vand.u32 2147483647, %v1340
        %v1343 = vcvt.s32.f32 %v1336
        %v1344 = vmul.f32 %v1343, %v1341
        %v1345 = vxor.u32 %v1344, 2147483648
        %v1346 = vsel %vm1263, %v1345, %v1344
        %v1347 = vsub.s32 4, %v1323
        %v1348 = vsel %vm1263, %v1347, %v1323
        %v1349 = vsel %vm1262, %v562, %v1346
        %v1350 = vsel %vm1262, 0, %v1348
        %v1351 = vcosq.f32.pop %v1349
        %v1352 = vsinq.f32.pop %v1349
        %vm1353 = vweird.f32 %v562
        %v1354 = vadd.s32 %v1350, 3
        %v1355 = vand.u32 %v1354, 3
        %vm1356 = vcmp.lt.s32.totalorder %v1355, 2
        %vm1357 = vcmp.eq.s32.totalorder %v1355, 0
        %v1358 = vxor.u32 %v1352, 2147483648
        %v1359 = vsel %vm1357, %v1351, %v1358
        %vm1360 = vcmp.eq.s32.totalorder %v1355, 2
        %v1361 = vxor.u32 %v1351, 2147483648
        %v1362 = vsel %vm1360, %v1361, %v1352
        %v1363 = vsel %vm1356, %v1359, %v1362
        %v1364 = vsel %vm1353, nan, %v1363
        %v1365 = vand.u32 2147483647, %v643
        %vm1366 = vcmp.le.f32.partialorder %v1365, 0.7853982
        %vm1367 = vcmp.lt.s32.totalorder %v643, 0
        %v1368 = vand.u32 %v643, 2139095040
        %v1369 = vshrl.u32 %v1368, 23
        %v1370 = vsub.s32 %v1369, 127
        %v1371 = vand.u32 2147483647, %v643
        %v1372 = vand.u32 %v1371, 8388607
        %v1373 = vor.u32 %v1372, 8388608
        %v1374 = vsub.s32 0, %v1373
        %v1375 = vadd.s32 %v1370, 1
        %vm1376 = vcmp.gt.s32.totalorder %v1375, 0
        %v1377 = vsel %vm1376, %v1375, 0
        %v1378 = vshrl.u32 %v1377, 5
        %v1379 = vand.u32 %v1377, 31
        %v1380 = vsub.s32 32, %v1379
        %v1381 = vshrl.u32 683565275, %v1380
        %v1382 = vshll.u32 683565275, %v1379
        %v1383 = vshrl.u32 2475754826, %v1380
        %v1384 = vor.u32 %v1382, %v1383
        %v1385 = vshll.u32 2475754826, %v1379
        %v1386 = vshrl.u32 2131351028, %v1380
        %v1387 = vor.u32 %v1385, %v1386
        %v1388 = vshll.u32 2131351028, %v1379
        %v1389 = vshrl.u32 2102212464, %v1380
        %v1390 = vor.u32 %v1388, %v1389
        %v1391 = vshll.u32 2102212464, %v1379
        %v1392 = vshrl.u32 920167782, %v1380
        %v1393 = vor.u32 %v1391, %v1392
        %v1394 = vshll.u32 920167782, %v1379
        %v1395 = vshrl.u32 1326507024, %v1380
        %v1396 = vor.u32 %v1394, %v1395
        %vm1397 = vcmp.lt.s32.totalorder %v1378, 1
        %vm1398 = vcmp.lt.s32.totalorder %v1378, 2
        %vm1399 = vcmp.lt.s32.totalorder %v1378, 3
        %vm1400 = vcmp.lt.s32.totalorder %v1378, 4
        %v1401 = vsel %vm1397, %v1381, %v1384
        %v1402 = vsel %vm1400, %v1390, 2102212464
        %v1403 = vsel %vm1399, %v1387, %v1402
        %v1404 = vsel %vm1398, %v1401, %v1403
        %v1405 = vsel %vm1397, %v1384, %v1387
        %v1406 = vsel %vm1400, %v1393, 920167782
        %v1407 = vsel %vm1399, %v1390, %v1406
        %v1408 = vsel %vm1398, %v1405, %v1407
        %v1409 = vsel %vm1397, %v1387, %v1390
        %v1410 = vsel %vm1400, %v1396, 1326507024
        %v1411 = vsel %vm1399, %v1393, %v1410
        %v1412 = vsel %vm1398, %v1409, %v1411
        %v1413 = vshll.u32 %v1373, 8
        %v1414 = vmul.u32.u64.compose %v1413, %v1412
        %v1415 = vextract.low.u32 %v1414
        %v1416 = vextract.high.u32 %v1414
        %v1417 = vmul.u32.u64.compose %v1413, %v1408
        %v1418 = vextract.low.u32 %v1417
        %v1419 = vextract.high.u32 %v1417
        %v1420 = vmul.u32 %v1413, %v1404
        %v1421 = vadd.s32 %v1416, %v1418
        %vm1422 = vc.u32 %v1416, %v1418
        %v1423 = vadd.s32 %v1419, 1
        %v1424 = vsel %vm1422, %v1423, %v1419
        %v1425 = vadd.s32 %v1420, %v1424
        %v1426 = vadd.s32 %v1425, 536870912
        %v1427 = vshrl.u32 %v1426, 30
        %v1428 = vshll.u32 %v1427, 30
        %v1429 = vsub.s32 %v1425, %v1428
        %vm1430 = vcmp.lt.s32.totalorder %v1429, 0
        %v1431 = vsub.s32 0, %v1429
        %v1432 = vsel %vm1430, %v1431, %v1429
        %v1433 = vclz %v1432
        %v1434 = vsub.s32 %v1433, 2
        %vm1435 = vcmp.gt.s32.totalorder 0, %v1434
        %v1436 = vsel %vm1435, 0, %v1434
        %v1437 = vsub.s32 32, %v1436
        %v1438 = vshll.u32 %v1429, %v1436
        %v1439 = vshrl.u32 %v1421, %v1437
        %v1440 = vor.u32 %v1438, %v1439
        %v1441 = vsub.s32 4294967266, %v1436
        %v1442 = vadd.s32 %v1441, 127
        %v1443 = vshll.u32 %v1442, 23
        %v1444 = vor.u32 4788187, %v1443
        %v1445 = vand.u32 2147483647, %v1444
        %v1447 = vcvt.s32.f32 %v1440
        %v1448 = vmul.f32 %v1447, %v1445
        %v1449 = vxor.u32 %v1448, 2147483648
        %v1450 = vsel %vm1367, %v1449, %v1448
        %v1451 = vsub.s32 4, %v1427
        %v1452 = vsel %vm1367, %v1451, %v1427
        %v1453 = vsel %vm1366, %v643, %v1450
        %v1454 = vsel %vm1366, 0, %v1452
        %v1455 = vcosq.f32.pop %v1453
        %v1456 = vsinq.f32.pop %v1453
        %vm1457 = vweird.f32 %v643
        %v1458 = vadd.s32 %v1454, 3
        %v1459 = vand.u32 %v1458, 3
        %vm1460 = vcmp.lt.s32.totalorder %v1459, 2
        %vm1461 = vcmp.eq.s32.totalorder %v1459, 0
        %v1462 = vxor.u32 %v1456, 2147483648
        %v1463 = vsel %vm1461, %v1455, %v1462
        %vm1464 = vcmp.eq.s32.totalorder %v1459, 2
        %v1465 = vxor.u32 %v1455, 2147483648
        %v1466 = vsel %vm1464, %v1465, %v1456
        %v1467 = vsel %vm1460, %v1463, %v1466
        %v1468 = vsel %vm1457, nan, %v1467
        %v1469 = vand.u32 2147483647, %v645
        %vm1470 = vcmp.le.f32.partialorder %v1469, 0.7853982
        %vm1471 = vcmp.lt.s32.totalorder %v645, 0
        %v1472 = vand.u32 %v645, 2139095040
        %v1473 = vshrl.u32 %v1472, 23
        %v1474 = vsub.s32 %v1473, 127
        %v1475 = vand.u32 2147483647, %v645
        %v1476 = vand.u32 %v1475, 8388607
        %v1477 = vor.u32 %v1476, 8388608
        %v1478 = vsub.s32 0, %v1477
        %v1479 = vadd.s32 %v1474, 1
        %vm1480 = vcmp.gt.s32.totalorder %v1479, 0
        %v1481 = vsel %vm1480, %v1479, 0
        %v1482 = vshrl.u32 %v1481, 5
        %v1483 = vand.u32 %v1481, 31
        %v1484 = vsub.s32 32, %v1483
        %v1485 = vshrl.u32 683565275, %v1484
        %v1486 = vshll.u32 683565275, %v1483
        %v1487 = vshrl.u32 2475754826, %v1484
        %v1488 = vor.u32 %v1486, %v1487
        %v1489 = vshll.u32 2475754826, %v1483
        %v1490 = vshrl.u32 2131351028, %v1484
        %v1491 = vor.u32 %v1489, %v1490
        %v1492 = vshll.u32 2131351028, %v1483
        %v1493 = vshrl.u32 2102212464, %v1484
        %v1494 = vor.u32 %v1492, %v1493
        %v1495 = vshll.u32 2102212464, %v1483
        %v1496 = vshrl.u32 920167782, %v1484
        %v1497 = vor.u32 %v1495, %v1496
        %v1498 = vshll.u32 920167782, %v1483
        %v1499 = vshrl.u32 1326507024, %v1484
        %v1500 = vor.u32 %v1498, %v1499
        %vm1501 = vcmp.lt.s32.totalorder %v1482, 1
        %vm1502 = vcmp.lt.s32.totalorder %v1482, 2
        %vm1503 = vcmp.lt.s32.totalorder %v1482, 3
        %vm1504 = vcmp.lt.s32.totalorder %v1482, 4
        %v1505 = vsel %vm1501, %v1485, %v1488
        %v1506 = vsel %vm1504, %v1494, 2102212464
        %v1507 = vsel %vm1503, %v1491, %v1506
        %v1508 = vsel %vm1502, %v1505, %v1507
        %v1509 = vsel %vm1501, %v1488, %v1491
        %v1510 = vsel %vm1504, %v1497, 920167782
        %v1511 = vsel %vm1503, %v1494, %v1510
        %v1512 = vsel %vm1502, %v1509, %v1511
        %v1513 = vsel %vm1501, %v1491, %v1494
        %v1514 = vsel %vm1504, %v1500, 1326507024
        %v1515 = vsel %vm1503, %v1497, %v1514
        %v1516 = vsel %vm1502, %v1513, %v1515
        %v1517 = vshll.u32 %v1477, 8
        %v1518 = vmul.u32.u64.compose %v1517, %v1516
        %v1519 = vextract.low.u32 %v1518
        %v1520 = vextract.high.u32 %v1518
        %v1521 = vmul.u32.u64.compose %v1517, %v1512
        %v1522 = vextract.low.u32 %v1521
        %v1523 = vextract.high.u32 %v1521
        %v1524 = vmul.u32 %v1517, %v1508
        %v1525 = vadd.s32 %v1520, %v1522
        %vm1526 = vc.u32 %v1520, %v1522
        %v1527 = vadd.s32 %v1523, 1
        %v1528 = vsel %vm1526, %v1527, %v1523
        %v1529 = vadd.s32 %v1524, %v1528
        %v1530 = vadd.s32 %v1529, 536870912
        %v1531 = vshrl.u32 %v1530, 30
        %v1532 = vshll.u32 %v1531, 30
        %v1533 = vsub.s32 %v1529, %v1532
        %vm1534 = vcmp.lt.s32.totalorder %v1533, 0
        %v1535 = vsub.s32 0, %v1533
        %v1536 = vsel %vm1534, %v1535, %v1533
        %v1537 = vclz %v1536
        %v1538 = vsub.s32 %v1537, 2
        %vm1539 = vcmp.gt.s32.totalorder 0, %v1538
        %v1540 = vsel %vm1539, 0, %v1538
        %v1541 = vsub.s32 32, %v1540
        %v1542 = vshll.u32 %v1533, %v1540
        %v1543 = vshrl.u32 %v1525, %v1541
        %v1544 = vor.u32 %v1542, %v1543
        %v1545 = vsub.s32 4294967266, %v1540
        %v1546 = vadd.s32 %v1545, 127
        %v1547 = vshll.u32 %v1546, 23
        %v1548 = vor.u32 4788187, %v1547
        %v1549 = vand.u32 2147483647, %v1548
        %v1551 = vcvt.s32.f32 %v1544
        %v1552 = vmul.f32 %v1551, %v1549
        %v1553 = vxor.u32 %v1552, 2147483648
        %v1554 = vsel %vm1471, %v1553, %v1552
        %v1555 = vsub.s32 4, %v1531
        %v1556 = vsel %vm1471, %v1555, %v1531
        %v1557 = vsel %vm1470, %v645, %v1554
        %v1558 = vsel %vm1470, 0, %v1556
        %v1559 = vcosq.f32.pop %v1557
        %v1560 = vsinq.f32.pop %v1557
        %vm1561 = vweird.f32 %v645
        %v1562 = vadd.s32 %v1558, 3
        %v1563 = vand.u32 %v1562, 3
        %vm1564 = vcmp.lt.s32.totalorder %v1563, 2
        %vm1565 = vcmp.eq.s32.totalorder %v1563, 0
        %v1566 = vxor.u32 %v1560, 2147483648
        %v1567 = vsel %vm1565, %v1559, %v1566
        %vm1568 = vcmp.eq.s32.totalorder %v1563, 2
        %v1569 = vxor.u32 %v1559, 2147483648
        %v1570 = vsel %vm1568, %v1569, %v1560
        %v1571 = vsel %vm1564, %v1567, %v1570
        %v1572 = vsel %vm1561, nan, %v1571
        %v1573 = vand.u32 2147483647, %v726
        %vm1574 = vcmp.le.f32.partialorder %v1573, 0.7853982
        %vm1575 = vcmp.lt.s32.totalorder %v726, 0
        %v1576 = vand.u32 %v726, 2139095040
        %v1577 = vshrl.u32 %v1576, 23
        %v1578 = vsub.s32 %v1577, 127
        %v1579 = vand.u32 2147483647, %v726
        %v1580 = vand.u32 %v1579, 8388607
        %v1581 = vor.u32 %v1580, 8388608
        %v1582 = vsub.s32 0, %v1581
        %v1583 = vadd.s32 %v1578, 1
        %vm1584 = vcmp.gt.s32.totalorder %v1583, 0
        %v1585 = vsel %vm1584, %v1583, 0
        %v1586 = vshrl.u32 %v1585, 5
        %v1587 = vand.u32 %v1585, 31
        %v1588 = vsub.s32 32, %v1587
        %v1589 = vshrl.u32 683565275, %v1588
        %v1590 = vshll.u32 683565275, %v1587
        %v1591 = vshrl.u32 2475754826, %v1588
        %v1592 = vor.u32 %v1590, %v1591
        %v1593 = vshll.u32 2475754826, %v1587
        %v1594 = vshrl.u32 2131351028, %v1588
        %v1595 = vor.u32 %v1593, %v1594
        %v1596 = vshll.u32 2131351028, %v1587
        %v1597 = vshrl.u32 2102212464, %v1588
        %v1598 = vor.u32 %v1596, %v1597
        %v1599 = vshll.u32 2102212464, %v1587
        %v1600 = vshrl.u32 920167782, %v1588
        %v1601 = vor.u32 %v1599, %v1600
        %v1602 = vshll.u32 920167782, %v1587
        %v1603 = vshrl.u32 1326507024, %v1588
        %v1604 = vor.u32 %v1602, %v1603
        %vm1605 = vcmp.lt.s32.totalorder %v1586, 1
        %vm1606 = vcmp.lt.s32.totalorder %v1586, 2
        %vm1607 = vcmp.lt.s32.totalorder %v1586, 3
        %vm1608 = vcmp.lt.s32.totalorder %v1586, 4
        %v1609 = vsel %vm1605, %v1589, %v1592
        %v1610 = vsel %vm1608, %v1598, 2102212464
        %v1611 = vsel %vm1607, %v1595, %v1610
        %v1612 = vsel %vm1606, %v1609, %v1611
        %v1613 = vsel %vm1605, %v1592, %v1595
        %v1614 = vsel %vm1608, %v1601, 920167782
        %v1615 = vsel %vm1607, %v1598, %v1614
        %v1616 = vsel %vm1606, %v1613, %v1615
        %v1617 = vsel %vm1605, %v1595, %v1598
        %v1618 = vsel %vm1608, %v1604, 1326507024
        %v1619 = vsel %vm1607, %v1601, %v1618
        %v1620 = vsel %vm1606, %v1617, %v1619
        %v1621 = vshll.u32 %v1581, 8
        %v1622 = vmul.u32.u64.compose %v1621, %v1620
        %v1623 = vextract.low.u32 %v1622
        %v1624 = vextract.high.u32 %v1622
        %v1625 = vmul.u32.u64.compose %v1621, %v1616
        %v1626 = vextract.low.u32 %v1625
        %v1627 = vextract.high.u32 %v1625
        %v1628 = vmul.u32 %v1621, %v1612
        %v1629 = vadd.s32 %v1624, %v1626
        %vm1630 = vc.u32 %v1624, %v1626
        %v1631 = vadd.s32 %v1627, 1
        %v1632 = vsel %vm1630, %v1631, %v1627
        %v1633 = vadd.s32 %v1628, %v1632
        %v1634 = vadd.s32 %v1633, 536870912
        %v1635 = vshrl.u32 %v1634, 30
        %v1636 = vshll.u32 %v1635, 30
        %v1637 = vsub.s32 %v1633, %v1636
        %vm1638 = vcmp.lt.s32.totalorder %v1637, 0
        %v1639 = vsub.s32 0, %v1637
        %v1640 = vsel %vm1638, %v1639, %v1637
        %v1641 = vclz %v1640
        %v1642 = vsub.s32 %v1641, 2
        %vm1643 = vcmp.gt.s32.totalorder 0, %v1642
        %v1644 = vsel %vm1643, 0, %v1642
        %v1645 = vsub.s32 32, %v1644
        %v1646 = vshll.u32 %v1637, %v1644
        %v1647 = vshrl.u32 %v1629, %v1645
        %v1648 = vor.u32 %v1646, %v1647
        %v1649 = vsub.s32 4294967266, %v1644
        %v1650 = vadd.s32 %v1649, 127
        %v1651 = vshll.u32 %v1650, 23
        %v1652 = vor.u32 4788187, %v1651
        %v1653 = vand.u32 2147483647, %v1652
        %v1655 = vcvt.s32.f32 %v1648
        %v1656 = vmul.f32 %v1655, %v1653
        %v1657 = vxor.u32 %v1656, 2147483648
        %v1658 = vsel %vm1575, %v1657, %v1656
        %v1659 = vsub.s32 4, %v1635
        %v1660 = vsel %vm1575, %v1659, %v1635
        %v1661 = vsel %vm1574, %v726, %v1658
        %v1662 = vsel %vm1574, 0, %v1660
        %v1663 = vcosq.f32.pop %v1661
        %v1664 = vsinq.f32.pop %v1661
        %vm1665 = vweird.f32 %v726
        %v1666 = vadd.s32 %v1662, 3
        %v1667 = vand.u32 %v1666, 3
        %vm1668 = vcmp.lt.s32.totalorder %v1667, 2
        %vm1669 = vcmp.eq.s32.totalorder %v1667, 0
        %v1670 = vxor.u32 %v1664, 2147483648
        %v1671 = vsel %vm1669, %v1663, %v1670
        %vm1672 = vcmp.eq.s32.totalorder %v1667, 2
        %v1673 = vxor.u32 %v1663, 2147483648
        %v1674 = vsel %vm1672, %v1673, %v1664
        %v1675 = vsel %vm1668, %v1671, %v1674
        %v1676 = vsel %vm1665, nan, %v1675
        %v1677 = vand.u32 2147483647, %v728
        %vm1678 = vcmp.le.f32.partialorder %v1677, 0.7853982
        %vm1679 = vcmp.lt.s32.totalorder %v728, 0
        %v1680 = vand.u32 %v728, 2139095040
        %v1681 = vshrl.u32 %v1680, 23
        %v1682 = vsub.s32 %v1681, 127
        %v1683 = vand.u32 2147483647, %v728
        %v1684 = vand.u32 %v1683, 8388607
        %v1685 = vor.u32 %v1684, 8388608
        %v1686 = vsub.s32 0, %v1685
        %v1687 = vadd.s32 %v1682, 1
        %vm1688 = vcmp.gt.s32.totalorder %v1687, 0
        %v1689 = vsel %vm1688, %v1687, 0
        %v1690 = vshrl.u32 %v1689, 5
        %v1691 = vand.u32 %v1689, 31
        %v1692 = vsub.s32 32, %v1691
        %v1693 = vshrl.u32 683565275, %v1692
        %v1694 = vshll.u32 683565275, %v1691
        %v1695 = vshrl.u32 2475754826, %v1692
        %v1696 = vor.u32 %v1694, %v1695
        %v1697 = vshll.u32 2475754826, %v1691
        %v1698 = vshrl.u32 2131351028, %v1692
        %v1699 = vor.u32 %v1697, %v1698
        %v1700 = vshll.u32 2131351028, %v1691
        %v1701 = vshrl.u32 2102212464, %v1692
        %v1702 = vor.u32 %v1700, %v1701
        %v1703 = vshll.u32 2102212464, %v1691
        %v1704 = vshrl.u32 920167782, %v1692
        %v1705 = vor.u32 %v1703, %v1704
        %v1706 = vshll.u32 920167782, %v1691
        %v1707 = vshrl.u32 1326507024, %v1692
        %v1708 = vor.u32 %v1706, %v1707
        %vm1709 = vcmp.lt.s32.totalorder %v1690, 1
        %vm1710 = vcmp.lt.s32.totalorder %v1690, 2
        %vm1711 = vcmp.lt.s32.totalorder %v1690, 3
        %vm1712 = vcmp.lt.s32.totalorder %v1690, 4
        %v1713 = vsel %vm1709, %v1693, %v1696
        %v1714 = vsel %vm1712, %v1702, 2102212464
        %v1715 = vsel %vm1711, %v1699, %v1714
        %v1716 = vsel %vm1710, %v1713, %v1715
        %v1717 = vsel %vm1709, %v1696, %v1699
        %v1718 = vsel %vm1712, %v1705, 920167782
        %v1719 = vsel %vm1711, %v1702, %v1718
        %v1720 = vsel %vm1710, %v1717, %v1719
        %v1721 = vsel %vm1709, %v1699, %v1702
        %v1722 = vsel %vm1712, %v1708, 1326507024
        %v1723 = vsel %vm1711, %v1705, %v1722
        %v1724 = vsel %vm1710, %v1721, %v1723
        %v1725 = vshll.u32 %v1685, 8
        %v1726 = vmul.u32.u64.compose %v1725, %v1724
        %v1727 = vextract.low.u32 %v1726
        %v1728 = vextract.high.u32 %v1726
        %v1729 = vmul.u32.u64.compose %v1725, %v1720
        %v1730 = vextract.low.u32 %v1729
        %v1731 = vextract.high.u32 %v1729
        %v1732 = vmul.u32 %v1725, %v1716
        %v1733 = vadd.s32 %v1728, %v1730
        %vm1734 = vc.u32 %v1728, %v1730
        %v1735 = vadd.s32 %v1731, 1
        %v1736 = vsel %vm1734, %v1735, %v1731
        %v1737 = vadd.s32 %v1732, %v1736
        %v1738 = vadd.s32 %v1737, 536870912
        %v1739 = vshrl.u32 %v1738, 30
        %v1740 = vshll.u32 %v1739, 30
        %v1741 = vsub.s32 %v1737, %v1740
        %vm1742 = vcmp.lt.s32.totalorder %v1741, 0
        %v1743 = vsub.s32 0, %v1741
        %v1744 = vsel %vm1742, %v1743, %v1741
        %v1745 = vclz %v1744
        %v1746 = vsub.s32 %v1745, 2
        %vm1747 = vcmp.gt.s32.totalorder 0, %v1746
        %v1748 = vsel %vm1747, 0, %v1746
        %v1749 = vsub.s32 32, %v1748
        %v1750 = vshll.u32 %v1741, %v1748
        %v1751 = vshrl.u32 %v1733, %v1749
        %v1752 = vor.u32 %v1750, %v1751
        %v1753 = vsub.s32 4294967266, %v1748
        %v1754 = vadd.s32 %v1753, 127
        %v1755 = vshll.u32 %v1754, 23
        %v1756 = vor.u32 4788187, %v1755
        %v1757 = vand.u32 2147483647, %v1756
        %v1759 = vcvt.s32.f32 %v1752
        %v1760 = vmul.f32 %v1759, %v1757
        %v1761 = vxor.u32 %v1760, 2147483648
        %v1762 = vsel %vm1679, %v1761, %v1760
        %v1763 = vsub.s32 4, %v1739
        %v1764 = vsel %vm1679, %v1763, %v1739
        %v1765 = vsel %vm1678, %v728, %v1762
        %v1766 = vsel %vm1678, 0, %v1764
        %v1767 = vcosq.f32.pop %v1765
        %v1768 = vsinq.f32.pop %v1765
        %vm1769 = vweird.f32 %v728
        %v1770 = vadd.s32 %v1766, 3
        %v1771 = vand.u32 %v1770, 3
        %vm1772 = vcmp.lt.s32.totalorder %v1771, 2
        %vm1773 = vcmp.eq.s32.totalorder %v1771, 0
        %v1774 = vxor.u32 %v1768, 2147483648
        %v1775 = vsel %vm1773, %v1767, %v1774
        %vm1776 = vcmp.eq.s32.totalorder %v1771, 2
        %v1777 = vxor.u32 %v1767, 2147483648
        %v1778 = vsel %vm1776, %v1777, %v1768
        %v1779 = vsel %vm1772, %v1775, %v1778
        %v1780 = vsel %vm1769, nan, %v1779
        %v1781 = vand.u32 2147483647, %v809
        %vm1782 = vcmp.le.f32.partialorder %v1781, 0.7853982
        %vm1783 = vcmp.lt.s32.totalorder %v809, 0
        %v1784 = vand.u32 %v809, 2139095040
        %v1785 = vshrl.u32 %v1784, 23
        %v1786 = vsub.s32 %v1785, 127
        %v1787 = vand.u32 2147483647, %v809
        %v1788 = vand.u32 %v1787, 8388607
        %v1789 = vor.u32 %v1788, 8388608
        %v1790 = vsub.s32 0, %v1789
        %v1791 = vadd.s32 %v1786, 1
        %vm1792 = vcmp.gt.s32.totalorder %v1791, 0
        %v1793 = vsel %vm1792, %v1791, 0
        %v1794 = vshrl.u32 %v1793, 5
        %v1795 = vand.u32 %v1793, 31
        %v1796 = vsub.s32 32, %v1795
        %v1797 = vshrl.u32 683565275, %v1796
        %v1798 = vshll.u32 683565275, %v1795
        %v1799 = vshrl.u32 2475754826, %v1796
        %v1800 = vor.u32 %v1798, %v1799
        %v1801 = vshll.u32 2475754826, %v1795
        %v1802 = vshrl.u32 2131351028, %v1796
        %v1803 = vor.u32 %v1801, %v1802
        %v1804 = vshll.u32 2131351028, %v1795
        %v1805 = vshrl.u32 2102212464, %v1796
        %v1806 = vor.u32 %v1804, %v1805
        %v1807 = vshll.u32 2102212464, %v1795
        %v1808 = vshrl.u32 920167782, %v1796
        %v1809 = vor.u32 %v1807, %v1808
        %v1810 = vshll.u32 920167782, %v1795
        %v1811 = vshrl.u32 1326507024, %v1796
        %v1812 = vor.u32 %v1810, %v1811
        %vm1813 = vcmp.lt.s32.totalorder %v1794, 1
        %vm1814 = vcmp.lt.s32.totalorder %v1794, 2
        %vm1815 = vcmp.lt.s32.totalorder %v1794, 3
        %vm1816 = vcmp.lt.s32.totalorder %v1794, 4
        %v1817 = vsel %vm1813, %v1797, %v1800
        %v1818 = vsel %vm1816, %v1806, 2102212464
        %v1819 = vsel %vm1815, %v1803, %v1818
        %v1820 = vsel %vm1814, %v1817, %v1819
        %v1821 = vsel %vm1813, %v1800, %v1803
        %v1822 = vsel %vm1816, %v1809, 920167782
        %v1823 = vsel %vm1815, %v1806, %v1822
        %v1824 = vsel %vm1814, %v1821, %v1823
        %v1825 = vsel %vm1813, %v1803, %v1806
        %v1826 = vsel %vm1816, %v1812, 1326507024
        %v1827 = vsel %vm1815, %v1809, %v1826
        %v1828 = vsel %vm1814, %v1825, %v1827
        %v1829 = vshll.u32 %v1789, 8
        %v1830 = vmul.u32.u64.compose %v1829, %v1828
        %v1831 = vextract.low.u32 %v1830
        %v1832 = vextract.high.u32 %v1830
        %v1833 = vmul.u32.u64.compose %v1829, %v1824
        %v1834 = vextract.low.u32 %v1833
        %v1835 = vextract.high.u32 %v1833
        %v1836 = vmul.u32 %v1829, %v1820
        %v1837 = vadd.s32 %v1832, %v1834
        %vm1838 = vc.u32 %v1832, %v1834
        %v1839 = vadd.s32 %v1835, 1
        %v1840 = vsel %vm1838, %v1839, %v1835
        %v1841 = vadd.s32 %v1836, %v1840
        %v1842 = vadd.s32 %v1841, 536870912
        %v1843 = vshrl.u32 %v1842, 30
        %v1844 = vshll.u32 %v1843, 30
        %v1845 = vsub.s32 %v1841, %v1844
        %vm1846 = vcmp.lt.s32.totalorder %v1845, 0
        %v1847 = vsub.s32 0, %v1845
        %v1848 = vsel %vm1846, %v1847, %v1845
        %v1849 = vclz %v1848
        %v1850 = vsub.s32 %v1849, 2
        %vm1851 = vcmp.gt.s32.totalorder 0, %v1850
        %v1852 = vsel %vm1851, 0, %v1850
        %v1853 = vsub.s32 32, %v1852
        %v1854 = vshll.u32 %v1845, %v1852
        %v1855 = vshrl.u32 %v1837, %v1853
        %v1856 = vor.u32 %v1854, %v1855
        %v1857 = vsub.s32 4294967266, %v1852
        %v1858 = vadd.s32 %v1857, 127
        %v1859 = vshll.u32 %v1858, 23
        %v1860 = vor.u32 4788187, %v1859
        %v1861 = vand.u32 2147483647, %v1860
        %v1863 = vcvt.s32.f32 %v1856
        %v1864 = vmul.f32 %v1863, %v1861
        %v1865 = vxor.u32 %v1864, 2147483648
        %v1866 = vsel %vm1783, %v1865, %v1864
        %v1867 = vsub.s32 4, %v1843
        %v1868 = vsel %vm1783, %v1867, %v1843
        %v1869 = vsel %vm1782, %v809, %v1866
        %v1870 = vsel %vm1782, 0, %v1868
        %v1871 = vcosq.f32.pop %v1869
        %v1872 = vsinq.f32.pop %v1869
        %vm1873 = vweird.f32 %v809
        %v1874 = vadd.s32 %v1870, 3
        %v1875 = vand.u32 %v1874, 3
        %vm1876 = vcmp.lt.s32.totalorder %v1875, 2
        %vm1877 = vcmp.eq.s32.totalorder %v1875, 0
        %v1878 = vxor.u32 %v1872, 2147483648
        %v1879 = vsel %vm1877, %v1871, %v1878
        %vm1880 = vcmp.eq.s32.totalorder %v1875, 2
        %v1881 = vxor.u32 %v1871, 2147483648
        %v1882 = vsel %vm1880, %v1881, %v1872
        %v1883 = vsel %vm1876, %v1879, %v1882
        %v1884 = vsel %vm1873, nan, %v1883
        %v1885 = vand.u32 2147483647, %v811
        %vm1886 = vcmp.le.f32.partialorder %v1885, 0.7853982
        %vm1887 = vcmp.lt.s32.totalorder %v811, 0
        %v1888 = vand.u32 %v811, 2139095040
        %v1889 = vshrl.u32 %v1888, 23
        %v1890 = vsub.s32 %v1889, 127
        %v1891 = vand.u32 2147483647, %v811
        %v1892 = vand.u32 %v1891, 8388607
        %v1893 = vor.u32 %v1892, 8388608
        %v1894 = vsub.s32 0, %v1893
        %v1895 = vadd.s32 %v1890, 1
        %vm1896 = vcmp.gt.s32.totalorder %v1895, 0
        %v1897 = vsel %vm1896, %v1895, 0
        %v1898 = vshrl.u32 %v1897, 5
        %v1899 = vand.u32 %v1897, 31
        %v1900 = vsub.s32 32, %v1899
        %v1901 = vshrl.u32 683565275, %v1900
        %v1902 = vshll.u32 683565275, %v1899
        %v1903 = vshrl.u32 2475754826, %v1900
        %v1904 = vor.u32 %v1902, %v1903
        %v1905 = vshll.u32 2475754826, %v1899
        %v1906 = vshrl.u32 2131351028, %v1900
        %v1907 = vor.u32 %v1905, %v1906
        %v1908 = vshll.u32 2131351028, %v1899
        %v1909 = vshrl.u32 2102212464, %v1900
        %v1910 = vor.u32 %v1908, %v1909
        %v1911 = vshll.u32 2102212464, %v1899
        %v1912 = vshrl.u32 920167782, %v1900
        %v1913 = vor.u32 %v1911, %v1912
        %v1914 = vshll.u32 920167782, %v1899
        %v1915 = vshrl.u32 1326507024, %v1900
        %v1916 = vor.u32 %v1914, %v1915
        %vm1917 = vcmp.lt.s32.totalorder %v1898, 1
        %vm1918 = vcmp.lt.s32.totalorder %v1898, 2
        %vm1919 = vcmp.lt.s32.totalorder %v1898, 3
        %vm1920 = vcmp.lt.s32.totalorder %v1898, 4
        %v1921 = vsel %vm1917, %v1901, %v1904
        %v1922 = vsel %vm1920, %v1910, 2102212464
        %v1923 = vsel %vm1919, %v1907, %v1922
        %v1924 = vsel %vm1918, %v1921, %v1923
        %v1925 = vsel %vm1917, %v1904, %v1907
        %v1926 = vsel %vm1920, %v1913, 920167782
        %v1927 = vsel %vm1919, %v1910, %v1926
        %v1928 = vsel %vm1918, %v1925, %v1927
        %v1929 = vsel %vm1917, %v1907, %v1910
        %v1930 = vsel %vm1920, %v1916, 1326507024
        %v1931 = vsel %vm1919, %v1913, %v1930
        %v1932 = vsel %vm1918, %v1929, %v1931
        %v1933 = vshll.u32 %v1893, 8
        %v1934 = vmul.u32.u64.compose %v1933, %v1932
        %v1935 = vextract.low.u32 %v1934
        %v1936 = vextract.high.u32 %v1934
        %v1937 = vmul.u32.u64.compose %v1933, %v1928
        %v1938 = vextract.low.u32 %v1937
        %v1939 = vextract.high.u32 %v1937
        %v1940 = vmul.u32 %v1933, %v1924
        %v1941 = vadd.s32 %v1936, %v1938
        %vm1942 = vc.u32 %v1936, %v1938
        %v1943 = vadd.s32 %v1939, 1
        %v1944 = vsel %vm1942, %v1943, %v1939
        %v1945 = vadd.s32 %v1940, %v1944
        %v1946 = vadd.s32 %v1945, 536870912
        %v1947 = vshrl.u32 %v1946, 30
        %v1948 = vshll.u32 %v1947, 30
        %v1949 = vsub.s32 %v1945, %v1948
        %vm1950 = vcmp.lt.s32.totalorder %v1949, 0
        %v1951 = vsub.s32 0, %v1949
        %v1952 = vsel %vm1950, %v1951, %v1949
        %v1953 = vclz %v1952
        %v1954 = vsub.s32 %v1953, 2
        %vm1955 = vcmp.gt.s32.totalorder 0, %v1954
        %v1956 = vsel %vm1955, 0, %v1954
        %v1957 = vsub.s32 32, %v1956
        %v1958 = vshll.u32 %v1949, %v1956
        %v1959 = vshrl.u32 %v1941, %v1957
        %v1960 = vor.u32 %v1958, %v1959
        %v1961 = vsub.s32 4294967266, %v1956
        %v1962 = vadd.s32 %v1961, 127
        %v1963 = vshll.u32 %v1962, 23
        %v1964 = vor.u32 4788187, %v1963
        %v1965 = vand.u32 2147483647, %v1964
        %v1967 = vcvt.s32.f32 %v1960
        %v1968 = vmul.f32 %v1967, %v1965
        %v1969 = vxor.u32 %v1968, 2147483648
        %v1970 = vsel %vm1887, %v1969, %v1968
        %v1971 = vsub.s32 4, %v1947
        %v1972 = vsel %vm1887, %v1971, %v1947
        %v1973 = vsel %vm1886, %v811, %v1970
        %v1974 = vsel %vm1886, 0, %v1972
        %v1975 = vcosq.f32.pop %v1973
        %v1976 = vsinq.f32.pop %v1973
        %vm1977 = vweird.f32 %v811
        %v1978 = vadd.s32 %v1974, 3
        %v1979 = vand.u32 %v1978, 3
        %vm1980 = vcmp.lt.s32.totalorder %v1979, 2
        %vm1981 = vcmp.eq.s32.totalorder %v1979, 0
        %v1982 = vxor.u32 %v1976, 2147483648
        %v1983 = vsel %vm1981, %v1975, %v1982
        %vm1984 = vcmp.eq.s32.totalorder %v1979, 2
        %v1985 = vxor.u32 %v1975, 2147483648
        %v1986 = vsel %vm1984, %v1985, %v1976
        %v1987 = vsel %vm1980, %v1983, %v1986
        %v1988 = vsel %vm1977, nan, %v1987
        %v1989 = vand.u32 2147483647, %v892
        %vm1990 = vcmp.le.f32.partialorder %v1989, 0.7853982
        %vm1991 = vcmp.lt.s32.totalorder %v892, 0
        %v1992 = vand.u32 %v892, 2139095040
        %v1993 = vshrl.u32 %v1992, 23
        %v1994 = vsub.s32 %v1993, 127
        %v1995 = vand.u32 2147483647, %v892
        %v1996 = vand.u32 %v1995, 8388607
        %v1997 = vor.u32 %v1996, 8388608
        %v1998 = vsub.s32 0, %v1997
        %v1999 = vadd.s32 %v1994, 1
        %vm2000 = vcmp.gt.s32.totalorder %v1999, 0
        %v2001 = vsel %vm2000, %v1999, 0
        %v2002 = vshrl.u32 %v2001, 5
        %v2003 = vand.u32 %v2001, 31
        %v2004 = vsub.s32 32, %v2003
        %v2005 = vshrl.u32 683565275, %v2004
        %v2006 = vshll.u32 683565275, %v2003
        %v2007 = vshrl.u32 2475754826, %v2004
        %v2008 = vor.u32 %v2006, %v2007
        %v2009 = vshll.u32 2475754826, %v2003
        %v2010 = vshrl.u32 2131351028, %v2004
        %v2011 = vor.u32 %v2009, %v2010
        %v2012 = vshll.u32 2131351028, %v2003
        %v2013 = vshrl.u32 2102212464, %v2004
        %v2014 = vor.u32 %v2012, %v2013
        %v2015 = vshll.u32 2102212464, %v2003
        %v2016 = vshrl.u32 920167782, %v2004
        %v2017 = vor.u32 %v2015, %v2016
        %v2018 = vshll.u32 920167782, %v2003
        %v2019 = vshrl.u32 1326507024, %v2004
        %v2020 = vor.u32 %v2018, %v2019
        %vm2021 = vcmp.lt.s32.totalorder %v2002, 1
        %vm2022 = vcmp.lt.s32.totalorder %v2002, 2
        %vm2023 = vcmp.lt.s32.totalorder %v2002, 3
        %vm2024 = vcmp.lt.s32.totalorder %v2002, 4
        %v2025 = vsel %vm2021, %v2005, %v2008
        %v2026 = vsel %vm2024, %v2014, 2102212464
        %v2027 = vsel %vm2023, %v2011, %v2026
        %v2028 = vsel %vm2022, %v2025, %v2027
        %v2029 = vsel %vm2021, %v2008, %v2011
        %v2030 = vsel %vm2024, %v2017, 920167782
        %v2031 = vsel %vm2023, %v2014, %v2030
        %v2032 = vsel %vm2022, %v2029, %v2031
        %v2033 = vsel %vm2021, %v2011, %v2014
        %v2034 = vsel %vm2024, %v2020, 1326507024
        %v2035 = vsel %vm2023, %v2017, %v2034
        %v2036 = vsel %vm2022, %v2033, %v2035
        %v2037 = vshll.u32 %v1997, 8
        %v2038 = vmul.u32.u64.compose %v2037, %v2036
        %v2039 = vextract.low.u32 %v2038
        %v2040 = vextract.high.u32 %v2038
        %v2041 = vmul.u32.u64.compose %v2037, %v2032
        %v2042 = vextract.low.u32 %v2041
        %v2043 = vextract.high.u32 %v2041
        %v2044 = vmul.u32 %v2037, %v2028
        %v2045 = vadd.s32 %v2040, %v2042
        %vm2046 = vc.u32 %v2040, %v2042
        %v2047 = vadd.s32 %v2043, 1
        %v2048 = vsel %vm2046, %v2047, %v2043
        %v2049 = vadd.s32 %v2044, %v2048
        %v2050 = vadd.s32 %v2049, 536870912
        %v2051 = vshrl.u32 %v2050, 30
        %v2052 = vshll.u32 %v2051, 30
        %v2053 = vsub.s32 %v2049, %v2052
        %vm2054 = vcmp.lt.s32.totalorder %v2053, 0
        %v2055 = vsub.s32 0, %v2053
        %v2056 = vsel %vm2054, %v2055, %v2053
        %v2057 = vclz %v2056
        %v2058 = vsub.s32 %v2057, 2
        %vm2059 = vcmp.gt.s32.totalorder 0, %v2058
        %v2060 = vsel %vm2059, 0, %v2058
        %v2061 = vsub.s32 32, %v2060
        %v2062 = vshll.u32 %v2053, %v2060
        %v2063 = vshrl.u32 %v2045, %v2061
        %v2064 = vor.u32 %v2062, %v2063
        %v2065 = vsub.s32 4294967266, %v2060
        %v2066 = vadd.s32 %v2065, 127
        %v2067 = vshll.u32 %v2066, 23
        %v2068 = vor.u32 4788187, %v2067
        %v2069 = vand.u32 2147483647, %v2068
        %v2071 = vcvt.s32.f32 %v2064
        %v2072 = vmul.f32 %v2071, %v2069
        %v2073 = vxor.u32 %v2072, 2147483648
        %v2074 = vsel %vm1991, %v2073, %v2072
        %v2075 = vsub.s32 4, %v2051
        %v2076 = vsel %vm1991, %v2075, %v2051
        %v2077 = vsel %vm1990, %v892, %v2074
        %v2078 = vsel %vm1990, 0, %v2076
        %v2079 = vcosq.f32.pop %v2077
        %v2080 = vsinq.f32.pop %v2077
        %vm2081 = vweird.f32 %v892
        %v2082 = vadd.s32 %v2078, 3
        %v2083 = vand.u32 %v2082, 3
        %vm2084 = vcmp.lt.s32.totalorder %v2083, 2
        %vm2085 = vcmp.eq.s32.totalorder %v2083, 0
        %v2086 = vxor.u32 %v2080, 2147483648
        %v2087 = vsel %vm2085, %v2079, %v2086
        %vm2088 = vcmp.eq.s32.totalorder %v2083, 2
        %v2089 = vxor.u32 %v2079, 2147483648
        %v2090 = vsel %vm2088, %v2089, %v2080
        %v2091 = vsel %vm2084, %v2087, %v2090
        %v2092 = vsel %vm2081, nan, %v2091
        %v2093 = vand.u32 2147483647, %v894
        %vm2094 = vcmp.le.f32.partialorder %v2093, 0.7853982
        %vm2095 = vcmp.lt.s32.totalorder %v894, 0
        %v2096 = vand.u32 %v894, 2139095040
        %v2097 = vshrl.u32 %v2096, 23
        %v2098 = vsub.s32 %v2097, 127
        %v2099 = vand.u32 2147483647, %v894
        %v2100 = vand.u32 %v2099, 8388607
        %v2101 = vor.u32 %v2100, 8388608
        %v2102 = vsub.s32 0, %v2101
        %v2103 = vadd.s32 %v2098, 1
        %vm2104 = vcmp.gt.s32.totalorder %v2103, 0
        %v2105 = vsel %vm2104, %v2103, 0
        %v2106 = vshrl.u32 %v2105, 5
        %v2107 = vand.u32 %v2105, 31
        %v2108 = vsub.s32 32, %v2107
        %v2109 = vshrl.u32 683565275, %v2108
        %v2110 = vshll.u32 683565275, %v2107
        %v2111 = vshrl.u32 2475754826, %v2108
        %v2112 = vor.u32 %v2110, %v2111
        %v2113 = vshll.u32 2475754826, %v2107
        %v2114 = vshrl.u32 2131351028, %v2108
        %v2115 = vor.u32 %v2113, %v2114
        %v2116 = vshll.u32 2131351028, %v2107
        %v2117 = vshrl.u32 2102212464, %v2108
        %v2118 = vor.u32 %v2116, %v2117
        %v2119 = vshll.u32 2102212464, %v2107
        %v2120 = vshrl.u32 920167782, %v2108
        %v2121 = vor.u32 %v2119, %v2120
        %v2122 = vshll.u32 920167782, %v2107
        %v2123 = vshrl.u32 1326507024, %v2108
        %v2124 = vor.u32 %v2122, %v2123
        %vm2125 = vcmp.lt.s32.totalorder %v2106, 1
        %vm2126 = vcmp.lt.s32.totalorder %v2106, 2
        %vm2127 = vcmp.lt.s32.totalorder %v2106, 3
        %vm2128 = vcmp.lt.s32.totalorder %v2106, 4
        %v2129 = vsel %vm2125, %v2109, %v2112
        %v2130 = vsel %vm2128, %v2118, 2102212464
        %v2131 = vsel %vm2127, %v2115, %v2130
        %v2132 = vsel %vm2126, %v2129, %v2131
        %v2133 = vsel %vm2125, %v2112, %v2115
        %v2134 = vsel %vm2128, %v2121, 920167782
        %v2135 = vsel %vm2127, %v2118, %v2134
        %v2136 = vsel %vm2126, %v2133, %v2135
        %v2137 = vsel %vm2125, %v2115, %v2118
        %v2138 = vsel %vm2128, %v2124, 1326507024
        %v2139 = vsel %vm2127, %v2121, %v2138
        %v2140 = vsel %vm2126, %v2137, %v2139
        %v2141 = vshll.u32 %v2101, 8
        %v2142 = vmul.u32.u64.compose %v2141, %v2140
        %v2143 = vextract.low.u32 %v2142
        %v2144 = vextract.high.u32 %v2142
        %v2145 = vmul.u32.u64.compose %v2141, %v2136
        %v2146 = vextract.low.u32 %v2145
        %v2147 = vextract.high.u32 %v2145
        %v2148 = vmul.u32 %v2141, %v2132
        %v2149 = vadd.s32 %v2144, %v2146
        %vm2150 = vc.u32 %v2144, %v2146
        %v2151 = vadd.s32 %v2147, 1
        %v2152 = vsel %vm2150, %v2151, %v2147
        %v2153 = vadd.s32 %v2148, %v2152
        %v2154 = vadd.s32 %v2153, 536870912
        %v2155 = vshrl.u32 %v2154, 30
        %v2156 = vshll.u32 %v2155, 30
        %v2157 = vsub.s32 %v2153, %v2156
        %vm2158 = vcmp.lt.s32.totalorder %v2157, 0
        %v2159 = vsub.s32 0, %v2157
        %v2160 = vsel %vm2158, %v2159, %v2157
        %v2161 = vclz %v2160
        %v2162 = vsub.s32 %v2161, 2
        %vm2163 = vcmp.gt.s32.totalorder 0, %v2162
        %v2164 = vsel %vm2163, 0, %v2162
        %v2165 = vsub.s32 32, %v2164
        %v2166 = vshll.u32 %v2157, %v2164
        %v2167 = vshrl.u32 %v2149, %v2165
        %v2168 = vor.u32 %v2166, %v2167
        %v2169 = vsub.s32 4294967266, %v2164
        %v2170 = vadd.s32 %v2169, 127
        %v2171 = vshll.u32 %v2170, 23
        %v2172 = vor.u32 4788187, %v2171
        %v2173 = vand.u32 2147483647, %v2172
        %v2175 = vcvt.s32.f32 %v2168
        %v2176 = vmul.f32 %v2175, %v2173
        %v2177 = vxor.u32 %v2176, 2147483648
        %v2178 = vsel %vm2095, %v2177, %v2176
        %v2179 = vsub.s32 4, %v2155
        %v2180 = vsel %vm2095, %v2179, %v2155
        %v2181 = vsel %vm2094, %v894, %v2178
        %v2182 = vsel %vm2094, 0, %v2180
        %v2183 = vcosq.f32.pop %v2181
        %v2184 = vsinq.f32.pop %v2181
        %vm2185 = vweird.f32 %v894
        %v2186 = vadd.s32 %v2182, 3
        %v2187 = vand.u32 %v2186, 3
        %vm2188 = vcmp.lt.s32.totalorder %v2187, 2
        %vm2189 = vcmp.eq.s32.totalorder %v2187, 0
        %v2190 = vxor.u32 %v2184, 2147483648
        %v2191 = vsel %vm2189, %v2183, %v2190
        %vm2192 = vcmp.eq.s32.totalorder %v2187, 2
        %v2193 = vxor.u32 %v2183, 2147483648
        %v2194 = vsel %vm2192, %v2193, %v2184
        %v2195 = vsel %vm2188, %v2191, %v2194
        %v2196 = vsel %vm2185, nan, %v2195
        %v2197 = vand.u32 2147483647, %v975
        %vm2198 = vcmp.le.f32.partialorder %v2197, 0.7853982
        %vm2199 = vcmp.lt.s32.totalorder %v975, 0
        %v2200 = vand.u32 %v975, 2139095040
        %v2201 = vshrl.u32 %v2200, 23
        %v2202 = vsub.s32 %v2201, 127
        %v2203 = vand.u32 2147483647, %v975
        %v2204 = vand.u32 %v2203, 8388607
        %v2205 = vor.u32 %v2204, 8388608
        %v2206 = vsub.s32 0, %v2205
        %v2207 = vadd.s32 %v2202, 1
        %vm2208 = vcmp.gt.s32.totalorder %v2207, 0
        %v2209 = vsel %vm2208, %v2207, 0
        %v2210 = vshrl.u32 %v2209, 5
        %v2211 = vand.u32 %v2209, 31
        %v2212 = vsub.s32 32, %v2211
        %v2213 = vshrl.u32 683565275, %v2212
        %v2214 = vshll.u32 683565275, %v2211
        %v2215 = vshrl.u32 2475754826, %v2212
        %v2216 = vor.u32 %v2214, %v2215
        %v2217 = vshll.u32 2475754826, %v2211
        %v2218 = vshrl.u32 2131351028, %v2212
        %v2219 = vor.u32 %v2217, %v2218
        %v2220 = vshll.u32 2131351028, %v2211
        %v2221 = vshrl.u32 2102212464, %v2212
        %v2222 = vor.u32 %v2220, %v2221
        %v2223 = vshll.u32 2102212464, %v2211
        %v2224 = vshrl.u32 920167782, %v2212
        %v2225 = vor.u32 %v2223, %v2224
        %v2226 = vshll.u32 920167782, %v2211
        %v2227 = vshrl.u32 1326507024, %v2212
        %v2228 = vor.u32 %v2226, %v2227
        %vm2229 = vcmp.lt.s32.totalorder %v2210, 1
        %vm2230 = vcmp.lt.s32.totalorder %v2210, 2
        %vm2231 = vcmp.lt.s32.totalorder %v2210, 3
        %vm2232 = vcmp.lt.s32.totalorder %v2210, 4
        %v2233 = vsel %vm2229, %v2213, %v2216
        %v2234 = vsel %vm2232, %v2222, 2102212464
        %v2235 = vsel %vm2231, %v2219, %v2234
        %v2236 = vsel %vm2230, %v2233, %v2235
        %v2237 = vsel %vm2229, %v2216, %v2219
        %v2238 = vsel %vm2232, %v2225, 920167782
        %v2239 = vsel %vm2231, %v2222, %v2238
        %v2240 = vsel %vm2230, %v2237, %v2239
        %v2241 = vsel %vm2229, %v2219, %v2222
        %v2242 = vsel %vm2232, %v2228, 1326507024
        %v2243 = vsel %vm2231, %v2225, %v2242
        %v2244 = vsel %vm2230, %v2241, %v2243
        %v2245 = vshll.u32 %v2205, 8
        %v2246 = vmul.u32.u64.compose %v2245, %v2244
        %v2247 = vextract.low.u32 %v2246
        %v2248 = vextract.high.u32 %v2246
        %v2249 = vmul.u32.u64.compose %v2245, %v2240
        %v2250 = vextract.low.u32 %v2249
        %v2251 = vextract.high.u32 %v2249
        %v2252 = vmul.u32 %v2245, %v2236
        %v2253 = vadd.s32 %v2248, %v2250
        %vm2254 = vc.u32 %v2248, %v2250
        %v2255 = vadd.s32 %v2251, 1
        %v2256 = vsel %vm2254, %v2255, %v2251
        %v2257 = vadd.s32 %v2252, %v2256
        %v2258 = vadd.s32 %v2257, 536870912
        %v2259 = vshrl.u32 %v2258, 30
        %v2260 = vshll.u32 %v2259, 30
        %v2261 = vsub.s32 %v2257, %v2260
        %vm2262 = vcmp.lt.s32.totalorder %v2261, 0
        %v2263 = vsub.s32 0, %v2261
        %v2264 = vsel %vm2262, %v2263, %v2261
        %v2265 = vclz %v2264
        %v2266 = vsub.s32 %v2265, 2
        %vm2267 = vcmp.gt.s32.totalorder 0, %v2266
        %v2268 = vsel %vm2267, 0, %v2266
        %v2269 = vsub.s32 32, %v2268
        %v2270 = vshll.u32 %v2261, %v2268
        %v2271 = vshrl.u32 %v2253, %v2269
        %v2272 = vor.u32 %v2270, %v2271
        %v2273 = vsub.s32 4294967266, %v2268
        %v2274 = vadd.s32 %v2273, 127
        %v2275 = vshll.u32 %v2274, 23
        %v2276 = vor.u32 4788187, %v2275
        %v2277 = vand.u32 2147483647, %v2276
        %v2279 = vcvt.s32.f32 %v2272
        %v2280 = vmul.f32 %v2279, %v2277
        %v2281 = vxor.u32 %v2280, 2147483648
        %v2282 = vsel %vm2199, %v2281, %v2280
        %v2283 = vsub.s32 4, %v2259
        %v2284 = vsel %vm2199, %v2283, %v2259
        %v2285 = vsel %vm2198, %v975, %v2282
        %v2286 = vsel %vm2198, 0, %v2284
        %v2287 = vcosq.f32.pop %v2285
        %v2288 = vsinq.f32.pop %v2285
        %vm2289 = vweird.f32 %v975
        %v2290 = vadd.s32 %v2286, 3
        %v2291 = vand.u32 %v2290, 3
        %vm2292 = vcmp.lt.s32.totalorder %v2291, 2
        %vm2293 = vcmp.eq.s32.totalorder %v2291, 0
        %v2294 = vxor.u32 %v2288, 2147483648
        %v2295 = vsel %vm2293, %v2287, %v2294
        %vm2296 = vcmp.eq.s32.totalorder %v2291, 2
        %v2297 = vxor.u32 %v2287, 2147483648
        %v2298 = vsel %vm2296, %v2297, %v2288
        %v2299 = vsel %vm2292, %v2295, %v2298
        %v2300 = vsel %vm2289, nan, %v2299
        %v2301 = vand.u32 2147483647, %v977
        %vm2302 = vcmp.le.f32.partialorder %v2301, 0.7853982
        %vm2303 = vcmp.lt.s32.totalorder %v977, 0
        %v2304 = vand.u32 %v977, 2139095040
        %v2305 = vshrl.u32 %v2304, 23
        %v2306 = vsub.s32 %v2305, 127
        %v2307 = vand.u32 2147483647, %v977
        %v2308 = vand.u32 %v2307, 8388607
        %v2309 = vor.u32 %v2308, 8388608
        %v2310 = vsub.s32 0, %v2309
        %v2311 = vadd.s32 %v2306, 1
        %vm2312 = vcmp.gt.s32.totalorder %v2311, 0
        %v2313 = vsel %vm2312, %v2311, 0
        %v2314 = vshrl.u32 %v2313, 5
        %v2315 = vand.u32 %v2313, 31
        %v2316 = vsub.s32 32, %v2315
        %v2317 = vshrl.u32 683565275, %v2316
        %v2318 = vshll.u32 683565275, %v2315
        %v2319 = vshrl.u32 2475754826, %v2316
        %v2320 = vor.u32 %v2318, %v2319
        %v2321 = vshll.u32 2475754826, %v2315
        %v2322 = vshrl.u32 2131351028, %v2316
        %v2323 = vor.u32 %v2321, %v2322
        %v2324 = vshll.u32 2131351028, %v2315
        %v2325 = vshrl.u32 2102212464, %v2316
        %v2326 = vor.u32 %v2324, %v2325
        %v2327 = vshll.u32 2102212464, %v2315
        %v2328 = vshrl.u32 920167782, %v2316
        %v2329 = vor.u32 %v2327, %v2328
        %v2330 = vshll.u32 920167782, %v2315
        %v2331 = vshrl.u32 1326507024, %v2316
        %v2332 = vor.u32 %v2330, %v2331
        %vm2333 = vcmp.lt.s32.totalorder %v2314, 1
        %vm2334 = vcmp.lt.s32.totalorder %v2314, 2
        %vm2335 = vcmp.lt.s32.totalorder %v2314, 3
        %vm2336 = vcmp.lt.s32.totalorder %v2314, 4
        %v2337 = vsel %vm2333, %v2317, %v2320
        %v2338 = vsel %vm2336, %v2326, 2102212464
        %v2339 = vsel %vm2335, %v2323, %v2338
        %v2340 = vsel %vm2334, %v2337, %v2339
        %v2341 = vsel %vm2333, %v2320, %v2323
        %v2342 = vsel %vm2336, %v2329, 920167782
        %v2343 = vsel %vm2335, %v2326, %v2342
        %v2344 = vsel %vm2334, %v2341, %v2343
        %v2345 = vsel %vm2333, %v2323, %v2326
        %v2346 = vsel %vm2336, %v2332, 1326507024
        %v2347 = vsel %vm2335, %v2329, %v2346
        %v2348 = vsel %vm2334, %v2345, %v2347
        %v2349 = vshll.u32 %v2309, 8
        %v2350 = vmul.u32.u64.compose %v2349, %v2348
        %v2351 = vextract.low.u32 %v2350
        %v2352 = vextract.high.u32 %v2350
        %v2353 = vmul.u32.u64.compose %v2349, %v2344
        %v2354 = vextract.low.u32 %v2353
        %v2355 = vextract.high.u32 %v2353
        %v2356 = vmul.u32 %v2349, %v2340
        %v2357 = vadd.s32 %v2352, %v2354
        %vm2358 = vc.u32 %v2352, %v2354
        %v2359 = vadd.s32 %v2355, 1
        %v2360 = vsel %vm2358, %v2359, %v2355
        %v2361 = vadd.s32 %v2356, %v2360
        %v2362 = vadd.s32 %v2361, 536870912
        %v2363 = vshrl.u32 %v2362, 30
        %v2364 = vshll.u32 %v2363, 30
        %v2365 = vsub.s32 %v2361, %v2364
        %vm2366 = vcmp.lt.s32.totalorder %v2365, 0
        %v2367 = vsub.s32 0, %v2365
        %v2368 = vsel %vm2366, %v2367, %v2365
        %v2369 = vclz %v2368
        %v2370 = vsub.s32 %v2369, 2
        %vm2371 = vcmp.gt.s32.totalorder 0, %v2370
        %v2372 = vsel %vm2371, 0, %v2370
        %v2373 = vsub.s32 32, %v2372
        %v2374 = vshll.u32 %v2365, %v2372
        %v2375 = vshrl.u32 %v2357, %v2373
        %v2376 = vor.u32 %v2374, %v2375
        %v2377 = vsub.s32 4294967266, %v2372
        %v2378 = vadd.s32 %v2377, 127
        %v2379 = vshll.u32 %v2378, 23
        %v2380 = vor.u32 4788187, %v2379
        %v2381 = vand.u32 2147483647, %v2380
        %v2383 = vcvt.s32.f32 %v2376
        %v2384 = vmul.f32 %v2383, %v2381
        %v2385 = vxor.u32 %v2384, 2147483648
        %v2386 = vsel %vm2303, %v2385, %v2384
        %v2387 = vsub.s32 4, %v2363
        %v2388 = vsel %vm2303, %v2387, %v2363
        %v2389 = vsel %vm2302, %v977, %v2386
        %v2390 = vsel %vm2302, 0, %v2388
        %v2391 = vcosq.f32.pop %v2389
        %v2392 = vsinq.f32.pop %v2389
        %vm2393 = vweird.f32 %v977
        %v2394 = vadd.s32 %v2390, 3
        %v2395 = vand.u32 %v2394, 3
        %vm2396 = vcmp.lt.s32.totalorder %v2395, 2
        %vm2397 = vcmp.eq.s32.totalorder %v2395, 0
        %v2398 = vxor.u32 %v2392, 2147483648
        %v2399 = vsel %vm2397, %v2391, %v2398
        %vm2400 = vcmp.eq.s32.totalorder %v2395, 2
        %v2401 = vxor.u32 %v2391, 2147483648
        %v2402 = vsel %vm2400, %v2401, %v2392
        %v2403 = vsel %vm2396, %v2399, %v2402
        %v2404 = vsel %vm2393, nan, %v2403
        %v2405 = vand.u32 2147483647, %v1058
        %vm2406 = vcmp.le.f32.partialorder %v2405, 0.7853982
        %vm2407 = vcmp.lt.s32.totalorder %v1058, 0
        %v2408 = vand.u32 %v1058, 2139095040
        %v2409 = vshrl.u32 %v2408, 23
        %v2410 = vsub.s32 %v2409, 127
        %v2411 = vand.u32 2147483647, %v1058
        %v2412 = vand.u32 %v2411, 8388607
        %v2413 = vor.u32 %v2412, 8388608
        %v2414 = vsub.s32 0, %v2413
        %v2415 = vadd.s32 %v2410, 1
        %vm2416 = vcmp.gt.s32.totalorder %v2415, 0
        %v2417 = vsel %vm2416, %v2415, 0
        %v2418 = vshrl.u32 %v2417, 5
        %v2419 = vand.u32 %v2417, 31
        %v2420 = vsub.s32 32, %v2419
        %v2421 = vshrl.u32 683565275, %v2420
        %v2422 = vshll.u32 683565275, %v2419
        %v2423 = vshrl.u32 2475754826, %v2420
        %v2424 = vor.u32 %v2422, %v2423
        %v2425 = vshll.u32 2475754826, %v2419
        %v2426 = vshrl.u32 2131351028, %v2420
        %v2427 = vor.u32 %v2425, %v2426
        %v2428 = vshll.u32 2131351028, %v2419
        %v2429 = vshrl.u32 2102212464, %v2420
        %v2430 = vor.u32 %v2428, %v2429
        %v2431 = vshll.u32 2102212464, %v2419
        %v2432 = vshrl.u32 920167782, %v2420
        %v2433 = vor.u32 %v2431, %v2432
        %v2434 = vshll.u32 920167782, %v2419
        %v2435 = vshrl.u32 1326507024, %v2420
        %v2436 = vor.u32 %v2434, %v2435
        %vm2437 = vcmp.lt.s32.totalorder %v2418, 1
        %vm2438 = vcmp.lt.s32.totalorder %v2418, 2
        %vm2439 = vcmp.lt.s32.totalorder %v2418, 3
        %vm2440 = vcmp.lt.s32.totalorder %v2418, 4
        %v2441 = vsel %vm2437, %v2421, %v2424
        %v2442 = vsel %vm2440, %v2430, 2102212464
        %v2443 = vsel %vm2439, %v2427, %v2442
        %v2444 = vsel %vm2438, %v2441, %v2443
        %v2445 = vsel %vm2437, %v2424, %v2427
        %v2446 = vsel %vm2440, %v2433, 920167782
        %v2447 = vsel %vm2439, %v2430, %v2446
        %v2448 = vsel %vm2438, %v2445, %v2447
        %v2449 = vsel %vm2437, %v2427, %v2430
        %v2450 = vsel %vm2440, %v2436, 1326507024
        %v2451 = vsel %vm2439, %v2433, %v2450
        %v2452 = vsel %vm2438, %v2449, %v2451
        %v2453 = vshll.u32 %v2413, 8
        %v2454 = vmul.u32.u64.compose %v2453, %v2452
        %v2455 = vextract.low.u32 %v2454
        %v2456 = vextract.high.u32 %v2454
        %v2457 = vmul.u32.u64.compose %v2453, %v2448
        %v2458 = vextract.low.u32 %v2457
        %v2459 = vextract.high.u32 %v2457
        %v2460 = vmul.u32 %v2453, %v2444
        %v2461 = vadd.s32 %v2456, %v2458
        %vm2462 = vc.u32 %v2456, %v2458
        %v2463 = vadd.s32 %v2459, 1
        %v2464 = vsel %vm2462, %v2463, %v2459
        %v2465 = vadd.s32 %v2460, %v2464
        %v2466 = vadd.s32 %v2465, 536870912
        %v2467 = vshrl.u32 %v2466, 30
        %v2468 = vshll.u32 %v2467, 30
        %v2469 = vsub.s32 %v2465, %v2468
        %vm2470 = vcmp.lt.s32.totalorder %v2469, 0
        %v2471 = vsub.s32 0, %v2469
        %v2472 = vsel %vm2470, %v2471, %v2469
        %v2473 = vclz %v2472
        %v2474 = vsub.s32 %v2473, 2
        %vm2475 = vcmp.gt.s32.totalorder 0, %v2474
        %v2476 = vsel %vm2475, 0, %v2474
        %v2477 = vsub.s32 32, %v2476
        %v2478 = vshll.u32 %v2469, %v2476
        %v2479 = vshrl.u32 %v2461, %v2477
        %v2480 = vor.u32 %v2478, %v2479
        %v2481 = vsub.s32 4294967266, %v2476
        %v2482 = vadd.s32 %v2481, 127
        %v2483 = vshll.u32 %v2482, 23
        %v2484 = vor.u32 4788187, %v2483
        %v2485 = vand.u32 2147483647, %v2484
        %v2487 = vcvt.s32.f32 %v2480
        %v2488 = vmul.f32 %v2487, %v2485
        %v2489 = vxor.u32 %v2488, 2147483648
        %v2490 = vsel %vm2407, %v2489, %v2488
        %v2491 = vsub.s32 4, %v2467
        %v2492 = vsel %vm2407, %v2491, %v2467
        %v2493 = vsel %vm2406, %v1058, %v2490
        %v2494 = vsel %vm2406, 0, %v2492
        %v2495 = vcosq.f32.pop %v2493
        %v2496 = vsinq.f32.pop %v2493
        %vm2497 = vweird.f32 %v1058
        %v2498 = vadd.s32 %v2494, 3
        %v2499 = vand.u32 %v2498, 3
        %vm2500 = vcmp.lt.s32.totalorder %v2499, 2
        %vm2501 = vcmp.eq.s32.totalorder %v2499, 0
        %v2502 = vxor.u32 %v2496, 2147483648
        %v2503 = vsel %vm2501, %v2495, %v2502
        %vm2504 = vcmp.eq.s32.totalorder %v2499, 2
        %v2505 = vxor.u32 %v2495, 2147483648
        %v2506 = vsel %vm2504, %v2505, %v2496
        %v2507 = vsel %vm2500, %v2503, %v2506
        %v2508 = vsel %vm2497, nan, %v2507
        %v2509 = vand.u32 2147483647, %v1060
        %vm2510 = vcmp.le.f32.partialorder %v2509, 0.7853982
        %vm2511 = vcmp.lt.s32.totalorder %v1060, 0
        %v2512 = vand.u32 %v1060, 2139095040
        %v2513 = vshrl.u32 %v2512, 23
        %v2514 = vsub.s32 %v2513, 127
        %v2515 = vand.u32 2147483647, %v1060
        %v2516 = vand.u32 %v2515, 8388607
        %v2517 = vor.u32 %v2516, 8388608
        %v2518 = vsub.s32 0, %v2517
        %v2519 = vadd.s32 %v2514, 1
        %vm2520 = vcmp.gt.s32.totalorder %v2519, 0
        %v2521 = vsel %vm2520, %v2519, 0
        %v2522 = vshrl.u32 %v2521, 5
        %v2523 = vand.u32 %v2521, 31
        %v2524 = vsub.s32 32, %v2523
        %v2525 = vshrl.u32 683565275, %v2524
        %v2526 = vshll.u32 683565275, %v2523
        %v2527 = vshrl.u32 2475754826, %v2524
        %v2528 = vor.u32 %v2526, %v2527
        %v2529 = vshll.u32 2475754826, %v2523
        %v2530 = vshrl.u32 2131351028, %v2524
        %v2531 = vor.u32 %v2529, %v2530
        %v2532 = vshll.u32 2131351028, %v2523
        %v2533 = vshrl.u32 2102212464, %v2524
        %v2534 = vor.u32 %v2532, %v2533
        %v2535 = vshll.u32 2102212464, %v2523
        %v2536 = vshrl.u32 920167782, %v2524
        %v2537 = vor.u32 %v2535, %v2536
        %v2538 = vshll.u32 920167782, %v2523
        %v2539 = vshrl.u32 1326507024, %v2524
        %v2540 = vor.u32 %v2538, %v2539
        %vm2541 = vcmp.lt.s32.totalorder %v2522, 1
        %vm2542 = vcmp.lt.s32.totalorder %v2522, 2
        %vm2543 = vcmp.lt.s32.totalorder %v2522, 3
        %vm2544 = vcmp.lt.s32.totalorder %v2522, 4
        %v2545 = vsel %vm2541, %v2525, %v2528
        %v2546 = vsel %vm2544, %v2534, 2102212464
        %v2547 = vsel %vm2543, %v2531, %v2546
        %v2548 = vsel %vm2542, %v2545, %v2547
        %v2549 = vsel %vm2541, %v2528, %v2531
        %v2550 = vsel %vm2544, %v2537, 920167782
        %v2551 = vsel %vm2543, %v2534, %v2550
        %v2552 = vsel %vm2542, %v2549, %v2551
        %v2553 = vsel %vm2541, %v2531, %v2534
        %v2554 = vsel %vm2544, %v2540, 1326507024
        %v2555 = vsel %vm2543, %v2537, %v2554
        %v2556 = vsel %vm2542, %v2553, %v2555
        %v2557 = vshll.u32 %v2517, 8
        %v2558 = vmul.u32.u64.compose %v2557, %v2556
        %v2559 = vextract.low.u32 %v2558
        %v2560 = vextract.high.u32 %v2558
        %v2561 = vmul.u32.u64.compose %v2557, %v2552
        %v2562 = vextract.low.u32 %v2561
        %v2563 = vextract.high.u32 %v2561
        %v2564 = vmul.u32 %v2557, %v2548
        %v2565 = vadd.s32 %v2560, %v2562
        %vm2566 = vc.u32 %v2560, %v2562
        %v2567 = vadd.s32 %v2563, 1
        %v2568 = vsel %vm2566, %v2567, %v2563
        %v2569 = vadd.s32 %v2564, %v2568
        %v2570 = vadd.s32 %v2569, 536870912
        %v2571 = vshrl.u32 %v2570, 30
        %v2572 = vshll.u32 %v2571, 30
        %v2573 = vsub.s32 %v2569, %v2572
        %vm2574 = vcmp.lt.s32.totalorder %v2573, 0
        %v2575 = vsub.s32 0, %v2573
        %v2576 = vsel %vm2574, %v2575, %v2573
        %v2577 = vclz %v2576
        %v2578 = vsub.s32 %v2577, 2
        %vm2579 = vcmp.gt.s32.totalorder 0, %v2578
        %v2580 = vsel %vm2579, 0, %v2578
        %v2581 = vsub.s32 32, %v2580
        %v2582 = vshll.u32 %v2573, %v2580
        %v2583 = vshrl.u32 %v2565, %v2581
        %v2584 = vor.u32 %v2582, %v2583
        %v2585 = vsub.s32 4294967266, %v2580
        %v2586 = vadd.s32 %v2585, 127
        %v2587 = vshll.u32 %v2586, 23
        %v2588 = vor.u32 4788187, %v2587
        %v2589 = vand.u32 2147483647, %v2588
        %v2591 = vcvt.s32.f32 %v2584
        %v2592 = vmul.f32 %v2591, %v2589
        %v2593 = vxor.u32 %v2592, 2147483648
        %v2594 = vsel %vm2511, %v2593, %v2592
        %v2595 = vsub.s32 4, %v2571
        %v2596 = vsel %vm2511, %v2595, %v2571
        %v2597 = vsel %vm2510, %v1060, %v2594
        %v2598 = vsel %vm2510, 0, %v2596
        %v2599 = vcosq.f32.pop %v2597
        %v2600 = vsinq.f32.pop %v2597
        %vm2601 = vweird.f32 %v1060
        %v2602 = vadd.s32 %v2598, 3
        %v2603 = vand.u32 %v2602, 3
        %vm2604 = vcmp.lt.s32.totalorder %v2603, 2
        %vm2605 = vcmp.eq.s32.totalorder %v2603, 0
        %v2606 = vxor.u32 %v2600, 2147483648
        %v2607 = vsel %vm2605, %v2599, %v2606
        %vm2608 = vcmp.eq.s32.totalorder %v2603, 2
        %v2609 = vxor.u32 %v2599, 2147483648
        %v2610 = vsel %vm2608, %v2609, %v2600
        %v2611 = vsel %vm2604, %v2607, %v2610
        %v2612 = vsel %vm2601, nan, %v2611
        %v2613 = vand.u32 2147483647, %v1141
        %vm2614 = vcmp.le.f32.partialorder %v2613, 0.7853982
        %vm2615 = vcmp.lt.s32.totalorder %v1141, 0
        %v2616 = vand.u32 %v1141, 2139095040
        %v2617 = vshrl.u32 %v2616, 23
        %v2618 = vsub.s32 %v2617, 127
        %v2619 = vand.u32 2147483647, %v1141
        %v2620 = vand.u32 %v2619, 8388607
        %v2621 = vor.u32 %v2620, 8388608
        %v2622 = vsub.s32 0, %v2621
        %v2623 = vadd.s32 %v2618, 1
        %vm2624 = vcmp.gt.s32.totalorder %v2623, 0
        %v2625 = vsel %vm2624, %v2623, 0
        %v2626 = vshrl.u32 %v2625, 5
        %v2627 = vand.u32 %v2625, 31
        %v2628 = vsub.s32 32, %v2627
        %v2629 = vshrl.u32 683565275, %v2628
        %v2630 = vshll.u32 683565275, %v2627
        %v2631 = vshrl.u32 2475754826, %v2628
        %v2632 = vor.u32 %v2630, %v2631
        %v2633 = vshll.u32 2475754826, %v2627
        %v2634 = vshrl.u32 2131351028, %v2628
        %v2635 = vor.u32 %v2633, %v2634
        %v2636 = vshll.u32 2131351028, %v2627
        %v2637 = vshrl.u32 2102212464, %v2628
        %v2638 = vor.u32 %v2636, %v2637
        %v2639 = vshll.u32 2102212464, %v2627
        %v2640 = vshrl.u32 920167782, %v2628
        %v2641 = vor.u32 %v2639, %v2640
        %v2642 = vshll.u32 920167782, %v2627
        %v2643 = vshrl.u32 1326507024, %v2628
        %v2644 = vor.u32 %v2642, %v2643
        %vm2645 = vcmp.lt.s32.totalorder %v2626, 1
        %vm2646 = vcmp.lt.s32.totalorder %v2626, 2
        %vm2647 = vcmp.lt.s32.totalorder %v2626, 3
        %vm2648 = vcmp.lt.s32.totalorder %v2626, 4
        %v2649 = vsel %vm2645, %v2629, %v2632
        %v2650 = vsel %vm2648, %v2638, 2102212464
        %v2651 = vsel %vm2647, %v2635, %v2650
        %v2652 = vsel %vm2646, %v2649, %v2651
        %v2653 = vsel %vm2645, %v2632, %v2635
        %v2654 = vsel %vm2648, %v2641, 920167782
        %v2655 = vsel %vm2647, %v2638, %v2654
        %v2656 = vsel %vm2646, %v2653, %v2655
        %v2657 = vsel %vm2645, %v2635, %v2638
        %v2658 = vsel %vm2648, %v2644, 1326507024
        %v2659 = vsel %vm2647, %v2641, %v2658
        %v2660 = vsel %vm2646, %v2657, %v2659
        %v2661 = vshll.u32 %v2621, 8
        %v2662 = vmul.u32.u64.compose %v2661, %v2660
        %v2663 = vextract.low.u32 %v2662
        %v2664 = vextract.high.u32 %v2662
        %v2665 = vmul.u32.u64.compose %v2661, %v2656
        %v2666 = vextract.low.u32 %v2665
        %v2667 = vextract.high.u32 %v2665
        %v2668 = vmul.u32 %v2661, %v2652
        %v2669 = vadd.s32 %v2664, %v2666
        %vm2670 = vc.u32 %v2664, %v2666
        %v2671 = vadd.s32 %v2667, 1
        %v2672 = vsel %vm2670, %v2671, %v2667
        %v2673 = vadd.s32 %v2668, %v2672
        %v2674 = vadd.s32 %v2673, 536870912
        %v2675 = vshrl.u32 %v2674, 30
        %v2676 = vshll.u32 %v2675, 30
        %v2677 = vsub.s32 %v2673, %v2676
        %vm2678 = vcmp.lt.s32.totalorder %v2677, 0
        %v2679 = vsub.s32 0, %v2677
        %v2680 = vsel %vm2678, %v2679, %v2677
        %v2681 = vclz %v2680
        %v2682 = vsub.s32 %v2681, 2
        %vm2683 = vcmp.gt.s32.totalorder 0, %v2682
        %v2684 = vsel %vm2683, 0, %v2682
        %v2685 = vsub.s32 32, %v2684
        %v2686 = vshll.u32 %v2677, %v2684
        %v2687 = vshrl.u32 %v2669, %v2685
        %v2688 = vor.u32 %v2686, %v2687
        %v2689 = vsub.s32 4294967266, %v2684
        %v2690 = vadd.s32 %v2689, 127
        %v2691 = vshll.u32 %v2690, 23
        %v2692 = vor.u32 4788187, %v2691
        %v2693 = vand.u32 2147483647, %v2692
        %v2695 = vcvt.s32.f32 %v2688
        %v2696 = vmul.f32 %v2695, %v2693
        %v2697 = vxor.u32 %v2696, 2147483648
        %v2698 = vsel %vm2615, %v2697, %v2696
        %v2699 = vsub.s32 4, %v2675
        %v2700 = vsel %vm2615, %v2699, %v2675
        %v2701 = vsel %vm2614, %v1141, %v2698
        %v2702 = vsel %vm2614, 0, %v2700
        %v2703 = vcosq.f32.pop %v2701
        %v2704 = vsinq.f32.pop %v2701
        %vm2705 = vweird.f32 %v1141
        %v2706 = vadd.s32 %v2702, 3
        %v2707 = vand.u32 %v2706, 3
        %vm2708 = vcmp.lt.s32.totalorder %v2707, 2
        %vm2709 = vcmp.eq.s32.totalorder %v2707, 0
        %v2710 = vxor.u32 %v2704, 2147483648
        %v2711 = vsel %vm2709, %v2703, %v2710
        %vm2712 = vcmp.eq.s32.totalorder %v2707, 2
        %v2713 = vxor.u32 %v2703, 2147483648
        %v2714 = vsel %vm2712, %v2713, %v2704
        %v2715 = vsel %vm2708, %v2711, %v2714
        %v2716 = vsel %vm2705, nan, %v2715
        %v2717 = vand.u32 2147483647, %v1143
        %vm2718 = vcmp.le.f32.partialorder %v2717, 0.7853982
        %vm2719 = vcmp.lt.s32.totalorder %v1143, 0
        %v2720 = vand.u32 %v1143, 2139095040
        %v2721 = vshrl.u32 %v2720, 23
        %v2722 = vsub.s32 %v2721, 127
        %v2723 = vand.u32 2147483647, %v1143
        %v2724 = vand.u32 %v2723, 8388607
        %v2725 = vor.u32 %v2724, 8388608
        %v2726 = vsub.s32 0, %v2725
        %v2727 = vadd.s32 %v2722, 1
        %vm2728 = vcmp.gt.s32.totalorder %v2727, 0
        %v2729 = vsel %vm2728, %v2727, 0
        %v2730 = vshrl.u32 %v2729, 5
        %v2731 = vand.u32 %v2729, 31
        %v2732 = vsub.s32 32, %v2731
        %v2733 = vshrl.u32 683565275, %v2732
        %v2734 = vshll.u32 683565275, %v2731
        %v2735 = vshrl.u32 2475754826, %v2732
        %v2736 = vor.u32 %v2734, %v2735
        %v2737 = vshll.u32 2475754826, %v2731
        %v2738 = vshrl.u32 2131351028, %v2732
        %v2739 = vor.u32 %v2737, %v2738
        %v2740 = vshll.u32 2131351028, %v2731
        %v2741 = vshrl.u32 2102212464, %v2732
        %v2742 = vor.u32 %v2740, %v2741
        %v2743 = vshll.u32 2102212464, %v2731
        %v2744 = vshrl.u32 920167782, %v2732
        %v2745 = vor.u32 %v2743, %v2744
        %v2746 = vshll.u32 920167782, %v2731
        %v2747 = vshrl.u32 1326507024, %v2732
        %v2748 = vor.u32 %v2746, %v2747
        %vm2749 = vcmp.lt.s32.totalorder %v2730, 1
        %vm2750 = vcmp.lt.s32.totalorder %v2730, 2
        %vm2751 = vcmp.lt.s32.totalorder %v2730, 3
        %vm2752 = vcmp.lt.s32.totalorder %v2730, 4
        %v2753 = vsel %vm2749, %v2733, %v2736
        %v2754 = vsel %vm2752, %v2742, 2102212464
        %v2755 = vsel %vm2751, %v2739, %v2754
        %v2756 = vsel %vm2750, %v2753, %v2755
        %v2757 = vsel %vm2749, %v2736, %v2739
        %v2758 = vsel %vm2752, %v2745, 920167782
        %v2759 = vsel %vm2751, %v2742, %v2758
        %v2760 = vsel %vm2750, %v2757, %v2759
        %v2761 = vsel %vm2749, %v2739, %v2742
        %v2762 = vsel %vm2752, %v2748, 1326507024
        %v2763 = vsel %vm2751, %v2745, %v2762
        %v2764 = vsel %vm2750, %v2761, %v2763
        %v2765 = vshll.u32 %v2725, 8
        %v2766 = vmul.u32.u64.compose %v2765, %v2764
        %v2767 = vextract.low.u32 %v2766
        %v2768 = vextract.high.u32 %v2766
        %v2769 = vmul.u32.u64.compose %v2765, %v2760
        %v2770 = vextract.low.u32 %v2769
        %v2771 = vextract.high.u32 %v2769
        %v2772 = vmul.u32 %v2765, %v2756
        %v2773 = vadd.s32 %v2768, %v2770
        %vm2774 = vc.u32 %v2768, %v2770
        %v2775 = vadd.s32 %v2771, 1
        %v2776 = vsel %vm2774, %v2775, %v2771
        %v2777 = vadd.s32 %v2772, %v2776
        %v2778 = vadd.s32 %v2777, 536870912
        %v2779 = vshrl.u32 %v2778, 30
        %v2780 = vshll.u32 %v2779, 30
        %v2781 = vsub.s32 %v2777, %v2780
        %vm2782 = vcmp.lt.s32.totalorder %v2781, 0
        %v2783 = vsub.s32 0, %v2781
        %v2784 = vsel %vm2782, %v2783, %v2781
        %v2785 = vclz %v2784
        %v2786 = vsub.s32 %v2785, 2
        %vm2787 = vcmp.gt.s32.totalorder 0, %v2786
        %v2788 = vsel %vm2787, 0, %v2786
        %v2789 = vsub.s32 32, %v2788
        %v2790 = vshll.u32 %v2781, %v2788
        %v2791 = vshrl.u32 %v2773, %v2789
        %v2792 = vor.u32 %v2790, %v2791
        %v2793 = vsub.s32 4294967266, %v2788
        %v2794 = vadd.s32 %v2793, 127
        %v2795 = vshll.u32 %v2794, 23
        %v2796 = vor.u32 4788187, %v2795
        %v2797 = vand.u32 2147483647, %v2796
        %v2799 = vcvt.s32.f32 %v2792
        %v2800 = vmul.f32 %v2799, %v2797
        %v2801 = vxor.u32 %v2800, 2147483648
        %v2802 = vsel %vm2719, %v2801, %v2800
        %v2803 = vsub.s32 4, %v2779
        %v2804 = vsel %vm2719, %v2803, %v2779
        %v2805 = vsel %vm2718, %v1143, %v2802
        %v2806 = vsel %vm2718, 0, %v2804
        %v2807 = vcosq.f32.pop %v2805
        %v2808 = vsinq.f32.pop %v2805
        %vm2809 = vweird.f32 %v1143
        %v2810 = vadd.s32 %v2806, 3
        %v2811 = vand.u32 %v2810, 3
        %vm2812 = vcmp.lt.s32.totalorder %v2811, 2
        %vm2813 = vcmp.eq.s32.totalorder %v2811, 0
        %v2814 = vxor.u32 %v2808, 2147483648
        %v2815 = vsel %vm2813, %v2807, %v2814
        %vm2816 = vcmp.eq.s32.totalorder %v2811, 2
        %v2817 = vxor.u32 %v2807, 2147483648
        %v2818 = vsel %vm2816, %v2817, %v2808
        %v2819 = vsel %vm2812, %v2815, %v2818
        %v2820 = vsel %vm2809, nan, %v2819
        %v2821 = vand.u32 2147483647, %v566
        %vm2822 = vcmp.le.f32.partialorder %v2821, 0.7853982
        %vm2823 = vcmp.lt.s32.totalorder %v566, 0
        %v2824 = vand.u32 %v566, 2139095040
        %v2825 = vshrl.u32 %v2824, 23
        %v2826 = vsub.s32 %v2825, 127
        %v2827 = vand.u32 2147483647, %v566
        %v2828 = vand.u32 %v2827, 8388607
        %v2829 = vor.u32 %v2828, 8388608
        %v2830 = vsub.s32 0, %v2829
        %v2831 = vadd.s32 %v2826, 1
        %vm2832 = vcmp.gt.s32.totalorder %v2831, 0
        %v2833 = vsel %vm2832, %v2831, 0
        %v2834 = vshrl.u32 %v2833, 5
        %v2835 = vand.u32 %v2833, 31
        %v2836 = vsub.s32 32, %v2835
        %v2837 = vshrl.u32 683565275, %v2836
        %v2838 = vshll.u32 683565275, %v2835
        %v2839 = vshrl.u32 2475754826, %v2836
        %v2840 = vor.u32 %v2838, %v2839
        %v2841 = vshll.u32 2475754826, %v2835
        %v2842 = vshrl.u32 2131351028, %v2836
        %v2843 = vor.u32 %v2841, %v2842
        %v2844 = vshll.u32 2131351028, %v2835
        %v2845 = vshrl.u32 2102212464, %v2836
        %v2846 = vor.u32 %v2844, %v2845
        %v2847 = vshll.u32 2102212464, %v2835
        %v2848 = vshrl.u32 920167782, %v2836
        %v2849 = vor.u32 %v2847, %v2848
        %v2850 = vshll.u32 920167782, %v2835
        %v2851 = vshrl.u32 1326507024, %v2836
        %v2852 = vor.u32 %v2850, %v2851
        %vm2853 = vcmp.lt.s32.totalorder %v2834, 1
        %vm2854 = vcmp.lt.s32.totalorder %v2834, 2
        %vm2855 = vcmp.lt.s32.totalorder %v2834, 3
        %vm2856 = vcmp.lt.s32.totalorder %v2834, 4
        %v2857 = vsel %vm2853, %v2837, %v2840
        %v2858 = vsel %vm2856, %v2846, 2102212464
        %v2859 = vsel %vm2855, %v2843, %v2858
        %v2860 = vsel %vm2854, %v2857, %v2859
        %v2861 = vsel %vm2853, %v2840, %v2843
        %v2862 = vsel %vm2856, %v2849, 920167782
        %v2863 = vsel %vm2855, %v2846, %v2862
        %v2864 = vsel %vm2854, %v2861, %v2863
        %v2865 = vsel %vm2853, %v2843, %v2846
        %v2866 = vsel %vm2856, %v2852, 1326507024
        %v2867 = vsel %vm2855, %v2849, %v2866
        %v2868 = vsel %vm2854, %v2865, %v2867
        %v2869 = vshll.u32 %v2829, 8
        %v2870 = vmul.u32.u64.compose %v2869, %v2868
        %v2871 = vextract.low.u32 %v2870
        %v2872 = vextract.high.u32 %v2870
        %v2873 = vmul.u32.u64.compose %v2869, %v2864
        %v2874 = vextract.low.u32 %v2873
        %v2875 = vextract.high.u32 %v2873
        %v2876 = vmul.u32 %v2869, %v2860
        %v2877 = vadd.s32 %v2872, %v2874
        %vm2878 = vc.u32 %v2872, %v2874
        %v2879 = vadd.s32 %v2875, 1
        %v2880 = vsel %vm2878, %v2879, %v2875
        %v2881 = vadd.s32 %v2876, %v2880
        %v2882 = vadd.s32 %v2881, 536870912
        %v2883 = vshrl.u32 %v2882, 30
        %v2884 = vshll.u32 %v2883, 30
        %v2885 = vsub.s32 %v2881, %v2884
        %vm2886 = vcmp.lt.s32.totalorder %v2885, 0
        %v2887 = vsub.s32 0, %v2885
        %v2888 = vsel %vm2886, %v2887, %v2885
        %v2889 = vclz %v2888
        %v2890 = vsub.s32 %v2889, 2
        %vm2891 = vcmp.gt.s32.totalorder 0, %v2890
        %v2892 = vsel %vm2891, 0, %v2890
        %v2893 = vsub.s32 32, %v2892
        %v2894 = vshll.u32 %v2885, %v2892
        %v2895 = vshrl.u32 %v2877, %v2893
        %v2896 = vor.u32 %v2894, %v2895
        %v2897 = vsub.s32 4294967266, %v2892
        %v2898 = vadd.s32 %v2897, 127
        %v2899 = vshll.u32 %v2898, 23
        %v2900 = vor.u32 4788187, %v2899
        %v2901 = vand.u32 2147483647, %v2900
        %v2903 = vcvt.s32.f32 %v2896
        %v2904 = vmul.f32 %v2903, %v2901
        %v2905 = vxor.u32 %v2904, 2147483648
        %v2906 = vsel %vm2823, %v2905, %v2904
        %v2907 = vsub.s32 4, %v2883
        %v2908 = vsel %vm2823, %v2907, %v2883
        %v2909 = vsel %vm2822, %v566, %v2906
        %v2910 = vsel %vm2822, 0, %v2908
        %v2911 = vcosq.f32.pop %v2909
        %v2912 = vsinq.f32.pop %v2909
        %vm2913 = vweird.f32 %v566
        %v2914 = vadd.s32 %v2910, 3
        %v2915 = vand.u32 %v2914, 3
        %vm2916 = vcmp.lt.s32.totalorder %v2915, 2
        %vm2917 = vcmp.eq.s32.totalorder %v2915, 0
        %v2918 = vxor.u32 %v2912, 2147483648
        %v2919 = vsel %vm2917, %v2911, %v2918
        %vm2920 = vcmp.eq.s32.totalorder %v2915, 2
        %v2921 = vxor.u32 %v2911, 2147483648
        %v2922 = vsel %vm2920, %v2921, %v2912
        %v2923 = vsel %vm2916, %v2919, %v2922
        %v2924 = vsel %vm2913, nan, %v2923
        %v2925 = vand.u32 2147483647, %v568
        %vm2926 = vcmp.le.f32.partialorder %v2925, 0.7853982
        %vm2927 = vcmp.lt.s32.totalorder %v568, 0
        %v2928 = vand.u32 %v568, 2139095040
        %v2929 = vshrl.u32 %v2928, 23
        %v2930 = vsub.s32 %v2929, 127
        %v2931 = vand.u32 2147483647, %v568
        %v2932 = vand.u32 %v2931, 8388607
        %v2933 = vor.u32 %v2932, 8388608
        %v2934 = vsub.s32 0, %v2933
        %v2935 = vadd.s32 %v2930, 1
        %vm2936 = vcmp.gt.s32.totalorder %v2935, 0
        %v2937 = vsel %vm2936, %v2935, 0
        %v2938 = vshrl.u32 %v2937, 5
        %v2939 = vand.u32 %v2937, 31
        %v2940 = vsub.s32 32, %v2939
        %v2941 = vshrl.u32 683565275, %v2940
        %v2942 = vshll.u32 683565275, %v2939
        %v2943 = vshrl.u32 2475754826, %v2940
        %v2944 = vor.u32 %v2942, %v2943
        %v2945 = vshll.u32 2475754826, %v2939
        %v2946 = vshrl.u32 2131351028, %v2940
        %v2947 = vor.u32 %v2945, %v2946
        %v2948 = vshll.u32 2131351028, %v2939
        %v2949 = vshrl.u32 2102212464, %v2940
        %v2950 = vor.u32 %v2948, %v2949
        %v2951 = vshll.u32 2102212464, %v2939
        %v2952 = vshrl.u32 920167782, %v2940
        %v2953 = vor.u32 %v2951, %v2952
        %v2954 = vshll.u32 920167782, %v2939
        %v2955 = vshrl.u32 1326507024, %v2940
        %v2956 = vor.u32 %v2954, %v2955
        %vm2957 = vcmp.lt.s32.totalorder %v2938, 1
        %vm2958 = vcmp.lt.s32.totalorder %v2938, 2
        %vm2959 = vcmp.lt.s32.totalorder %v2938, 3
        %vm2960 = vcmp.lt.s32.totalorder %v2938, 4
        %v2961 = vsel %vm2957, %v2941, %v2944
        %v2962 = vsel %vm2960, %v2950, 2102212464
        %v2963 = vsel %vm2959, %v2947, %v2962
        %v2964 = vsel %vm2958, %v2961, %v2963
        %v2965 = vsel %vm2957, %v2944, %v2947
        %v2966 = vsel %vm2960, %v2953, 920167782
        %v2967 = vsel %vm2959, %v2950, %v2966
        %v2968 = vsel %vm2958, %v2965, %v2967
        %v2969 = vsel %vm2957, %v2947, %v2950
        %v2970 = vsel %vm2960, %v2956, 1326507024
        %v2971 = vsel %vm2959, %v2953, %v2970
        %v2972 = vsel %vm2958, %v2969, %v2971
        %v2973 = vshll.u32 %v2933, 8
        %v2974 = vmul.u32.u64.compose %v2973, %v2972
        %v2975 = vextract.low.u32 %v2974
        %v2976 = vextract.high.u32 %v2974
        %v2977 = vmul.u32.u64.compose %v2973, %v2968
        %v2978 = vextract.low.u32 %v2977
        %v2979 = vextract.high.u32 %v2977
        %v2980 = vmul.u32 %v2973, %v2964
        %v2981 = vadd.s32 %v2976, %v2978
        %vm2982 = vc.u32 %v2976, %v2978
        %v2983 = vadd.s32 %v2979, 1
        %v2984 = vsel %vm2982, %v2983, %v2979
        %v2985 = vadd.s32 %v2980, %v2984
        %v2986 = vadd.s32 %v2985, 536870912
        %v2987 = vshrl.u32 %v2986, 30
        %v2988 = vshll.u32 %v2987, 30
        %v2989 = vsub.s32 %v2985, %v2988
        %vm2990 = vcmp.lt.s32.totalorder %v2989, 0
        %v2991 = vsub.s32 0, %v2989
        %v2992 = vsel %vm2990, %v2991, %v2989
        %v2993 = vclz %v2992
        %v2994 = vsub.s32 %v2993, 2
        %vm2995 = vcmp.gt.s32.totalorder 0, %v2994
        %v2996 = vsel %vm2995, 0, %v2994
        %v2997 = vsub.s32 32, %v2996
        %v2998 = vshll.u32 %v2989, %v2996
        %v2999 = vshrl.u32 %v2981, %v2997
        %v3000 = vor.u32 %v2998, %v2999
        %v3001 = vsub.s32 4294967266, %v2996
        %v3002 = vadd.s32 %v3001, 127
        %v3003 = vshll.u32 %v3002, 23
        %v3004 = vor.u32 4788187, %v3003
        %v3005 = vand.u32 2147483647, %v3004
        %v3007 = vcvt.s32.f32 %v3000
        %v3008 = vmul.f32 %v3007, %v3005
        %v3009 = vxor.u32 %v3008, 2147483648
        %v3010 = vsel %vm2927, %v3009, %v3008
        %v3011 = vsub.s32 4, %v2987
        %v3012 = vsel %vm2927, %v3011, %v2987
        %v3013 = vsel %vm2926, %v568, %v3010
        %v3014 = vsel %vm2926, 0, %v3012
        %v3015 = vcosq.f32.pop %v3013
        %v3016 = vsinq.f32.pop %v3013
        %vm3017 = vweird.f32 %v568
        %v3018 = vadd.s32 %v3014, 3
        %v3019 = vand.u32 %v3018, 3
        %vm3020 = vcmp.lt.s32.totalorder %v3019, 2
        %vm3021 = vcmp.eq.s32.totalorder %v3019, 0
        %v3022 = vxor.u32 %v3016, 2147483648
        %v3023 = vsel %vm3021, %v3015, %v3022
        %vm3024 = vcmp.eq.s32.totalorder %v3019, 2
        %v3025 = vxor.u32 %v3015, 2147483648
        %v3026 = vsel %vm3024, %v3025, %v3016
        %v3027 = vsel %vm3020, %v3023, %v3026
        %v3028 = vsel %vm3017, nan, %v3027
        %v3029 = vand.u32 2147483647, %v649
        %vm3030 = vcmp.le.f32.partialorder %v3029, 0.7853982
        %vm3031 = vcmp.lt.s32.totalorder %v649, 0
        %v3032 = vand.u32 %v649, 2139095040
        %v3033 = vshrl.u32 %v3032, 23
        %v3034 = vsub.s32 %v3033, 127
        %v3035 = vand.u32 2147483647, %v649
        %v3036 = vand.u32 %v3035, 8388607
        %v3037 = vor.u32 %v3036, 8388608
        %v3038 = vsub.s32 0, %v3037
        %v3039 = vadd.s32 %v3034, 1
        %vm3040 = vcmp.gt.s32.totalorder %v3039, 0
        %v3041 = vsel %vm3040, %v3039, 0
        %v3042 = vshrl.u32 %v3041, 5
        %v3043 = vand.u32 %v3041, 31
        %v3044 = vsub.s32 32, %v3043
        %v3045 = vshrl.u32 683565275, %v3044
        %v3046 = vshll.u32 683565275, %v3043
        %v3047 = vshrl.u32 2475754826, %v3044
        %v3048 = vor.u32 %v3046, %v3047
        %v3049 = vshll.u32 2475754826, %v3043
        %v3050 = vshrl.u32 2131351028, %v3044
        %v3051 = vor.u32 %v3049, %v3050
        %v3052 = vshll.u32 2131351028, %v3043
        %v3053 = vshrl.u32 2102212464, %v3044
        %v3054 = vor.u32 %v3052, %v3053
        %v3055 = vshll.u32 2102212464, %v3043
        %v3056 = vshrl.u32 920167782, %v3044
        %v3057 = vor.u32 %v3055, %v3056
        %v3058 = vshll.u32 920167782, %v3043
        %v3059 = vshrl.u32 1326507024, %v3044
        %v3060 = vor.u32 %v3058, %v3059
        %vm3061 = vcmp.lt.s32.totalorder %v3042, 1
        %vm3062 = vcmp.lt.s32.totalorder %v3042, 2
        %vm3063 = vcmp.lt.s32.totalorder %v3042, 3
        %vm3064 = vcmp.lt.s32.totalorder %v3042, 4
        %v3065 = vsel %vm3061, %v3045, %v3048
        %v3066 = vsel %vm3064, %v3054, 2102212464
        %v3067 = vsel %vm3063, %v3051, %v3066
        %v3068 = vsel %vm3062, %v3065, %v3067
        %v3069 = vsel %vm3061, %v3048, %v3051
        %v3070 = vsel %vm3064, %v3057, 920167782
        %v3071 = vsel %vm3063, %v3054, %v3070
        %v3072 = vsel %vm3062, %v3069, %v3071
        %v3073 = vsel %vm3061, %v3051, %v3054
        %v3074 = vsel %vm3064, %v3060, 1326507024
        %v3075 = vsel %vm3063, %v3057, %v3074
        %v3076 = vsel %vm3062, %v3073, %v3075
        %v3077 = vshll.u32 %v3037, 8
        %v3078 = vmul.u32.u64.compose %v3077, %v3076
        %v3079 = vextract.low.u32 %v3078
        %v3080 = vextract.high.u32 %v3078
        %v3081 = vmul.u32.u64.compose %v3077, %v3072
        %v3082 = vextract.low.u32 %v3081
        %v3083 = vextract.high.u32 %v3081
        %v3084 = vmul.u32 %v3077, %v3068
        %v3085 = vadd.s32 %v3080, %v3082
        %vm3086 = vc.u32 %v3080, %v3082
        %v3087 = vadd.s32 %v3083, 1
        %v3088 = vsel %vm3086, %v3087, %v3083
        %v3089 = vadd.s32 %v3084, %v3088
        %v3090 = vadd.s32 %v3089, 536870912
        %v3091 = vshrl.u32 %v3090, 30
        %v3092 = vshll.u32 %v3091, 30
        %v3093 = vsub.s32 %v3089, %v3092
        %vm3094 = vcmp.lt.s32.totalorder %v3093, 0
        %v3095 = vsub.s32 0, %v3093
        %v3096 = vsel %vm3094, %v3095, %v3093
        %v3097 = vclz %v3096
        %v3098 = vsub.s32 %v3097, 2
        %vm3099 = vcmp.gt.s32.totalorder 0, %v3098
        %v3100 = vsel %vm3099, 0, %v3098
        %v3101 = vsub.s32 32, %v3100
        %v3102 = vshll.u32 %v3093, %v3100
        %v3103 = vshrl.u32 %v3085, %v3101
        %v3104 = vor.u32 %v3102, %v3103
        %v3105 = vsub.s32 4294967266, %v3100
        %v3106 = vadd.s32 %v3105, 127
        %v3107 = vshll.u32 %v3106, 23
        %v3108 = vor.u32 4788187, %v3107
        %v3109 = vand.u32 2147483647, %v3108
        %v3111 = vcvt.s32.f32 %v3104
        %v3112 = vmul.f32 %v3111, %v3109
        %v3113 = vxor.u32 %v3112, 2147483648
        %v3114 = vsel %vm3031, %v3113, %v3112
        %v3115 = vsub.s32 4, %v3091
        %v3116 = vsel %vm3031, %v3115, %v3091
        %v3117 = vsel %vm3030, %v649, %v3114
        %v3118 = vsel %vm3030, 0, %v3116
        %v3119 = vcosq.f32.pop %v3117
        %v3120 = vsinq.f32.pop %v3117
        %vm3121 = vweird.f32 %v649
        %v3122 = vadd.s32 %v3118, 3
        %v3123 = vand.u32 %v3122, 3
        %vm3124 = vcmp.lt.s32.totalorder %v3123, 2
        %vm3125 = vcmp.eq.s32.totalorder %v3123, 0
        %v3126 = vxor.u32 %v3120, 2147483648
        %v3127 = vsel %vm3125, %v3119, %v3126
        %vm3128 = vcmp.eq.s32.totalorder %v3123, 2
        %v3129 = vxor.u32 %v3119, 2147483648
        %v3130 = vsel %vm3128, %v3129, %v3120
        %v3131 = vsel %vm3124, %v3127, %v3130
        %v3132 = vsel %vm3121, nan, %v3131
        %v3133 = vand.u32 2147483647, %v651
        %vm3134 = vcmp.le.f32.partialorder %v3133, 0.7853982
        %vm3135 = vcmp.lt.s32.totalorder %v651, 0
        %v3136 = vand.u32 %v651, 2139095040
        %v3137 = vshrl.u32 %v3136, 23
        %v3138 = vsub.s32 %v3137, 127
        %v3139 = vand.u32 2147483647, %v651
        %v3140 = vand.u32 %v3139, 8388607
        %v3141 = vor.u32 %v3140, 8388608
        %v3142 = vsub.s32 0, %v3141
        %v3143 = vadd.s32 %v3138, 1
        %vm3144 = vcmp.gt.s32.totalorder %v3143, 0
        %v3145 = vsel %vm3144, %v3143, 0
        %v3146 = vshrl.u32 %v3145, 5
        %v3147 = vand.u32 %v3145, 31
        %v3148 = vsub.s32 32, %v3147
        %v3149 = vshrl.u32 683565275, %v3148
        %v3150 = vshll.u32 683565275, %v3147
        %v3151 = vshrl.u32 2475754826, %v3148
        %v3152 = vor.u32 %v3150, %v3151
        %v3153 = vshll.u32 2475754826, %v3147
        %v3154 = vshrl.u32 2131351028, %v3148
        %v3155 = vor.u32 %v3153, %v3154
        %v3156 = vshll.u32 2131351028, %v3147
        %v3157 = vshrl.u32 2102212464, %v3148
        %v3158 = vor.u32 %v3156, %v3157
        %v3159 = vshll.u32 2102212464, %v3147
        %v3160 = vshrl.u32 920167782, %v3148
        %v3161 = vor.u32 %v3159, %v3160
        %v3162 = vshll.u32 920167782, %v3147
        %v3163 = vshrl.u32 1326507024, %v3148
        %v3164 = vor.u32 %v3162, %v3163
        %vm3165 = vcmp.lt.s32.totalorder %v3146, 1
        %vm3166 = vcmp.lt.s32.totalorder %v3146, 2
        %vm3167 = vcmp.lt.s32.totalorder %v3146, 3
        %vm3168 = vcmp.lt.s32.totalorder %v3146, 4
        %v3169 = vsel %vm3165, %v3149, %v3152
        %v3170 = vsel %vm3168, %v3158, 2102212464
        %v3171 = vsel %vm3167, %v3155, %v3170
        %v3172 = vsel %vm3166, %v3169, %v3171
        %v3173 = vsel %vm3165, %v3152, %v3155
        %v3174 = vsel %vm3168, %v3161, 920167782
        %v3175 = vsel %vm3167, %v3158, %v3174
        %v3176 = vsel %vm3166, %v3173, %v3175
        %v3177 = vsel %vm3165, %v3155, %v3158
        %v3178 = vsel %vm3168, %v3164, 1326507024
        %v3179 = vsel %vm3167, %v3161, %v3178
        %v3180 = vsel %vm3166, %v3177, %v3179
        %v3181 = vshll.u32 %v3141, 8
        %v3182 = vmul.u32.u64.compose %v3181, %v3180
        %v3183 = vextract.low.u32 %v3182
        %v3184 = vextract.high.u32 %v3182
        %v3185 = vmul.u32.u64.compose %v3181, %v3176
        %v3186 = vextract.low.u32 %v3185
        %v3187 = vextract.high.u32 %v3185
        %v3188 = vmul.u32 %v3181, %v3172
        %v3189 = vadd.s32 %v3184, %v3186
        %vm3190 = vc.u32 %v3184, %v3186
        %v3191 = vadd.s32 %v3187, 1
        %v3192 = vsel %vm3190, %v3191, %v3187
        %v3193 = vadd.s32 %v3188, %v3192
        %v3194 = vadd.s32 %v3193, 536870912
        %v3195 = vshrl.u32 %v3194, 30
        %v3196 = vshll.u32 %v3195, 30
        %v3197 = vsub.s32 %v3193, %v3196
        %vm3198 = vcmp.lt.s32.totalorder %v3197, 0
        %v3199 = vsub.s32 0, %v3197
        %v3200 = vsel %vm3198, %v3199, %v3197
        %v3201 = vclz %v3200
        %v3202 = vsub.s32 %v3201, 2
        %vm3203 = vcmp.gt.s32.totalorder 0, %v3202
        %v3204 = vsel %vm3203, 0, %v3202
        %v3205 = vsub.s32 32, %v3204
        %v3206 = vshll.u32 %v3197, %v3204
        %v3207 = vshrl.u32 %v3189, %v3205
        %v3208 = vor.u32 %v3206, %v3207
        %v3209 = vsub.s32 4294967266, %v3204
        %v3210 = vadd.s32 %v3209, 127
        %v3211 = vshll.u32 %v3210, 23
        %v3212 = vor.u32 4788187, %v3211
        %v3213 = vand.u32 2147483647, %v3212
        %v3215 = vcvt.s32.f32 %v3208
        %v3216 = vmul.f32 %v3215, %v3213
        %v3217 = vxor.u32 %v3216, 2147483648
        %v3218 = vsel %vm3135, %v3217, %v3216
        %v3219 = vsub.s32 4, %v3195
        %v3220 = vsel %vm3135, %v3219, %v3195
        %v3221 = vsel %vm3134, %v651, %v3218
        %v3222 = vsel %vm3134, 0, %v3220
        %v3223 = vcosq.f32.pop %v3221
        %v3224 = vsinq.f32.pop %v3221
        %vm3225 = vweird.f32 %v651
        %v3226 = vadd.s32 %v3222, 3
        %v3227 = vand.u32 %v3226, 3
        %vm3228 = vcmp.lt.s32.totalorder %v3227, 2
        %vm3229 = vcmp.eq.s32.totalorder %v3227, 0
        %v3230 = vxor.u32 %v3224, 2147483648
        %v3231 = vsel %vm3229, %v3223, %v3230
        %vm3232 = vcmp.eq.s32.totalorder %v3227, 2
        %v3233 = vxor.u32 %v3223, 2147483648
        %v3234 = vsel %vm3232, %v3233, %v3224
        %v3235 = vsel %vm3228, %v3231, %v3234
        %v3236 = vsel %vm3225, nan, %v3235
        %v3237 = vand.u32 2147483647, %v732
        %vm3238 = vcmp.le.f32.partialorder %v3237, 0.7853982
        %vm3239 = vcmp.lt.s32.totalorder %v732, 0
        %v3240 = vand.u32 %v732, 2139095040
        %v3241 = vshrl.u32 %v3240, 23
        %v3242 = vsub.s32 %v3241, 127
        %v3243 = vand.u32 2147483647, %v732
        %v3244 = vand.u32 %v3243, 8388607
        %v3245 = vor.u32 %v3244, 8388608
        %v3246 = vsub.s32 0, %v3245
        %v3247 = vadd.s32 %v3242, 1
        %vm3248 = vcmp.gt.s32.totalorder %v3247, 0
        %v3249 = vsel %vm3248, %v3247, 0
        %v3250 = vshrl.u32 %v3249, 5
        %v3251 = vand.u32 %v3249, 31
        %v3252 = vsub.s32 32, %v3251
        %v3253 = vshrl.u32 683565275, %v3252
        %v3254 = vshll.u32 683565275, %v3251
        %v3255 = vshrl.u32 2475754826, %v3252
        %v3256 = vor.u32 %v3254, %v3255
        %v3257 = vshll.u32 2475754826, %v3251
        %v3258 = vshrl.u32 2131351028, %v3252
        %v3259 = vor.u32 %v3257, %v3258
        %v3260 = vshll.u32 2131351028, %v3251
        %v3261 = vshrl.u32 2102212464, %v3252
        %v3262 = vor.u32 %v3260, %v3261
        %v3263 = vshll.u32 2102212464, %v3251
        %v3264 = vshrl.u32 920167782, %v3252
        %v3265 = vor.u32 %v3263, %v3264
        %v3266 = vshll.u32 920167782, %v3251
        %v3267 = vshrl.u32 1326507024, %v3252
        %v3268 = vor.u32 %v3266, %v3267
        %vm3269 = vcmp.lt.s32.totalorder %v3250, 1
        %vm3270 = vcmp.lt.s32.totalorder %v3250, 2
        %vm3271 = vcmp.lt.s32.totalorder %v3250, 3
        %vm3272 = vcmp.lt.s32.totalorder %v3250, 4
        %v3273 = vsel %vm3269, %v3253, %v3256
        %v3274 = vsel %vm3272, %v3262, 2102212464
        %v3275 = vsel %vm3271, %v3259, %v3274
        %v3276 = vsel %vm3270, %v3273, %v3275
        %v3277 = vsel %vm3269, %v3256, %v3259
        %v3278 = vsel %vm3272, %v3265, 920167782
        %v3279 = vsel %vm3271, %v3262, %v3278
        %v3280 = vsel %vm3270, %v3277, %v3279
        %v3281 = vsel %vm3269, %v3259, %v3262
        %v3282 = vsel %vm3272, %v3268, 1326507024
        %v3283 = vsel %vm3271, %v3265, %v3282
        %v3284 = vsel %vm3270, %v3281, %v3283
        %v3285 = vshll.u32 %v3245, 8
        %v3286 = vmul.u32.u64.compose %v3285, %v3284
        %v3287 = vextract.low.u32 %v3286
        %v3288 = vextract.high.u32 %v3286
        %v3289 = vmul.u32.u64.compose %v3285, %v3280
        %v3290 = vextract.low.u32 %v3289
        %v3291 = vextract.high.u32 %v3289
        %v3292 = vmul.u32 %v3285, %v3276
        %v3293 = vadd.s32 %v3288, %v3290
        %vm3294 = vc.u32 %v3288, %v3290
        %v3295 = vadd.s32 %v3291, 1
        %v3296 = vsel %vm3294, %v3295, %v3291
        %v3297 = vadd.s32 %v3292, %v3296
        %v3298 = vadd.s32 %v3297, 536870912
        %v3299 = vshrl.u32 %v3298, 30
        %v3300 = vshll.u32 %v3299, 30
        %v3301 = vsub.s32 %v3297, %v3300
        %vm3302 = vcmp.lt.s32.totalorder %v3301, 0
        %v3303 = vsub.s32 0, %v3301
        %v3304 = vsel %vm3302, %v3303, %v3301
        %v3305 = vclz %v3304
        %v3306 = vsub.s32 %v3305, 2
        %vm3307 = vcmp.gt.s32.totalorder 0, %v3306
        %v3308 = vsel %vm3307, 0, %v3306
        %v3309 = vsub.s32 32, %v3308
        %v3310 = vshll.u32 %v3301, %v3308
        %v3311 = vshrl.u32 %v3293, %v3309
        %v3312 = vor.u32 %v3310, %v3311
        %v3313 = vsub.s32 4294967266, %v3308
        %v3314 = vadd.s32 %v3313, 127
        %v3315 = vshll.u32 %v3314, 23
        %v3316 = vor.u32 4788187, %v3315
        %v3317 = vand.u32 2147483647, %v3316
        %v3319 = vcvt.s32.f32 %v3312
        %v3320 = vmul.f32 %v3319, %v3317
        %v3321 = vxor.u32 %v3320, 2147483648
        %v3322 = vsel %vm3239, %v3321, %v3320
        %v3323 = vsub.s32 4, %v3299
        %v3324 = vsel %vm3239, %v3323, %v3299
        %v3325 = vsel %vm3238, %v732, %v3322
        %v3326 = vsel %vm3238, 0, %v3324
        %v3327 = vcosq.f32.pop %v3325
        %v3328 = vsinq.f32.pop %v3325
        %vm3329 = vweird.f32 %v732
        %v3330 = vadd.s32 %v3326, 3
        %v3331 = vand.u32 %v3330, 3
        %vm3332 = vcmp.lt.s32.totalorder %v3331, 2
        %vm3333 = vcmp.eq.s32.totalorder %v3331, 0
        %v3334 = vxor.u32 %v3328, 2147483648
        %v3335 = vsel %vm3333, %v3327, %v3334
        %vm3336 = vcmp.eq.s32.totalorder %v3331, 2
        %v3337 = vxor.u32 %v3327, 2147483648
        %v3338 = vsel %vm3336, %v3337, %v3328
        %v3339 = vsel %vm3332, %v3335, %v3338
        %v3340 = vsel %vm3329, nan, %v3339
        %v3341 = vand.u32 2147483647, %v734
        %vm3342 = vcmp.le.f32.partialorder %v3341, 0.7853982
        %vm3343 = vcmp.lt.s32.totalorder %v734, 0
        %v3344 = vand.u32 %v734, 2139095040
        %v3345 = vshrl.u32 %v3344, 23
        %v3346 = vsub.s32 %v3345, 127
        %v3347 = vand.u32 2147483647, %v734
        %v3348 = vand.u32 %v3347, 8388607
        %v3349 = vor.u32 %v3348, 8388608
        %v3350 = vsub.s32 0, %v3349
        %v3351 = vadd.s32 %v3346, 1
        %vm3352 = vcmp.gt.s32.totalorder %v3351, 0
        %v3353 = vsel %vm3352, %v3351, 0
        %v3354 = vshrl.u32 %v3353, 5
        %v3355 = vand.u32 %v3353, 31
        %v3356 = vsub.s32 32, %v3355
        %v3357 = vshrl.u32 683565275, %v3356
        %v3358 = vshll.u32 683565275, %v3355
        %v3359 = vshrl.u32 2475754826, %v3356
        %v3360 = vor.u32 %v3358, %v3359
        %v3361 = vshll.u32 2475754826, %v3355
        %v3362 = vshrl.u32 2131351028, %v3356
        %v3363 = vor.u32 %v3361, %v3362
        %v3364 = vshll.u32 2131351028, %v3355
        %v3365 = vshrl.u32 2102212464, %v3356
        %v3366 = vor.u32 %v3364, %v3365
        %v3367 = vshll.u32 2102212464, %v3355
        %v3368 = vshrl.u32 920167782, %v3356
        %v3369 = vor.u32 %v3367, %v3368
        %v3370 = vshll.u32 920167782, %v3355
        %v3371 = vshrl.u32 1326507024, %v3356
        %v3372 = vor.u32 %v3370, %v3371
        %vm3373 = vcmp.lt.s32.totalorder %v3354, 1
        %vm3374 = vcmp.lt.s32.totalorder %v3354, 2
        %vm3375 = vcmp.lt.s32.totalorder %v3354, 3
        %vm3376 = vcmp.lt.s32.totalorder %v3354, 4
        %v3377 = vsel %vm3373, %v3357, %v3360
        %v3378 = vsel %vm3376, %v3366, 2102212464
        %v3379 = vsel %vm3375, %v3363, %v3378
        %v3380 = vsel %vm3374, %v3377, %v3379
        %v3381 = vsel %vm3373, %v3360, %v3363
        %v3382 = vsel %vm3376, %v3369, 920167782
        %v3383 = vsel %vm3375, %v3366, %v3382
        %v3384 = vsel %vm3374, %v3381, %v3383
        %v3385 = vsel %vm3373, %v3363, %v3366
        %v3386 = vsel %vm3376, %v3372, 1326507024
        %v3387 = vsel %vm3375, %v3369, %v3386
        %v3388 = vsel %vm3374, %v3385, %v3387
        %v3389 = vshll.u32 %v3349, 8
        %v3390 = vmul.u32.u64.compose %v3389, %v3388
        %v3391 = vextract.low.u32 %v3390
        %v3392 = vextract.high.u32 %v3390
        %v3393 = vmul.u32.u64.compose %v3389, %v3384
        %v3394 = vextract.low.u32 %v3393
        %v3395 = vextract.high.u32 %v3393
        %v3396 = vmul.u32 %v3389, %v3380
        %v3397 = vadd.s32 %v3392, %v3394
        %vm3398 = vc.u32 %v3392, %v3394
        %v3399 = vadd.s32 %v3395, 1
        %v3400 = vsel %vm3398, %v3399, %v3395
        %v3401 = vadd.s32 %v3396, %v3400
        %v3402 = vadd.s32 %v3401, 536870912
        %v3403 = vshrl.u32 %v3402, 30
        %v3404 = vshll.u32 %v3403, 30
        %v3405 = vsub.s32 %v3401, %v3404
        %vm3406 = vcmp.lt.s32.totalorder %v3405, 0
        %v3407 = vsub.s32 0, %v3405
        %v3408 = vsel %vm3406, %v3407, %v3405
        %v3409 = vclz %v3408
        %v3410 = vsub.s32 %v3409, 2
        %vm3411 = vcmp.gt.s32.totalorder 0, %v3410
        %v3412 = vsel %vm3411, 0, %v3410
        %v3413 = vsub.s32 32, %v3412
        %v3414 = vshll.u32 %v3405, %v3412
        %v3415 = vshrl.u32 %v3397, %v3413
        %v3416 = vor.u32 %v3414, %v3415
        %v3417 = vsub.s32 4294967266, %v3412
        %v3418 = vadd.s32 %v3417, 127
        %v3419 = vshll.u32 %v3418, 23
        %v3420 = vor.u32 4788187, %v3419
        %v3421 = vand.u32 2147483647, %v3420
        %v3423 = vcvt.s32.f32 %v3416
        %v3424 = vmul.f32 %v3423, %v3421
        %v3425 = vxor.u32 %v3424, 2147483648
        %v3426 = vsel %vm3343, %v3425, %v3424
        %v3427 = vsub.s32 4, %v3403
        %v3428 = vsel %vm3343, %v3427, %v3403
        %v3429 = vsel %vm3342, %v734, %v3426
        %v3430 = vsel %vm3342, 0, %v3428
        %v3431 = vcosq.f32.pop %v3429
        %v3432 = vsinq.f32.pop %v3429
        %vm3433 = vweird.f32 %v734
        %v3434 = vadd.s32 %v3430, 3
        %v3435 = vand.u32 %v3434, 3
        %vm3436 = vcmp.lt.s32.totalorder %v3435, 2
        %vm3437 = vcmp.eq.s32.totalorder %v3435, 0
        %v3438 = vxor.u32 %v3432, 2147483648
        %v3439 = vsel %vm3437, %v3431, %v3438
        %vm3440 = vcmp.eq.s32.totalorder %v3435, 2
        %v3441 = vxor.u32 %v3431, 2147483648
        %v3442 = vsel %vm3440, %v3441, %v3432
        %v3443 = vsel %vm3436, %v3439, %v3442
        %v3444 = vsel %vm3433, nan, %v3443
        %v3445 = vand.u32 2147483647, %v815
        %vm3446 = vcmp.le.f32.partialorder %v3445, 0.7853982
        %vm3447 = vcmp.lt.s32.totalorder %v815, 0
        %v3448 = vand.u32 %v815, 2139095040
        %v3449 = vshrl.u32 %v3448, 23
        %v3450 = vsub.s32 %v3449, 127
        %v3451 = vand.u32 2147483647, %v815
        %v3452 = vand.u32 %v3451, 8388607
        %v3453 = vor.u32 %v3452, 8388608
        %v3454 = vsub.s32 0, %v3453
        %v3455 = vadd.s32 %v3450, 1
        %vm3456 = vcmp.gt.s32.totalorder %v3455, 0
        %v3457 = vsel %vm3456, %v3455, 0
        %v3458 = vshrl.u32 %v3457, 5
        %v3459 = vand.u32 %v3457, 31
        %v3460 = vsub.s32 32, %v3459
        %v3461 = vshrl.u32 683565275, %v3460
        %v3462 = vshll.u32 683565275, %v3459
        %v3463 = vshrl.u32 2475754826, %v3460
        %v3464 = vor.u32 %v3462, %v3463
        %v3465 = vshll.u32 2475754826, %v3459
        %v3466 = vshrl.u32 2131351028, %v3460
        %v3467 = vor.u32 %v3465, %v3466
        %v3468 = vshll.u32 2131351028, %v3459
        %v3469 = vshrl.u32 2102212464, %v3460
        %v3470 = vor.u32 %v3468, %v3469
        %v3471 = vshll.u32 2102212464, %v3459
        %v3472 = vshrl.u32 920167782, %v3460
        %v3473 = vor.u32 %v3471, %v3472
        %v3474 = vshll.u32 920167782, %v3459
        %v3475 = vshrl.u32 1326507024, %v3460
        %v3476 = vor.u32 %v3474, %v3475
        %vm3477 = vcmp.lt.s32.totalorder %v3458, 1
        %vm3478 = vcmp.lt.s32.totalorder %v3458, 2
        %vm3479 = vcmp.lt.s32.totalorder %v3458, 3
        %vm3480 = vcmp.lt.s32.totalorder %v3458, 4
        %v3481 = vsel %vm3477, %v3461, %v3464
        %v3482 = vsel %vm3480, %v3470, 2102212464
        %v3483 = vsel %vm3479, %v3467, %v3482
        %v3484 = vsel %vm3478, %v3481, %v3483
        %v3485 = vsel %vm3477, %v3464, %v3467
        %v3486 = vsel %vm3480, %v3473, 920167782
        %v3487 = vsel %vm3479, %v3470, %v3486
        %v3488 = vsel %vm3478, %v3485, %v3487
        %v3489 = vsel %vm3477, %v3467, %v3470
        %v3490 = vsel %vm3480, %v3476, 1326507024
        %v3491 = vsel %vm3479, %v3473, %v3490
        %v3492 = vsel %vm3478, %v3489, %v3491
        %v3493 = vshll.u32 %v3453, 8
        %v3494 = vmul.u32.u64.compose %v3493, %v3492
        %v3495 = vextract.low.u32 %v3494
        %v3496 = vextract.high.u32 %v3494
        %v3497 = vmul.u32.u64.compose %v3493, %v3488
        %v3498 = vextract.low.u32 %v3497
        %v3499 = vextract.high.u32 %v3497
        %v3500 = vmul.u32 %v3493, %v3484
        %v3501 = vadd.s32 %v3496, %v3498
        %vm3502 = vc.u32 %v3496, %v3498
        %v3503 = vadd.s32 %v3499, 1
        %v3504 = vsel %vm3502, %v3503, %v3499
        %v3505 = vadd.s32 %v3500, %v3504
        %v3506 = vadd.s32 %v3505, 536870912
        %v3507 = vshrl.u32 %v3506, 30
        %v3508 = vshll.u32 %v3507, 30
        %v3509 = vsub.s32 %v3505, %v3508
        %vm3510 = vcmp.lt.s32.totalorder %v3509, 0
        %v3511 = vsub.s32 0, %v3509
        %v3512 = vsel %vm3510, %v3511, %v3509
        %v3513 = vclz %v3512
        %v3514 = vsub.s32 %v3513, 2
        %vm3515 = vcmp.gt.s32.totalorder 0, %v3514
        %v3516 = vsel %vm3515, 0, %v3514
        %v3517 = vsub.s32 32, %v3516
        %v3518 = vshll.u32 %v3509, %v3516
        %v3519 = vshrl.u32 %v3501, %v3517
        %v3520 = vor.u32 %v3518, %v3519
        %v3521 = vsub.s32 4294967266, %v3516
        %v3522 = vadd.s32 %v3521, 127
        %v3523 = vshll.u32 %v3522, 23
        %v3524 = vor.u32 4788187, %v3523
        %v3525 = vand.u32 2147483647, %v3524
        %v3527 = vcvt.s32.f32 %v3520
        %v3528 = vmul.f32 %v3527, %v3525
        %v3529 = vxor.u32 %v3528, 2147483648
        %v3530 = vsel %vm3447, %v3529, %v3528
        %v3531 = vsub.s32 4, %v3507
        %v3532 = vsel %vm3447, %v3531, %v3507
        %v3533 = vsel %vm3446, %v815, %v3530
        %v3534 = vsel %vm3446, 0, %v3532
        %v3535 = vcosq.f32.pop %v3533
        %v3536 = vsinq.f32.pop %v3533
        %vm3537 = vweird.f32 %v815
        %v3538 = vadd.s32 %v3534, 3
        %v3539 = vand.u32 %v3538, 3
        %vm3540 = vcmp.lt.s32.totalorder %v3539, 2
        %vm3541 = vcmp.eq.s32.totalorder %v3539, 0
        %v3542 = vxor.u32 %v3536, 2147483648
        %v3543 = vsel %vm3541, %v3535, %v3542
        %vm3544 = vcmp.eq.s32.totalorder %v3539, 2
        %v3545 = vxor.u32 %v3535, 2147483648
        %v3546 = vsel %vm3544, %v3545, %v3536
        %v3547 = vsel %vm3540, %v3543, %v3546
        %v3548 = vsel %vm3537, nan, %v3547
        %v3549 = vand.u32 2147483647, %v817
        %vm3550 = vcmp.le.f32.partialorder %v3549, 0.7853982
        %vm3551 = vcmp.lt.s32.totalorder %v817, 0
        %v3552 = vand.u32 %v817, 2139095040
        %v3553 = vshrl.u32 %v3552, 23
        %v3554 = vsub.s32 %v3553, 127
        %v3555 = vand.u32 2147483647, %v817
        %v3556 = vand.u32 %v3555, 8388607
        %v3557 = vor.u32 %v3556, 8388608
        %v3558 = vsub.s32 0, %v3557
        %v3559 = vadd.s32 %v3554, 1
        %vm3560 = vcmp.gt.s32.totalorder %v3559, 0
        %v3561 = vsel %vm3560, %v3559, 0
        %v3562 = vshrl.u32 %v3561, 5
        %v3563 = vand.u32 %v3561, 31
        %v3564 = vsub.s32 32, %v3563
        %v3565 = vshrl.u32 683565275, %v3564
        %v3566 = vshll.u32 683565275, %v3563
        %v3567 = vshrl.u32 2475754826, %v3564
        %v3568 = vor.u32 %v3566, %v3567
        %v3569 = vshll.u32 2475754826, %v3563
        %v3570 = vshrl.u32 2131351028, %v3564
        %v3571 = vor.u32 %v3569, %v3570
        %v3572 = vshll.u32 2131351028, %v3563
        %v3573 = vshrl.u32 2102212464, %v3564
        %v3574 = vor.u32 %v3572, %v3573
        %v3575 = vshll.u32 2102212464, %v3563
        %v3576 = vshrl.u32 920167782, %v3564
        %v3577 = vor.u32 %v3575, %v3576
        %v3578 = vshll.u32 920167782, %v3563
        %v3579 = vshrl.u32 1326507024, %v3564
        %v3580 = vor.u32 %v3578, %v3579
        %vm3581 = vcmp.lt.s32.totalorder %v3562, 1
        %vm3582 = vcmp.lt.s32.totalorder %v3562, 2
        %vm3583 = vcmp.lt.s32.totalorder %v3562, 3
        %vm3584 = vcmp.lt.s32.totalorder %v3562, 4
        %v3585 = vsel %vm3581, %v3565, %v3568
        %v3586 = vsel %vm3584, %v3574, 2102212464
        %v3587 = vsel %vm3583, %v3571, %v3586
        %v3588 = vsel %vm3582, %v3585, %v3587
        %v3589 = vsel %vm3581, %v3568, %v3571
        %v3590 = vsel %vm3584, %v3577, 920167782
        %v3591 = vsel %vm3583, %v3574, %v3590
        %v3592 = vsel %vm3582, %v3589, %v3591
        %v3593 = vsel %vm3581, %v3571, %v3574
        %v3594 = vsel %vm3584, %v3580, 1326507024
        %v3595 = vsel %vm3583, %v3577, %v3594
        %v3596 = vsel %vm3582, %v3593, %v3595
        %v3597 = vshll.u32 %v3557, 8
        %v3598 = vmul.u32.u64.compose %v3597, %v3596
        %v3599 = vextract.low.u32 %v3598
        %v3600 = vextract.high.u32 %v3598
        %v3601 = vmul.u32.u64.compose %v3597, %v3592
        %v3602 = vextract.low.u32 %v3601
        %v3603 = vextract.high.u32 %v3601
        %v3604 = vmul.u32 %v3597, %v3588
        %v3605 = vadd.s32 %v3600, %v3602
        %vm3606 = vc.u32 %v3600, %v3602
        %v3607 = vadd.s32 %v3603, 1
        %v3608 = vsel %vm3606, %v3607, %v3603
        %v3609 = vadd.s32 %v3604, %v3608
        %v3610 = vadd.s32 %v3609, 536870912
        %v3611 = vshrl.u32 %v3610, 30
        %v3612 = vshll.u32 %v3611, 30
        %v3613 = vsub.s32 %v3609, %v3612
        %vm3614 = vcmp.lt.s32.totalorder %v3613, 0
        %v3615 = vsub.s32 0, %v3613
        %v3616 = vsel %vm3614, %v3615, %v3613
        %v3617 = vclz %v3616
        %v3618 = vsub.s32 %v3617, 2
        %vm3619 = vcmp.gt.s32.totalorder 0, %v3618
        %v3620 = vsel %vm3619, 0, %v3618
        %v3621 = vsub.s32 32, %v3620
        %v3622 = vshll.u32 %v3613, %v3620
        %v3623 = vshrl.u32 %v3605, %v3621
        %v3624 = vor.u32 %v3622, %v3623
        %v3625 = vsub.s32 4294967266, %v3620
        %v3626 = vadd.s32 %v3625, 127
        %v3627 = vshll.u32 %v3626, 23
        %v3628 = vor.u32 4788187, %v3627
        %v3629 = vand.u32 2147483647, %v3628
        %v3631 = vcvt.s32.f32 %v3624
        %v3632 = vmul.f32 %v3631, %v3629
        %v3633 = vxor.u32 %v3632, 2147483648
        %v3634 = vsel %vm3551, %v3633, %v3632
        %v3635 = vsub.s32 4, %v3611
        %v3636 = vsel %vm3551, %v3635, %v3611
        %v3637 = vsel %vm3550, %v817, %v3634
        %v3638 = vsel %vm3550, 0, %v3636
        %v3639 = vcosq.f32.pop %v3637
        %v3640 = vsinq.f32.pop %v3637
        %vm3641 = vweird.f32 %v817
        %v3642 = vadd.s32 %v3638, 3
        %v3643 = vand.u32 %v3642, 3
        %vm3644 = vcmp.lt.s32.totalorder %v3643, 2
        %vm3645 = vcmp.eq.s32.totalorder %v3643, 0
        %v3646 = vxor.u32 %v3640, 2147483648
        %v3647 = vsel %vm3645, %v3639, %v3646
        %vm3648 = vcmp.eq.s32.totalorder %v3643, 2
        %v3649 = vxor.u32 %v3639, 2147483648
        %v3650 = vsel %vm3648, %v3649, %v3640
        %v3651 = vsel %vm3644, %v3647, %v3650
        %v3652 = vsel %vm3641, nan, %v3651
        %v3653 = vand.u32 2147483647, %v898
        %vm3654 = vcmp.le.f32.partialorder %v3653, 0.7853982
        %vm3655 = vcmp.lt.s32.totalorder %v898, 0
        %v3656 = vand.u32 %v898, 2139095040
        %v3657 = vshrl.u32 %v3656, 23
        %v3658 = vsub.s32 %v3657, 127
        %v3659 = vand.u32 2147483647, %v898
        %v3660 = vand.u32 %v3659, 8388607
        %v3661 = vor.u32 %v3660, 8388608
        %v3662 = vsub.s32 0, %v3661
        %v3663 = vadd.s32 %v3658, 1
        %vm3664 = vcmp.gt.s32.totalorder %v3663, 0
        %v3665 = vsel %vm3664, %v3663, 0
        %v3666 = vshrl.u32 %v3665, 5
        %v3667 = vand.u32 %v3665, 31
        %v3668 = vsub.s32 32, %v3667
        %v3669 = vshrl.u32 683565275, %v3668
        %v3670 = vshll.u32 683565275, %v3667
        %v3671 = vshrl.u32 2475754826, %v3668
        %v3672 = vor.u32 %v3670, %v3671
        %v3673 = vshll.u32 2475754826, %v3667
        %v3674 = vshrl.u32 2131351028, %v3668
        %v3675 = vor.u32 %v3673, %v3674
        %v3676 = vshll.u32 2131351028, %v3667
        %v3677 = vshrl.u32 2102212464, %v3668
        %v3678 = vor.u32 %v3676, %v3677
        %v3679 = vshll.u32 2102212464, %v3667
        %v3680 = vshrl.u32 920167782, %v3668
        %v3681 = vor.u32 %v3679, %v3680
        %v3682 = vshll.u32 920167782, %v3667
        %v3683 = vshrl.u32 1326507024, %v3668
        %v3684 = vor.u32 %v3682, %v3683
        %vm3685 = vcmp.lt.s32.totalorder %v3666, 1
        %vm3686 = vcmp.lt.s32.totalorder %v3666, 2
        %vm3687 = vcmp.lt.s32.totalorder %v3666, 3
        %vm3688 = vcmp.lt.s32.totalorder %v3666, 4
        %v3689 = vsel %vm3685, %v3669, %v3672
        %v3690 = vsel %vm3688, %v3678, 2102212464
        %v3691 = vsel %vm3687, %v3675, %v3690
        %v3692 = vsel %vm3686, %v3689, %v3691
        %v3693 = vsel %vm3685, %v3672, %v3675
        %v3694 = vsel %vm3688, %v3681, 920167782
        %v3695 = vsel %vm3687, %v3678, %v3694
        %v3696 = vsel %vm3686, %v3693, %v3695
        %v3697 = vsel %vm3685, %v3675, %v3678
        %v3698 = vsel %vm3688, %v3684, 1326507024
        %v3699 = vsel %vm3687, %v3681, %v3698
        %v3700 = vsel %vm3686, %v3697, %v3699
        %v3701 = vshll.u32 %v3661, 8
        %v3702 = vmul.u32.u64.compose %v3701, %v3700
        %v3703 = vextract.low.u32 %v3702
        %v3704 = vextract.high.u32 %v3702
        %v3705 = vmul.u32.u64.compose %v3701, %v3696
        %v3706 = vextract.low.u32 %v3705
        %v3707 = vextract.high.u32 %v3705
        %v3708 = vmul.u32 %v3701, %v3692
        %v3709 = vadd.s32 %v3704, %v3706
        %vm3710 = vc.u32 %v3704, %v3706
        %v3711 = vadd.s32 %v3707, 1
        %v3712 = vsel %vm3710, %v3711, %v3707
        %v3713 = vadd.s32 %v3708, %v3712
        %v3714 = vadd.s32 %v3713, 536870912
        %v3715 = vshrl.u32 %v3714, 30
        %v3716 = vshll.u32 %v3715, 30
        %v3717 = vsub.s32 %v3713, %v3716
        %vm3718 = vcmp.lt.s32.totalorder %v3717, 0
        %v3719 = vsub.s32 0, %v3717
        %v3720 = vsel %vm3718, %v3719, %v3717
        %v3721 = vclz %v3720
        %v3722 = vsub.s32 %v3721, 2
        %vm3723 = vcmp.gt.s32.totalorder 0, %v3722
        %v3724 = vsel %vm3723, 0, %v3722
        %v3725 = vsub.s32 32, %v3724
        %v3726 = vshll.u32 %v3717, %v3724
        %v3727 = vshrl.u32 %v3709, %v3725
        %v3728 = vor.u32 %v3726, %v3727
        %v3729 = vsub.s32 4294967266, %v3724
        %v3730 = vadd.s32 %v3729, 127
        %v3731 = vshll.u32 %v3730, 23
        %v3732 = vor.u32 4788187, %v3731
        %v3733 = vand.u32 2147483647, %v3732
        %v3735 = vcvt.s32.f32 %v3728
        %v3736 = vmul.f32 %v3735, %v3733
        %v3737 = vxor.u32 %v3736, 2147483648
        %v3738 = vsel %vm3655, %v3737, %v3736
        %v3739 = vsub.s32 4, %v3715
        %v3740 = vsel %vm3655, %v3739, %v3715
        %v3741 = vsel %vm3654, %v898, %v3738
        %v3742 = vsel %vm3654, 0, %v3740
        %v3743 = vcosq.f32.pop %v3741
        %v3744 = vsinq.f32.pop %v3741
        %vm3745 = vweird.f32 %v898
        %v3746 = vadd.s32 %v3742, 3
        %v3747 = vand.u32 %v3746, 3
        %vm3748 = vcmp.lt.s32.totalorder %v3747, 2
        %vm3749 = vcmp.eq.s32.totalorder %v3747, 0
        %v3750 = vxor.u32 %v3744, 2147483648
        %v3751 = vsel %vm3749, %v3743, %v3750
        %vm3752 = vcmp.eq.s32.totalorder %v3747, 2
        %v3753 = vxor.u32 %v3743, 2147483648
        %v3754 = vsel %vm3752, %v3753, %v3744
        %v3755 = vsel %vm3748, %v3751, %v3754
        %v3756 = vsel %vm3745, nan, %v3755
        %v3757 = vand.u32 2147483647, %v900
        %vm3758 = vcmp.le.f32.partialorder %v3757, 0.7853982
        %vm3759 = vcmp.lt.s32.totalorder %v900, 0
        %v3760 = vand.u32 %v900, 2139095040
        %v3761 = vshrl.u32 %v3760, 23
        %v3762 = vsub.s32 %v3761, 127
        %v3763 = vand.u32 2147483647, %v900
        %v3764 = vand.u32 %v3763, 8388607
        %v3765 = vor.u32 %v3764, 8388608
        %v3766 = vsub.s32 0, %v3765
        %v3767 = vadd.s32 %v3762, 1
        %vm3768 = vcmp.gt.s32.totalorder %v3767, 0
        %v3769 = vsel %vm3768, %v3767, 0
        %v3770 = vshrl.u32 %v3769, 5
        %v3771 = vand.u32 %v3769, 31
        %v3772 = vsub.s32 32, %v3771
        %v3773 = vshrl.u32 683565275, %v3772
        %v3774 = vshll.u32 683565275, %v3771
        %v3775 = vshrl.u32 2475754826, %v3772
        %v3776 = vor.u32 %v3774, %v3775
        %v3777 = vshll.u32 2475754826, %v3771
        %v3778 = vshrl.u32 2131351028, %v3772
        %v3779 = vor.u32 %v3777, %v3778
        %v3780 = vshll.u32 2131351028, %v3771
        %v3781 = vshrl.u32 2102212464, %v3772
        %v3782 = vor.u32 %v3780, %v3781
        %v3783 = vshll.u32 2102212464, %v3771
        %v3784 = vshrl.u32 920167782, %v3772
        %v3785 = vor.u32 %v3783, %v3784
        %v3786 = vshll.u32 920167782, %v3771
        %v3787 = vshrl.u32 1326507024, %v3772
        %v3788 = vor.u32 %v3786, %v3787
        %vm3789 = vcmp.lt.s32.totalorder %v3770, 1
        %vm3790 = vcmp.lt.s32.totalorder %v3770, 2
        %vm3791 = vcmp.lt.s32.totalorder %v3770, 3
        %vm3792 = vcmp.lt.s32.totalorder %v3770, 4
        %v3793 = vsel %vm3789, %v3773, %v3776
        %v3794 = vsel %vm3792, %v3782, 2102212464
        %v3795 = vsel %vm3791, %v3779, %v3794
        %v3796 = vsel %vm3790, %v3793, %v3795
        %v3797 = vsel %vm3789, %v3776, %v3779
        %v3798 = vsel %vm3792, %v3785, 920167782
        %v3799 = vsel %vm3791, %v3782, %v3798
        %v3800 = vsel %vm3790, %v3797, %v3799
        %v3801 = vsel %vm3789, %v3779, %v3782
        %v3802 = vsel %vm3792, %v3788, 1326507024
        %v3803 = vsel %vm3791, %v3785, %v3802
        %v3804 = vsel %vm3790, %v3801, %v3803
        %v3805 = vshll.u32 %v3765, 8
        %v3806 = vmul.u32.u64.compose %v3805, %v3804
        %v3807 = vextract.low.u32 %v3806
        %v3808 = vextract.high.u32 %v3806
        %v3809 = vmul.u32.u64.compose %v3805, %v3800
        %v3810 = vextract.low.u32 %v3809
        %v3811 = vextract.high.u32 %v3809
        %v3812 = vmul.u32 %v3805, %v3796
        %v3813 = vadd.s32 %v3808, %v3810
        %vm3814 = vc.u32 %v3808, %v3810
        %v3815 = vadd.s32 %v3811, 1
        %v3816 = vsel %vm3814, %v3815, %v3811
        %v3817 = vadd.s32 %v3812, %v3816
        %v3818 = vadd.s32 %v3817, 536870912
        %v3819 = vshrl.u32 %v3818, 30
        %v3820 = vshll.u32 %v3819, 30
        %v3821 = vsub.s32 %v3817, %v3820
        %vm3822 = vcmp.lt.s32.totalorder %v3821, 0
        %v3823 = vsub.s32 0, %v3821
        %v3824 = vsel %vm3822, %v3823, %v3821
        %v3825 = vclz %v3824
        %v3826 = vsub.s32 %v3825, 2
        %vm3827 = vcmp.gt.s32.totalorder 0, %v3826
        %v3828 = vsel %vm3827, 0, %v3826
        %v3829 = vsub.s32 32, %v3828
        %v3830 = vshll.u32 %v3821, %v3828
        %v3831 = vshrl.u32 %v3813, %v3829
        %v3832 = vor.u32 %v3830, %v3831
        %v3833 = vsub.s32 4294967266, %v3828
        %v3834 = vadd.s32 %v3833, 127
        %v3835 = vshll.u32 %v3834, 23
        %v3836 = vor.u32 4788187, %v3835
        %v3837 = vand.u32 2147483647, %v3836
        %v3839 = vcvt.s32.f32 %v3832
        %v3840 = vmul.f32 %v3839, %v3837
        %v3841 = vxor.u32 %v3840, 2147483648
        %v3842 = vsel %vm3759, %v3841, %v3840
        %v3843 = vsub.s32 4, %v3819
        %v3844 = vsel %vm3759, %v3843, %v3819
        %v3845 = vsel %vm3758, %v900, %v3842
        %v3846 = vsel %vm3758, 0, %v3844
        %v3847 = vcosq.f32.pop %v3845
        %v3848 = vsinq.f32.pop %v3845
        %vm3849 = vweird.f32 %v900
        %v3850 = vadd.s32 %v3846, 3
        %v3851 = vand.u32 %v3850, 3
        %vm3852 = vcmp.lt.s32.totalorder %v3851, 2
        %vm3853 = vcmp.eq.s32.totalorder %v3851, 0
        %v3854 = vxor.u32 %v3848, 2147483648
        %v3855 = vsel %vm3853, %v3847, %v3854
        %vm3856 = vcmp.eq.s32.totalorder %v3851, 2
        %v3857 = vxor.u32 %v3847, 2147483648
        %v3858 = vsel %vm3856, %v3857, %v3848
        %v3859 = vsel %vm3852, %v3855, %v3858
        %v3860 = vsel %vm3849, nan, %v3859
        %v3861 = vand.u32 2147483647, %v981
        %vm3862 = vcmp.le.f32.partialorder %v3861, 0.7853982
        %vm3863 = vcmp.lt.s32.totalorder %v981, 0
        %v3864 = vand.u32 %v981, 2139095040
        %v3865 = vshrl.u32 %v3864, 23
        %v3866 = vsub.s32 %v3865, 127
        %v3867 = vand.u32 2147483647, %v981
        %v3868 = vand.u32 %v3867, 8388607
        %v3869 = vor.u32 %v3868, 8388608
        %v3870 = vsub.s32 0, %v3869
        %v3871 = vadd.s32 %v3866, 1
        %vm3872 = vcmp.gt.s32.totalorder %v3871, 0
        %v3873 = vsel %vm3872, %v3871, 0
        %v3874 = vshrl.u32 %v3873, 5
        %v3875 = vand.u32 %v3873, 31
        %v3876 = vsub.s32 32, %v3875
        %v3877 = vshrl.u32 683565275, %v3876
        %v3878 = vshll.u32 683565275, %v3875
        %v3879 = vshrl.u32 2475754826, %v3876
        %v3880 = vor.u32 %v3878, %v3879
        %v3881 = vshll.u32 2475754826, %v3875
        %v3882 = vshrl.u32 2131351028, %v3876
        %v3883 = vor.u32 %v3881, %v3882
        %v3884 = vshll.u32 2131351028, %v3875
        %v3885 = vshrl.u32 2102212464, %v3876
        %v3886 = vor.u32 %v3884, %v3885
        %v3887 = vshll.u32 2102212464, %v3875
        %v3888 = vshrl.u32 920167782, %v3876
        %v3889 = vor.u32 %v3887, %v3888
        %v3890 = vshll.u32 920167782, %v3875
        %v3891 = vshrl.u32 1326507024, %v3876
        %v3892 = vor.u32 %v3890, %v3891
        %vm3893 = vcmp.lt.s32.totalorder %v3874, 1
        %vm3894 = vcmp.lt.s32.totalorder %v3874, 2
        %vm3895 = vcmp.lt.s32.totalorder %v3874, 3
        %vm3896 = vcmp.lt.s32.totalorder %v3874, 4
        %v3897 = vsel %vm3893, %v3877, %v3880
        %v3898 = vsel %vm3896, %v3886, 2102212464
        %v3899 = vsel %vm3895, %v3883, %v3898
        %v3900 = vsel %vm3894, %v3897, %v3899
        %v3901 = vsel %vm3893, %v3880, %v3883
        %v3902 = vsel %vm3896, %v3889, 920167782
        %v3903 = vsel %vm3895, %v3886, %v3902
        %v3904 = vsel %vm3894, %v3901, %v3903
        %v3905 = vsel %vm3893, %v3883, %v3886
        %v3906 = vsel %vm3896, %v3892, 1326507024
        %v3907 = vsel %vm3895, %v3889, %v3906
        %v3908 = vsel %vm3894, %v3905, %v3907
        %v3909 = vshll.u32 %v3869, 8
        %v3910 = vmul.u32.u64.compose %v3909, %v3908
        %v3911 = vextract.low.u32 %v3910
        %v3912 = vextract.high.u32 %v3910
        %v3913 = vmul.u32.u64.compose %v3909, %v3904
        %v3914 = vextract.low.u32 %v3913
        %v3915 = vextract.high.u32 %v3913
        %v3916 = vmul.u32 %v3909, %v3900
        %v3917 = vadd.s32 %v3912, %v3914
        %vm3918 = vc.u32 %v3912, %v3914
        %v3919 = vadd.s32 %v3915, 1
        %v3920 = vsel %vm3918, %v3919, %v3915
        %v3921 = vadd.s32 %v3916, %v3920
        %v3922 = vadd.s32 %v3921, 536870912
        %v3923 = vshrl.u32 %v3922, 30
        %v3924 = vshll.u32 %v3923, 30
        %v3925 = vsub.s32 %v3921, %v3924
        %vm3926 = vcmp.lt.s32.totalorder %v3925, 0
        %v3927 = vsub.s32 0, %v3925
        %v3928 = vsel %vm3926, %v3927, %v3925
        %v3929 = vclz %v3928
        %v3930 = vsub.s32 %v3929, 2
        %vm3931 = vcmp.gt.s32.totalorder 0, %v3930
        %v3932 = vsel %vm3931, 0, %v3930
        %v3933 = vsub.s32 32, %v3932
        %v3934 = vshll.u32 %v3925, %v3932
        %v3935 = vshrl.u32 %v3917, %v3933
        %v3936 = vor.u32 %v3934, %v3935
        %v3937 = vsub.s32 4294967266, %v3932
        %v3938 = vadd.s32 %v3937, 127
        %v3939 = vshll.u32 %v3938, 23
        %v3940 = vor.u32 4788187, %v3939
        %v3941 = vand.u32 2147483647, %v3940
        %v3943 = vcvt.s32.f32 %v3936
        %v3944 = vmul.f32 %v3943, %v3941
        %v3945 = vxor.u32 %v3944, 2147483648
        %v3946 = vsel %vm3863, %v3945, %v3944
        %v3947 = vsub.s32 4, %v3923
        %v3948 = vsel %vm3863, %v3947, %v3923
        %v3949 = vsel %vm3862, %v981, %v3946
        %v3950 = vsel %vm3862, 0, %v3948
        %v3951 = vcosq.f32.pop %v3949
        %v3952 = vsinq.f32.pop %v3949
        %vm3953 = vweird.f32 %v981
        %v3954 = vadd.s32 %v3950, 3
        %v3955 = vand.u32 %v3954, 3
        %vm3956 = vcmp.lt.s32.totalorder %v3955, 2
        %vm3957 = vcmp.eq.s32.totalorder %v3955, 0
        %v3958 = vxor.u32 %v3952, 2147483648
        %v3959 = vsel %vm3957, %v3951, %v3958
        %vm3960 = vcmp.eq.s32.totalorder %v3955, 2
        %v3961 = vxor.u32 %v3951, 2147483648
        %v3962 = vsel %vm3960, %v3961, %v3952
        %v3963 = vsel %vm3956, %v3959, %v3962
        %v3964 = vsel %vm3953, nan, %v3963
        %v3965 = vand.u32 2147483647, %v983
        %vm3966 = vcmp.le.f32.partialorder %v3965, 0.7853982
        %vm3967 = vcmp.lt.s32.totalorder %v983, 0
        %v3968 = vand.u32 %v983, 2139095040
        %v3969 = vshrl.u32 %v3968, 23
        %v3970 = vsub.s32 %v3969, 127
        %v3971 = vand.u32 2147483647, %v983
        %v3972 = vand.u32 %v3971, 8388607
        %v3973 = vor.u32 %v3972, 8388608
        %v3974 = vsub.s32 0, %v3973
        %v3975 = vadd.s32 %v3970, 1
        %vm3976 = vcmp.gt.s32.totalorder %v3975, 0
        %v3977 = vsel %vm3976, %v3975, 0
        %v3978 = vshrl.u32 %v3977, 5
        %v3979 = vand.u32 %v3977, 31
        %v3980 = vsub.s32 32, %v3979
        %v3981 = vshrl.u32 683565275, %v3980
        %v3982 = vshll.u32 683565275, %v3979
        %v3983 = vshrl.u32 2475754826, %v3980
        %v3984 = vor.u32 %v3982, %v3983
        %v3985 = vshll.u32 2475754826, %v3979
        %v3986 = vshrl.u32 2131351028, %v3980
        %v3987 = vor.u32 %v3985, %v3986
        %v3988 = vshll.u32 2131351028, %v3979
        %v3989 = vshrl.u32 2102212464, %v3980
        %v3990 = vor.u32 %v3988, %v3989
        %v3991 = vshll.u32 2102212464, %v3979
        %v3992 = vshrl.u32 920167782, %v3980
        %v3993 = vor.u32 %v3991, %v3992
        %v3994 = vshll.u32 920167782, %v3979
        %v3995 = vshrl.u32 1326507024, %v3980
        %v3996 = vor.u32 %v3994, %v3995
        %vm3997 = vcmp.lt.s32.totalorder %v3978, 1
        %vm3998 = vcmp.lt.s32.totalorder %v3978, 2
        %vm3999 = vcmp.lt.s32.totalorder %v3978, 3
        %vm4000 = vcmp.lt.s32.totalorder %v3978, 4
        %v4001 = vsel %vm3997, %v3981, %v3984
        %v4002 = vsel %vm4000, %v3990, 2102212464
        %v4003 = vsel %vm3999, %v3987, %v4002
        %v4004 = vsel %vm3998, %v4001, %v4003
        %v4005 = vsel %vm3997, %v3984, %v3987
        %v4006 = vsel %vm4000, %v3993, 920167782
        %v4007 = vsel %vm3999, %v3990, %v4006
        %v4008 = vsel %vm3998, %v4005, %v4007
        %v4009 = vsel %vm3997, %v3987, %v3990
        %v4010 = vsel %vm4000, %v3996, 1326507024
        %v4011 = vsel %vm3999, %v3993, %v4010
        %v4012 = vsel %vm3998, %v4009, %v4011
        %v4013 = vshll.u32 %v3973, 8
        %v4014 = vmul.u32.u64.compose %v4013, %v4012
        %v4015 = vextract.low.u32 %v4014
        %v4016 = vextract.high.u32 %v4014
        %v4017 = vmul.u32.u64.compose %v4013, %v4008
        %v4018 = vextract.low.u32 %v4017
        %v4019 = vextract.high.u32 %v4017
        %v4020 = vmul.u32 %v4013, %v4004
        %v4021 = vadd.s32 %v4016, %v4018
        %vm4022 = vc.u32 %v4016, %v4018
        %v4023 = vadd.s32 %v4019, 1
        %v4024 = vsel %vm4022, %v4023, %v4019
        %v4025 = vadd.s32 %v4020, %v4024
        %v4026 = vadd.s32 %v4025, 536870912
        %v4027 = vshrl.u32 %v4026, 30
        %v4028 = vshll.u32 %v4027, 30
        %v4029 = vsub.s32 %v4025, %v4028
        %vm4030 = vcmp.lt.s32.totalorder %v4029, 0
        %v4031 = vsub.s32 0, %v4029
        %v4032 = vsel %vm4030, %v4031, %v4029
        %v4033 = vclz %v4032
        %v4034 = vsub.s32 %v4033, 2
        %vm4035 = vcmp.gt.s32.totalorder 0, %v4034
        %v4036 = vsel %vm4035, 0, %v4034
        %v4037 = vsub.s32 32, %v4036
        %v4038 = vshll.u32 %v4029, %v4036
        %v4039 = vshrl.u32 %v4021, %v4037
        %v4040 = vor.u32 %v4038, %v4039
        %v4041 = vsub.s32 4294967266, %v4036
        %v4042 = vadd.s32 %v4041, 127
        %v4043 = vshll.u32 %v4042, 23
        %v4044 = vor.u32 4788187, %v4043
        %v4045 = vand.u32 2147483647, %v4044
        %v4047 = vcvt.s32.f32 %v4040
        %v4048 = vmul.f32 %v4047, %v4045
        %v4049 = vxor.u32 %v4048, 2147483648
        %v4050 = vsel %vm3967, %v4049, %v4048
        %v4051 = vsub.s32 4, %v4027
        %v4052 = vsel %vm3967, %v4051, %v4027
        %v4053 = vsel %vm3966, %v983, %v4050
        %v4054 = vsel %vm3966, 0, %v4052
        %v4055 = vcosq.f32.pop %v4053
        %v4056 = vsinq.f32.pop %v4053
        %vm4057 = vweird.f32 %v983
        %v4058 = vadd.s32 %v4054, 3
        %v4059 = vand.u32 %v4058, 3
        %vm4060 = vcmp.lt.s32.totalorder %v4059, 2
        %vm4061 = vcmp.eq.s32.totalorder %v4059, 0
        %v4062 = vxor.u32 %v4056, 2147483648
        %v4063 = vsel %vm4061, %v4055, %v4062
        %vm4064 = vcmp.eq.s32.totalorder %v4059, 2
        %v4065 = vxor.u32 %v4055, 2147483648
        %v4066 = vsel %vm4064, %v4065, %v4056
        %v4067 = vsel %vm4060, %v4063, %v4066
        %v4068 = vsel %vm4057, nan, %v4067
        %v4069 = vand.u32 2147483647, %v1064
        %vm4070 = vcmp.le.f32.partialorder %v4069, 0.7853982
        %vm4071 = vcmp.lt.s32.totalorder %v1064, 0
        %v4072 = vand.u32 %v1064, 2139095040
        %v4073 = vshrl.u32 %v4072, 23
        %v4074 = vsub.s32 %v4073, 127
        %v4075 = vand.u32 2147483647, %v1064
        %v4076 = vand.u32 %v4075, 8388607
        %v4077 = vor.u32 %v4076, 8388608
        %v4078 = vsub.s32 0, %v4077
        %v4079 = vadd.s32 %v4074, 1
        %vm4080 = vcmp.gt.s32.totalorder %v4079, 0
        %v4081 = vsel %vm4080, %v4079, 0
        %v4082 = vshrl.u32 %v4081, 5
        %v4083 = vand.u32 %v4081, 31
        %v4084 = vsub.s32 32, %v4083
        %v4085 = vshrl.u32 683565275, %v4084
        %v4086 = vshll.u32 683565275, %v4083
        %v4087 = vshrl.u32 2475754826, %v4084
        %v4088 = vor.u32 %v4086, %v4087
        %v4089 = vshll.u32 2475754826, %v4083
        %v4090 = vshrl.u32 2131351028, %v4084
        %v4091 = vor.u32 %v4089, %v4090
        %v4092 = vshll.u32 2131351028, %v4083
        %v4093 = vshrl.u32 2102212464, %v4084
        %v4094 = vor.u32 %v4092, %v4093
        %v4095 = vshll.u32 2102212464, %v4083
        %v4096 = vshrl.u32 920167782, %v4084
        %v4097 = vor.u32 %v4095, %v4096
        %v4098 = vshll.u32 920167782, %v4083
        %v4099 = vshrl.u32 1326507024, %v4084
        %v4100 = vor.u32 %v4098, %v4099
        %vm4101 = vcmp.lt.s32.totalorder %v4082, 1
        %vm4102 = vcmp.lt.s32.totalorder %v4082, 2
        %vm4103 = vcmp.lt.s32.totalorder %v4082, 3
        %vm4104 = vcmp.lt.s32.totalorder %v4082, 4
        %v4105 = vsel %vm4101, %v4085, %v4088
        %v4106 = vsel %vm4104, %v4094, 2102212464
        %v4107 = vsel %vm4103, %v4091, %v4106
        %v4108 = vsel %vm4102, %v4105, %v4107
        %v4109 = vsel %vm4101, %v4088, %v4091
        %v4110 = vsel %vm4104, %v4097, 920167782
        %v4111 = vsel %vm4103, %v4094, %v4110
        %v4112 = vsel %vm4102, %v4109, %v4111
        %v4113 = vsel %vm4101, %v4091, %v4094
        %v4114 = vsel %vm4104, %v4100, 1326507024
        %v4115 = vsel %vm4103, %v4097, %v4114
        %v4116 = vsel %vm4102, %v4113, %v4115
        %v4117 = vshll.u32 %v4077, 8
        %v4118 = vmul.u32.u64.compose %v4117, %v4116
        %v4119 = vextract.low.u32 %v4118
        %v4120 = vextract.high.u32 %v4118
        %v4121 = vmul.u32.u64.compose %v4117, %v4112
        %v4122 = vextract.low.u32 %v4121
        %v4123 = vextract.high.u32 %v4121
        %v4124 = vmul.u32 %v4117, %v4108
        %v4125 = vadd.s32 %v4120, %v4122
        %vm4126 = vc.u32 %v4120, %v4122
        %v4127 = vadd.s32 %v4123, 1
        %v4128 = vsel %vm4126, %v4127, %v4123
        %v4129 = vadd.s32 %v4124, %v4128
        %v4130 = vadd.s32 %v4129, 536870912
        %v4131 = vshrl.u32 %v4130, 30
        %v4132 = vshll.u32 %v4131, 30
        %v4133 = vsub.s32 %v4129, %v4132
        %vm4134 = vcmp.lt.s32.totalorder %v4133, 0
        %v4135 = vsub.s32 0, %v4133
        %v4136 = vsel %vm4134, %v4135, %v4133
        %v4137 = vclz %v4136
        %v4138 = vsub.s32 %v4137, 2
        %vm4139 = vcmp.gt.s32.totalorder 0, %v4138
        %v4140 = vsel %vm4139, 0, %v4138
        %v4141 = vsub.s32 32, %v4140
        %v4142 = vshll.u32 %v4133, %v4140
        %v4143 = vshrl.u32 %v4125, %v4141
        %v4144 = vor.u32 %v4142, %v4143
        %v4145 = vsub.s32 4294967266, %v4140
        %v4146 = vadd.s32 %v4145, 127
        %v4147 = vshll.u32 %v4146, 23
        %v4148 = vor.u32 4788187, %v4147
        %v4149 = vand.u32 2147483647, %v4148
        %v4151 = vcvt.s32.f32 %v4144
        %v4152 = vmul.f32 %v4151, %v4149
        %v4153 = vxor.u32 %v4152, 2147483648
        %v4154 = vsel %vm4071, %v4153, %v4152
        %v4155 = vsub.s32 4, %v4131
        %v4156 = vsel %vm4071, %v4155, %v4131
        %v4157 = vsel %vm4070, %v1064, %v4154
        %v4158 = vsel %vm4070, 0, %v4156
        %v4159 = vcosq.f32.pop %v4157
        %v4160 = vsinq.f32.pop %v4157
        %vm4161 = vweird.f32 %v1064
        %v4162 = vadd.s32 %v4158, 3
        %v4163 = vand.u32 %v4162, 3
        %vm4164 = vcmp.lt.s32.totalorder %v4163, 2
        %vm4165 = vcmp.eq.s32.totalorder %v4163, 0
        %v4166 = vxor.u32 %v4160, 2147483648
        %v4167 = vsel %vm4165, %v4159, %v4166
        %vm4168 = vcmp.eq.s32.totalorder %v4163, 2
        %v4169 = vxor.u32 %v4159, 2147483648
        %v4170 = vsel %vm4168, %v4169, %v4160
        %v4171 = vsel %vm4164, %v4167, %v4170
        %v4172 = vsel %vm4161, nan, %v4171
        %v4173 = vand.u32 2147483647, %v1066
        %vm4174 = vcmp.le.f32.partialorder %v4173, 0.7853982
        %vm4175 = vcmp.lt.s32.totalorder %v1066, 0
        %v4176 = vand.u32 %v1066, 2139095040
        %v4177 = vshrl.u32 %v4176, 23
        %v4178 = vsub.s32 %v4177, 127
        %v4179 = vand.u32 2147483647, %v1066
        %v4180 = vand.u32 %v4179, 8388607
        %v4181 = vor.u32 %v4180, 8388608
        %v4182 = vsub.s32 0, %v4181
        %v4183 = vadd.s32 %v4178, 1
        %vm4184 = vcmp.gt.s32.totalorder %v4183, 0
        %v4185 = vsel %vm4184, %v4183, 0
        %v4186 = vshrl.u32 %v4185, 5
        %v4187 = vand.u32 %v4185, 31
        %v4188 = vsub.s32 32, %v4187
        %v4189 = vshrl.u32 683565275, %v4188
        %v4190 = vshll.u32 683565275, %v4187
        %v4191 = vshrl.u32 2475754826, %v4188
        %v4192 = vor.u32 %v4190, %v4191
        %v4193 = vshll.u32 2475754826, %v4187
        %v4194 = vshrl.u32 2131351028, %v4188
        %v4195 = vor.u32 %v4193, %v4194
        %v4196 = vshll.u32 2131351028, %v4187
        %v4197 = vshrl.u32 2102212464, %v4188
        %v4198 = vor.u32 %v4196, %v4197
        %v4199 = vshll.u32 2102212464, %v4187
        %v4200 = vshrl.u32 920167782, %v4188
        %v4201 = vor.u32 %v4199, %v4200
        %v4202 = vshll.u32 920167782, %v4187
        %v4203 = vshrl.u32 1326507024, %v4188
        %v4204 = vor.u32 %v4202, %v4203
        %vm4205 = vcmp.lt.s32.totalorder %v4186, 1
        %vm4206 = vcmp.lt.s32.totalorder %v4186, 2
        %vm4207 = vcmp.lt.s32.totalorder %v4186, 3
        %vm4208 = vcmp.lt.s32.totalorder %v4186, 4
        %v4209 = vsel %vm4205, %v4189, %v4192
        %v4210 = vsel %vm4208, %v4198, 2102212464
        %v4211 = vsel %vm4207, %v4195, %v4210
        %v4212 = vsel %vm4206, %v4209, %v4211
        %v4213 = vsel %vm4205, %v4192, %v4195
        %v4214 = vsel %vm4208, %v4201, 920167782
        %v4215 = vsel %vm4207, %v4198, %v4214
        %v4216 = vsel %vm4206, %v4213, %v4215
        %v4217 = vsel %vm4205, %v4195, %v4198
        %v4218 = vsel %vm4208, %v4204, 1326507024
        %v4219 = vsel %vm4207, %v4201, %v4218
        %v4220 = vsel %vm4206, %v4217, %v4219
        %v4221 = vshll.u32 %v4181, 8
        %v4222 = vmul.u32.u64.compose %v4221, %v4220
        %v4223 = vextract.low.u32 %v4222
        %v4224 = vextract.high.u32 %v4222
        %v4225 = vmul.u32.u64.compose %v4221, %v4216
        %v4226 = vextract.low.u32 %v4225
        %v4227 = vextract.high.u32 %v4225
        %v4228 = vmul.u32 %v4221, %v4212
        %v4229 = vadd.s32 %v4224, %v4226
        %vm4230 = vc.u32 %v4224, %v4226
        %v4231 = vadd.s32 %v4227, 1
        %v4232 = vsel %vm4230, %v4231, %v4227
        %v4233 = vadd.s32 %v4228, %v4232
        %v4234 = vadd.s32 %v4233, 536870912
        %v4235 = vshrl.u32 %v4234, 30
        %v4236 = vshll.u32 %v4235, 30
        %v4237 = vsub.s32 %v4233, %v4236
        %vm4238 = vcmp.lt.s32.totalorder %v4237, 0
        %v4239 = vsub.s32 0, %v4237
        %v4240 = vsel %vm4238, %v4239, %v4237
        %v4241 = vclz %v4240
        %v4242 = vsub.s32 %v4241, 2
        %vm4243 = vcmp.gt.s32.totalorder 0, %v4242
        %v4244 = vsel %vm4243, 0, %v4242
        %v4245 = vsub.s32 32, %v4244
        %v4246 = vshll.u32 %v4237, %v4244
        %v4247 = vshrl.u32 %v4229, %v4245
        %v4248 = vor.u32 %v4246, %v4247
        %v4249 = vsub.s32 4294967266, %v4244
        %v4250 = vadd.s32 %v4249, 127
        %v4251 = vshll.u32 %v4250, 23
        %v4252 = vor.u32 4788187, %v4251
        %v4253 = vand.u32 2147483647, %v4252
        %v4255 = vcvt.s32.f32 %v4248
        %v4256 = vmul.f32 %v4255, %v4253
        %v4257 = vxor.u32 %v4256, 2147483648
        %v4258 = vsel %vm4175, %v4257, %v4256
        %v4259 = vsub.s32 4, %v4235
        %v4260 = vsel %vm4175, %v4259, %v4235
        %v4261 = vsel %vm4174, %v1066, %v4258
        %v4262 = vsel %vm4174, 0, %v4260
        %v4263 = vcosq.f32.pop %v4261
        %v4264 = vsinq.f32.pop %v4261
        %vm4265 = vweird.f32 %v1066
        %v4266 = vadd.s32 %v4262, 3
        %v4267 = vand.u32 %v4266, 3
        %vm4268 = vcmp.lt.s32.totalorder %v4267, 2
        %vm4269 = vcmp.eq.s32.totalorder %v4267, 0
        %v4270 = vxor.u32 %v4264, 2147483648
        %v4271 = vsel %vm4269, %v4263, %v4270
        %vm4272 = vcmp.eq.s32.totalorder %v4267, 2
        %v4273 = vxor.u32 %v4263, 2147483648
        %v4274 = vsel %vm4272, %v4273, %v4264
        %v4275 = vsel %vm4268, %v4271, %v4274
        %v4276 = vsel %vm4265, nan, %v4275
        %v4277 = vand.u32 2147483647, %v1147
        %vm4278 = vcmp.le.f32.partialorder %v4277, 0.7853982
        %vm4279 = vcmp.lt.s32.totalorder %v1147, 0
        %v4280 = vand.u32 %v1147, 2139095040
        %v4281 = vshrl.u32 %v4280, 23
        %v4282 = vsub.s32 %v4281, 127
        %v4283 = vand.u32 2147483647, %v1147
        %v4284 = vand.u32 %v4283, 8388607
        %v4285 = vor.u32 %v4284, 8388608
        %v4286 = vsub.s32 0, %v4285
        %v4287 = vadd.s32 %v4282, 1
        %vm4288 = vcmp.gt.s32.totalorder %v4287, 0
        %v4289 = vsel %vm4288, %v4287, 0
        %v4290 = vshrl.u32 %v4289, 5
        %v4291 = vand.u32 %v4289, 31
        %v4292 = vsub.s32 32, %v4291
        %v4293 = vshrl.u32 683565275, %v4292
        %v4294 = vshll.u32 683565275, %v4291
        %v4295 = vshrl.u32 2475754826, %v4292
        %v4296 = vor.u32 %v4294, %v4295
        %v4297 = vshll.u32 2475754826, %v4291
        %v4298 = vshrl.u32 2131351028, %v4292
        %v4299 = vor.u32 %v4297, %v4298
        %v4300 = vshll.u32 2131351028, %v4291
        %v4301 = vshrl.u32 2102212464, %v4292
        %v4302 = vor.u32 %v4300, %v4301
        %v4303 = vshll.u32 2102212464, %v4291
        %v4304 = vshrl.u32 920167782, %v4292
        %v4305 = vor.u32 %v4303, %v4304
        %v4306 = vshll.u32 920167782, %v4291
        %v4307 = vshrl.u32 1326507024, %v4292
        %v4308 = vor.u32 %v4306, %v4307
        %vm4309 = vcmp.lt.s32.totalorder %v4290, 1
        %vm4310 = vcmp.lt.s32.totalorder %v4290, 2
        %vm4311 = vcmp.lt.s32.totalorder %v4290, 3
        %vm4312 = vcmp.lt.s32.totalorder %v4290, 4
        %v4313 = vsel %vm4309, %v4293, %v4296
        %v4314 = vsel %vm4312, %v4302, 2102212464
        %v4315 = vsel %vm4311, %v4299, %v4314
        %v4316 = vsel %vm4310, %v4313, %v4315
        %v4317 = vsel %vm4309, %v4296, %v4299
        %v4318 = vsel %vm4312, %v4305, 920167782
        %v4319 = vsel %vm4311, %v4302, %v4318
        %v4320 = vsel %vm4310, %v4317, %v4319
        %v4321 = vsel %vm4309, %v4299, %v4302
        %v4322 = vsel %vm4312, %v4308, 1326507024
        %v4323 = vsel %vm4311, %v4305, %v4322
        %v4324 = vsel %vm4310, %v4321, %v4323
        %v4325 = vshll.u32 %v4285, 8
        %v4326 = vmul.u32.u64.compose %v4325, %v4324
        %v4327 = vextract.low.u32 %v4326
        %v4328 = vextract.high.u32 %v4326
        %v4329 = vmul.u32.u64.compose %v4325, %v4320
        %v4330 = vextract.low.u32 %v4329
        %v4331 = vextract.high.u32 %v4329
        %v4332 = vmul.u32 %v4325, %v4316
        %v4333 = vadd.s32 %v4328, %v4330
        %vm4334 = vc.u32 %v4328, %v4330
        %v4335 = vadd.s32 %v4331, 1
        %v4336 = vsel %vm4334, %v4335, %v4331
        %v4337 = vadd.s32 %v4332, %v4336
        %v4338 = vadd.s32 %v4337, 536870912
        %v4339 = vshrl.u32 %v4338, 30
        %v4340 = vshll.u32 %v4339, 30
        %v4341 = vsub.s32 %v4337, %v4340
        %vm4342 = vcmp.lt.s32.totalorder %v4341, 0
        %v4343 = vsub.s32 0, %v4341
        %v4344 = vsel %vm4342, %v4343, %v4341
        %v4345 = vclz %v4344
        %v4346 = vsub.s32 %v4345, 2
        %vm4347 = vcmp.gt.s32.totalorder 0, %v4346
        %v4348 = vsel %vm4347, 0, %v4346
        %v4349 = vsub.s32 32, %v4348
        %v4350 = vshll.u32 %v4341, %v4348
        %v4351 = vshrl.u32 %v4333, %v4349
        %v4352 = vor.u32 %v4350, %v4351
        %v4353 = vsub.s32 4294967266, %v4348
        %v4354 = vadd.s32 %v4353, 127
        %v4355 = vshll.u32 %v4354, 23
        %v4356 = vor.u32 4788187, %v4355
        %v4357 = vand.u32 2147483647, %v4356
        %v4359 = vcvt.s32.f32 %v4352
        %v4360 = vmul.f32 %v4359, %v4357
        %v4361 = vxor.u32 %v4360, 2147483648
        %v4362 = vsel %vm4279, %v4361, %v4360
        %v4363 = vsub.s32 4, %v4339
        %v4364 = vsel %vm4279, %v4363, %v4339
        %v4365 = vsel %vm4278, %v1147, %v4362
        %v4366 = vsel %vm4278, 0, %v4364
        %v4367 = vcosq.f32.pop %v4365
        %v4368 = vsinq.f32.pop %v4365
        %vm4369 = vweird.f32 %v1147
        %v4370 = vadd.s32 %v4366, 3
        %v4371 = vand.u32 %v4370, 3
        %vm4372 = vcmp.lt.s32.totalorder %v4371, 2
        %vm4373 = vcmp.eq.s32.totalorder %v4371, 0
        %v4374 = vxor.u32 %v4368, 2147483648
        %v4375 = vsel %vm4373, %v4367, %v4374
        %vm4376 = vcmp.eq.s32.totalorder %v4371, 2
        %v4377 = vxor.u32 %v4367, 2147483648
        %v4378 = vsel %vm4376, %v4377, %v4368
        %v4379 = vsel %vm4372, %v4375, %v4378
        %v4380 = vsel %vm4369, nan, %v4379
        %v4381 = vand.u32 2147483647, %v1149
        %vm4382 = vcmp.le.f32.partialorder %v4381, 0.7853982
        %vm4383 = vcmp.lt.s32.totalorder %v1149, 0
        %v4384 = vand.u32 %v1149, 2139095040
        %v4385 = vshrl.u32 %v4384, 23
        %v4386 = vsub.s32 %v4385, 127
        %v4387 = vand.u32 2147483647, %v1149
        %v4388 = vand.u32 %v4387, 8388607
        %v4389 = vor.u32 %v4388, 8388608
        %v4390 = vsub.s32 0, %v4389
        %v4391 = vadd.s32 %v4386, 1
        %vm4392 = vcmp.gt.s32.totalorder %v4391, 0
        %v4393 = vsel %vm4392, %v4391, 0
        %v4394 = vshrl.u32 %v4393, 5
        %v4395 = vand.u32 %v4393, 31
        %v4396 = vsub.s32 32, %v4395
        %v4397 = vshrl.u32 683565275, %v4396
        %v4398 = vshll.u32 683565275, %v4395
        %v4399 = vshrl.u32 2475754826, %v4396
        %v4400 = vor.u32 %v4398, %v4399
        %v4401 = vshll.u32 2475754826, %v4395
        %v4402 = vshrl.u32 2131351028, %v4396
        %v4403 = vor.u32 %v4401, %v4402
        %v4404 = vshll.u32 2131351028, %v4395
        %v4405 = vshrl.u32 2102212464, %v4396
        %v4406 = vor.u32 %v4404, %v4405
        %v4407 = vshll.u32 2102212464, %v4395
        %v4408 = vshrl.u32 920167782, %v4396
        %v4409 = vor.u32 %v4407, %v4408
        %v4410 = vshll.u32 920167782, %v4395
        %v4411 = vshrl.u32 1326507024, %v4396
        %v4412 = vor.u32 %v4410, %v4411
        %vm4413 = vcmp.lt.s32.totalorder %v4394, 1
        %vm4414 = vcmp.lt.s32.totalorder %v4394, 2
        %vm4415 = vcmp.lt.s32.totalorder %v4394, 3
        %vm4416 = vcmp.lt.s32.totalorder %v4394, 4
        %v4417 = vsel %vm4413, %v4397, %v4400
        %v4418 = vsel %vm4416, %v4406, 2102212464
        %v4419 = vsel %vm4415, %v4403, %v4418
        %v4420 = vsel %vm4414, %v4417, %v4419
        %v4421 = vsel %vm4413, %v4400, %v4403
        %v4422 = vsel %vm4416, %v4409, 920167782
        %v4423 = vsel %vm4415, %v4406, %v4422
        %v4424 = vsel %vm4414, %v4421, %v4423
        %v4425 = vsel %vm4413, %v4403, %v4406
        %v4426 = vsel %vm4416, %v4412, 1326507024
        %v4427 = vsel %vm4415, %v4409, %v4426
        %v4428 = vsel %vm4414, %v4425, %v4427
        %v4429 = vshll.u32 %v4389, 8
        %v4430 = vmul.u32.u64.compose %v4429, %v4428
        %v4431 = vextract.low.u32 %v4430
        %v4432 = vextract.high.u32 %v4430
        %v4433 = vmul.u32.u64.compose %v4429, %v4424
        %v4434 = vextract.low.u32 %v4433
        %v4435 = vextract.high.u32 %v4433
        %v4436 = vmul.u32 %v4429, %v4420
        %v4437 = vadd.s32 %v4432, %v4434
        %vm4438 = vc.u32 %v4432, %v4434
        %v4439 = vadd.s32 %v4435, 1
        %v4440 = vsel %vm4438, %v4439, %v4435
        %v4441 = vadd.s32 %v4436, %v4440
        %v4442 = vadd.s32 %v4441, 536870912
        %v4443 = vshrl.u32 %v4442, 30
        %v4444 = vshll.u32 %v4443, 30
        %v4445 = vsub.s32 %v4441, %v4444
        %vm4446 = vcmp.lt.s32.totalorder %v4445, 0
        %v4447 = vsub.s32 0, %v4445
        %v4448 = vsel %vm4446, %v4447, %v4445
        %v4449 = vclz %v4448
        %v4450 = vsub.s32 %v4449, 2
        %vm4451 = vcmp.gt.s32.totalorder 0, %v4450
        %v4452 = vsel %vm4451, 0, %v4450
        %v4453 = vsub.s32 32, %v4452
        %v4454 = vshll.u32 %v4445, %v4452
        %v4455 = vshrl.u32 %v4437, %v4453
        %v4456 = vor.u32 %v4454, %v4455
        %v4457 = vsub.s32 4294967266, %v4452
        %v4458 = vadd.s32 %v4457, 127
        %v4459 = vshll.u32 %v4458, 23
        %v4460 = vor.u32 4788187, %v4459
        %v4461 = vand.u32 2147483647, %v4460
        %v4463 = vcvt.s32.f32 %v4456
        %v4464 = vmul.f32 %v4463, %v4461
        %v4465 = vxor.u32 %v4464, 2147483648
        %v4466 = vsel %vm4383, %v4465, %v4464
        %v4467 = vsub.s32 4, %v4443
        %v4468 = vsel %vm4383, %v4467, %v4443
        %v4469 = vsel %vm4382, %v1149, %v4466
        %v4470 = vsel %vm4382, 0, %v4468
        %v4471 = vcosq.f32.pop %v4469
        %v4472 = vsinq.f32.pop %v4469
        %vm4473 = vweird.f32 %v1149
        %v4474 = vadd.s32 %v4470, 3
        %v4475 = vand.u32 %v4474, 3
        %vm4476 = vcmp.lt.s32.totalorder %v4475, 2
        %vm4477 = vcmp.eq.s32.totalorder %v4475, 0
        %v4478 = vxor.u32 %v4472, 2147483648
        %v4479 = vsel %vm4477, %v4471, %v4478
        %vm4480 = vcmp.eq.s32.totalorder %v4475, 2
        %v4481 = vxor.u32 %v4471, 2147483648
        %v4482 = vsel %vm4480, %v4481, %v4472
        %v4483 = vsel %vm4476, %v4479, %v4482
        %v4484 = vsel %vm4473, nan, %v4483
        %v4485 = vand.u32 2147483647, %v572
        %vm4486 = vcmp.le.f32.partialorder %v4485, 0.7853982
        %vm4487 = vcmp.lt.s32.totalorder %v572, 0
        %v4488 = vand.u32 %v572, 2139095040
        %v4489 = vshrl.u32 %v4488, 23
        %v4490 = vsub.s32 %v4489, 127
        %v4491 = vand.u32 2147483647, %v572
        %v4492 = vand.u32 %v4491, 8388607
        %v4493 = vor.u32 %v4492, 8388608
        %v4494 = vsub.s32 0, %v4493
        %v4495 = vadd.s32 %v4490, 1
        %vm4496 = vcmp.gt.s32.totalorder %v4495, 0
        %v4497 = vsel %vm4496, %v4495, 0
        %v4498 = vshrl.u32 %v4497, 5
        %v4499 = vand.u32 %v4497, 31
        %v4500 = vsub.s32 32, %v4499
        %v4501 = vshrl.u32 683565275, %v4500
        %v4502 = vshll.u32 683565275, %v4499
        %v4503 = vshrl.u32 2475754826, %v4500
        %v4504 = vor.u32 %v4502, %v4503
        %v4505 = vshll.u32 2475754826, %v4499
        %v4506 = vshrl.u32 2131351028, %v4500
        %v4507 = vor.u32 %v4505, %v4506
        %v4508 = vshll.u32 2131351028, %v4499
        %v4509 = vshrl.u32 2102212464, %v4500
        %v4510 = vor.u32 %v4508, %v4509
        %v4511 = vshll.u32 2102212464, %v4499
        %v4512 = vshrl.u32 920167782, %v4500
        %v4513 = vor.u32 %v4511, %v4512
        %v4514 = vshll.u32 920167782, %v4499
        %v4515 = vshrl.u32 1326507024, %v4500
        %v4516 = vor.u32 %v4514, %v4515
        %vm4517 = vcmp.lt.s32.totalorder %v4498, 1
        %vm4518 = vcmp.lt.s32.totalorder %v4498, 2
        %vm4519 = vcmp.lt.s32.totalorder %v4498, 3
        %vm4520 = vcmp.lt.s32.totalorder %v4498, 4
        %v4521 = vsel %vm4517, %v4501, %v4504
        %v4522 = vsel %vm4520, %v4510, 2102212464
        %v4523 = vsel %vm4519, %v4507, %v4522
        %v4524 = vsel %vm4518, %v4521, %v4523
        %v4525 = vsel %vm4517, %v4504, %v4507
        %v4526 = vsel %vm4520, %v4513, 920167782
        %v4527 = vsel %vm4519, %v4510, %v4526
        %v4528 = vsel %vm4518, %v4525, %v4527
        %v4529 = vsel %vm4517, %v4507, %v4510
        %v4530 = vsel %vm4520, %v4516, 1326507024
        %v4531 = vsel %vm4519, %v4513, %v4530
        %v4532 = vsel %vm4518, %v4529, %v4531
        %v4533 = vshll.u32 %v4493, 8
        %v4534 = vmul.u32.u64.compose %v4533, %v4532
        %v4535 = vextract.low.u32 %v4534
        %v4536 = vextract.high.u32 %v4534
        %v4537 = vmul.u32.u64.compose %v4533, %v4528
        %v4538 = vextract.low.u32 %v4537
        %v4539 = vextract.high.u32 %v4537
        %v4540 = vmul.u32 %v4533, %v4524
        %v4541 = vadd.s32 %v4536, %v4538
        %vm4542 = vc.u32 %v4536, %v4538
        %v4543 = vadd.s32 %v4539, 1
        %v4544 = vsel %vm4542, %v4543, %v4539
        %v4545 = vadd.s32 %v4540, %v4544
        %v4546 = vadd.s32 %v4545, 536870912
        %v4547 = vshrl.u32 %v4546, 30
        %v4548 = vshll.u32 %v4547, 30
        %v4549 = vsub.s32 %v4545, %v4548
        %vm4550 = vcmp.lt.s32.totalorder %v4549, 0
        %v4551 = vsub.s32 0, %v4549
        %v4552 = vsel %vm4550, %v4551, %v4549
        %v4553 = vclz %v4552
        %v4554 = vsub.s32 %v4553, 2
        %vm4555 = vcmp.gt.s32.totalorder 0, %v4554
        %v4556 = vsel %vm4555, 0, %v4554
        %v4557 = vsub.s32 32, %v4556
        %v4558 = vshll.u32 %v4549, %v4556
        %v4559 = vshrl.u32 %v4541, %v4557
        %v4560 = vor.u32 %v4558, %v4559
        %v4561 = vsub.s32 4294967266, %v4556
        %v4562 = vadd.s32 %v4561, 127
        %v4563 = vshll.u32 %v4562, 23
        %v4564 = vor.u32 4788187, %v4563
        %v4565 = vand.u32 2147483647, %v4564
        %v4567 = vcvt.s32.f32 %v4560
        %v4568 = vmul.f32 %v4567, %v4565
        %v4569 = vxor.u32 %v4568, 2147483648
        %v4570 = vsel %vm4487, %v4569, %v4568
        %v4571 = vsub.s32 4, %v4547
        %v4572 = vsel %vm4487, %v4571, %v4547
        %v4573 = vsel %vm4486, %v572, %v4570
        %v4574 = vsel %vm4486, 0, %v4572
        %v4575 = vcosq.f32.pop %v4573
        %v4576 = vsinq.f32.pop %v4573
        %vm4577 = vweird.f32 %v572
        %v4578 = vadd.s32 %v4574, 3
        %v4579 = vand.u32 %v4578, 3
        %vm4580 = vcmp.lt.s32.totalorder %v4579, 2
        %vm4581 = vcmp.eq.s32.totalorder %v4579, 0
        %v4582 = vxor.u32 %v4576, 2147483648
        %v4583 = vsel %vm4581, %v4575, %v4582
        %vm4584 = vcmp.eq.s32.totalorder %v4579, 2
        %v4585 = vxor.u32 %v4575, 2147483648
        %v4586 = vsel %vm4584, %v4585, %v4576
        %v4587 = vsel %vm4580, %v4583, %v4586
        %v4588 = vsel %vm4577, nan, %v4587
        %v4589 = vand.u32 2147483647, %v574
        %vm4590 = vcmp.le.f32.partialorder %v4589, 0.7853982
        %vm4591 = vcmp.lt.s32.totalorder %v574, 0
        %v4592 = vand.u32 %v574, 2139095040
        %v4593 = vshrl.u32 %v4592, 23
        %v4594 = vsub.s32 %v4593, 127
        %v4595 = vand.u32 2147483647, %v574
        %v4596 = vand.u32 %v4595, 8388607
        %v4597 = vor.u32 %v4596, 8388608
        %v4598 = vsub.s32 0, %v4597
        %v4599 = vadd.s32 %v4594, 1
        %vm4600 = vcmp.gt.s32.totalorder %v4599, 0
        %v4601 = vsel %vm4600, %v4599, 0
        %v4602 = vshrl.u32 %v4601, 5
        %v4603 = vand.u32 %v4601, 31
        %v4604 = vsub.s32 32, %v4603
        %v4605 = vshrl.u32 683565275, %v4604
        %v4606 = vshll.u32 683565275, %v4603
        %v4607 = vshrl.u32 2475754826, %v4604
        %v4608 = vor.u32 %v4606, %v4607
        %v4609 = vshll.u32 2475754826, %v4603
        %v4610 = vshrl.u32 2131351028, %v4604
        %v4611 = vor.u32 %v4609, %v4610
        %v4612 = vshll.u32 2131351028, %v4603
        %v4613 = vshrl.u32 2102212464, %v4604
        %v4614 = vor.u32 %v4612, %v4613
        %v4615 = vshll.u32 2102212464, %v4603
        %v4616 = vshrl.u32 920167782, %v4604
        %v4617 = vor.u32 %v4615, %v4616
        %v4618 = vshll.u32 920167782, %v4603
        %v4619 = vshrl.u32 1326507024, %v4604
        %v4620 = vor.u32 %v4618, %v4619
        %vm4621 = vcmp.lt.s32.totalorder %v4602, 1
        %vm4622 = vcmp.lt.s32.totalorder %v4602, 2
        %vm4623 = vcmp.lt.s32.totalorder %v4602, 3
        %vm4624 = vcmp.lt.s32.totalorder %v4602, 4
        %v4625 = vsel %vm4621, %v4605, %v4608
        %v4626 = vsel %vm4624, %v4614, 2102212464
        %v4627 = vsel %vm4623, %v4611, %v4626
        %v4628 = vsel %vm4622, %v4625, %v4627
        %v4629 = vsel %vm4621, %v4608, %v4611
        %v4630 = vsel %vm4624, %v4617, 920167782
        %v4631 = vsel %vm4623, %v4614, %v4630
        %v4632 = vsel %vm4622, %v4629, %v4631
        %v4633 = vsel %vm4621, %v4611, %v4614
        %v4634 = vsel %vm4624, %v4620, 1326507024
        %v4635 = vsel %vm4623, %v4617, %v4634
        %v4636 = vsel %vm4622, %v4633, %v4635
        %v4637 = vshll.u32 %v4597, 8
        %v4638 = vmul.u32.u64.compose %v4637, %v4636
        %v4639 = vextract.low.u32 %v4638
        %v4640 = vextract.high.u32 %v4638
        %v4641 = vmul.u32.u64.compose %v4637, %v4632
        %v4642 = vextract.low.u32 %v4641
        %v4643 = vextract.high.u32 %v4641
        %v4644 = vmul.u32 %v4637, %v4628
        %v4645 = vadd.s32 %v4640, %v4642
        %vm4646 = vc.u32 %v4640, %v4642
        %v4647 = vadd.s32 %v4643, 1
        %v4648 = vsel %vm4646, %v4647, %v4643
        %v4649 = vadd.s32 %v4644, %v4648
        %v4650 = vadd.s32 %v4649, 536870912
        %v4651 = vshrl.u32 %v4650, 30
        %v4652 = vshll.u32 %v4651, 30
        %v4653 = vsub.s32 %v4649, %v4652
        %vm4654 = vcmp.lt.s32.totalorder %v4653, 0
        %v4655 = vsub.s32 0, %v4653
        %v4656 = vsel %vm4654, %v4655, %v4653
        %v4657 = vclz %v4656
        %v4658 = vsub.s32 %v4657, 2
        %vm4659 = vcmp.gt.s32.totalorder 0, %v4658
        %v4660 = vsel %vm4659, 0, %v4658
        %v4661 = vsub.s32 32, %v4660
        %v4662 = vshll.u32 %v4653, %v4660
        %v4663 = vshrl.u32 %v4645, %v4661
        %v4664 = vor.u32 %v4662, %v4663
        %v4665 = vsub.s32 4294967266, %v4660
        %v4666 = vadd.s32 %v4665, 127
        %v4667 = vshll.u32 %v4666, 23
        %v4668 = vor.u32 4788187, %v4667
        %v4669 = vand.u32 2147483647, %v4668
        %v4671 = vcvt.s32.f32 %v4664
        %v4672 = vmul.f32 %v4671, %v4669
        %v4673 = vxor.u32 %v4672, 2147483648
        %v4674 = vsel %vm4591, %v4673, %v4672
        %v4675 = vsub.s32 4, %v4651
        %v4676 = vsel %vm4591, %v4675, %v4651
        %v4677 = vsel %vm4590, %v574, %v4674
        %v4678 = vsel %vm4590, 0, %v4676
        %v4679 = vcosq.f32.pop %v4677
        %v4680 = vsinq.f32.pop %v4677
        %vm4681 = vweird.f32 %v574
        %v4682 = vadd.s32 %v4678, 3
        %v4683 = vand.u32 %v4682, 3
        %vm4684 = vcmp.lt.s32.totalorder %v4683, 2
        %vm4685 = vcmp.eq.s32.totalorder %v4683, 0
        %v4686 = vxor.u32 %v4680, 2147483648
        %v4687 = vsel %vm4685, %v4679, %v4686
        %vm4688 = vcmp.eq.s32.totalorder %v4683, 2
        %v4689 = vxor.u32 %v4679, 2147483648
        %v4690 = vsel %vm4688, %v4689, %v4680
        %v4691 = vsel %vm4684, %v4687, %v4690
        %v4692 = vsel %vm4681, nan, %v4691
        %v4693 = vand.u32 2147483647, %v655
        %vm4694 = vcmp.le.f32.partialorder %v4693, 0.7853982
        %vm4695 = vcmp.lt.s32.totalorder %v655, 0
        %v4696 = vand.u32 %v655, 2139095040
        %v4697 = vshrl.u32 %v4696, 23
        %v4698 = vsub.s32 %v4697, 127
        %v4699 = vand.u32 2147483647, %v655
        %v4700 = vand.u32 %v4699, 8388607
        %v4701 = vor.u32 %v4700, 8388608
        %v4702 = vsub.s32 0, %v4701
        %v4703 = vadd.s32 %v4698, 1
        %vm4704 = vcmp.gt.s32.totalorder %v4703, 0
        %v4705 = vsel %vm4704, %v4703, 0
        %v4706 = vshrl.u32 %v4705, 5
        %v4707 = vand.u32 %v4705, 31
        %v4708 = vsub.s32 32, %v4707
        %v4709 = vshrl.u32 683565275, %v4708
        %v4710 = vshll.u32 683565275, %v4707
        %v4711 = vshrl.u32 2475754826, %v4708
        %v4712 = vor.u32 %v4710, %v4711
        %v4713 = vshll.u32 2475754826, %v4707
        %v4714 = vshrl.u32 2131351028, %v4708
        %v4715 = vor.u32 %v4713, %v4714
        %v4716 = vshll.u32 2131351028, %v4707
        %v4717 = vshrl.u32 2102212464, %v4708
        %v4718 = vor.u32 %v4716, %v4717
        %v4719 = vshll.u32 2102212464, %v4707
        %v4720 = vshrl.u32 920167782, %v4708
        %v4721 = vor.u32 %v4719, %v4720
        %v4722 = vshll.u32 920167782, %v4707
        %v4723 = vshrl.u32 1326507024, %v4708
        %v4724 = vor.u32 %v4722, %v4723
        %vm4725 = vcmp.lt.s32.totalorder %v4706, 1
        %vm4726 = vcmp.lt.s32.totalorder %v4706, 2
        %vm4727 = vcmp.lt.s32.totalorder %v4706, 3
        %vm4728 = vcmp.lt.s32.totalorder %v4706, 4
        %v4729 = vsel %vm4725, %v4709, %v4712
        %v4730 = vsel %vm4728, %v4718, 2102212464
        %v4731 = vsel %vm4727, %v4715, %v4730
        %v4732 = vsel %vm4726, %v4729, %v4731
        %v4733 = vsel %vm4725, %v4712, %v4715
        %v4734 = vsel %vm4728, %v4721, 920167782
        %v4735 = vsel %vm4727, %v4718, %v4734
        %v4736 = vsel %vm4726, %v4733, %v4735
        %v4737 = vsel %vm4725, %v4715, %v4718
        %v4738 = vsel %vm4728, %v4724, 1326507024
        %v4739 = vsel %vm4727, %v4721, %v4738
        %v4740 = vsel %vm4726, %v4737, %v4739
        %v4741 = vshll.u32 %v4701, 8
        %v4742 = vmul.u32.u64.compose %v4741, %v4740
        %v4743 = vextract.low.u32 %v4742
        %v4744 = vextract.high.u32 %v4742
        %v4745 = vmul.u32.u64.compose %v4741, %v4736
        %v4746 = vextract.low.u32 %v4745
        %v4747 = vextract.high.u32 %v4745
        %v4748 = vmul.u32 %v4741, %v4732
        %v4749 = vadd.s32 %v4744, %v4746
        %vm4750 = vc.u32 %v4744, %v4746
        %v4751 = vadd.s32 %v4747, 1
        %v4752 = vsel %vm4750, %v4751, %v4747
        %v4753 = vadd.s32 %v4748, %v4752
        %v4754 = vadd.s32 %v4753, 536870912
        %v4755 = vshrl.u32 %v4754, 30
        %v4756 = vshll.u32 %v4755, 30
        %v4757 = vsub.s32 %v4753, %v4756
        %vm4758 = vcmp.lt.s32.totalorder %v4757, 0
        %v4759 = vsub.s32 0, %v4757
        %v4760 = vsel %vm4758, %v4759, %v4757
        %v4761 = vclz %v4760
        %v4762 = vsub.s32 %v4761, 2
        %vm4763 = vcmp.gt.s32.totalorder 0, %v4762
        %v4764 = vsel %vm4763, 0, %v4762
        %v4765 = vsub.s32 32, %v4764
        %v4766 = vshll.u32 %v4757, %v4764
        %v4767 = vshrl.u32 %v4749, %v4765
        %v4768 = vor.u32 %v4766, %v4767
        %v4769 = vsub.s32 4294967266, %v4764
        %v4770 = vadd.s32 %v4769, 127
        %v4771 = vshll.u32 %v4770, 23
        %v4772 = vor.u32 4788187, %v4771
        %v4773 = vand.u32 2147483647, %v4772
        %v4775 = vcvt.s32.f32 %v4768
        %v4776 = vmul.f32 %v4775, %v4773
        %v4777 = vxor.u32 %v4776, 2147483648
        %v4778 = vsel %vm4695, %v4777, %v4776
        %v4779 = vsub.s32 4, %v4755
        %v4780 = vsel %vm4695, %v4779, %v4755
        %v4781 = vsel %vm4694, %v655, %v4778
        %v4782 = vsel %vm4694, 0, %v4780
        %v4783 = vcosq.f32.pop %v4781
        %v4784 = vsinq.f32.pop %v4781
        %vm4785 = vweird.f32 %v655
        %v4786 = vadd.s32 %v4782, 3
        %v4787 = vand.u32 %v4786, 3
        %vm4788 = vcmp.lt.s32.totalorder %v4787, 2
        %vm4789 = vcmp.eq.s32.totalorder %v4787, 0
        %v4790 = vxor.u32 %v4784, 2147483648
        %v4791 = vsel %vm4789, %v4783, %v4790
        %vm4792 = vcmp.eq.s32.totalorder %v4787, 2
        %v4793 = vxor.u32 %v4783, 2147483648
        %v4794 = vsel %vm4792, %v4793, %v4784
        %v4795 = vsel %vm4788, %v4791, %v4794
        %v4796 = vsel %vm4785, nan, %v4795
        %v4797 = vand.u32 2147483647, %v657
        %vm4798 = vcmp.le.f32.partialorder %v4797, 0.7853982
        %vm4799 = vcmp.lt.s32.totalorder %v657, 0
        %v4800 = vand.u32 %v657, 2139095040
        %v4801 = vshrl.u32 %v4800, 23
        %v4802 = vsub.s32 %v4801, 127
        %v4803 = vand.u32 2147483647, %v657
        %v4804 = vand.u32 %v4803, 8388607
        %v4805 = vor.u32 %v4804, 8388608
        %v4806 = vsub.s32 0, %v4805
        %v4807 = vadd.s32 %v4802, 1
        %vm4808 = vcmp.gt.s32.totalorder %v4807, 0
        %v4809 = vsel %vm4808, %v4807, 0
        %v4810 = vshrl.u32 %v4809, 5
        %v4811 = vand.u32 %v4809, 31
        %v4812 = vsub.s32 32, %v4811
        %v4813 = vshrl.u32 683565275, %v4812
        %v4814 = vshll.u32 683565275, %v4811
        %v4815 = vshrl.u32 2475754826, %v4812
        %v4816 = vor.u32 %v4814, %v4815
        %v4817 = vshll.u32 2475754826, %v4811
        %v4818 = vshrl.u32 2131351028, %v4812
        %v4819 = vor.u32 %v4817, %v4818
        %v4820 = vshll.u32 2131351028, %v4811
        %v4821 = vshrl.u32 2102212464, %v4812
        %v4822 = vor.u32 %v4820, %v4821
        %v4823 = vshll.u32 2102212464, %v4811
        %v4824 = vshrl.u32 920167782, %v4812
        %v4825 = vor.u32 %v4823, %v4824
        %v4826 = vshll.u32 920167782, %v4811
        %v4827 = vshrl.u32 1326507024, %v4812
        %v4828 = vor.u32 %v4826, %v4827
        %vm4829 = vcmp.lt.s32.totalorder %v4810, 1
        %vm4830 = vcmp.lt.s32.totalorder %v4810, 2
        %vm4831 = vcmp.lt.s32.totalorder %v4810, 3
        %vm4832 = vcmp.lt.s32.totalorder %v4810, 4
        %v4833 = vsel %vm4829, %v4813, %v4816
        %v4834 = vsel %vm4832, %v4822, 2102212464
        %v4835 = vsel %vm4831, %v4819, %v4834
        %v4836 = vsel %vm4830, %v4833, %v4835
        %v4837 = vsel %vm4829, %v4816, %v4819
        %v4838 = vsel %vm4832, %v4825, 920167782
        %v4839 = vsel %vm4831, %v4822, %v4838
        %v4840 = vsel %vm4830, %v4837, %v4839
        %v4841 = vsel %vm4829, %v4819, %v4822
        %v4842 = vsel %vm4832, %v4828, 1326507024
        %v4843 = vsel %vm4831, %v4825, %v4842
        %v4844 = vsel %vm4830, %v4841, %v4843
        %v4845 = vshll.u32 %v4805, 8
        %v4846 = vmul.u32.u64.compose %v4845, %v4844
        %v4847 = vextract.low.u32 %v4846
        %v4848 = vextract.high.u32 %v4846
        %v4849 = vmul.u32.u64.compose %v4845, %v4840
        %v4850 = vextract.low.u32 %v4849
        %v4851 = vextract.high.u32 %v4849
        %v4852 = vmul.u32 %v4845, %v4836
        %v4853 = vadd.s32 %v4848, %v4850
        %vm4854 = vc.u32 %v4848, %v4850
        %v4855 = vadd.s32 %v4851, 1
        %v4856 = vsel %vm4854, %v4855, %v4851
        %v4857 = vadd.s32 %v4852, %v4856
        %v4858 = vadd.s32 %v4857, 536870912
        %v4859 = vshrl.u32 %v4858, 30
        %v4860 = vshll.u32 %v4859, 30
        %v4861 = vsub.s32 %v4857, %v4860
        %vm4862 = vcmp.lt.s32.totalorder %v4861, 0
        %v4863 = vsub.s32 0, %v4861
        %v4864 = vsel %vm4862, %v4863, %v4861
        %v4865 = vclz %v4864
        %v4866 = vsub.s32 %v4865, 2
        %vm4867 = vcmp.gt.s32.totalorder 0, %v4866
        %v4868 = vsel %vm4867, 0, %v4866
        %v4869 = vsub.s32 32, %v4868
        %v4870 = vshll.u32 %v4861, %v4868
        %v4871 = vshrl.u32 %v4853, %v4869
        %v4872 = vor.u32 %v4870, %v4871
        %v4873 = vsub.s32 4294967266, %v4868
        %v4874 = vadd.s32 %v4873, 127
        %v4875 = vshll.u32 %v4874, 23
        %v4876 = vor.u32 4788187, %v4875
        %v4877 = vand.u32 2147483647, %v4876
        %v4879 = vcvt.s32.f32 %v4872
        %v4880 = vmul.f32 %v4879, %v4877
        %v4881 = vxor.u32 %v4880, 2147483648
        %v4882 = vsel %vm4799, %v4881, %v4880
        %v4883 = vsub.s32 4, %v4859
        %v4884 = vsel %vm4799, %v4883, %v4859
        %v4885 = vsel %vm4798, %v657, %v4882
        %v4886 = vsel %vm4798, 0, %v4884
        %v4887 = vcosq.f32.pop %v4885
        %v4888 = vsinq.f32.pop %v4885
        %vm4889 = vweird.f32 %v657
        %v4890 = vadd.s32 %v4886, 3
        %v4891 = vand.u32 %v4890, 3
        %vm4892 = vcmp.lt.s32.totalorder %v4891, 2
        %vm4893 = vcmp.eq.s32.totalorder %v4891, 0
        %v4894 = vxor.u32 %v4888, 2147483648
        %v4895 = vsel %vm4893, %v4887, %v4894
        %vm4896 = vcmp.eq.s32.totalorder %v4891, 2
        %v4897 = vxor.u32 %v4887, 2147483648
        %v4898 = vsel %vm4896, %v4897, %v4888
        %v4899 = vsel %vm4892, %v4895, %v4898
        %v4900 = vsel %vm4889, nan, %v4899
        %v4901 = vand.u32 2147483647, %v738
        %vm4902 = vcmp.le.f32.partialorder %v4901, 0.7853982
        %vm4903 = vcmp.lt.s32.totalorder %v738, 0
        %v4904 = vand.u32 %v738, 2139095040
        %v4905 = vshrl.u32 %v4904, 23
        %v4906 = vsub.s32 %v4905, 127
        %v4907 = vand.u32 2147483647, %v738
        %v4908 = vand.u32 %v4907, 8388607
        %v4909 = vor.u32 %v4908, 8388608
        %v4910 = vsub.s32 0, %v4909
        %v4911 = vadd.s32 %v4906, 1
        %vm4912 = vcmp.gt.s32.totalorder %v4911, 0
        %v4913 = vsel %vm4912, %v4911, 0
        %v4914 = vshrl.u32 %v4913, 5
        %v4915 = vand.u32 %v4913, 31
        %v4916 = vsub.s32 32, %v4915
        %v4917 = vshrl.u32 683565275, %v4916
        %v4918 = vshll.u32 683565275, %v4915
        %v4919 = vshrl.u32 2475754826, %v4916
        %v4920 = vor.u32 %v4918, %v4919
        %v4921 = vshll.u32 2475754826, %v4915
        %v4922 = vshrl.u32 2131351028, %v4916
        %v4923 = vor.u32 %v4921, %v4922
        %v4924 = vshll.u32 2131351028, %v4915
        %v4925 = vshrl.u32 2102212464, %v4916
        %v4926 = vor.u32 %v4924, %v4925
        %v4927 = vshll.u32 2102212464, %v4915
        %v4928 = vshrl.u32 920167782, %v4916
        %v4929 = vor.u32 %v4927, %v4928
        %v4930 = vshll.u32 920167782, %v4915
        %v4931 = vshrl.u32 1326507024, %v4916
        %v4932 = vor.u32 %v4930, %v4931
        %vm4933 = vcmp.lt.s32.totalorder %v4914, 1
        %vm4934 = vcmp.lt.s32.totalorder %v4914, 2
        %vm4935 = vcmp.lt.s32.totalorder %v4914, 3
        %vm4936 = vcmp.lt.s32.totalorder %v4914, 4
        %v4937 = vsel %vm4933, %v4917, %v4920
        %v4938 = vsel %vm4936, %v4926, 2102212464
        %v4939 = vsel %vm4935, %v4923, %v4938
        %v4940 = vsel %vm4934, %v4937, %v4939
        %v4941 = vsel %vm4933, %v4920, %v4923
        %v4942 = vsel %vm4936, %v4929, 920167782
        %v4943 = vsel %vm4935, %v4926, %v4942
        %v4944 = vsel %vm4934, %v4941, %v4943
        %v4945 = vsel %vm4933, %v4923, %v4926
        %v4946 = vsel %vm4936, %v4932, 1326507024
        %v4947 = vsel %vm4935, %v4929, %v4946
        %v4948 = vsel %vm4934, %v4945, %v4947
        %v4949 = vshll.u32 %v4909, 8
        %v4950 = vmul.u32.u64.compose %v4949, %v4948
        %v4951 = vextract.low.u32 %v4950
        %v4952 = vextract.high.u32 %v4950
        %v4953 = vmul.u32.u64.compose %v4949, %v4944
        %v4954 = vextract.low.u32 %v4953
        %v4955 = vextract.high.u32 %v4953
        %v4956 = vmul.u32 %v4949, %v4940
        %v4957 = vadd.s32 %v4952, %v4954
        %vm4958 = vc.u32 %v4952, %v4954
        %v4959 = vadd.s32 %v4955, 1
        %v4960 = vsel %vm4958, %v4959, %v4955
        %v4961 = vadd.s32 %v4956, %v4960
        %v4962 = vadd.s32 %v4961, 536870912
        %v4963 = vshrl.u32 %v4962, 30
        %v4964 = vshll.u32 %v4963, 30
        %v4965 = vsub.s32 %v4961, %v4964
        %vm4966 = vcmp.lt.s32.totalorder %v4965, 0
        %v4967 = vsub.s32 0, %v4965
        %v4968 = vsel %vm4966, %v4967, %v4965
        %v4969 = vclz %v4968
        %v4970 = vsub.s32 %v4969, 2
        %vm4971 = vcmp.gt.s32.totalorder 0, %v4970
        %v4972 = vsel %vm4971, 0, %v4970
        %v4973 = vsub.s32 32, %v4972
        %v4974 = vshll.u32 %v4965, %v4972
        %v4975 = vshrl.u32 %v4957, %v4973
        %v4976 = vor.u32 %v4974, %v4975
        %v4977 = vsub.s32 4294967266, %v4972
        %v4978 = vadd.s32 %v4977, 127
        %v4979 = vshll.u32 %v4978, 23
        %v4980 = vor.u32 4788187, %v4979
        %v4981 = vand.u32 2147483647, %v4980
        %v4983 = vcvt.s32.f32 %v4976
        %v4984 = vmul.f32 %v4983, %v4981
        %v4985 = vxor.u32 %v4984, 2147483648
        %v4986 = vsel %vm4903, %v4985, %v4984
        %v4987 = vsub.s32 4, %v4963
        %v4988 = vsel %vm4903, %v4987, %v4963
        %v4989 = vsel %vm4902, %v738, %v4986
        %v4990 = vsel %vm4902, 0, %v4988
        %v4991 = vcosq.f32.pop %v4989
        %v4992 = vsinq.f32.pop %v4989
        %vm4993 = vweird.f32 %v738
        %v4994 = vadd.s32 %v4990, 3
        %v4995 = vand.u32 %v4994, 3
        %vm4996 = vcmp.lt.s32.totalorder %v4995, 2
        %vm4997 = vcmp.eq.s32.totalorder %v4995, 0
        %v4998 = vxor.u32 %v4992, 2147483648
        %v4999 = vsel %vm4997, %v4991, %v4998
        %vm5000 = vcmp.eq.s32.totalorder %v4995, 2
        %v5001 = vxor.u32 %v4991, 2147483648
        %v5002 = vsel %vm5000, %v5001, %v4992
        %v5003 = vsel %vm4996, %v4999, %v5002
        %v5004 = vsel %vm4993, nan, %v5003
        %v5005 = vand.u32 2147483647, %v740
        %vm5006 = vcmp.le.f32.partialorder %v5005, 0.7853982
        %vm5007 = vcmp.lt.s32.totalorder %v740, 0
        %v5008 = vand.u32 %v740, 2139095040
        %v5009 = vshrl.u32 %v5008, 23
        %v5010 = vsub.s32 %v5009, 127
        %v5011 = vand.u32 2147483647, %v740
        %v5012 = vand.u32 %v5011, 8388607
        %v5013 = vor.u32 %v5012, 8388608
        %v5014 = vsub.s32 0, %v5013
        %v5015 = vadd.s32 %v5010, 1
        %vm5016 = vcmp.gt.s32.totalorder %v5015, 0
        %v5017 = vsel %vm5016, %v5015, 0
        %v5018 = vshrl.u32 %v5017, 5
        %v5019 = vand.u32 %v5017, 31
        %v5020 = vsub.s32 32, %v5019
        %v5021 = vshrl.u32 683565275, %v5020
        %v5022 = vshll.u32 683565275, %v5019
        %v5023 = vshrl.u32 2475754826, %v5020
        %v5024 = vor.u32 %v5022, %v5023
        %v5025 = vshll.u32 2475754826, %v5019
        %v5026 = vshrl.u32 2131351028, %v5020
        %v5027 = vor.u32 %v5025, %v5026
        %v5028 = vshll.u32 2131351028, %v5019
        %v5029 = vshrl.u32 2102212464, %v5020
        %v5030 = vor.u32 %v5028, %v5029
        %v5031 = vshll.u32 2102212464, %v5019
        %v5032 = vshrl.u32 920167782, %v5020
        %v5033 = vor.u32 %v5031, %v5032
        %v5034 = vshll.u32 920167782, %v5019
        %v5035 = vshrl.u32 1326507024, %v5020
        %v5036 = vor.u32 %v5034, %v5035
        %vm5037 = vcmp.lt.s32.totalorder %v5018, 1
        %vm5038 = vcmp.lt.s32.totalorder %v5018, 2
        %vm5039 = vcmp.lt.s32.totalorder %v5018, 3
        %vm5040 = vcmp.lt.s32.totalorder %v5018, 4
        %v5041 = vsel %vm5037, %v5021, %v5024
        %v5042 = vsel %vm5040, %v5030, 2102212464
        %v5043 = vsel %vm5039, %v5027, %v5042
        %v5044 = vsel %vm5038, %v5041, %v5043
        %v5045 = vsel %vm5037, %v5024, %v5027
        %v5046 = vsel %vm5040, %v5033, 920167782
        %v5047 = vsel %vm5039, %v5030, %v5046
        %v5048 = vsel %vm5038, %v5045, %v5047
        %v5049 = vsel %vm5037, %v5027, %v5030
        %v5050 = vsel %vm5040, %v5036, 1326507024
        %v5051 = vsel %vm5039, %v5033, %v5050
        %v5052 = vsel %vm5038, %v5049, %v5051
        %v5053 = vshll.u32 %v5013, 8
        %v5054 = vmul.u32.u64.compose %v5053, %v5052
        %v5055 = vextract.low.u32 %v5054
        %v5056 = vextract.high.u32 %v5054
        %v5057 = vmul.u32.u64.compose %v5053, %v5048
        %v5058 = vextract.low.u32 %v5057
        %v5059 = vextract.high.u32 %v5057
        %v5060 = vmul.u32 %v5053, %v5044
        %v5061 = vadd.s32 %v5056, %v5058
        %vm5062 = vc.u32 %v5056, %v5058
        %v5063 = vadd.s32 %v5059, 1
        %v5064 = vsel %vm5062, %v5063, %v5059
        %v5065 = vadd.s32 %v5060, %v5064
        %v5066 = vadd.s32 %v5065, 536870912
        %v5067 = vshrl.u32 %v5066, 30
        %v5068 = vshll.u32 %v5067, 30
        %v5069 = vsub.s32 %v5065, %v5068
        %vm5070 = vcmp.lt.s32.totalorder %v5069, 0
        %v5071 = vsub.s32 0, %v5069
        %v5072 = vsel %vm5070, %v5071, %v5069
        %v5073 = vclz %v5072
        %v5074 = vsub.s32 %v5073, 2
        %vm5075 = vcmp.gt.s32.totalorder 0, %v5074
        %v5076 = vsel %vm5075, 0, %v5074
        %v5077 = vsub.s32 32, %v5076
        %v5078 = vshll.u32 %v5069, %v5076
        %v5079 = vshrl.u32 %v5061, %v5077
        %v5080 = vor.u32 %v5078, %v5079
        %v5081 = vsub.s32 4294967266, %v5076
        %v5082 = vadd.s32 %v5081, 127
        %v5083 = vshll.u32 %v5082, 23
        %v5084 = vor.u32 4788187, %v5083
        %v5085 = vand.u32 2147483647, %v5084
        %v5087 = vcvt.s32.f32 %v5080
        %v5088 = vmul.f32 %v5087, %v5085
        %v5089 = vxor.u32 %v5088, 2147483648
        %v5090 = vsel %vm5007, %v5089, %v5088
        %v5091 = vsub.s32 4, %v5067
        %v5092 = vsel %vm5007, %v5091, %v5067
        %v5093 = vsel %vm5006, %v740, %v5090
        %v5094 = vsel %vm5006, 0, %v5092
        %v5095 = vcosq.f32.pop %v5093
        %v5096 = vsinq.f32.pop %v5093
        %vm5097 = vweird.f32 %v740
        %v5098 = vadd.s32 %v5094, 3
        %v5099 = vand.u32 %v5098, 3
        %vm5100 = vcmp.lt.s32.totalorder %v5099, 2
        %vm5101 = vcmp.eq.s32.totalorder %v5099, 0
        %v5102 = vxor.u32 %v5096, 2147483648
        %v5103 = vsel %vm5101, %v5095, %v5102
        %vm5104 = vcmp.eq.s32.totalorder %v5099, 2
        %v5105 = vxor.u32 %v5095, 2147483648
        %v5106 = vsel %vm5104, %v5105, %v5096
        %v5107 = vsel %vm5100, %v5103, %v5106
        %v5108 = vsel %vm5097, nan, %v5107
        %v5109 = vand.u32 2147483647, %v821
        %vm5110 = vcmp.le.f32.partialorder %v5109, 0.7853982
        %vm5111 = vcmp.lt.s32.totalorder %v821, 0
        %v5112 = vand.u32 %v821, 2139095040
        %v5113 = vshrl.u32 %v5112, 23
        %v5114 = vsub.s32 %v5113, 127
        %v5115 = vand.u32 2147483647, %v821
        %v5116 = vand.u32 %v5115, 8388607
        %v5117 = vor.u32 %v5116, 8388608
        %v5118 = vsub.s32 0, %v5117
        %v5119 = vadd.s32 %v5114, 1
        %vm5120 = vcmp.gt.s32.totalorder %v5119, 0
        %v5121 = vsel %vm5120, %v5119, 0
        %v5122 = vshrl.u32 %v5121, 5
        %v5123 = vand.u32 %v5121, 31
        %v5124 = vsub.s32 32, %v5123
        %v5125 = vshrl.u32 683565275, %v5124
        %v5126 = vshll.u32 683565275, %v5123
        %v5127 = vshrl.u32 2475754826, %v5124
        %v5128 = vor.u32 %v5126, %v5127
        %v5129 = vshll.u32 2475754826, %v5123
        %v5130 = vshrl.u32 2131351028, %v5124
        %v5131 = vor.u32 %v5129, %v5130
        %v5132 = vshll.u32 2131351028, %v5123
        %v5133 = vshrl.u32 2102212464, %v5124
        %v5134 = vor.u32 %v5132, %v5133
        %v5135 = vshll.u32 2102212464, %v5123
        %v5136 = vshrl.u32 920167782, %v5124
        %v5137 = vor.u32 %v5135, %v5136
        %v5138 = vshll.u32 920167782, %v5123
        %v5139 = vshrl.u32 1326507024, %v5124
        %v5140 = vor.u32 %v5138, %v5139
        %vm5141 = vcmp.lt.s32.totalorder %v5122, 1
        %vm5142 = vcmp.lt.s32.totalorder %v5122, 2
        %vm5143 = vcmp.lt.s32.totalorder %v5122, 3
        %vm5144 = vcmp.lt.s32.totalorder %v5122, 4
        %v5145 = vsel %vm5141, %v5125, %v5128
        %v5146 = vsel %vm5144, %v5134, 2102212464
        %v5147 = vsel %vm5143, %v5131, %v5146
        %v5148 = vsel %vm5142, %v5145, %v5147
        %v5149 = vsel %vm5141, %v5128, %v5131
        %v5150 = vsel %vm5144, %v5137, 920167782
        %v5151 = vsel %vm5143, %v5134, %v5150
        %v5152 = vsel %vm5142, %v5149, %v5151
        %v5153 = vsel %vm5141, %v5131, %v5134
        %v5154 = vsel %vm5144, %v5140, 1326507024
        %v5155 = vsel %vm5143, %v5137, %v5154
        %v5156 = vsel %vm5142, %v5153, %v5155
        %v5157 = vshll.u32 %v5117, 8
        %v5158 = vmul.u32.u64.compose %v5157, %v5156
        %v5159 = vextract.low.u32 %v5158
        %v5160 = vextract.high.u32 %v5158
        %v5161 = vmul.u32.u64.compose %v5157, %v5152
        %v5162 = vextract.low.u32 %v5161
        %v5163 = vextract.high.u32 %v5161
        %v5164 = vmul.u32 %v5157, %v5148
        %v5165 = vadd.s32 %v5160, %v5162
        %vm5166 = vc.u32 %v5160, %v5162
        %v5167 = vadd.s32 %v5163, 1
        %v5168 = vsel %vm5166, %v5167, %v5163
        %v5169 = vadd.s32 %v5164, %v5168
        %v5170 = vadd.s32 %v5169, 536870912
        %v5171 = vshrl.u32 %v5170, 30
        %v5172 = vshll.u32 %v5171, 30
        %v5173 = vsub.s32 %v5169, %v5172
        %vm5174 = vcmp.lt.s32.totalorder %v5173, 0
        %v5175 = vsub.s32 0, %v5173
        %v5176 = vsel %vm5174, %v5175, %v5173
        %v5177 = vclz %v5176
        %v5178 = vsub.s32 %v5177, 2
        %vm5179 = vcmp.gt.s32.totalorder 0, %v5178
        %v5180 = vsel %vm5179, 0, %v5178
        %v5181 = vsub.s32 32, %v5180
        %v5182 = vshll.u32 %v5173, %v5180
        %v5183 = vshrl.u32 %v5165, %v5181
        %v5184 = vor.u32 %v5182, %v5183
        %v5185 = vsub.s32 4294967266, %v5180
        %v5186 = vadd.s32 %v5185, 127
        %v5187 = vshll.u32 %v5186, 23
        %v5188 = vor.u32 4788187, %v5187
        %v5189 = vand.u32 2147483647, %v5188
        %v5191 = vcvt.s32.f32 %v5184
        %v5192 = vmul.f32 %v5191, %v5189
        %v5193 = vxor.u32 %v5192, 2147483648
        %v5194 = vsel %vm5111, %v5193, %v5192
        %v5195 = vsub.s32 4, %v5171
        %v5196 = vsel %vm5111, %v5195, %v5171
        %v5197 = vsel %vm5110, %v821, %v5194
        %v5198 = vsel %vm5110, 0, %v5196
        %v5199 = vcosq.f32.pop %v5197
        %v5200 = vsinq.f32.pop %v5197
        %vm5201 = vweird.f32 %v821
        %v5202 = vadd.s32 %v5198, 3
        %v5203 = vand.u32 %v5202, 3
        %vm5204 = vcmp.lt.s32.totalorder %v5203, 2
        %vm5205 = vcmp.eq.s32.totalorder %v5203, 0
        %v5206 = vxor.u32 %v5200, 2147483648
        %v5207 = vsel %vm5205, %v5199, %v5206
        %vm5208 = vcmp.eq.s32.totalorder %v5203, 2
        %v5209 = vxor.u32 %v5199, 2147483648
        %v5210 = vsel %vm5208, %v5209, %v5200
        %v5211 = vsel %vm5204, %v5207, %v5210
        %v5212 = vsel %vm5201, nan, %v5211
        %v5213 = vand.u32 2147483647, %v823
        %vm5214 = vcmp.le.f32.partialorder %v5213, 0.7853982
        %vm5215 = vcmp.lt.s32.totalorder %v823, 0
        %v5216 = vand.u32 %v823, 2139095040
        %v5217 = vshrl.u32 %v5216, 23
        %v5218 = vsub.s32 %v5217, 127
        %v5219 = vand.u32 2147483647, %v823
        %v5220 = vand.u32 %v5219, 8388607
        %v5221 = vor.u32 %v5220, 8388608
        %v5222 = vsub.s32 0, %v5221
        %v5223 = vadd.s32 %v5218, 1
        %vm5224 = vcmp.gt.s32.totalorder %v5223, 0
        %v5225 = vsel %vm5224, %v5223, 0
        %v5226 = vshrl.u32 %v5225, 5
        %v5227 = vand.u32 %v5225, 31
        %v5228 = vsub.s32 32, %v5227
        %v5229 = vshrl.u32 683565275, %v5228
        %v5230 = vshll.u32 683565275, %v5227
        %v5231 = vshrl.u32 2475754826, %v5228
        %v5232 = vor.u32 %v5230, %v5231
        %v5233 = vshll.u32 2475754826, %v5227
        %v5234 = vshrl.u32 2131351028, %v5228
        %v5235 = vor.u32 %v5233, %v5234
        %v5236 = vshll.u32 2131351028, %v5227
        %v5237 = vshrl.u32 2102212464, %v5228
        %v5238 = vor.u32 %v5236, %v5237
        %v5239 = vshll.u32 2102212464, %v5227
        %v5240 = vshrl.u32 920167782, %v5228
        %v5241 = vor.u32 %v5239, %v5240
        %v5242 = vshll.u32 920167782, %v5227
        %v5243 = vshrl.u32 1326507024, %v5228
        %v5244 = vor.u32 %v5242, %v5243
        %vm5245 = vcmp.lt.s32.totalorder %v5226, 1
        %vm5246 = vcmp.lt.s32.totalorder %v5226, 2
        %vm5247 = vcmp.lt.s32.totalorder %v5226, 3
        %vm5248 = vcmp.lt.s32.totalorder %v5226, 4
        %v5249 = vsel %vm5245, %v5229, %v5232
        %v5250 = vsel %vm5248, %v5238, 2102212464
        %v5251 = vsel %vm5247, %v5235, %v5250
        %v5252 = vsel %vm5246, %v5249, %v5251
        %v5253 = vsel %vm5245, %v5232, %v5235
        %v5254 = vsel %vm5248, %v5241, 920167782
        %v5255 = vsel %vm5247, %v5238, %v5254
        %v5256 = vsel %vm5246, %v5253, %v5255
        %v5257 = vsel %vm5245, %v5235, %v5238
        %v5258 = vsel %vm5248, %v5244, 1326507024
        %v5259 = vsel %vm5247, %v5241, %v5258
        %v5260 = vsel %vm5246, %v5257, %v5259
        %v5261 = vshll.u32 %v5221, 8
        %v5262 = vmul.u32.u64.compose %v5261, %v5260
        %v5263 = vextract.low.u32 %v5262
        %v5264 = vextract.high.u32 %v5262
        %v5265 = vmul.u32.u64.compose %v5261, %v5256
        %v5266 = vextract.low.u32 %v5265
        %v5267 = vextract.high.u32 %v5265
        %v5268 = vmul.u32 %v5261, %v5252
        %v5269 = vadd.s32 %v5264, %v5266
        %vm5270 = vc.u32 %v5264, %v5266
        %v5271 = vadd.s32 %v5267, 1
        %v5272 = vsel %vm5270, %v5271, %v5267
        %v5273 = vadd.s32 %v5268, %v5272
        %v5274 = vadd.s32 %v5273, 536870912
        %v5275 = vshrl.u32 %v5274, 30
        %v5276 = vshll.u32 %v5275, 30
        %v5277 = vsub.s32 %v5273, %v5276
        %vm5278 = vcmp.lt.s32.totalorder %v5277, 0
        %v5279 = vsub.s32 0, %v5277
        %v5280 = vsel %vm5278, %v5279, %v5277
        %v5281 = vclz %v5280
        %v5282 = vsub.s32 %v5281, 2
        %vm5283 = vcmp.gt.s32.totalorder 0, %v5282
        %v5284 = vsel %vm5283, 0, %v5282
        %v5285 = vsub.s32 32, %v5284
        %v5286 = vshll.u32 %v5277, %v5284
        %v5287 = vshrl.u32 %v5269, %v5285
        %v5288 = vor.u32 %v5286, %v5287
        %v5289 = vsub.s32 4294967266, %v5284
        %v5290 = vadd.s32 %v5289, 127
        %v5291 = vshll.u32 %v5290, 23
        %v5292 = vor.u32 4788187, %v5291
        %v5293 = vand.u32 2147483647, %v5292
        %v5295 = vcvt.s32.f32 %v5288
        %v5296 = vmul.f32 %v5295, %v5293
        %v5297 = vxor.u32 %v5296, 2147483648
        %v5298 = vsel %vm5215, %v5297, %v5296
        %v5299 = vsub.s32 4, %v5275
        %v5300 = vsel %vm5215, %v5299, %v5275
        %v5301 = vsel %vm5214, %v823, %v5298
        %v5302 = vsel %vm5214, 0, %v5300
        %v5303 = vcosq.f32.pop %v5301
        %v5304 = vsinq.f32.pop %v5301
        %vm5305 = vweird.f32 %v823
        %v5306 = vadd.s32 %v5302, 3
        %v5307 = vand.u32 %v5306, 3
        %vm5308 = vcmp.lt.s32.totalorder %v5307, 2
        %vm5309 = vcmp.eq.s32.totalorder %v5307, 0
        %v5310 = vxor.u32 %v5304, 2147483648
        %v5311 = vsel %vm5309, %v5303, %v5310
        %vm5312 = vcmp.eq.s32.totalorder %v5307, 2
        %v5313 = vxor.u32 %v5303, 2147483648
        %v5314 = vsel %vm5312, %v5313, %v5304
        %v5315 = vsel %vm5308, %v5311, %v5314
        %v5316 = vsel %vm5305, nan, %v5315
        %v5317 = vand.u32 2147483647, %v904
        %vm5318 = vcmp.le.f32.partialorder %v5317, 0.7853982
        %vm5319 = vcmp.lt.s32.totalorder %v904, 0
        %v5320 = vand.u32 %v904, 2139095040
        %v5321 = vshrl.u32 %v5320, 23
        %v5322 = vsub.s32 %v5321, 127
        %v5323 = vand.u32 2147483647, %v904
        %v5324 = vand.u32 %v5323, 8388607
        %v5325 = vor.u32 %v5324, 8388608
        %v5326 = vsub.s32 0, %v5325
        %v5327 = vadd.s32 %v5322, 1
        %vm5328 = vcmp.gt.s32.totalorder %v5327, 0
        %v5329 = vsel %vm5328, %v5327, 0
        %v5330 = vshrl.u32 %v5329, 5
        %v5331 = vand.u32 %v5329, 31
        %v5332 = vsub.s32 32, %v5331
        %v5333 = vshrl.u32 683565275, %v5332
        %v5334 = vshll.u32 683565275, %v5331
        %v5335 = vshrl.u32 2475754826, %v5332
        %v5336 = vor.u32 %v5334, %v5335
        %v5337 = vshll.u32 2475754826, %v5331
        %v5338 = vshrl.u32 2131351028, %v5332
        %v5339 = vor.u32 %v5337, %v5338
        %v5340 = vshll.u32 2131351028, %v5331
        %v5341 = vshrl.u32 2102212464, %v5332
        %v5342 = vor.u32 %v5340, %v5341
        %v5343 = vshll.u32 2102212464, %v5331
        %v5344 = vshrl.u32 920167782, %v5332
        %v5345 = vor.u32 %v5343, %v5344
        %v5346 = vshll.u32 920167782, %v5331
        %v5347 = vshrl.u32 1326507024, %v5332
        %v5348 = vor.u32 %v5346, %v5347
        %vm5349 = vcmp.lt.s32.totalorder %v5330, 1
        %vm5350 = vcmp.lt.s32.totalorder %v5330, 2
        %vm5351 = vcmp.lt.s32.totalorder %v5330, 3
        %vm5352 = vcmp.lt.s32.totalorder %v5330, 4
        %v5353 = vsel %vm5349, %v5333, %v5336
        %v5354 = vsel %vm5352, %v5342, 2102212464
        %v5355 = vsel %vm5351, %v5339, %v5354
        %v5356 = vsel %vm5350, %v5353, %v5355
        %v5357 = vsel %vm5349, %v5336, %v5339
        %v5358 = vsel %vm5352, %v5345, 920167782
        %v5359 = vsel %vm5351, %v5342, %v5358
        %v5360 = vsel %vm5350, %v5357, %v5359
        %v5361 = vsel %vm5349, %v5339, %v5342
        %v5362 = vsel %vm5352, %v5348, 1326507024
        %v5363 = vsel %vm5351, %v5345, %v5362
        %v5364 = vsel %vm5350, %v5361, %v5363
        %v5365 = vshll.u32 %v5325, 8
        %v5366 = vmul.u32.u64.compose %v5365, %v5364
        %v5367 = vextract.low.u32 %v5366
        %v5368 = vextract.high.u32 %v5366
        %v5369 = vmul.u32.u64.compose %v5365, %v5360
        %v5370 = vextract.low.u32 %v5369
        %v5371 = vextract.high.u32 %v5369
        %v5372 = vmul.u32 %v5365, %v5356
        %v5373 = vadd.s32 %v5368, %v5370
        %vm5374 = vc.u32 %v5368, %v5370
        %v5375 = vadd.s32 %v5371, 1
        %v5376 = vsel %vm5374, %v5375, %v5371
        %v5377 = vadd.s32 %v5372, %v5376
        %v5378 = vadd.s32 %v5377, 536870912
        %v5379 = vshrl.u32 %v5378, 30
        %v5380 = vshll.u32 %v5379, 30
        %v5381 = vsub.s32 %v5377, %v5380
        %vm5382 = vcmp.lt.s32.totalorder %v5381, 0
        %v5383 = vsub.s32 0, %v5381
        %v5384 = vsel %vm5382, %v5383, %v5381
        %v5385 = vclz %v5384
        %v5386 = vsub.s32 %v5385, 2
        %vm5387 = vcmp.gt.s32.totalorder 0, %v5386
        %v5388 = vsel %vm5387, 0, %v5386
        %v5389 = vsub.s32 32, %v5388
        %v5390 = vshll.u32 %v5381, %v5388
        %v5391 = vshrl.u32 %v5373, %v5389
        %v5392 = vor.u32 %v5390, %v5391
        %v5393 = vsub.s32 4294967266, %v5388
        %v5394 = vadd.s32 %v5393, 127
        %v5395 = vshll.u32 %v5394, 23
        %v5396 = vor.u32 4788187, %v5395
        %v5397 = vand.u32 2147483647, %v5396
        %v5399 = vcvt.s32.f32 %v5392
        %v5400 = vmul.f32 %v5399, %v5397
        %v5401 = vxor.u32 %v5400, 2147483648
        %v5402 = vsel %vm5319, %v5401, %v5400
        %v5403 = vsub.s32 4, %v5379
        %v5404 = vsel %vm5319, %v5403, %v5379
        %v5405 = vsel %vm5318, %v904, %v5402
        %v5406 = vsel %vm5318, 0, %v5404
        %v5407 = vcosq.f32.pop %v5405
        %v5408 = vsinq.f32.pop %v5405
        %vm5409 = vweird.f32 %v904
        %v5410 = vadd.s32 %v5406, 3
        %v5411 = vand.u32 %v5410, 3
        %vm5412 = vcmp.lt.s32.totalorder %v5411, 2
        %vm5413 = vcmp.eq.s32.totalorder %v5411, 0
        %v5414 = vxor.u32 %v5408, 2147483648
        %v5415 = vsel %vm5413, %v5407, %v5414
        %vm5416 = vcmp.eq.s32.totalorder %v5411, 2
        %v5417 = vxor.u32 %v5407, 2147483648
        %v5418 = vsel %vm5416, %v5417, %v5408
        %v5419 = vsel %vm5412, %v5415, %v5418
        %v5420 = vsel %vm5409, nan, %v5419
        %v5421 = vand.u32 2147483647, %v906
        %vm5422 = vcmp.le.f32.partialorder %v5421, 0.7853982
        %vm5423 = vcmp.lt.s32.totalorder %v906, 0
        %v5424 = vand.u32 %v906, 2139095040
        %v5425 = vshrl.u32 %v5424, 23
        %v5426 = vsub.s32 %v5425, 127
        %v5427 = vand.u32 2147483647, %v906
        %v5428 = vand.u32 %v5427, 8388607
        %v5429 = vor.u32 %v5428, 8388608
        %v5430 = vsub.s32 0, %v5429
        %v5431 = vadd.s32 %v5426, 1
        %vm5432 = vcmp.gt.s32.totalorder %v5431, 0
        %v5433 = vsel %vm5432, %v5431, 0
        %v5434 = vshrl.u32 %v5433, 5
        %v5435 = vand.u32 %v5433, 31
        %v5436 = vsub.s32 32, %v5435
        %v5437 = vshrl.u32 683565275, %v5436
        %v5438 = vshll.u32 683565275, %v5435
        %v5439 = vshrl.u32 2475754826, %v5436
        %v5440 = vor.u32 %v5438, %v5439
        %v5441 = vshll.u32 2475754826, %v5435
        %v5442 = vshrl.u32 2131351028, %v5436
        %v5443 = vor.u32 %v5441, %v5442
        %v5444 = vshll.u32 2131351028, %v5435
        %v5445 = vshrl.u32 2102212464, %v5436
        %v5446 = vor.u32 %v5444, %v5445
        %v5447 = vshll.u32 2102212464, %v5435
        %v5448 = vshrl.u32 920167782, %v5436
        %v5449 = vor.u32 %v5447, %v5448
        %v5450 = vshll.u32 920167782, %v5435
        %v5451 = vshrl.u32 1326507024, %v5436
        %v5452 = vor.u32 %v5450, %v5451
        %vm5453 = vcmp.lt.s32.totalorder %v5434, 1
        %vm5454 = vcmp.lt.s32.totalorder %v5434, 2
        %vm5455 = vcmp.lt.s32.totalorder %v5434, 3
        %vm5456 = vcmp.lt.s32.totalorder %v5434, 4
        %v5457 = vsel %vm5453, %v5437, %v5440
        %v5458 = vsel %vm5456, %v5446, 2102212464
        %v5459 = vsel %vm5455, %v5443, %v5458
        %v5460 = vsel %vm5454, %v5457, %v5459
        %v5461 = vsel %vm5453, %v5440, %v5443
        %v5462 = vsel %vm5456, %v5449, 920167782
        %v5463 = vsel %vm5455, %v5446, %v5462
        %v5464 = vsel %vm5454, %v5461, %v5463
        %v5465 = vsel %vm5453, %v5443, %v5446
        %v5466 = vsel %vm5456, %v5452, 1326507024
        %v5467 = vsel %vm5455, %v5449, %v5466
        %v5468 = vsel %vm5454, %v5465, %v5467
        %v5469 = vshll.u32 %v5429, 8
        %v5470 = vmul.u32.u64.compose %v5469, %v5468
        %v5471 = vextract.low.u32 %v5470
        %v5472 = vextract.high.u32 %v5470
        %v5473 = vmul.u32.u64.compose %v5469, %v5464
        %v5474 = vextract.low.u32 %v5473
        %v5475 = vextract.high.u32 %v5473
        %v5476 = vmul.u32 %v5469, %v5460
        %v5477 = vadd.s32 %v5472, %v5474
        %vm5478 = vc.u32 %v5472, %v5474
        %v5479 = vadd.s32 %v5475, 1
        %v5480 = vsel %vm5478, %v5479, %v5475
        %v5481 = vadd.s32 %v5476, %v5480
        %v5482 = vadd.s32 %v5481, 536870912
        %v5483 = vshrl.u32 %v5482, 30
        %v5484 = vshll.u32 %v5483, 30
        %v5485 = vsub.s32 %v5481, %v5484
        %vm5486 = vcmp.lt.s32.totalorder %v5485, 0
        %v5487 = vsub.s32 0, %v5485
        %v5488 = vsel %vm5486, %v5487, %v5485
        %v5489 = vclz %v5488
        %v5490 = vsub.s32 %v5489, 2
        %vm5491 = vcmp.gt.s32.totalorder 0, %v5490
        %v5492 = vsel %vm5491, 0, %v5490
        %v5493 = vsub.s32 32, %v5492
        %v5494 = vshll.u32 %v5485, %v5492
        %v5495 = vshrl.u32 %v5477, %v5493
        %v5496 = vor.u32 %v5494, %v5495
        %v5497 = vsub.s32 4294967266, %v5492
        %v5498 = vadd.s32 %v5497, 127
        %v5499 = vshll.u32 %v5498, 23
        %v5500 = vor.u32 4788187, %v5499
        %v5501 = vand.u32 2147483647, %v5500
        %v5503 = vcvt.s32.f32 %v5496
        %v5504 = vmul.f32 %v5503, %v5501
        %v5505 = vxor.u32 %v5504, 2147483648
        %v5506 = vsel %vm5423, %v5505, %v5504
        %v5507 = vsub.s32 4, %v5483
        %v5508 = vsel %vm5423, %v5507, %v5483
        %v5509 = vsel %vm5422, %v906, %v5506
        %v5510 = vsel %vm5422, 0, %v5508
        %v5511 = vcosq.f32.pop %v5509
        %v5512 = vsinq.f32.pop %v5509
        %vm5513 = vweird.f32 %v906
        %v5514 = vadd.s32 %v5510, 3
        %v5515 = vand.u32 %v5514, 3
        %vm5516 = vcmp.lt.s32.totalorder %v5515, 2
        %vm5517 = vcmp.eq.s32.totalorder %v5515, 0
        %v5518 = vxor.u32 %v5512, 2147483648
        %v5519 = vsel %vm5517, %v5511, %v5518
        %vm5520 = vcmp.eq.s32.totalorder %v5515, 2
        %v5521 = vxor.u32 %v5511, 2147483648
        %v5522 = vsel %vm5520, %v5521, %v5512
        %v5523 = vsel %vm5516, %v5519, %v5522
        %v5524 = vsel %vm5513, nan, %v5523
        %v5525 = vand.u32 2147483647, %v987
        %vm5526 = vcmp.le.f32.partialorder %v5525, 0.7853982
        %vm5527 = vcmp.lt.s32.totalorder %v987, 0
        %v5528 = vand.u32 %v987, 2139095040
        %v5529 = vshrl.u32 %v5528, 23
        %v5530 = vsub.s32 %v5529, 127
        %v5531 = vand.u32 2147483647, %v987
        %v5532 = vand.u32 %v5531, 8388607
        %v5533 = vor.u32 %v5532, 8388608
        %v5534 = vsub.s32 0, %v5533
        %v5535 = vadd.s32 %v5530, 1
        %vm5536 = vcmp.gt.s32.totalorder %v5535, 0
        %v5537 = vsel %vm5536, %v5535, 0
        %v5538 = vshrl.u32 %v5537, 5
        %v5539 = vand.u32 %v5537, 31
        %v5540 = vsub.s32 32, %v5539
        %v5541 = vshrl.u32 683565275, %v5540
        %v5542 = vshll.u32 683565275, %v5539
        %v5543 = vshrl.u32 2475754826, %v5540
        %v5544 = vor.u32 %v5542, %v5543
        %v5545 = vshll.u32 2475754826, %v5539
        %v5546 = vshrl.u32 2131351028, %v5540
        %v5547 = vor.u32 %v5545, %v5546
        %v5548 = vshll.u32 2131351028, %v5539
        %v5549 = vshrl.u32 2102212464, %v5540
        %v5550 = vor.u32 %v5548, %v5549
        %v5551 = vshll.u32 2102212464, %v5539
        %v5552 = vshrl.u32 920167782, %v5540
        %v5553 = vor.u32 %v5551, %v5552
        %v5554 = vshll.u32 920167782, %v5539
        %v5555 = vshrl.u32 1326507024, %v5540
        %v5556 = vor.u32 %v5554, %v5555
        %vm5557 = vcmp.lt.s32.totalorder %v5538, 1
        %vm5558 = vcmp.lt.s32.totalorder %v5538, 2
        %vm5559 = vcmp.lt.s32.totalorder %v5538, 3
        %vm5560 = vcmp.lt.s32.totalorder %v5538, 4
        %v5561 = vsel %vm5557, %v5541, %v5544
        %v5562 = vsel %vm5560, %v5550, 2102212464
        %v5563 = vsel %vm5559, %v5547, %v5562
        %v5564 = vsel %vm5558, %v5561, %v5563
        %v5565 = vsel %vm5557, %v5544, %v5547
        %v5566 = vsel %vm5560, %v5553, 920167782
        %v5567 = vsel %vm5559, %v5550, %v5566
        %v5568 = vsel %vm5558, %v5565, %v5567
        %v5569 = vsel %vm5557, %v5547, %v5550
        %v5570 = vsel %vm5560, %v5556, 1326507024
        %v5571 = vsel %vm5559, %v5553, %v5570
        %v5572 = vsel %vm5558, %v5569, %v5571
        %v5573 = vshll.u32 %v5533, 8
        %v5574 = vmul.u32.u64.compose %v5573, %v5572
        %v5575 = vextract.low.u32 %v5574
        %v5576 = vextract.high.u32 %v5574
        %v5577 = vmul.u32.u64.compose %v5573, %v5568
        %v5578 = vextract.low.u32 %v5577
        %v5579 = vextract.high.u32 %v5577
        %v5580 = vmul.u32 %v5573, %v5564
        %v5581 = vadd.s32 %v5576, %v5578
        %vm5582 = vc.u32 %v5576, %v5578
        %v5583 = vadd.s32 %v5579, 1
        %v5584 = vsel %vm5582, %v5583, %v5579
        %v5585 = vadd.s32 %v5580, %v5584
        %v5586 = vadd.s32 %v5585, 536870912
        %v5587 = vshrl.u32 %v5586, 30
        %v5588 = vshll.u32 %v5587, 30
        %v5589 = vsub.s32 %v5585, %v5588
        %vm5590 = vcmp.lt.s32.totalorder %v5589, 0
        %v5591 = vsub.s32 0, %v5589
        %v5592 = vsel %vm5590, %v5591, %v5589
        %v5593 = vclz %v5592
        %v5594 = vsub.s32 %v5593, 2
        %vm5595 = vcmp.gt.s32.totalorder 0, %v5594
        %v5596 = vsel %vm5595, 0, %v5594
        %v5597 = vsub.s32 32, %v5596
        %v5598 = vshll.u32 %v5589, %v5596
        %v5599 = vshrl.u32 %v5581, %v5597
        %v5600 = vor.u32 %v5598, %v5599
        %v5601 = vsub.s32 4294967266, %v5596
        %v5602 = vadd.s32 %v5601, 127
        %v5603 = vshll.u32 %v5602, 23
        %v5604 = vor.u32 4788187, %v5603
        %v5605 = vand.u32 2147483647, %v5604
        %v5607 = vcvt.s32.f32 %v5600
        %v5608 = vmul.f32 %v5607, %v5605
        %v5609 = vxor.u32 %v5608, 2147483648
        %v5610 = vsel %vm5527, %v5609, %v5608
        %v5611 = vsub.s32 4, %v5587
        %v5612 = vsel %vm5527, %v5611, %v5587
        %v5613 = vsel %vm5526, %v987, %v5610
        %v5614 = vsel %vm5526, 0, %v5612
        %v5615 = vcosq.f32.pop %v5613
        %v5616 = vsinq.f32.pop %v5613
        %vm5617 = vweird.f32 %v987
        %v5618 = vadd.s32 %v5614, 3
        %v5619 = vand.u32 %v5618, 3
        %vm5620 = vcmp.lt.s32.totalorder %v5619, 2
        %vm5621 = vcmp.eq.s32.totalorder %v5619, 0
        %v5622 = vxor.u32 %v5616, 2147483648
        %v5623 = vsel %vm5621, %v5615, %v5622
        %vm5624 = vcmp.eq.s32.totalorder %v5619, 2
        %v5625 = vxor.u32 %v5615, 2147483648
        %v5626 = vsel %vm5624, %v5625, %v5616
        %v5627 = vsel %vm5620, %v5623, %v5626
        %v5628 = vsel %vm5617, nan, %v5627
        %v5629 = vand.u32 2147483647, %v989
        %vm5630 = vcmp.le.f32.partialorder %v5629, 0.7853982
        %vm5631 = vcmp.lt.s32.totalorder %v989, 0
        %v5632 = vand.u32 %v989, 2139095040
        %v5633 = vshrl.u32 %v5632, 23
        %v5634 = vsub.s32 %v5633, 127
        %v5635 = vand.u32 2147483647, %v989
        %v5636 = vand.u32 %v5635, 8388607
        %v5637 = vor.u32 %v5636, 8388608
        %v5638 = vsub.s32 0, %v5637
        %v5639 = vadd.s32 %v5634, 1
        %vm5640 = vcmp.gt.s32.totalorder %v5639, 0
        %v5641 = vsel %vm5640, %v5639, 0
        %v5642 = vshrl.u32 %v5641, 5
        %v5643 = vand.u32 %v5641, 31
        %v5644 = vsub.s32 32, %v5643
        %v5645 = vshrl.u32 683565275, %v5644
        %v5646 = vshll.u32 683565275, %v5643
        %v5647 = vshrl.u32 2475754826, %v5644
        %v5648 = vor.u32 %v5646, %v5647
        %v5649 = vshll.u32 2475754826, %v5643
        %v5650 = vshrl.u32 2131351028, %v5644
        %v5651 = vor.u32 %v5649, %v5650
        %v5652 = vshll.u32 2131351028, %v5643
        %v5653 = vshrl.u32 2102212464, %v5644
        %v5654 = vor.u32 %v5652, %v5653
        %v5655 = vshll.u32 2102212464, %v5643
        %v5656 = vshrl.u32 920167782, %v5644
        %v5657 = vor.u32 %v5655, %v5656
        %v5658 = vshll.u32 920167782, %v5643
        %v5659 = vshrl.u32 1326507024, %v5644
        %v5660 = vor.u32 %v5658, %v5659
        %vm5661 = vcmp.lt.s32.totalorder %v5642, 1
        %vm5662 = vcmp.lt.s32.totalorder %v5642, 2
        %vm5663 = vcmp.lt.s32.totalorder %v5642, 3
        %vm5664 = vcmp.lt.s32.totalorder %v5642, 4
        %v5665 = vsel %vm5661, %v5645, %v5648
        %v5666 = vsel %vm5664, %v5654, 2102212464
        %v5667 = vsel %vm5663, %v5651, %v5666
        %v5668 = vsel %vm5662, %v5665, %v5667
        %v5669 = vsel %vm5661, %v5648, %v5651
        %v5670 = vsel %vm5664, %v5657, 920167782
        %v5671 = vsel %vm5663, %v5654, %v5670
        %v5672 = vsel %vm5662, %v5669, %v5671
        %v5673 = vsel %vm5661, %v5651, %v5654
        %v5674 = vsel %vm5664, %v5660, 1326507024
        %v5675 = vsel %vm5663, %v5657, %v5674
        %v5676 = vsel %vm5662, %v5673, %v5675
        %v5677 = vshll.u32 %v5637, 8
        %v5678 = vmul.u32.u64.compose %v5677, %v5676
        %v5679 = vextract.low.u32 %v5678
        %v5680 = vextract.high.u32 %v5678
        %v5681 = vmul.u32.u64.compose %v5677, %v5672
        %v5682 = vextract.low.u32 %v5681
        %v5683 = vextract.high.u32 %v5681
        %v5684 = vmul.u32 %v5677, %v5668
        %v5685 = vadd.s32 %v5680, %v5682
        %vm5686 = vc.u32 %v5680, %v5682
        %v5687 = vadd.s32 %v5683, 1
        %v5688 = vsel %vm5686, %v5687, %v5683
        %v5689 = vadd.s32 %v5684, %v5688
        %v5690 = vadd.s32 %v5689, 536870912
        %v5691 = vshrl.u32 %v5690, 30
        %v5692 = vshll.u32 %v5691, 30
        %v5693 = vsub.s32 %v5689, %v5692
        %vm5694 = vcmp.lt.s32.totalorder %v5693, 0
        %v5695 = vsub.s32 0, %v5693
        %v5696 = vsel %vm5694, %v5695, %v5693
        %v5697 = vclz %v5696
        %v5698 = vsub.s32 %v5697, 2
        %vm5699 = vcmp.gt.s32.totalorder 0, %v5698
        %v5700 = vsel %vm5699, 0, %v5698
        %v5701 = vsub.s32 32, %v5700
        %v5702 = vshll.u32 %v5693, %v5700
        %v5703 = vshrl.u32 %v5685, %v5701
        %v5704 = vor.u32 %v5702, %v5703
        %v5705 = vsub.s32 4294967266, %v5700
        %v5706 = vadd.s32 %v5705, 127
        %v5707 = vshll.u32 %v5706, 23
        %v5708 = vor.u32 4788187, %v5707
        %v5709 = vand.u32 2147483647, %v5708
        %v5711 = vcvt.s32.f32 %v5704
        %v5712 = vmul.f32 %v5711, %v5709
        %v5713 = vxor.u32 %v5712, 2147483648
        %v5714 = vsel %vm5631, %v5713, %v5712
        %v5715 = vsub.s32 4, %v5691
        %v5716 = vsel %vm5631, %v5715, %v5691
        %v5717 = vsel %vm5630, %v989, %v5714
        %v5718 = vsel %vm5630, 0, %v5716
        %v5719 = vcosq.f32.pop %v5717
        %v5720 = vsinq.f32.pop %v5717
        %vm5721 = vweird.f32 %v989
        %v5722 = vadd.s32 %v5718, 3
        %v5723 = vand.u32 %v5722, 3
        %vm5724 = vcmp.lt.s32.totalorder %v5723, 2
        %vm5725 = vcmp.eq.s32.totalorder %v5723, 0
        %v5726 = vxor.u32 %v5720, 2147483648
        %v5727 = vsel %vm5725, %v5719, %v5726
        %vm5728 = vcmp.eq.s32.totalorder %v5723, 2
        %v5729 = vxor.u32 %v5719, 2147483648
        %v5730 = vsel %vm5728, %v5729, %v5720
        %v5731 = vsel %vm5724, %v5727, %v5730
        %v5732 = vsel %vm5721, nan, %v5731
        %v5733 = vand.u32 2147483647, %v1070
        %vm5734 = vcmp.le.f32.partialorder %v5733, 0.7853982
        %vm5735 = vcmp.lt.s32.totalorder %v1070, 0
        %v5736 = vand.u32 %v1070, 2139095040
        %v5737 = vshrl.u32 %v5736, 23
        %v5738 = vsub.s32 %v5737, 127
        %v5739 = vand.u32 2147483647, %v1070
        %v5740 = vand.u32 %v5739, 8388607
        %v5741 = vor.u32 %v5740, 8388608
        %v5742 = vsub.s32 0, %v5741
        %v5743 = vadd.s32 %v5738, 1
        %vm5744 = vcmp.gt.s32.totalorder %v5743, 0
        %v5745 = vsel %vm5744, %v5743, 0
        %v5746 = vshrl.u32 %v5745, 5
        %v5747 = vand.u32 %v5745, 31
        %v5748 = vsub.s32 32, %v5747
        %v5749 = vshrl.u32 683565275, %v5748
        %v5750 = vshll.u32 683565275, %v5747
        %v5751 = vshrl.u32 2475754826, %v5748
        %v5752 = vor.u32 %v5750, %v5751
        %v5753 = vshll.u32 2475754826, %v5747
        %v5754 = vshrl.u32 2131351028, %v5748
        %v5755 = vor.u32 %v5753, %v5754
        %v5756 = vshll.u32 2131351028, %v5747
        %v5757 = vshrl.u32 2102212464, %v5748
        %v5758 = vor.u32 %v5756, %v5757
        %v5759 = vshll.u32 2102212464, %v5747
        %v5760 = vshrl.u32 920167782, %v5748
        %v5761 = vor.u32 %v5759, %v5760
        %v5762 = vshll.u32 920167782, %v5747
        %v5763 = vshrl.u32 1326507024, %v5748
        %v5764 = vor.u32 %v5762, %v5763
        %vm5765 = vcmp.lt.s32.totalorder %v5746, 1
        %vm5766 = vcmp.lt.s32.totalorder %v5746, 2
        %vm5767 = vcmp.lt.s32.totalorder %v5746, 3
        %vm5768 = vcmp.lt.s32.totalorder %v5746, 4
        %v5769 = vsel %vm5765, %v5749, %v5752
        %v5770 = vsel %vm5768, %v5758, 2102212464
        %v5771 = vsel %vm5767, %v5755, %v5770
        %v5772 = vsel %vm5766, %v5769, %v5771
        %v5773 = vsel %vm5765, %v5752, %v5755
        %v5774 = vsel %vm5768, %v5761, 920167782
        %v5775 = vsel %vm5767, %v5758, %v5774
        %v5776 = vsel %vm5766, %v5773, %v5775
        %v5777 = vsel %vm5765, %v5755, %v5758
        %v5778 = vsel %vm5768, %v5764, 1326507024
        %v5779 = vsel %vm5767, %v5761, %v5778
        %v5780 = vsel %vm5766, %v5777, %v5779
        %v5781 = vshll.u32 %v5741, 8
        %v5782 = vmul.u32.u64.compose %v5781, %v5780
        %v5783 = vextract.low.u32 %v5782
        %v5784 = vextract.high.u32 %v5782
        %v5785 = vmul.u32.u64.compose %v5781, %v5776
        %v5786 = vextract.low.u32 %v5785
        %v5787 = vextract.high.u32 %v5785
        %v5788 = vmul.u32 %v5781, %v5772
        %v5789 = vadd.s32 %v5784, %v5786
        %vm5790 = vc.u32 %v5784, %v5786
        %v5791 = vadd.s32 %v5787, 1
        %v5792 = vsel %vm5790, %v5791, %v5787
        %v5793 = vadd.s32 %v5788, %v5792
        %v5794 = vadd.s32 %v5793, 536870912
        %v5795 = vshrl.u32 %v5794, 30
        %v5796 = vshll.u32 %v5795, 30
        %v5797 = vsub.s32 %v5793, %v5796
        %vm5798 = vcmp.lt.s32.totalorder %v5797, 0
        %v5799 = vsub.s32 0, %v5797
        %v5800 = vsel %vm5798, %v5799, %v5797
        %v5801 = vclz %v5800
        %v5802 = vsub.s32 %v5801, 2
        %vm5803 = vcmp.gt.s32.totalorder 0, %v5802
        %v5804 = vsel %vm5803, 0, %v5802
        %v5805 = vsub.s32 32, %v5804
        %v5806 = vshll.u32 %v5797, %v5804
        %v5807 = vshrl.u32 %v5789, %v5805
        %v5808 = vor.u32 %v5806, %v5807
        %v5809 = vsub.s32 4294967266, %v5804
        %v5810 = vadd.s32 %v5809, 127
        %v5811 = vshll.u32 %v5810, 23
        %v5812 = vor.u32 4788187, %v5811
        %v5813 = vand.u32 2147483647, %v5812
        %v5815 = vcvt.s32.f32 %v5808
        %v5816 = vmul.f32 %v5815, %v5813
        %v5817 = vxor.u32 %v5816, 2147483648
        %v5818 = vsel %vm5735, %v5817, %v5816
        %v5819 = vsub.s32 4, %v5795
        %v5820 = vsel %vm5735, %v5819, %v5795
        %v5821 = vsel %vm5734, %v1070, %v5818
        %v5822 = vsel %vm5734, 0, %v5820
        %v5823 = vcosq.f32.pop %v5821
        %v5824 = vsinq.f32.pop %v5821
        %vm5825 = vweird.f32 %v1070
        %v5826 = vadd.s32 %v5822, 3
        %v5827 = vand.u32 %v5826, 3
        %vm5828 = vcmp.lt.s32.totalorder %v5827, 2
        %vm5829 = vcmp.eq.s32.totalorder %v5827, 0
        %v5830 = vxor.u32 %v5824, 2147483648
        %v5831 = vsel %vm5829, %v5823, %v5830
        %vm5832 = vcmp.eq.s32.totalorder %v5827, 2
        %v5833 = vxor.u32 %v5823, 2147483648
        %v5834 = vsel %vm5832, %v5833, %v5824
        %v5835 = vsel %vm5828, %v5831, %v5834
        %v5836 = vsel %vm5825, nan, %v5835
        %v5837 = vand.u32 2147483647, %v1072
        %vm5838 = vcmp.le.f32.partialorder %v5837, 0.7853982
        %vm5839 = vcmp.lt.s32.totalorder %v1072, 0
        %v5840 = vand.u32 %v1072, 2139095040
        %v5841 = vshrl.u32 %v5840, 23
        %v5842 = vsub.s32 %v5841, 127
        %v5843 = vand.u32 2147483647, %v1072
        %v5844 = vand.u32 %v5843, 8388607
        %v5845 = vor.u32 %v5844, 8388608
        %v5846 = vsub.s32 0, %v5845
        %v5847 = vadd.s32 %v5842, 1
        %vm5848 = vcmp.gt.s32.totalorder %v5847, 0
        %v5849 = vsel %vm5848, %v5847, 0
        %v5850 = vshrl.u32 %v5849, 5
        %v5851 = vand.u32 %v5849, 31
        %v5852 = vsub.s32 32, %v5851
        %v5853 = vshrl.u32 683565275, %v5852
        %v5854 = vshll.u32 683565275, %v5851
        %v5855 = vshrl.u32 2475754826, %v5852
        %v5856 = vor.u32 %v5854, %v5855
        %v5857 = vshll.u32 2475754826, %v5851
        %v5858 = vshrl.u32 2131351028, %v5852
        %v5859 = vor.u32 %v5857, %v5858
        %v5860 = vshll.u32 2131351028, %v5851
        %v5861 = vshrl.u32 2102212464, %v5852
        %v5862 = vor.u32 %v5860, %v5861
        %v5863 = vshll.u32 2102212464, %v5851
        %v5864 = vshrl.u32 920167782, %v5852
        %v5865 = vor.u32 %v5863, %v5864
        %v5866 = vshll.u32 920167782, %v5851
        %v5867 = vshrl.u32 1326507024, %v5852
        %v5868 = vor.u32 %v5866, %v5867
        %vm5869 = vcmp.lt.s32.totalorder %v5850, 1
        %vm5870 = vcmp.lt.s32.totalorder %v5850, 2
        %vm5871 = vcmp.lt.s32.totalorder %v5850, 3
        %vm5872 = vcmp.lt.s32.totalorder %v5850, 4
        %v5873 = vsel %vm5869, %v5853, %v5856
        %v5874 = vsel %vm5872, %v5862, 2102212464
        %v5875 = vsel %vm5871, %v5859, %v5874
        %v5876 = vsel %vm5870, %v5873, %v5875
        %v5877 = vsel %vm5869, %v5856, %v5859
        %v5878 = vsel %vm5872, %v5865, 920167782
        %v5879 = vsel %vm5871, %v5862, %v5878
        %v5880 = vsel %vm5870, %v5877, %v5879
        %v5881 = vsel %vm5869, %v5859, %v5862
        %v5882 = vsel %vm5872, %v5868, 1326507024
        %v5883 = vsel %vm5871, %v5865, %v5882
        %v5884 = vsel %vm5870, %v5881, %v5883
        %v5885 = vshll.u32 %v5845, 8
        %v5886 = vmul.u32.u64.compose %v5885, %v5884
        %v5887 = vextract.low.u32 %v5886
        %v5888 = vextract.high.u32 %v5886
        %v5889 = vmul.u32.u64.compose %v5885, %v5880
        %v5890 = vextract.low.u32 %v5889
        %v5891 = vextract.high.u32 %v5889
        %v5892 = vmul.u32 %v5885, %v5876
        %v5893 = vadd.s32 %v5888, %v5890
        %vm5894 = vc.u32 %v5888, %v5890
        %v5895 = vadd.s32 %v5891, 1
        %v5896 = vsel %vm5894, %v5895, %v5891
        %v5897 = vadd.s32 %v5892, %v5896
        %v5898 = vadd.s32 %v5897, 536870912
        %v5899 = vshrl.u32 %v5898, 30
        %v5900 = vshll.u32 %v5899, 30
        %v5901 = vsub.s32 %v5897, %v5900
        %vm5902 = vcmp.lt.s32.totalorder %v5901, 0
        %v5903 = vsub.s32 0, %v5901
        %v5904 = vsel %vm5902, %v5903, %v5901
        %v5905 = vclz %v5904
        %v5906 = vsub.s32 %v5905, 2
        %vm5907 = vcmp.gt.s32.totalorder 0, %v5906
        %v5908 = vsel %vm5907, 0, %v5906
        %v5909 = vsub.s32 32, %v5908
        %v5910 = vshll.u32 %v5901, %v5908
        %v5911 = vshrl.u32 %v5893, %v5909
        %v5912 = vor.u32 %v5910, %v5911
        %v5913 = vsub.s32 4294967266, %v5908
        %v5914 = vadd.s32 %v5913, 127
        %v5915 = vshll.u32 %v5914, 23
        %v5916 = vor.u32 4788187, %v5915
        %v5917 = vand.u32 2147483647, %v5916
        %v5919 = vcvt.s32.f32 %v5912
        %v5920 = vmul.f32 %v5919, %v5917
        %v5921 = vxor.u32 %v5920, 2147483648
        %v5922 = vsel %vm5839, %v5921, %v5920
        %v5923 = vsub.s32 4, %v5899
        %v5924 = vsel %vm5839, %v5923, %v5899
        %v5925 = vsel %vm5838, %v1072, %v5922
        %v5926 = vsel %vm5838, 0, %v5924
        %v5927 = vcosq.f32.pop %v5925
        %v5928 = vsinq.f32.pop %v5925
        %vm5929 = vweird.f32 %v1072
        %v5930 = vadd.s32 %v5926, 3
        %v5931 = vand.u32 %v5930, 3
        %vm5932 = vcmp.lt.s32.totalorder %v5931, 2
        %vm5933 = vcmp.eq.s32.totalorder %v5931, 0
        %v5934 = vxor.u32 %v5928, 2147483648
        %v5935 = vsel %vm5933, %v5927, %v5934
        %vm5936 = vcmp.eq.s32.totalorder %v5931, 2
        %v5937 = vxor.u32 %v5927, 2147483648
        %v5938 = vsel %vm5936, %v5937, %v5928
        %v5939 = vsel %vm5932, %v5935, %v5938
        %v5940 = vsel %vm5929, nan, %v5939
        %v5941 = vand.u32 2147483647, %v1153
        %vm5942 = vcmp.le.f32.partialorder %v5941, 0.7853982
        %vm5943 = vcmp.lt.s32.totalorder %v1153, 0
        %v5944 = vand.u32 %v1153, 2139095040
        %v5945 = vshrl.u32 %v5944, 23
        %v5946 = vsub.s32 %v5945, 127
        %v5947 = vand.u32 2147483647, %v1153
        %v5948 = vand.u32 %v5947, 8388607
        %v5949 = vor.u32 %v5948, 8388608
        %v5950 = vsub.s32 0, %v5949
        %v5951 = vadd.s32 %v5946, 1
        %vm5952 = vcmp.gt.s32.totalorder %v5951, 0
        %v5953 = vsel %vm5952, %v5951, 0
        %v5954 = vshrl.u32 %v5953, 5
        %v5955 = vand.u32 %v5953, 31
        %v5956 = vsub.s32 32, %v5955
        %v5957 = vshrl.u32 683565275, %v5956
        %v5958 = vshll.u32 683565275, %v5955
        %v5959 = vshrl.u32 2475754826, %v5956
        %v5960 = vor.u32 %v5958, %v5959
        %v5961 = vshll.u32 2475754826, %v5955
        %v5962 = vshrl.u32 2131351028, %v5956
        %v5963 = vor.u32 %v5961, %v5962
        %v5964 = vshll.u32 2131351028, %v5955
        %v5965 = vshrl.u32 2102212464, %v5956
        %v5966 = vor.u32 %v5964, %v5965
        %v5967 = vshll.u32 2102212464, %v5955
        %v5968 = vshrl.u32 920167782, %v5956
        %v5969 = vor.u32 %v5967, %v5968
        %v5970 = vshll.u32 920167782, %v5955
        %v5971 = vshrl.u32 1326507024, %v5956
        %v5972 = vor.u32 %v5970, %v5971
        %vm5973 = vcmp.lt.s32.totalorder %v5954, 1
        %vm5974 = vcmp.lt.s32.totalorder %v5954, 2
        %vm5975 = vcmp.lt.s32.totalorder %v5954, 3
        %vm5976 = vcmp.lt.s32.totalorder %v5954, 4
        %v5977 = vsel %vm5973, %v5957, %v5960
        %v5978 = vsel %vm5976, %v5966, 2102212464
        %v5979 = vsel %vm5975, %v5963, %v5978
        %v5980 = vsel %vm5974, %v5977, %v5979
        %v5981 = vsel %vm5973, %v5960, %v5963
        %v5982 = vsel %vm5976, %v5969, 920167782
        %v5983 = vsel %vm5975, %v5966, %v5982
        %v5984 = vsel %vm5974, %v5981, %v5983
        %v5985 = vsel %vm5973, %v5963, %v5966
        %v5986 = vsel %vm5976, %v5972, 1326507024
        %v5987 = vsel %vm5975, %v5969, %v5986
        %v5988 = vsel %vm5974, %v5985, %v5987
        %v5989 = vshll.u32 %v5949, 8
        %v5990 = vmul.u32.u64.compose %v5989, %v5988
        %v5991 = vextract.low.u32 %v5990
        %v5992 = vextract.high.u32 %v5990
        %v5993 = vmul.u32.u64.compose %v5989, %v5984
        %v5994 = vextract.low.u32 %v5993
        %v5995 = vextract.high.u32 %v5993
        %v5996 = vmul.u32 %v5989, %v5980
        %v5997 = vadd.s32 %v5992, %v5994
        %vm5998 = vc.u32 %v5992, %v5994
        %v5999 = vadd.s32 %v5995, 1
        %v6000 = vsel %vm5998, %v5999, %v5995
        %v6001 = vadd.s32 %v5996, %v6000
        %v6002 = vadd.s32 %v6001, 536870912
        %v6003 = vshrl.u32 %v6002, 30
        %v6004 = vshll.u32 %v6003, 30
        %v6005 = vsub.s32 %v6001, %v6004
        %vm6006 = vcmp.lt.s32.totalorder %v6005, 0
        %v6007 = vsub.s32 0, %v6005
        %v6008 = vsel %vm6006, %v6007, %v6005
        %v6009 = vclz %v6008
        %v6010 = vsub.s32 %v6009, 2
        %vm6011 = vcmp.gt.s32.totalorder 0, %v6010
        %v6012 = vsel %vm6011, 0, %v6010
        %v6013 = vsub.s32 32, %v6012
        %v6014 = vshll.u32 %v6005, %v6012
        %v6015 = vshrl.u32 %v5997, %v6013
        %v6016 = vor.u32 %v6014, %v6015
        %v6017 = vsub.s32 4294967266, %v6012
        %v6018 = vadd.s32 %v6017, 127
        %v6019 = vshll.u32 %v6018, 23
        %v6020 = vor.u32 4788187, %v6019
        %v6021 = vand.u32 2147483647, %v6020
        %v6023 = vcvt.s32.f32 %v6016
        %v6024 = vmul.f32 %v6023, %v6021
        %v6025 = vxor.u32 %v6024, 2147483648
        %v6026 = vsel %vm5943, %v6025, %v6024
        %v6027 = vsub.s32 4, %v6003
        %v6028 = vsel %vm5943, %v6027, %v6003
        %v6029 = vsel %vm5942, %v1153, %v6026
        %v6030 = vsel %vm5942, 0, %v6028
        %v6031 = vcosq.f32.pop %v6029
        %v6032 = vsinq.f32.pop %v6029
        %vm6033 = vweird.f32 %v1153
        %v6034 = vadd.s32 %v6030, 3
        %v6035 = vand.u32 %v6034, 3
        %vm6036 = vcmp.lt.s32.totalorder %v6035, 2
        %vm6037 = vcmp.eq.s32.totalorder %v6035, 0
        %v6038 = vxor.u32 %v6032, 2147483648
        %v6039 = vsel %vm6037, %v6031, %v6038
        %vm6040 = vcmp.eq.s32.totalorder %v6035, 2
        %v6041 = vxor.u32 %v6031, 2147483648
        %v6042 = vsel %vm6040, %v6041, %v6032
        %v6043 = vsel %vm6036, %v6039, %v6042
        %v6044 = vsel %vm6033, nan, %v6043
        %v6045 = vand.u32 2147483647, %v1155
        %vm6046 = vcmp.le.f32.partialorder %v6045, 0.7853982
        %vm6047 = vcmp.lt.s32.totalorder %v1155, 0
        %v6048 = vand.u32 %v1155, 2139095040
        %v6049 = vshrl.u32 %v6048, 23
        %v6050 = vsub.s32 %v6049, 127
        %v6051 = vand.u32 2147483647, %v1155
        %v6052 = vand.u32 %v6051, 8388607
        %v6053 = vor.u32 %v6052, 8388608
        %v6054 = vsub.s32 0, %v6053
        %v6055 = vadd.s32 %v6050, 1
        %vm6056 = vcmp.gt.s32.totalorder %v6055, 0
        %v6057 = vsel %vm6056, %v6055, 0
        %v6058 = vshrl.u32 %v6057, 5
        %v6059 = vand.u32 %v6057, 31
        %v6060 = vsub.s32 32, %v6059
        %v6061 = vshrl.u32 683565275, %v6060
        %v6062 = vshll.u32 683565275, %v6059
        %v6063 = vshrl.u32 2475754826, %v6060
        %v6064 = vor.u32 %v6062, %v6063
        %v6065 = vshll.u32 2475754826, %v6059
        %v6066 = vshrl.u32 2131351028, %v6060
        %v6067 = vor.u32 %v6065, %v6066
        %v6068 = vshll.u32 2131351028, %v6059
        %v6069 = vshrl.u32 2102212464, %v6060
        %v6070 = vor.u32 %v6068, %v6069
        %v6071 = vshll.u32 2102212464, %v6059
        %v6072 = vshrl.u32 920167782, %v6060
        %v6073 = vor.u32 %v6071, %v6072
        %v6074 = vshll.u32 920167782, %v6059
        %v6075 = vshrl.u32 1326507024, %v6060
        %v6076 = vor.u32 %v6074, %v6075
        %vm6077 = vcmp.lt.s32.totalorder %v6058, 1
        %vm6078 = vcmp.lt.s32.totalorder %v6058, 2
        %vm6079 = vcmp.lt.s32.totalorder %v6058, 3
        %vm6080 = vcmp.lt.s32.totalorder %v6058, 4
        %v6081 = vsel %vm6077, %v6061, %v6064
        %v6082 = vsel %vm6080, %v6070, 2102212464
        %v6083 = vsel %vm6079, %v6067, %v6082
        %v6084 = vsel %vm6078, %v6081, %v6083
        %v6085 = vsel %vm6077, %v6064, %v6067
        %v6086 = vsel %vm6080, %v6073, 920167782
        %v6087 = vsel %vm6079, %v6070, %v6086
        %v6088 = vsel %vm6078, %v6085, %v6087
        %v6089 = vsel %vm6077, %v6067, %v6070
        %v6090 = vsel %vm6080, %v6076, 1326507024
        %v6091 = vsel %vm6079, %v6073, %v6090
        %v6092 = vsel %vm6078, %v6089, %v6091
        %v6093 = vshll.u32 %v6053, 8
        %v6094 = vmul.u32.u64.compose %v6093, %v6092
        %v6095 = vextract.low.u32 %v6094
        %v6096 = vextract.high.u32 %v6094
        %v6097 = vmul.u32.u64.compose %v6093, %v6088
        %v6098 = vextract.low.u32 %v6097
        %v6099 = vextract.high.u32 %v6097
        %v6100 = vmul.u32 %v6093, %v6084
        %v6101 = vadd.s32 %v6096, %v6098
        %vm6102 = vc.u32 %v6096, %v6098
        %v6103 = vadd.s32 %v6099, 1
        %v6104 = vsel %vm6102, %v6103, %v6099
        %v6105 = vadd.s32 %v6100, %v6104
        %v6106 = vadd.s32 %v6105, 536870912
        %v6107 = vshrl.u32 %v6106, 30
        %v6108 = vshll.u32 %v6107, 30
        %v6109 = vsub.s32 %v6105, %v6108
        %vm6110 = vcmp.lt.s32.totalorder %v6109, 0
        %v6111 = vsub.s32 0, %v6109
        %v6112 = vsel %vm6110, %v6111, %v6109
        %v6113 = vclz %v6112
        %v6114 = vsub.s32 %v6113, 2
        %vm6115 = vcmp.gt.s32.totalorder 0, %v6114
        %v6116 = vsel %vm6115, 0, %v6114
        %v6117 = vsub.s32 32, %v6116
        %v6118 = vshll.u32 %v6109, %v6116
        %v6119 = vshrl.u32 %v6101, %v6117
        %v6120 = vor.u32 %v6118, %v6119
        %v6121 = vsub.s32 4294967266, %v6116
        %v6122 = vadd.s32 %v6121, 127
        %v6123 = vshll.u32 %v6122, 23
        %v6124 = vor.u32 4788187, %v6123
        %v6125 = vand.u32 2147483647, %v6124
        %v6127 = vcvt.s32.f32 %v6120
        %v6128 = vmul.f32 %v6127, %v6125
        %v6129 = vxor.u32 %v6128, 2147483648
        %v6130 = vsel %vm6047, %v6129, %v6128
        %v6131 = vsub.s32 4, %v6107
        %v6132 = vsel %vm6047, %v6131, %v6107
        %v6133 = vsel %vm6046, %v1155, %v6130
        %v6134 = vsel %vm6046, 0, %v6132
        %v6135 = vcosq.f32.pop %v6133
        %v6136 = vsinq.f32.pop %v6133
        %vm6137 = vweird.f32 %v1155
        %v6138 = vadd.s32 %v6134, 3
        %v6139 = vand.u32 %v6138, 3
        %vm6140 = vcmp.lt.s32.totalorder %v6139, 2
        %vm6141 = vcmp.eq.s32.totalorder %v6139, 0
        %v6142 = vxor.u32 %v6136, 2147483648
        %v6143 = vsel %vm6141, %v6135, %v6142
        %vm6144 = vcmp.eq.s32.totalorder %v6139, 2
        %v6145 = vxor.u32 %v6135, 2147483648
        %v6146 = vsel %vm6144, %v6145, %v6136
        %v6147 = vsel %vm6140, %v6143, %v6146
        %v6148 = vsel %vm6137, nan, %v6147
        %v6149 = vld [vmem:[%s3] sm:$0xff]
        %v6150 = vld [vmem:[%s3 + $0x8] sm:$0xff]
        %v6151 = vld [vmem:[%s3 + $0x10] sm:$0xff]
        %v6152 = vld [vmem:[%s3 + $0x18] sm:$0xff]
        %v6153 = vld [vmem:[%s4] sm:$0xff]
        %v6154 = vld [vmem:[%s4 + $0x8] sm:$0xff]
        %v6155 = vld [vmem:[%s4 + $0x10] sm:$0xff]
        %v6156 = vld [vmem:[%s4 + $0x18] sm:$0xff]
        %6158 = vset.pattern.permute.xlu0 0
        %6159 = vperm.xlu0 %6158, %v6153
        %v6160 = vpop.permute.xlu0 %6159
        %6163 = vset.pattern.permute.xlu0 0
        %6164 = vperm.xlu0 %6163, %v6154
        %v6165 = vpop.permute.xlu0 %6164
        %6168 = vset.pattern.permute.xlu0 0
        %6169 = vperm.xlu0 %6168, %v6155
        %v6170 = vpop.permute.xlu0 %6169
        %6173 = vset.pattern.permute.xlu0 0
        %6174 = vperm.xlu0 %6173, %v6156
        %v6175 = vpop.permute.xlu0 %6174
        %vm6177 = vcmask 195584
        %v6179 = vsel %vm6177, %v6149, 0
        %v6182 = vsel %vm6177, %v6150, 0
        %v6185 = vsel %vm6177, %v6151, 0
        %v6188 = vsel %vm6177, %v6152, 0
        %6190 = vmatprep.subr.mxu0 0.0
        %6191 = vmatpush1.msra.mxu0 0.0
        %6192 = vmatprep.subr.mxu0 0.0
        %6193 = vmatpush1.msra.mxu0 0.0
        %6194 = vmatprep.subr.mxu0 0.0
        %6195 = vmatpush1.msra.mxu0 0.0
        %6196 = vmatprep.subr.mxu0 0.0
        %6197 = vmatpush1.msra.mxu0 0.0
        %6198 = vmatprep.subr.mxu0 0.0
        %6199 = vmatpush1.msra.mxu0 0.0
        %6200 = vmatprep.subr.mxu0 0.0
        %6201 = vmatpush1.msra.mxu0 0.0
        %6202 = vmatprep.subr.mxu0 0.0
        %6203 = vmatpush1.msra.mxu0 0.0
        %6204 = vmatprep.subr.mxu0 0.0
        %6205 = vmatpush1.msra.mxu0 0.0
        %6206 = vmatprep.subr.mxu0 0.0
        %6207 = vmatpush1.msra.mxu0 0.0
        %6208 = vmatprep.subr.mxu0 0.0
        %6209 = vmatpush1.msra.mxu0 0.0
        %6210 = vmatprep.subr.mxu0 0.0
        %6211 = vmatpush1.msra.mxu0 0.0
        %6212 = vmatprep.subr.mxu0 0.0
        %6213 = vmatpush1.msra.mxu0 0.0
        %6214 = vmatprep.subr.mxu0 0.0
        %6215 = vmatpush1.msra.mxu0 0.0
        %6216 = vmatprep.subr.mxu0 %v4692
        %6217 = vmatpush1.msra.mxu0 %v4588
        %6218 = vmatprep.subr.mxu0 %v3028
        %6219 = vmatpush1.msra.mxu0 %v2924
        %6220 = vmatprep.subr.mxu0 %v1364
        %6221 = vmatpush1.msra.mxu0 %v1260
        %6222 = vmatprep.subr.mxu0 0.0
        %6223 = vmatpush2.msra.mxu0 0.0
        %6224 = vmatprep.subr.mxu0 0.0
        %6225 = vmatpush2.msra.mxu0 0.0
        %6226 = vmatprep.subr.mxu0 0.0
        %6227 = vmatpush2.msra.mxu0 0.0
        %6228 = vmatprep.subr.mxu0 0.0
        %6229 = vmatpush2.msra.mxu0 0.0
        %6230 = vmatprep.subr.mxu0 0.0
        %6231 = vmatpush2.msra.mxu0 0.0
        %6232 = vmatprep.subr.mxu0 0.0
        %6233 = vmatpush2.msra.mxu0 0.0
        %6234 = vmatprep.subr.mxu0 0.0
        %6235 = vmatpush2.msra.mxu0 0.0
        %6236 = vmatprep.subr.mxu0 0.0
        %6237 = vmatpush2.msra.mxu0 0.0
        %6238 = vmatprep.subr.mxu0 0.0
        %6239 = vmatpush2.msra.mxu0 0.0
        %6240 = vmatprep.subr.mxu0 0.0
        %6241 = vmatpush2.msra.mxu0 0.0
        %6242 = vmatprep.subr.mxu0 0.0
        %6243 = vmatpush2.msra.mxu0 0.0
        %6244 = vmatprep.subr.mxu0 0.0
        %6245 = vmatpush2.msra.mxu0 0.0
        %6246 = vmatprep.subr.mxu0 0.0
        %6247 = vmatpush2.msra.mxu0 0.0
        %6248 = vmatprep.subr.mxu0 0.0
        %6249 = vmatpush2.msra.mxu0 0.0
        %6250 = vmatprep.subr.mxu0 0.0
        %6251 = vmatpush2.msra.mxu0 0.0
        %6252 = vmatprep.subr.mxu0 0.0
        %6253 = vmatpush2.msra.mxu0 0.0
        %6254 = vmatprep.mubr.f32.mxu0 0.0
        %6255 = vmatmul.mubr.f32.gmra.mxu0 %v6179
        %v6256 = vpop.f32.mrf.mxu0
        %v6257 = vadd.f32 %v6160, %v6256
        %v6258 = vpop.f32.mrf.mxu0
        %v6259 = vadd.f32 %v6160, %v6258
        %6260 = vmatprep.mubr.f32.mxu0 0.0
        %6261 = vmatmul.mubr.f32.gmra.mxu0 %v6182
        %v6262 = vpop.f32.mrf.mxu0
        %v6263 = vadd.f32 %v6165, %v6262
        %v6264 = vpop.f32.mrf.mxu0
        %v6265 = vadd.f32 %v6165, %v6264
        %6266 = vmatprep.mubr.f32.mxu0 0.0
        %6267 = vmatmul.mubr.f32.gmra.mxu0 %v6185
        %v6268 = vpop.f32.mrf.mxu0
        %v6269 = vadd.f32 %v6170, %v6268
        %v6270 = vpop.f32.mrf.mxu0
        %v6271 = vadd.f32 %v6170, %v6270
        %6272 = vmatprep.mubr.f32.mxu0 0.0
        %6273 = vmatmul.mubr.f32.gmra.mxu0 %v6188
        %v6274 = vpop.f32.mrf.mxu0
        %v6275 = vadd.f32 %v6175, %v6274
        %v6276 = vpop.f32.mrf.mxu0
        %v6277 = vadd.f32 %v6175, %v6276
        %6278 = vdwg.mxu0
        %6279 = vmatprep.subr.mxu0 0.0
        %6280 = vmatpush1.msra.mxu0 0.0
        %6281 = vmatprep.subr.mxu0 0.0
        %6282 = vmatpush1.msra.mxu0 0.0
        %6283 = vmatprep.subr.mxu0 0.0
        %6284 = vmatpush1.msra.mxu0 0.0
        %6285 = vmatprep.subr.mxu0 0.0
        %6286 = vmatpush1.msra.mxu0 0.0
        %6287 = vmatprep.subr.mxu0 0.0
        %6288 = vmatpush1.msra.mxu0 0.0
        %6289 = vmatprep.subr.mxu0 0.0
        %6290 = vmatpush1.msra.mxu0 0.0
        %6291 = vmatprep.subr.mxu0 0.0
        %6292 = vmatpush1.msra.mxu0 0.0
        %6293 = vmatprep.subr.mxu0 0.0
        %6294 = vmatpush1.msra.mxu0 0.0
        %6295 = vmatprep.subr.mxu0 0.0
        %6296 = vmatpush1.msra.mxu0 0.0
        %6297 = vmatprep.subr.mxu0 0.0
        %6298 = vmatpush1.msra.mxu0 0.0
        %6299 = vmatprep.subr.mxu0 0.0
        %6300 = vmatpush1.msra.mxu0 0.0
        %6301 = vmatprep.subr.mxu0 0.0
        %6302 = vmatpush1.msra.mxu0 0.0
        %6303 = vmatprep.subr.mxu0 0.0
        %6304 = vmatpush1.msra.mxu0 0.0
        %6305 = vmatprep.subr.mxu0 %v4900
        %6306 = vmatpush1.msra.mxu0 %v4796
        %6307 = vmatprep.subr.mxu0 %v3236
        %6308 = vmatpush1.msra.mxu0 %v3132
        %6309 = vmatprep.subr.mxu0 %v1572
        %6310 = vmatpush1.msra.mxu0 %v1468
        %6311 = vmatprep.subr.mxu0 0.0
        %6312 = vmatpush2.msra.mxu0 0.0
        %6313 = vmatprep.subr.mxu0 0.0
        %6314 = vmatpush2.msra.mxu0 0.0
        %6315 = vmatprep.subr.mxu0 0.0
        %6316 = vmatpush2.msra.mxu0 0.0
        %6317 = vmatprep.subr.mxu0 0.0
        %6318 = vmatpush2.msra.mxu0 0.0
        %6319 = vmatprep.subr.mxu0 0.0
        %6320 = vmatpush2.msra.mxu0 0.0
        %6321 = vmatprep.subr.mxu0 0.0
        %6322 = vmatpush2.msra.mxu0 0.0
        %6323 = vmatprep.subr.mxu0 0.0
        %6324 = vmatpush2.msra.mxu0 0.0
        %6325 = vmatprep.subr.mxu0 0.0
        %6326 = vmatpush2.msra.mxu0 0.0
        %6327 = vmatprep.subr.mxu0 0.0
        %6328 = vmatpush2.msra.mxu0 0.0
        %6329 = vmatprep.subr.mxu0 0.0
        %6330 = vmatpush2.msra.mxu0 0.0
        %6331 = vmatprep.subr.mxu0 0.0
        %6332 = vmatpush2.msra.mxu0 0.0
        %6333 = vmatprep.subr.mxu0 0.0
        %6334 = vmatpush2.msra.mxu0 0.0
        %6335 = vmatprep.subr.mxu0 0.0
        %6336 = vmatpush2.msra.mxu0 0.0
        %6337 = vmatprep.subr.mxu0 0.0
        %6338 = vmatpush2.msra.mxu0 0.0
        %6339 = vmatprep.subr.mxu0 0.0
        %6340 = vmatpush2.msra.mxu0 0.0
        %6341 = vmatprep.subr.mxu0 0.0
        %6342 = vmatpush2.msra.mxu0 0.0
        %6343 = vmatprep.mubr.f32.mxu0 0.0
        %6344 = vmatmul.mubr.f32.gmra.mxu0 %v6179
        %v6345 = vpop.f32.mrf.mxu0
        %v6346 = vadd.f32 %v6160, %v6345
        %v6347 = vpop.f32.mrf.mxu0
        %v6348 = vadd.f32 %v6160, %v6347
        %6349 = vmatprep.mubr.f32.mxu0 0.0
        %6350 = vmatmul.mubr.f32.gmra.mxu0 %v6182
        %v6351 = vpop.f32.mrf.mxu0
        %v6352 = vadd.f32 %v6165, %v6351
        %v6353 = vpop.f32.mrf.mxu0
        %v6354 = vadd.f32 %v6165, %v6353
        %6355 = vmatprep.mubr.f32.mxu0 0.0
        %6356 = vmatmul.mubr.f32.gmra.mxu0 %v6185
        %v6357 = vpop.f32.mrf.mxu0
        %v6358 = vadd.f32 %v6170, %v6357
        %v6359 = vpop.f32.mrf.mxu0
        %v6360 = vadd.f32 %v6170, %v6359
        %6361 = vmatprep.mubr.f32.mxu0 0.0
        %6362 = vmatmul.mubr.f32.gmra.mxu0 %v6188
        %v6363 = vpop.f32.mrf.mxu0
        %v6364 = vadd.f32 %v6175, %v6363
        %v6365 = vpop.f32.mrf.mxu0
        %v6366 = vadd.f32 %v6175, %v6365
        %6367 = vdwg.mxu0
        %6368 = vmatprep.subr.mxu0 0.0
        %6369 = vmatpush1.msra.mxu0 0.0
        %6370 = vmatprep.subr.mxu0 0.0
        %6371 = vmatpush1.msra.mxu0 0.0
        %6372 = vmatprep.subr.mxu0 0.0
        %6373 = vmatpush1.msra.mxu0 0.0
        %6374 = vmatprep.subr.mxu0 0.0
        %6375 = vmatpush1.msra.mxu0 0.0
        %6376 = vmatprep.subr.mxu0 0.0
        %6377 = vmatpush1.msra.mxu0 0.0
        %6378 = vmatprep.subr.mxu0 0.0
        %6379 = vmatpush1.msra.mxu0 0.0
        %6380 = vmatprep.subr.mxu0 0.0
        %6381 = vmatpush1.msra.mxu0 0.0
        %6382 = vmatprep.subr.mxu0 0.0
        %6383 = vmatpush1.msra.mxu0 0.0
        %6384 = vmatprep.subr.mxu0 0.0
        %6385 = vmatpush1.msra.mxu0 0.0
        %6386 = vmatprep.subr.mxu0 0.0
        %6387 = vmatpush1.msra.mxu0 0.0
        %6388 = vmatprep.subr.mxu0 0.0
        %6389 = vmatpush1.msra.mxu0 0.0
        %6390 = vmatprep.subr.mxu0 0.0
        %6391 = vmatpush1.msra.mxu0 0.0
        %6392 = vmatprep.subr.mxu0 0.0
        %6393 = vmatpush1.msra.mxu0 0.0
        %6394 = vmatprep.subr.mxu0 %v5108
        %6395 = vmatpush1.msra.mxu0 %v5004
        %6396 = vmatprep.subr.mxu0 %v3444
        %6397 = vmatpush1.msra.mxu0 %v3340
        %6398 = vmatprep.subr.mxu0 %v1780
        %6399 = vmatpush1.msra.mxu0 %v1676
        %6400 = vmatprep.subr.mxu0 0.0
        %6401 = vmatpush2.msra.mxu0 0.0
        %6402 = vmatprep.subr.mxu0 0.0
        %6403 = vmatpush2.msra.mxu0 0.0
        %6404 = vmatprep.subr.mxu0 0.0
        %6405 = vmatpush2.msra.mxu0 0.0
        %6406 = vmatprep.subr.mxu0 0.0
        %6407 = vmatpush2.msra.mxu0 0.0
        %6408 = vmatprep.subr.mxu0 0.0
        %6409 = vmatpush2.msra.mxu0 0.0
        %6410 = vmatprep.subr.mxu0 0.0
        %6411 = vmatpush2.msra.mxu0 0.0
        %6412 = vmatprep.subr.mxu0 0.0
        %6413 = vmatpush2.msra.mxu0 0.0
        %6414 = vmatprep.subr.mxu0 0.0
        %6415 = vmatpush2.msra.mxu0 0.0
        %6416 = vmatprep.subr.mxu0 0.0
        %6417 = vmatpush2.msra.mxu0 0.0
        %6418 = vmatprep.subr.mxu0 0.0
        %6419 = vmatpush2.msra.mxu0 0.0
        %6420 = vmatprep.subr.mxu0 0.0
        %6421 = vmatpush2.msra.mxu0 0.0
        %6422 = vmatprep.subr.mxu0 0.0
        %6423 = vmatpush2.msra.mxu0 0.0
        %6424 = vmatprep.subr.mxu0 0.0
        %6425 = vmatpush2.msra.mxu0 0.0
        %6426 = vmatprep.subr.mxu0 0.0
        %6427 = vmatpush2.msra.mxu0 0.0
        %6428 = vmatprep.subr.mxu0 0.0
        %6429 = vmatpush2.msra.mxu0 0.0
        %6430 = vmatprep.subr.mxu0 0.0
        %6431 = vmatpush2.msra.mxu0 0.0
        %6432 = vmatprep.mubr.f32.mxu0 0.0
        %6433 = vmatmul.mubr.f32.gmra.mxu0 %v6179
        %v6434 = vpop.f32.mrf.mxu0
        %v6435 = vadd.f32 %v6160, %v6434
        %v6436 = vpop.f32.mrf.mxu0
        %v6437 = vadd.f32 %v6160, %v6436
        %6438 = vmatprep.mubr.f32.mxu0 0.0
        %6439 = vmatmul.mubr.f32.gmra.mxu0 %v6182
        %v6440 = vpop.f32.mrf.mxu0
        %v6441 = vadd.f32 %v6165, %v6440
        %v6442 = vpop.f32.mrf.mxu0
        %v6443 = vadd.f32 %v6165, %v6442
        %6444 = vmatprep.mubr.f32.mxu0 0.0
        %6445 = vmatmul.mubr.f32.gmra.mxu0 %v6185
        %v6446 = vpop.f32.mrf.mxu0
        %v6447 = vadd.f32 %v6170, %v6446
        %v6448 = vpop.f32.mrf.mxu0
        %v6449 = vadd.f32 %v6170, %v6448
        %6450 = vmatprep.mubr.f32.mxu0 0.0
        %6451 = vmatmul.mubr.f32.gmra.mxu0 %v6188
        %v6452 = vpop.f32.mrf.mxu0
        %v6453 = vadd.f32 %v6175, %v6452
        %v6454 = vpop.f32.mrf.mxu0
        %v6455 = vadd.f32 %v6175, %v6454
        %6456 = vdwg.mxu0
        %6457 = vmatprep.subr.mxu0 0.0
        %6458 = vmatpush1.msra.mxu0 0.0
        %6459 = vmatprep.subr.mxu0 0.0
        %6460 = vmatpush1.msra.mxu0 0.0
        %6461 = vmatprep.subr.mxu0 0.0
        %6462 = vmatpush1.msra.mxu0 0.0
        %6463 = vmatprep.subr.mxu0 0.0
        %6464 = vmatpush1.msra.mxu0 0.0
        %6465 = vmatprep.subr.mxu0 0.0
        %6466 = vmatpush1.msra.mxu0 0.0
        %6467 = vmatprep.subr.mxu0 0.0
        %6468 = vmatpush1.msra.mxu0 0.0
        %6469 = vmatprep.subr.mxu0 0.0
        %6470 = vmatpush1.msra.mxu0 0.0
        %6471 = vmatprep.subr.mxu0 0.0
        %6472 = vmatpush1.msra.mxu0 0.0
        %6473 = vmatprep.subr.mxu0 0.0
        %6474 = vmatpush1.msra.mxu0 0.0
        %6475 = vmatprep.subr.mxu0 0.0
        %6476 = vmatpush1.msra.mxu0 0.0
        %6477 = vmatprep.subr.mxu0 0.0
        %6478 = vmatpush1.msra.mxu0 0.0
        %6479 = vmatprep.subr.mxu0 0.0
        %6480 = vmatpush1.msra.mxu0 0.0
        %6481 = vmatprep.subr.mxu0 0.0
        %6482 = vmatpush1.msra.mxu0 0.0
        %6483 = vmatprep.subr.mxu0 %v5316
        %6484 = vmatpush1.msra.mxu0 %v5212
        %6485 = vmatprep.subr.mxu0 %v3652
        %6486 = vmatpush1.msra.mxu0 %v3548
        %6487 = vmatprep.subr.mxu0 %v1988
        %6488 = vmatpush1.msra.mxu0 %v1884
        %6489 = vmatprep.subr.mxu0 0.0
        %6490 = vmatpush2.msra.mxu0 0.0
        %6491 = vmatprep.subr.mxu0 0.0
        %6492 = vmatpush2.msra.mxu0 0.0
        %6493 = vmatprep.subr.mxu0 0.0
        %6494 = vmatpush2.msra.mxu0 0.0
        %6495 = vmatprep.subr.mxu0 0.0
        %6496 = vmatpush2.msra.mxu0 0.0
        %6497 = vmatprep.subr.mxu0 0.0
        %6498 = vmatpush2.msra.mxu0 0.0
        %6499 = vmatprep.subr.mxu0 0.0
        %6500 = vmatpush2.msra.mxu0 0.0
        %6501 = vmatprep.subr.mxu0 0.0
        %6502 = vmatpush2.msra.mxu0 0.0
        %6503 = vmatprep.subr.mxu0 0.0
        %6504 = vmatpush2.msra.mxu0 0.0
        %6505 = vmatprep.subr.mxu0 0.0
        %6506 = vmatpush2.msra.mxu0 0.0
        %6507 = vmatprep.subr.mxu0 0.0
        %6508 = vmatpush2.msra.mxu0 0.0
        %6509 = vmatprep.subr.mxu0 0.0
        %6510 = vmatpush2.msra.mxu0 0.0
        %6511 = vmatprep.subr.mxu0 0.0
        %6512 = vmatpush2.msra.mxu0 0.0
        %6513 = vmatprep.subr.mxu0 0.0
        %6514 = vmatpush2.msra.mxu0 0.0
        %6515 = vmatprep.subr.mxu0 0.0
        %6516 = vmatpush2.msra.mxu0 0.0
        %6517 = vmatprep.subr.mxu0 0.0
        %6518 = vmatpush2.msra.mxu0 0.0
        %6519 = vmatprep.subr.mxu0 0.0
        %6520 = vmatpush2.msra.mxu0 0.0
        %6521 = vmatprep.mubr.f32.mxu0 0.0
        %6522 = vmatmul.mubr.f32.gmra.mxu0 %v6179
        %v6523 = vpop.f32.mrf.mxu0
        %v6524 = vadd.f32 %v6160, %v6523
        %v6525 = vpop.f32.mrf.mxu0
        %v6526 = vadd.f32 %v6160, %v6525
        %6527 = vmatprep.mubr.f32.mxu0 0.0
        %6528 = vmatmul.mubr.f32.gmra.mxu0 %v6182
        %v6529 = vpop.f32.mrf.mxu0
        %v6530 = vadd.f32 %v6165, %v6529
        %v6531 = vpop.f32.mrf.mxu0
        %v6532 = vadd.f32 %v6165, %v6531
        %6533 = vmatprep.mubr.f32.mxu0 0.0
        %6534 = vmatmul.mubr.f32.gmra.mxu0 %v6185
        %v6535 = vpop.f32.mrf.mxu0
        %v6536 = vadd.f32 %v6170, %v6535
        %v6537 = vpop.f32.mrf.mxu0
        %v6538 = vadd.f32 %v6170, %v6537
        %6539 = vmatprep.mubr.f32.mxu0 0.0
        %6540 = vmatmul.mubr.f32.gmra.mxu0 %v6188
        %v6541 = vpop.f32.mrf.mxu0
        %v6542 = vadd.f32 %v6175, %v6541
        %v6543 = vpop.f32.mrf.mxu0
        %v6544 = vadd.f32 %v6175, %v6543
        %6545 = vdwg.mxu0
        %6546 = vmatprep.subr.mxu0 0.0
        %6547 = vmatpush1.msra.mxu0 0.0
        %6548 = vmatprep.subr.mxu0 0.0
        %6549 = vmatpush1.msra.mxu0 0.0
        %6550 = vmatprep.subr.mxu0 0.0
        %6551 = vmatpush1.msra.mxu0 0.0
        %6552 = vmatprep.subr.mxu0 0.0
        %6553 = vmatpush1.msra.mxu0 0.0
        %6554 = vmatprep.subr.mxu0 0.0
        %6555 = vmatpush1.msra.mxu0 0.0
        %6556 = vmatprep.subr.mxu0 0.0
        %6557 = vmatpush1.msra.mxu0 0.0
        %6558 = vmatprep.subr.mxu0 0.0
        %6559 = vmatpush1.msra.mxu0 0.0
        %6560 = vmatprep.subr.mxu0 0.0
        %6561 = vmatpush1.msra.mxu0 0.0
        %6562 = vmatprep.subr.mxu0 0.0
        %6563 = vmatpush1.msra.mxu0 0.0
        %6564 = vmatprep.subr.mxu0 0.0
        %6565 = vmatpush1.msra.mxu0 0.0
        %6566 = vmatprep.subr.mxu0 0.0
        %6567 = vmatpush1.msra.mxu0 0.0
        %6568 = vmatprep.subr.mxu0 0.0
        %6569 = vmatpush1.msra.mxu0 0.0
        %6570 = vmatprep.subr.mxu0 0.0
        %6571 = vmatpush1.msra.mxu0 0.0
        %6572 = vmatprep.subr.mxu0 %v5524
        %6573 = vmatpush1.msra.mxu0 %v5420
        %6574 = vmatprep.subr.mxu0 %v3860
        %6575 = vmatpush1.msra.mxu0 %v3756
        %6576 = vmatprep.subr.mxu0 %v2196
        %6577 = vmatpush1.msra.mxu0 %v2092
        %6578 = vmatprep.subr.mxu0 0.0
        %6579 = vmatpush2.msra.mxu0 0.0
        %6580 = vmatprep.subr.mxu0 0.0
        %6581 = vmatpush2.msra.mxu0 0.0
        %6582 = vmatprep.subr.mxu0 0.0
        %6583 = vmatpush2.msra.mxu0 0.0
        %6584 = vmatprep.subr.mxu0 0.0
        %6585 = vmatpush2.msra.mxu0 0.0
        %6586 = vmatprep.subr.mxu0 0.0
        %6587 = vmatpush2.msra.mxu0 0.0
        %6588 = vmatprep.subr.mxu0 0.0
        %6589 = vmatpush2.msra.mxu0 0.0
        %6590 = vmatprep.subr.mxu0 0.0
        %6591 = vmatpush2.msra.mxu0 0.0
        %6592 = vmatprep.subr.mxu0 0.0
        %6593 = vmatpush2.msra.mxu0 0.0
        %6594 = vmatprep.subr.mxu0 0.0
        %6595 = vmatpush2.msra.mxu0 0.0
        %6596 = vmatprep.subr.mxu0 0.0
        %6597 = vmatpush2.msra.mxu0 0.0
        %6598 = vmatprep.subr.mxu0 0.0
        %6599 = vmatpush2.msra.mxu0 0.0
        %6600 = vmatprep.subr.mxu0 0.0
        %6601 = vmatpush2.msra.mxu0 0.0
        %6602 = vmatprep.subr.mxu0 0.0
        %6603 = vmatpush2.msra.mxu0 0.0
        %6604 = vmatprep.subr.mxu0 0.0
        %6605 = vmatpush2.msra.mxu0 0.0
        %6606 = vmatprep.subr.mxu0 0.0
        %6607 = vmatpush2.msra.mxu0 0.0
        %6608 = vmatprep.subr.mxu0 0.0
        %6609 = vmatpush2.msra.mxu0 0.0
        %6610 = vmatprep.mubr.f32.mxu0 0.0
        %6611 = vmatmul.mubr.f32.gmra.mxu0 %v6179
        %v6612 = vpop.f32.mrf.mxu0
        %v6613 = vadd.f32 %v6160, %v6612
        %v6614 = vpop.f32.mrf.mxu0
        %v6615 = vadd.f32 %v6160, %v6614
        %6616 = vmatprep.mubr.f32.mxu0 0.0
        %6617 = vmatmul.mubr.f32.gmra.mxu0 %v6182
        %v6618 = vpop.f32.mrf.mxu0
        %v6619 = vadd.f32 %v6165, %v6618
        %v6620 = vpop.f32.mrf.mxu0
        %v6621 = vadd.f32 %v6165, %v6620
        %6622 = vmatprep.mubr.f32.mxu0 0.0
        %6623 = vmatmul.mubr.f32.gmra.mxu0 %v6185
        %v6624 = vpop.f32.mrf.mxu0
        %v6625 = vadd.f32 %v6170, %v6624
        %v6626 = vpop.f32.mrf.mxu0
        %v6627 = vadd.f32 %v6170, %v6626
        %6628 = vmatprep.mubr.f32.mxu0 0.0
        %6629 = vmatmul.mubr.f32.gmra.mxu0 %v6188
        %v6630 = vpop.f32.mrf.mxu0
        %v6631 = vadd.f32 %v6175, %v6630
        %v6632 = vpop.f32.mrf.mxu0
        %v6633 = vadd.f32 %v6175, %v6632
        %6634 = vdwg.mxu0
        %6635 = vmatprep.subr.mxu0 0.0
        %6636 = vmatpush1.msra.mxu0 0.0
        %6637 = vmatprep.subr.mxu0 0.0
        %6638 = vmatpush1.msra.mxu0 0.0
        %6639 = vmatprep.subr.mxu0 0.0
        %6640 = vmatpush1.msra.mxu0 0.0
        %6641 = vmatprep.subr.mxu0 0.0
        %6642 = vmatpush1.msra.mxu0 0.0
        %6643 = vmatprep.subr.mxu0 0.0
        %6644 = vmatpush1.msra.mxu0 0.0
        %6645 = vmatprep.subr.mxu0 0.0
        %6646 = vmatpush1.msra.mxu0 0.0
        %6647 = vmatprep.subr.mxu0 0.0
        %6648 = vmatpush1.msra.mxu0 0.0
        %6649 = vmatprep.subr.mxu0 0.0
        %6650 = vmatpush1.msra.mxu0 0.0
        %6651 = vmatprep.subr.mxu0 0.0
        %6652 = vmatpush1.msra.mxu0 0.0
        %6653 = vmatprep.subr.mxu0 0.0
        %6654 = vmatpush1.msra.mxu0 0.0
        %6655 = vmatprep.subr.mxu0 0.0
        %6656 = vmatpush1.msra.mxu0 0.0
        %6657 = vmatprep.subr.mxu0 0.0
        %6658 = vmatpush1.msra.mxu0 0.0
        %6659 = vmatprep.subr.mxu0 0.0
        %6660 = vmatpush1.msra.mxu0 0.0
        %6661 = vmatprep.subr.mxu0 %v5732
        %6662 = vmatpush1.msra.mxu0 %v5628
        %6663 = vmatprep.subr.mxu0 %v4068
        %6664 = vmatpush1.msra.mxu0 %v3964
        %6665 = vmatprep.subr.mxu0 %v2404
        %6666 = vmatpush1.msra.mxu0 %v2300
        %6667 = vmatprep.subr.mxu0 0.0
        %6668 = vmatpush2.msra.mxu0 0.0
        %6669 = vmatprep.subr.mxu0 0.0
        %6670 = vmatpush2.msra.mxu0 0.0
        %6671 = vmatprep.subr.mxu0 0.0
        %6672 = vmatpush2.msra.mxu0 0.0
        %6673 = vmatprep.subr.mxu0 0.0
        %6674 = vmatpush2.msra.mxu0 0.0
        %6675 = vmatprep.subr.mxu0 0.0
        %6676 = vmatpush2.msra.mxu0 0.0
        %6677 = vmatprep.subr.mxu0 0.0
        %6678 = vmatpush2.msra.mxu0 0.0
        %6679 = vmatprep.subr.mxu0 0.0
        %6680 = vmatpush2.msra.mxu0 0.0
        %6681 = vmatprep.subr.mxu0 0.0
        %6682 = vmatpush2.msra.mxu0 0.0
        %6683 = vmatprep.subr.mxu0 0.0
        %6684 = vmatpush2.msra.mxu0 0.0
        %6685 = vmatprep.subr.mxu0 0.0
        %6686 = vmatpush2.msra.mxu0 0.0
        %6687 = vmatprep.subr.mxu0 0.0
        %6688 = vmatpush2.msra.mxu0 0.0
        %6689 = vmatprep.subr.mxu0 0.0
        %6690 = vmatpush2.msra.mxu0 0.0
        %6691 = vmatprep.subr.mxu0 0.0
        %6692 = vmatpush2.msra.mxu0 0.0
        %6693 = vmatprep.subr.mxu0 0.0
        %6694 = vmatpush2.msra.mxu0 0.0
        %6695 = vmatprep.subr.mxu0 0.0
        %6696 = vmatpush2.msra.mxu0 0.0
        %6697 = vmatprep.subr.mxu0 0.0
        %6698 = vmatpush2.msra.mxu0 0.0
        %6699 = vmatprep.mubr.f32.mxu0 0.0
        %6700 = vmatmul.mubr.f32.gmra.mxu0 %v6179
        %v6701 = vpop.f32.mrf.mxu0
        %v6702 = vadd.f32 %v6160, %v6701
        %v6703 = vpop.f32.mrf.mxu0
        %v6704 = vadd.f32 %v6160, %v6703
        %6705 = vmatprep.mubr.f32.mxu0 0.0
        %6706 = vmatmul.mubr.f32.gmra.mxu0 %v6182
        %v6707 = vpop.f32.mrf.mxu0
        %v6708 = vadd.f32 %v6165, %v6707
        %v6709 = vpop.f32.mrf.mxu0
        %v6710 = vadd.f32 %v6165, %v6709
        %6711 = vmatprep.mubr.f32.mxu0 0.0
        %6712 = vmatmul.mubr.f32.gmra.mxu0 %v6185
        %v6713 = vpop.f32.mrf.mxu0
        %v6714 = vadd.f32 %v6170, %v6713
        %v6715 = vpop.f32.mrf.mxu0
        %v6716 = vadd.f32 %v6170, %v6715
        %6717 = vmatprep.mubr.f32.mxu0 0.0
        %6718 = vmatmul.mubr.f32.gmra.mxu0 %v6188
        %v6719 = vpop.f32.mrf.mxu0
        %v6720 = vadd.f32 %v6175, %v6719
        %v6721 = vpop.f32.mrf.mxu0
        %v6722 = vadd.f32 %v6175, %v6721
        %6723 = vdwg.mxu0
        %6724 = vmatprep.subr.mxu0 0.0
        %6725 = vmatpush1.msra.mxu0 0.0
        %6726 = vmatprep.subr.mxu0 0.0
        %6727 = vmatpush1.msra.mxu0 0.0
        %6728 = vmatprep.subr.mxu0 0.0
        %6729 = vmatpush1.msra.mxu0 0.0
        %6730 = vmatprep.subr.mxu0 0.0
        %6731 = vmatpush1.msra.mxu0 0.0
        %6732 = vmatprep.subr.mxu0 0.0
        %6733 = vmatpush1.msra.mxu0 0.0
        %6734 = vmatprep.subr.mxu0 0.0
        %6735 = vmatpush1.msra.mxu0 0.0
        %6736 = vmatprep.subr.mxu0 0.0
        %6737 = vmatpush1.msra.mxu0 0.0
        %6738 = vmatprep.subr.mxu0 0.0
        %6739 = vmatpush1.msra.mxu0 0.0
        %6740 = vmatprep.subr.mxu0 0.0
        %6741 = vmatpush1.msra.mxu0 0.0
        %6742 = vmatprep.subr.mxu0 0.0
        %6743 = vmatpush1.msra.mxu0 0.0
        %6744 = vmatprep.subr.mxu0 0.0
        %6745 = vmatpush1.msra.mxu0 0.0
        %6746 = vmatprep.subr.mxu0 0.0
        %6747 = vmatpush1.msra.mxu0 0.0
        %6748 = vmatprep.subr.mxu0 0.0
        %6749 = vmatpush1.msra.mxu0 0.0
        %6750 = vmatprep.subr.mxu0 %v5940
        %6751 = vmatpush1.msra.mxu0 %v5836
        %6752 = vmatprep.subr.mxu0 %v4276
        %6753 = vmatpush1.msra.mxu0 %v4172
        %6754 = vmatprep.subr.mxu0 %v2612
        %6755 = vmatpush1.msra.mxu0 %v2508
        %6756 = vmatprep.subr.mxu0 0.0
        %6757 = vmatpush2.msra.mxu0 0.0
        %6758 = vmatprep.subr.mxu0 0.0
        %6759 = vmatpush2.msra.mxu0 0.0
        %6760 = vmatprep.subr.mxu0 0.0
        %6761 = vmatpush2.msra.mxu0 0.0
        %6762 = vmatprep.subr.mxu0 0.0
        %6763 = vmatpush2.msra.mxu0 0.0
        %6764 = vmatprep.subr.mxu0 0.0
        %6765 = vmatpush2.msra.mxu0 0.0
        %6766 = vmatprep.subr.mxu0 0.0
        %6767 = vmatpush2.msra.mxu0 0.0
        %6768 = vmatprep.subr.mxu0 0.0
        %6769 = vmatpush2.msra.mxu0 0.0
        %6770 = vmatprep.subr.mxu0 0.0
        %6771 = vmatpush2.msra.mxu0 0.0
        %6772 = vmatprep.subr.mxu0 0.0
        %6773 = vmatpush2.msra.mxu0 0.0
        %6774 = vmatprep.subr.mxu0 0.0
        %6775 = vmatpush2.msra.mxu0 0.0
        %6776 = vmatprep.subr.mxu0 0.0
        %6777 = vmatpush2.msra.mxu0 0.0
        %6778 = vmatprep.subr.mxu0 0.0
        %6779 = vmatpush2.msra.mxu0 0.0
        %6780 = vmatprep.subr.mxu0 0.0
        %6781 = vmatpush2.msra.mxu0 0.0
        %6782 = vmatprep.subr.mxu0 0.0
        %6783 = vmatpush2.msra.mxu0 0.0
        %6784 = vmatprep.subr.mxu0 0.0
        %6785 = vmatpush2.msra.mxu0 0.0
        %6786 = vmatprep.subr.mxu0 0.0
        %6787 = vmatpush2.msra.mxu0 0.0
        %6788 = vmatprep.mubr.f32.mxu0 0.0
        %6789 = vmatmul.mubr.f32.gmra.mxu0 %v6179
        %v6790 = vpop.f32.mrf.mxu0
        %v6791 = vadd.f32 %v6160, %v6790
        %v6792 = vpop.f32.mrf.mxu0
        %v6793 = vadd.f32 %v6160, %v6792
        %6794 = vmatprep.mubr.f32.mxu0 0.0
        %6795 = vmatmul.mubr.f32.gmra.mxu0 %v6182
        %v6796 = vpop.f32.mrf.mxu0
        %v6797 = vadd.f32 %v6165, %v6796
        %v6798 = vpop.f32.mrf.mxu0
        %v6799 = vadd.f32 %v6165, %v6798
        %6800 = vmatprep.mubr.f32.mxu0 0.0
        %6801 = vmatmul.mubr.f32.gmra.mxu0 %v6185
        %v6802 = vpop.f32.mrf.mxu0
        %v6803 = vadd.f32 %v6170, %v6802
        %v6804 = vpop.f32.mrf.mxu0
        %v6805 = vadd.f32 %v6170, %v6804
        %6806 = vmatprep.mubr.f32.mxu0 0.0
        %6807 = vmatmul.mubr.f32.gmra.mxu0 %v6188
        %v6808 = vpop.f32.mrf.mxu0
        %v6809 = vadd.f32 %v6175, %v6808
        %v6810 = vpop.f32.mrf.mxu0
        %v6811 = vadd.f32 %v6175, %v6810
        %6812 = vdwg.mxu0
        %6813 = vmatprep.subr.mxu0 0.0
        %6814 = vmatpush1.msra.mxu0 0.0
        %6815 = vmatprep.subr.mxu0 0.0
        %6816 = vmatpush1.msra.mxu0 0.0
        %6817 = vmatprep.subr.mxu0 0.0
        %6818 = vmatpush1.msra.mxu0 0.0
        %6819 = vmatprep.subr.mxu0 0.0
        %6820 = vmatpush1.msra.mxu0 0.0
        %6821 = vmatprep.subr.mxu0 0.0
        %6822 = vmatpush1.msra.mxu0 0.0
        %6823 = vmatprep.subr.mxu0 0.0
        %6824 = vmatpush1.msra.mxu0 0.0
        %6825 = vmatprep.subr.mxu0 0.0
        %6826 = vmatpush1.msra.mxu0 0.0
        %6827 = vmatprep.subr.mxu0 0.0
        %6828 = vmatpush1.msra.mxu0 0.0
        %6829 = vmatprep.subr.mxu0 0.0
        %6830 = vmatpush1.msra.mxu0 0.0
        %6831 = vmatprep.subr.mxu0 0.0
        %6832 = vmatpush1.msra.mxu0 0.0
        %6833 = vmatprep.subr.mxu0 0.0
        %6834 = vmatpush1.msra.mxu0 0.0
        %6835 = vmatprep.subr.mxu0 0.0
        %6836 = vmatpush1.msra.mxu0 0.0
        %6837 = vmatprep.subr.mxu0 0.0
        %6838 = vmatpush1.msra.mxu0 0.0
        %6839 = vmatprep.subr.mxu0 %v6148
        %6840 = vmatpush1.msra.mxu0 %v6044
        %6841 = vmatprep.subr.mxu0 %v4484
        %6842 = vmatpush1.msra.mxu0 %v4380
        %6843 = vmatprep.subr.mxu0 %v2820
        %6844 = vmatpush1.msra.mxu0 %v2716
        %6845 = vmatprep.subr.mxu0 0.0
        %6846 = vmatpush2.msra.mxu0 0.0
        %6847 = vmatprep.subr.mxu0 0.0
        %6848 = vmatpush2.msra.mxu0 0.0
        %6849 = vmatprep.subr.mxu0 0.0
        %6850 = vmatpush2.msra.mxu0 0.0
        %6851 = vmatprep.subr.mxu0 0.0
        %6852 = vmatpush2.msra.mxu0 0.0
        %6853 = vmatprep.subr.mxu0 0.0
        %6854 = vmatpush2.msra.mxu0 0.0
        %6855 = vmatprep.subr.mxu0 0.0
        %6856 = vmatpush2.msra.mxu0 0.0
        %6857 = vmatprep.subr.mxu0 0.0
        %6858 = vmatpush2.msra.mxu0 0.0
        %6859 = vmatprep.subr.mxu0 0.0
        %6860 = vmatpush2.msra.mxu0 0.0
        %6861 = vmatprep.subr.mxu0 0.0
        %6862 = vmatpush2.msra.mxu0 0.0
        %6863 = vmatprep.subr.mxu0 0.0
        %6864 = vmatpush2.msra.mxu0 0.0
        %6865 = vmatprep.subr.mxu0 0.0
        %6866 = vmatpush2.msra.mxu0 0.0
        %6867 = vmatprep.subr.mxu0 0.0
        %6868 = vmatpush2.msra.mxu0 0.0
        %6869 = vmatprep.subr.mxu0 0.0
        %6870 = vmatpush2.msra.mxu0 0.0
        %6871 = vmatprep.subr.mxu0 0.0
        %6872 = vmatpush2.msra.mxu0 0.0
        %6873 = vmatprep.subr.mxu0 0.0
        %6874 = vmatpush2.msra.mxu0 0.0
        %6875 = vmatprep.subr.mxu0 0.0
        %6876 = vmatpush2.msra.mxu0 0.0
        %6877 = vmatprep.mubr.f32.mxu0 0.0
        %6878 = vmatmul.mubr.f32.gmra.mxu0 %v6179
        %v6879 = vpop.f32.mrf.mxu0
        %v6880 = vadd.f32 %v6160, %v6879
        %v6881 = vpop.f32.mrf.mxu0
        %v6882 = vadd.f32 %v6160, %v6881
        %6883 = vmatprep.mubr.f32.mxu0 0.0
        %6884 = vmatmul.mubr.f32.gmra.mxu0 %v6182
        %v6885 = vpop.f32.mrf.mxu0
        %v6886 = vadd.f32 %v6165, %v6885
        %v6887 = vpop.f32.mrf.mxu0
        %v6888 = vadd.f32 %v6165, %v6887
        %6889 = vmatprep.mubr.f32.mxu0 0.0
        %6890 = vmatmul.mubr.f32.gmra.mxu0 %v6185
        %v6891 = vpop.f32.mrf.mxu0
        %v6892 = vadd.f32 %v6170, %v6891
        %v6893 = vpop.f32.mrf.mxu0
        %v6894 = vadd.f32 %v6170, %v6893
        %6895 = vmatprep.mubr.f32.mxu0 0.0
        %6896 = vmatmul.mubr.f32.gmra.mxu0 %v6188
        %v6897 = vpop.f32.mrf.mxu0
        %v6898 = vadd.f32 %v6175, %v6897
        %v6899 = vpop.f32.mrf.mxu0
        %v6900 = vadd.f32 %v6175, %v6899
        %6901 = vdwg.mxu0
        %v6902 = vmax.f32 %v6257, 0.0
        %v6903 = vmax.f32 %v6259, 0.0
        %v6904 = vmax.f32 %v6346, 0.0
        %v6905 = vmax.f32 %v6348, 0.0
        %v6906 = vmax.f32 %v6435, 0.0
        %v6907 = vmax.f32 %v6437, 0.0
        %v6908 = vmax.f32 %v6524, 0.0
        %v6909 = vmax.f32 %v6526, 0.0
        %v6910 = vmax.f32 %v6613, 0.0
        %v6911 = vmax.f32 %v6615, 0.0
        %v6912 = vmax.f32 %v6702, 0.0
        %v6913 = vmax.f32 %v6704, 0.0
        %v6914 = vmax.f32 %v6791, 0.0
        %v6915 = vmax.f32 %v6793, 0.0
        %v6916 = vmax.f32 %v6880, 0.0
        %v6917 = vmax.f32 %v6882, 0.0
        %v6918 = vmax.f32 %v6263, 0.0
        %v6919 = vmax.f32 %v6265, 0.0
        %v6920 = vmax.f32 %v6352, 0.0
        %v6921 = vmax.f32 %v6354, 0.0
        %v6922 = vmax.f32 %v6441, 0.0
        %v6923 = vmax.f32 %v6443, 0.0
        %v6924 = vmax.f32 %v6530, 0.0
        %v6925 = vmax.f32 %v6532, 0.0
        %v6926 = vmax.f32 %v6619, 0.0
        %v6927 = vmax.f32 %v6621, 0.0
        %v6928 = vmax.f32 %v6708, 0.0
        %v6929 = vmax.f32 %v6710, 0.0
        %v6930 = vmax.f32 %v6797, 0.0
        %v6931 = vmax.f32 %v6799, 0.0
        %v6932 = vmax.f32 %v6886, 0.0
        %v6933 = vmax.f32 %v6888, 0.0
        %v6934 = vmax.f32 %v6269, 0.0
        %v6935 = vmax.f32 %v6271, 0.0
        %v6936 = vmax.f32 %v6358, 0.0
        %v6937 = vmax.f32 %v6360, 0.0
        %v6938 = vmax.f32 %v6447, 0.0
        %v6939 = vmax.f32 %v6449, 0.0
        %v6940 = vmax.f32 %v6536, 0.0
        %v6941 = vmax.f32 %v6538, 0.0
        %v6942 = vmax.f32 %v6625, 0.0
        %v6943 = vmax.f32 %v6627, 0.0
        %v6944 = vmax.f32 %v6714, 0.0
        %v6945 = vmax.f32 %v6716, 0.0
        %v6946 = vmax.f32 %v6803, 0.0
        %v6947 = vmax.f32 %v6805, 0.0
        %v6948 = vmax.f32 %v6892, 0.0
        %v6949 = vmax.f32 %v6894, 0.0
        %v6950 = vmax.f32 %v6275, 0.0
        %v6951 = vmax.f32 %v6277, 0.0
        %v6952 = vmax.f32 %v6364, 0.0
        %v6953 = vmax.f32 %v6366, 0.0
        %v6954 = vmax.f32 %v6453, 0.0
        %v6955 = vmax.f32 %v6455, 0.0
        %v6956 = vmax.f32 %v6542, 0.0
        %v6957 = vmax.f32 %v6544, 0.0
        %v6958 = vmax.f32 %v6631, 0.0
        %v6959 = vmax.f32 %v6633, 0.0
        %v6960 = vmax.f32 %v6720, 0.0
        %v6961 = vmax.f32 %v6722, 0.0
        %v6962 = vmax.f32 %v6809, 0.0
        %v6963 = vmax.f32 %v6811, 0.0
        %v6964 = vmax.f32 %v6898, 0.0
        %v6965 = vmax.f32 %v6900, 0.0
        %v6966 = vld [vmem:[%s5] sm:$0xff]
        %v6967 = vld [vmem:[%s5 + $0x8] sm:$0xff]
        %v6968 = vld [vmem:[%s5 + $0x10] sm:$0xff]
        %v6969 = vld [vmem:[%s5 + $0x18] sm:$0xff]
        %v6970 = vld [vmem:[%s6] sm:$0xff]
        %v6971 = vld [vmem:[%s6 + $0x8] sm:$0xff]
        %v6972 = vld [vmem:[%s6 + $0x10] sm:$0xff]
        %v6973 = vld [vmem:[%s6 + $0x18] sm:$0xff]
        %v6975 = vsel %vm6177, %v6970, 0
        %v6978 = vsel %vm6177, %v6971, 0
        %v6981 = vsel %vm6177, %v6972, 0
        %v6984 = vsel %vm6177, %v6973, 0
        %6986 = vmatprep.subr.mxu0 0.0
        %6987 = vmatpush1.msra.mxu0 0.0
        %6988 = vmatprep.subr.mxu0 0.0
        %6989 = vmatpush1.msra.mxu0 0.0
        %6990 = vmatprep.subr.mxu0 0.0
        %6991 = vmatpush1.msra.mxu0 0.0
        %6992 = vmatprep.subr.mxu0 0.0
        %6993 = vmatpush1.msra.mxu0 0.0
        %6994 = vmatprep.subr.mxu0 0.0
        %6995 = vmatpush1.msra.mxu0 0.0
        %6996 = vmatprep.subr.mxu0 0.0
        %6997 = vmatpush1.msra.mxu0 0.0
        %6998 = vmatprep.subr.mxu0 0.0
        %6999 = vmatpush1.msra.mxu0 0.0
        %7000 = vmatprep.subr.mxu0 0.0
        %7001 = vmatpush1.msra.mxu0 0.0
        %7002 = vmatprep.subr.mxu0 0.0
        %7003 = vmatpush1.msra.mxu0 0.0
        %7004 = vmatprep.subr.mxu0 0.0
        %7005 = vmatpush1.msra.mxu0 0.0
        %7006 = vmatprep.subr.mxu0 0.0
        %7007 = vmatpush1.msra.mxu0 0.0
        %7008 = vmatprep.subr.mxu0 0.0
        %7009 = vmatpush1.msra.mxu0 0.0
        %7010 = vmatprep.subr.mxu0 0.0
        %7011 = vmatpush1.msra.mxu0 0.0
        %7012 = vmatprep.subr.mxu0 %v4692
        %7013 = vmatpush1.msra.mxu0 %v4588
        %7014 = vmatprep.subr.mxu0 %v3028
        %7015 = vmatpush1.msra.mxu0 %v2924
        %7016 = vmatprep.subr.mxu0 %v1364
        %7017 = vmatpush1.msra.mxu0 %v1260
        %7018 = vmatprep.subr.mxu0 0.0
        %7019 = vmatpush2.msra.mxu0 0.0
        %7020 = vmatprep.subr.mxu0 0.0
        %7021 = vmatpush2.msra.mxu0 0.0
        %7022 = vmatprep.subr.mxu0 0.0
        %7023 = vmatpush2.msra.mxu0 0.0
        %7024 = vmatprep.subr.mxu0 0.0
        %7025 = vmatpush2.msra.mxu0 0.0
        %7026 = vmatprep.subr.mxu0 0.0
        %7027 = vmatpush2.msra.mxu0 0.0
        %7028 = vmatprep.subr.mxu0 0.0
        %7029 = vmatpush2.msra.mxu0 0.0
        %7030 = vmatprep.subr.mxu0 0.0
        %7031 = vmatpush2.msra.mxu0 0.0
        %7032 = vmatprep.subr.mxu0 0.0
        %7033 = vmatpush2.msra.mxu0 0.0
        %7034 = vmatprep.subr.mxu0 0.0
        %7035 = vmatpush2.msra.mxu0 0.0
        %7036 = vmatprep.subr.mxu0 0.0
        %7037 = vmatpush2.msra.mxu0 0.0
        %7038 = vmatprep.subr.mxu0 0.0
        %7039 = vmatpush2.msra.mxu0 0.0
        %7040 = vmatprep.subr.mxu0 0.0
        %7041 = vmatpush2.msra.mxu0 0.0
        %7042 = vmatprep.subr.mxu0 0.0
        %7043 = vmatpush2.msra.mxu0 0.0
        %7044 = vmatprep.subr.mxu0 0.0
        %7045 = vmatpush2.msra.mxu0 0.0
        %7046 = vmatprep.subr.mxu0 0.0
        %7047 = vmatpush2.msra.mxu0 0.0
        %7048 = vmatprep.subr.mxu0 0.0
        %7049 = vmatpush2.msra.mxu0 0.0
        %7050 = vmatprep.mubr.f32.mxu0 0.0
        %7051 = vmatmul.mubr.f32.gmra.mxu0 %v6975
        %v7052 = vpop.f32.mrf.mxu0
        %v7053 = vadd.f32 0.0, %v7052
        %v7054 = vpop.f32.mrf.mxu0
        %v7055 = vadd.f32 0.0, %v7054
        %7056 = vmatprep.mubr.f32.mxu0 0.0
        %7057 = vmatmul.mubr.f32.gmra.mxu0 %v6978
        %v7058 = vpop.f32.mrf.mxu0
        %v7059 = vadd.f32 0.0, %v7058
        %v7060 = vpop.f32.mrf.mxu0
        %v7061 = vadd.f32 0.0, %v7060
        %7062 = vmatprep.mubr.f32.mxu0 0.0
        %7063 = vmatmul.mubr.f32.gmra.mxu0 %v6981
        %v7064 = vpop.f32.mrf.mxu0
        %v7065 = vadd.f32 0.0, %v7064
        %v7066 = vpop.f32.mrf.mxu0
        %v7067 = vadd.f32 0.0, %v7066
        %7068 = vmatprep.mubr.f32.mxu0 0.0
        %7069 = vmatmul.mubr.f32.gmra.mxu0 %v6984
        %v7070 = vpop.f32.mrf.mxu0
        %v7071 = vadd.f32 0.0, %v7070
        %v7072 = vpop.f32.mrf.mxu0
        %v7073 = vadd.f32 0.0, %v7072
        %7074 = vdwg.mxu0
        %7075 = vmatprep.subr.mxu0 0.0
        %7076 = vmatpush1.msra.mxu0 0.0
        %7077 = vmatprep.subr.mxu0 0.0
        %7078 = vmatpush1.msra.mxu0 0.0
        %7079 = vmatprep.subr.mxu0 0.0
        %7080 = vmatpush1.msra.mxu0 0.0
        %7081 = vmatprep.subr.mxu0 0.0
        %7082 = vmatpush1.msra.mxu0 0.0
        %7083 = vmatprep.subr.mxu0 0.0
        %7084 = vmatpush1.msra.mxu0 0.0
        %7085 = vmatprep.subr.mxu0 0.0
        %7086 = vmatpush1.msra.mxu0 0.0
        %7087 = vmatprep.subr.mxu0 0.0
        %7088 = vmatpush1.msra.mxu0 0.0
        %7089 = vmatprep.subr.mxu0 0.0
        %7090 = vmatpush1.msra.mxu0 0.0
        %7091 = vmatprep.subr.mxu0 0.0
        %7092 = vmatpush1.msra.mxu0 0.0
        %7093 = vmatprep.subr.mxu0 0.0
        %7094 = vmatpush1.msra.mxu0 0.0
        %7095 = vmatprep.subr.mxu0 0.0
        %7096 = vmatpush1.msra.mxu0 0.0
        %7097 = vmatprep.subr.mxu0 0.0
        %7098 = vmatpush1.msra.mxu0 0.0
        %7099 = vmatprep.subr.mxu0 0.0
        %7100 = vmatpush1.msra.mxu0 0.0
        %7101 = vmatprep.subr.mxu0 %v4900
        %7102 = vmatpush1.msra.mxu0 %v4796
        %7103 = vmatprep.subr.mxu0 %v3236
        %7104 = vmatpush1.msra.mxu0 %v3132
        %7105 = vmatprep.subr.mxu0 %v1572
        %7106 = vmatpush1.msra.mxu0 %v1468
        %7107 = vmatprep.subr.mxu0 0.0
        %7108 = vmatpush2.msra.mxu0 0.0
        %7109 = vmatprep.subr.mxu0 0.0
        %7110 = vmatpush2.msra.mxu0 0.0
        %7111 = vmatprep.subr.mxu0 0.0
        %7112 = vmatpush2.msra.mxu0 0.0
        %7113 = vmatprep.subr.mxu0 0.0
        %7114 = vmatpush2.msra.mxu0 0.0
        %7115 = vmatprep.subr.mxu0 0.0
        %7116 = vmatpush2.msra.mxu0 0.0
        %7117 = vmatprep.subr.mxu0 0.0
        %7118 = vmatpush2.msra.mxu0 0.0
        %7119 = vmatprep.subr.mxu0 0.0
        %7120 = vmatpush2.msra.mxu0 0.0
        %7121 = vmatprep.subr.mxu0 0.0
        %7122 = vmatpush2.msra.mxu0 0.0
        %7123 = vmatprep.subr.mxu0 0.0
        %7124 = vmatpush2.msra.mxu0 0.0
        %7125 = vmatprep.subr.mxu0 0.0
        %7126 = vmatpush2.msra.mxu0 0.0
        %7127 = vmatprep.subr.mxu0 0.0
        %7128 = vmatpush2.msra.mxu0 0.0
        %7129 = vmatprep.subr.mxu0 0.0
        %7130 = vmatpush2.msra.mxu0 0.0
        %7131 = vmatprep.subr.mxu0 0.0
        %7132 = vmatpush2.msra.mxu0 0.0
        %7133 = vmatprep.subr.mxu0 0.0
        %7134 = vmatpush2.msra.mxu0 0.0
        %7135 = vmatprep.subr.mxu0 0.0
        %7136 = vmatpush2.msra.mxu0 0.0
        %7137 = vmatprep.subr.mxu0 0.0
        %7138 = vmatpush2.msra.mxu0 0.0
        %7139 = vmatprep.mubr.f32.mxu0 0.0
        %7140 = vmatmul.mubr.f32.gmra.mxu0 %v6975
        %v7141 = vpop.f32.mrf.mxu0
        %v7142 = vadd.f32 0.0, %v7141
        %v7143 = vpop.f32.mrf.mxu0
        %v7144 = vadd.f32 0.0, %v7143
        %7145 = vmatprep.mubr.f32.mxu0 0.0
        %7146 = vmatmul.mubr.f32.gmra.mxu0 %v6978
        %v7147 = vpop.f32.mrf.mxu0
        %v7148 = vadd.f32 0.0, %v7147
        %v7149 = vpop.f32.mrf.mxu0
        %v7150 = vadd.f32 0.0, %v7149
        %7151 = vmatprep.mubr.f32.mxu0 0.0
        %7152 = vmatmul.mubr.f32.gmra.mxu0 %v6981
        %v7153 = vpop.f32.mrf.mxu0
        %v7154 = vadd.f32 0.0, %v7153
        %v7155 = vpop.f32.mrf.mxu0
        %v7156 = vadd.f32 0.0, %v7155
        %7157 = vmatprep.mubr.f32.mxu0 0.0
        %7158 = vmatmul.mubr.f32.gmra.mxu0 %v6984
        %v7159 = vpop.f32.mrf.mxu0
        %v7160 = vadd.f32 0.0, %v7159
        %v7161 = vpop.f32.mrf.mxu0
        %v7162 = vadd.f32 0.0, %v7161
        %7163 = vdwg.mxu0
        %7164 = vmatprep.subr.mxu0 0.0
        %7165 = vmatpush1.msra.mxu0 0.0
        %7166 = vmatprep.subr.mxu0 0.0
        %7167 = vmatpush1.msra.mxu0 0.0
        %7168 = vmatprep.subr.mxu0 0.0
        %7169 = vmatpush1.msra.mxu0 0.0
        %7170 = vmatprep.subr.mxu0 0.0
        %7171 = vmatpush1.msra.mxu0 0.0
        %7172 = vmatprep.subr.mxu0 0.0
        %7173 = vmatpush1.msra.mxu0 0.0
        %7174 = vmatprep.subr.mxu0 0.0
        %7175 = vmatpush1.msra.mxu0 0.0
        %7176 = vmatprep.subr.mxu0 0.0
        %7177 = vmatpush1.msra.mxu0 0.0
        %7178 = vmatprep.subr.mxu0 0.0
        %7179 = vmatpush1.msra.mxu0 0.0
        %7180 = vmatprep.subr.mxu0 0.0
        %7181 = vmatpush1.msra.mxu0 0.0
        %7182 = vmatprep.subr.mxu0 0.0
        %7183 = vmatpush1.msra.mxu0 0.0
        %7184 = vmatprep.subr.mxu0 0.0
        %7185 = vmatpush1.msra.mxu0 0.0
        %7186 = vmatprep.subr.mxu0 0.0
        %7187 = vmatpush1.msra.mxu0 0.0
        %7188 = vmatprep.subr.mxu0 0.0
        %7189 = vmatpush1.msra.mxu0 0.0
        %7190 = vmatprep.subr.mxu0 %v5108
        %7191 = vmatpush1.msra.mxu0 %v5004
        %7192 = vmatprep.subr.mxu0 %v3444
        %7193 = vmatpush1.msra.mxu0 %v3340
        %7194 = vmatprep.subr.mxu0 %v1780
        %7195 = vmatpush1.msra.mxu0 %v1676
        %7196 = vmatprep.subr.mxu0 0.0
        %7197 = vmatpush2.msra.mxu0 0.0
        %7198 = vmatprep.subr.mxu0 0.0
        %7199 = vmatpush2.msra.mxu0 0.0
        %7200 = vmatprep.subr.mxu0 0.0
        %7201 = vmatpush2.msra.mxu0 0.0
        %7202 = vmatprep.subr.mxu0 0.0
        %7203 = vmatpush2.msra.mxu0 0.0
        %7204 = vmatprep.subr.mxu0 0.0
        %7205 = vmatpush2.msra.mxu0 0.0
        %7206 = vmatprep.subr.mxu0 0.0
        %7207 = vmatpush2.msra.mxu0 0.0
        %7208 = vmatprep.subr.mxu0 0.0
        %7209 = vmatpush2.msra.mxu0 0.0
        %7210 = vmatprep.subr.mxu0 0.0
        %7211 = vmatpush2.msra.mxu0 0.0
        %7212 = vmatprep.subr.mxu0 0.0
        %7213 = vmatpush2.msra.mxu0 0.0
        %7214 = vmatprep.subr.mxu0 0.0
        %7215 = vmatpush2.msra.mxu0 0.0
        %7216 = vmatprep.subr.mxu0 0.0
        %7217 = vmatpush2.msra.mxu0 0.0
        %7218 = vmatprep.subr.mxu0 0.0
        %7219 = vmatpush2.msra.mxu0 0.0
        %7220 = vmatprep.subr.mxu0 0.0
        %7221 = vmatpush2.msra.mxu0 0.0
        %7222 = vmatprep.subr.mxu0 0.0
        %7223 = vmatpush2.msra.mxu0 0.0
        %7224 = vmatprep.subr.mxu0 0.0
        %7225 = vmatpush2.msra.mxu0 0.0
        %7226 = vmatprep.subr.mxu0 0.0
        %7227 = vmatpush2.msra.mxu0 0.0
        %7228 = vmatprep.mubr.f32.mxu0 0.0
        %7229 = vmatmul.mubr.f32.gmra.mxu0 %v6975
        %v7230 = vpop.f32.mrf.mxu0
        %v7231 = vadd.f32 0.0, %v7230
        %v7232 = vpop.f32.mrf.mxu0
        %v7233 = vadd.f32 0.0, %v7232
        %7234 = vmatprep.mubr.f32.mxu0 0.0
        %7235 = vmatmul.mubr.f32.gmra.mxu0 %v6978
        %v7236 = vpop.f32.mrf.mxu0
        %v7237 = vadd.f32 0.0, %v7236
        %v7238 = vpop.f32.mrf.mxu0
        %v7239 = vadd.f32 0.0, %v7238
        %7240 = vmatprep.mubr.f32.mxu0 0.0
        %7241 = vmatmul.mubr.f32.gmra.mxu0 %v6981
        %v7242 = vpop.f32.mrf.mxu0
        %v7243 = vadd.f32 0.0, %v7242
        %v7244 = vpop.f32.mrf.mxu0
        %v7245 = vadd.f32 0.0, %v7244
        %7246 = vmatprep.mubr.f32.mxu0 0.0
        %7247 = vmatmul.mubr.f32.gmra.mxu0 %v6984
        %v7248 = vpop.f32.mrf.mxu0
        %v7249 = vadd.f32 0.0, %v7248
        %v7250 = vpop.f32.mrf.mxu0
        %v7251 = vadd.f32 0.0, %v7250
        %7252 = vdwg.mxu0
        %7253 = vmatprep.subr.mxu0 0.0
        %7254 = vmatpush1.msra.mxu0 0.0
        %7255 = vmatprep.subr.mxu0 0.0
        %7256 = vmatpush1.msra.mxu0 0.0
        %7257 = vmatprep.subr.mxu0 0.0
        %7258 = vmatpush1.msra.mxu0 0.0
        %7259 = vmatprep.subr.mxu0 0.0
        %7260 = vmatpush1.msra.mxu0 0.0
        %7261 = vmatprep.subr.mxu0 0.0
        %7262 = vmatpush1.msra.mxu0 0.0
        %7263 = vmatprep.subr.mxu0 0.0
        %7264 = vmatpush1.msra.mxu0 0.0
        %7265 = vmatprep.subr.mxu0 0.0
        %7266 = vmatpush1.msra.mxu0 0.0
        %7267 = vmatprep.subr.mxu0 0.0
        %7268 = vmatpush1.msra.mxu0 0.0
        %7269 = vmatprep.subr.mxu0 0.0
        %7270 = vmatpush1.msra.mxu0 0.0
        %7271 = vmatprep.subr.mxu0 0.0
        %7272 = vmatpush1.msra.mxu0 0.0
        %7273 = vmatprep.subr.mxu0 0.0
        %7274 = vmatpush1.msra.mxu0 0.0
        %7275 = vmatprep.subr.mxu0 0.0
        %7276 = vmatpush1.msra.mxu0 0.0
        %7277 = vmatprep.subr.mxu0 0.0
        %7278 = vmatpush1.msra.mxu0 0.0
        %7279 = vmatprep.subr.mxu0 %v5316
        %7280 = vmatpush1.msra.mxu0 %v5212
        %7281 = vmatprep.subr.mxu0 %v3652
        %7282 = vmatpush1.msra.mxu0 %v3548
        %7283 = vmatprep.subr.mxu0 %v1988
        %7284 = vmatpush1.msra.mxu0 %v1884
        %7285 = vmatprep.subr.mxu0 0.0
        %7286 = vmatpush2.msra.mxu0 0.0
        %7287 = vmatprep.subr.mxu0 0.0
        %7288 = vmatpush2.msra.mxu0 0.0
        %7289 = vmatprep.subr.mxu0 0.0
        %7290 = vmatpush2.msra.mxu0 0.0
        %7291 = vmatprep.subr.mxu0 0.0
        %7292 = vmatpush2.msra.mxu0 0.0
        %7293 = vmatprep.subr.mxu0 0.0
        %7294 = vmatpush2.msra.mxu0 0.0
        %7295 = vmatprep.subr.mxu0 0.0
        %7296 = vmatpush2.msra.mxu0 0.0
        %7297 = vmatprep.subr.mxu0 0.0
        %7298 = vmatpush2.msra.mxu0 0.0
        %7299 = vmatprep.subr.mxu0 0.0
        %7300 = vmatpush2.msra.mxu0 0.0
        %7301 = vmatprep.subr.mxu0 0.0
        %7302 = vmatpush2.msra.mxu0 0.0
        %7303 = vmatprep.subr.mxu0 0.0
        %7304 = vmatpush2.msra.mxu0 0.0
        %7305 = vmatprep.subr.mxu0 0.0
        %7306 = vmatpush2.msra.mxu0 0.0
        %7307 = vmatprep.subr.mxu0 0.0
        %7308 = vmatpush2.msra.mxu0 0.0
        %7309 = vmatprep.subr.mxu0 0.0
        %7310 = vmatpush2.msra.mxu0 0.0
        %7311 = vmatprep.subr.mxu0 0.0
        %7312 = vmatpush2.msra.mxu0 0.0
        %7313 = vmatprep.subr.mxu0 0.0
        %7314 = vmatpush2.msra.mxu0 0.0
        %7315 = vmatprep.subr.mxu0 0.0
        %7316 = vmatpush2.msra.mxu0 0.0
        %7317 = vmatprep.mubr.f32.mxu0 0.0
        %7318 = vmatmul.mubr.f32.gmra.mxu0 %v6975
        %v7319 = vpop.f32.mrf.mxu0
        %v7320 = vadd.f32 0.0, %v7319
        %v7321 = vpop.f32.mrf.mxu0
        %v7322 = vadd.f32 0.0, %v7321
        %7323 = vmatprep.mubr.f32.mxu0 0.0
        %7324 = vmatmul.mubr.f32.gmra.mxu0 %v6978
        %v7325 = vpop.f32.mrf.mxu0
        %v7326 = vadd.f32 0.0, %v7325
        %v7327 = vpop.f32.mrf.mxu0
        %v7328 = vadd.f32 0.0, %v7327
        %7329 = vmatprep.mubr.f32.mxu0 0.0
        %7330 = vmatmul.mubr.f32.gmra.mxu0 %v6981
        %v7331 = vpop.f32.mrf.mxu0
        %v7332 = vadd.f32 0.0, %v7331
        %v7333 = vpop.f32.mrf.mxu0
        %v7334 = vadd.f32 0.0, %v7333
        %7335 = vmatprep.mubr.f32.mxu0 0.0
        %7336 = vmatmul.mubr.f32.gmra.mxu0 %v6984
        %v7337 = vpop.f32.mrf.mxu0
        %v7338 = vadd.f32 0.0, %v7337
        %v7339 = vpop.f32.mrf.mxu0
        %v7340 = vadd.f32 0.0, %v7339
        %7341 = vdwg.mxu0
        %7342 = vmatprep.subr.mxu0 0.0
        %7343 = vmatpush1.msra.mxu0 0.0
        %7344 = vmatprep.subr.mxu0 0.0
        %7345 = vmatpush1.msra.mxu0 0.0
        %7346 = vmatprep.subr.mxu0 0.0
        %7347 = vmatpush1.msra.mxu0 0.0
        %7348 = vmatprep.subr.mxu0 0.0
        %7349 = vmatpush1.msra.mxu0 0.0
        %7350 = vmatprep.subr.mxu0 0.0
        %7351 = vmatpush1.msra.mxu0 0.0
        %7352 = vmatprep.subr.mxu0 0.0
        %7353 = vmatpush1.msra.mxu0 0.0
        %7354 = vmatprep.subr.mxu0 0.0
        %7355 = vmatpush1.msra.mxu0 0.0
        %7356 = vmatprep.subr.mxu0 0.0
        %7357 = vmatpush1.msra.mxu0 0.0
        %7358 = vmatprep.subr.mxu0 0.0
        %7359 = vmatpush1.msra.mxu0 0.0
        %7360 = vmatprep.subr.mxu0 0.0
        %7361 = vmatpush1.msra.mxu0 0.0
        %7362 = vmatprep.subr.mxu0 0.0
        %7363 = vmatpush1.msra.mxu0 0.0
        %7364 = vmatprep.subr.mxu0 0.0
        %7365 = vmatpush1.msra.mxu0 0.0
        %7366 = vmatprep.subr.mxu0 0.0
        %7367 = vmatpush1.msra.mxu0 0.0
        %7368 = vmatprep.subr.mxu0 %v5524
        %7369 = vmatpush1.msra.mxu0 %v5420
        %7370 = vmatprep.subr.mxu0 %v3860
        %7371 = vmatpush1.msra.mxu0 %v3756
        %7372 = vmatprep.subr.mxu0 %v2196
        %7373 = vmatpush1.msra.mxu0 %v2092
        %7374 = vmatprep.subr.mxu0 0.0
        %7375 = vmatpush2.msra.mxu0 0.0
        %7376 = vmatprep.subr.mxu0 0.0
        %7377 = vmatpush2.msra.mxu0 0.0
        %7378 = vmatprep.subr.mxu0 0.0
        %7379 = vmatpush2.msra.mxu0 0.0
        %7380 = vmatprep.subr.mxu0 0.0
        %7381 = vmatpush2.msra.mxu0 0.0
        %7382 = vmatprep.subr.mxu0 0.0
        %7383 = vmatpush2.msra.mxu0 0.0
        %7384 = vmatprep.subr.mxu0 0.0
        %7385 = vmatpush2.msra.mxu0 0.0
        %7386 = vmatprep.subr.mxu0 0.0
        %7387 = vmatpush2.msra.mxu0 0.0
        %7388 = vmatprep.subr.mxu0 0.0
        %7389 = vmatpush2.msra.mxu0 0.0
        %7390 = vmatprep.subr.mxu0 0.0
        %7391 = vmatpush2.msra.mxu0 0.0
        %7392 = vmatprep.subr.mxu0 0.0
        %7393 = vmatpush2.msra.mxu0 0.0
        %7394 = vmatprep.subr.mxu0 0.0
        %7395 = vmatpush2.msra.mxu0 0.0
        %7396 = vmatprep.subr.mxu0 0.0
        %7397 = vmatpush2.msra.mxu0 0.0
        %7398 = vmatprep.subr.mxu0 0.0
        %7399 = vmatpush2.msra.mxu0 0.0
        %7400 = vmatprep.subr.mxu0 0.0
        %7401 = vmatpush2.msra.mxu0 0.0
        %7402 = vmatprep.subr.mxu0 0.0
        %7403 = vmatpush2.msra.mxu0 0.0
        %7404 = vmatprep.subr.mxu0 0.0
        %7405 = vmatpush2.msra.mxu0 0.0
        %7406 = vmatprep.mubr.f32.mxu0 0.0
        %7407 = vmatmul.mubr.f32.gmra.mxu0 %v6975
        %v7408 = vpop.f32.mrf.mxu0
        %v7409 = vadd.f32 0.0, %v7408
        %v7410 = vpop.f32.mrf.mxu0
        %v7411 = vadd.f32 0.0, %v7410
        %7412 = vmatprep.mubr.f32.mxu0 0.0
        %7413 = vmatmul.mubr.f32.gmra.mxu0 %v6978
        %v7414 = vpop.f32.mrf.mxu0
        %v7415 = vadd.f32 0.0, %v7414
        %v7416 = vpop.f32.mrf.mxu0
        %v7417 = vadd.f32 0.0, %v7416
        %7418 = vmatprep.mubr.f32.mxu0 0.0
        %7419 = vmatmul.mubr.f32.gmra.mxu0 %v6981
        %v7420 = vpop.f32.mrf.mxu0
        %v7421 = vadd.f32 0.0, %v7420
        %v7422 = vpop.f32.mrf.mxu0
        %v7423 = vadd.f32 0.0, %v7422
        %7424 = vmatprep.mubr.f32.mxu0 0.0
        %7425 = vmatmul.mubr.f32.gmra.mxu0 %v6984
        %v7426 = vpop.f32.mrf.mxu0
        %v7427 = vadd.f32 0.0, %v7426
        %v7428 = vpop.f32.mrf.mxu0
        %v7429 = vadd.f32 0.0, %v7428
        %7430 = vdwg.mxu0
        %7431 = vmatprep.subr.mxu0 0.0
        %7432 = vmatpush1.msra.mxu0 0.0
        %7433 = vmatprep.subr.mxu0 0.0
        %7434 = vmatpush1.msra.mxu0 0.0
        %7435 = vmatprep.subr.mxu0 0.0
        %7436 = vmatpush1.msra.mxu0 0.0
        %7437 = vmatprep.subr.mxu0 0.0
        %7438 = vmatpush1.msra.mxu0 0.0
        %7439 = vmatprep.subr.mxu0 0.0
        %7440 = vmatpush1.msra.mxu0 0.0
        %7441 = vmatprep.subr.mxu0 0.0
        %7442 = vmatpush1.msra.mxu0 0.0
        %7443 = vmatprep.subr.mxu0 0.0
        %7444 = vmatpush1.msra.mxu0 0.0
        %7445 = vmatprep.subr.mxu0 0.0
        %7446 = vmatpush1.msra.mxu0 0.0
        %7447 = vmatprep.subr.mxu0 0.0
        %7448 = vmatpush1.msra.mxu0 0.0
        %7449 = vmatprep.subr.mxu0 0.0
        %7450 = vmatpush1.msra.mxu0 0.0
        %7451 = vmatprep.subr.mxu0 0.0
        %7452 = vmatpush1.msra.mxu0 0.0
        %7453 = vmatprep.subr.mxu0 0.0
        %7454 = vmatpush1.msra.mxu0 0.0
        %7455 = vmatprep.subr.mxu0 0.0
        %7456 = vmatpush1.msra.mxu0 0.0
        %7457 = vmatprep.subr.mxu0 %v5732
        %7458 = vmatpush1.msra.mxu0 %v5628
        %7459 = vmatprep.subr.mxu0 %v4068
        %7460 = vmatpush1.msra.mxu0 %v3964
        %7461 = vmatprep.subr.mxu0 %v2404
        %7462 = vmatpush1.msra.mxu0 %v2300
        %7463 = vmatprep.subr.mxu0 0.0
        %7464 = vmatpush2.msra.mxu0 0.0
        %7465 = vmatprep.subr.mxu0 0.0
        %7466 = vmatpush2.msra.mxu0 0.0
        %7467 = vmatprep.subr.mxu0 0.0
        %7468 = vmatpush2.msra.mxu0 0.0
        %7469 = vmatprep.subr.mxu0 0.0
        %7470 = vmatpush2.msra.mxu0 0.0
        %7471 = vmatprep.subr.mxu0 0.0
        %7472 = vmatpush2.msra.mxu0 0.0
        %7473 = vmatprep.subr.mxu0 0.0
        %7474 = vmatpush2.msra.mxu0 0.0
        %7475 = vmatprep.subr.mxu0 0.0
        %7476 = vmatpush2.msra.mxu0 0.0
        %7477 = vmatprep.subr.mxu0 0.0
        %7478 = vmatpush2.msra.mxu0 0.0
        %7479 = vmatprep.subr.mxu0 0.0
        %7480 = vmatpush2.msra.mxu0 0.0
        %7481 = vmatprep.subr.mxu0 0.0
        %7482 = vmatpush2.msra.mxu0 0.0
        %7483 = vmatprep.subr.mxu0 0.0
        %7484 = vmatpush2.msra.mxu0 0.0
        %7485 = vmatprep.subr.mxu0 0.0
        %7486 = vmatpush2.msra.mxu0 0.0
        %7487 = vmatprep.subr.mxu0 0.0
        %7488 = vmatpush2.msra.mxu0 0.0
        %7489 = vmatprep.subr.mxu0 0.0
        %7490 = vmatpush2.msra.mxu0 0.0
        %7491 = vmatprep.subr.mxu0 0.0
        %7492 = vmatpush2.msra.mxu0 0.0
        %7493 = vmatprep.subr.mxu0 0.0
        %7494 = vmatpush2.msra.mxu0 0.0
        %7495 = vmatprep.mubr.f32.mxu0 0.0
        %7496 = vmatmul.mubr.f32.gmra.mxu0 %v6975
        %v7497 = vpop.f32.mrf.mxu0
        %v7498 = vadd.f32 0.0, %v7497
        %v7499 = vpop.f32.mrf.mxu0
        %v7500 = vadd.f32 0.0, %v7499
        %7501 = vmatprep.mubr.f32.mxu0 0.0
        %7502 = vmatmul.mubr.f32.gmra.mxu0 %v6978
        %v7503 = vpop.f32.mrf.mxu0
        %v7504 = vadd.f32 0.0, %v7503
        %v7505 = vpop.f32.mrf.mxu0
        %v7506 = vadd.f32 0.0, %v7505
        %7507 = vmatprep.mubr.f32.mxu0 0.0
        %7508 = vmatmul.mubr.f32.gmra.mxu0 %v6981
        %v7509 = vpop.f32.mrf.mxu0
        %v7510 = vadd.f32 0.0, %v7509
        %v7511 = vpop.f32.mrf.mxu0
        %v7512 = vadd.f32 0.0, %v7511
        %7513 = vmatprep.mubr.f32.mxu0 0.0
        %7514 = vmatmul.mubr.f32.gmra.mxu0 %v6984
        %v7515 = vpop.f32.mrf.mxu0
        %v7516 = vadd.f32 0.0, %v7515
        %v7517 = vpop.f32.mrf.mxu0
        %v7518 = vadd.f32 0.0, %v7517
        %7519 = vdwg.mxu0
        %7520 = vmatprep.subr.mxu0 0.0
        %7521 = vmatpush1.msra.mxu0 0.0
        %7522 = vmatprep.subr.mxu0 0.0
        %7523 = vmatpush1.msra.mxu0 0.0
        %7524 = vmatprep.subr.mxu0 0.0
        %7525 = vmatpush1.msra.mxu0 0.0
        %7526 = vmatprep.subr.mxu0 0.0
        %7527 = vmatpush1.msra.mxu0 0.0
        %7528 = vmatprep.subr.mxu0 0.0
        %7529 = vmatpush1.msra.mxu0 0.0
        %7530 = vmatprep.subr.mxu0 0.0
        %7531 = vmatpush1.msra.mxu0 0.0
        %7532 = vmatprep.subr.mxu0 0.0
        %7533 = vmatpush1.msra.mxu0 0.0
        %7534 = vmatprep.subr.mxu0 0.0
        %7535 = vmatpush1.msra.mxu0 0.0
        %7536 = vmatprep.subr.mxu0 0.0
        %7537 = vmatpush1.msra.mxu0 0.0
        %7538 = vmatprep.subr.mxu0 0.0
        %7539 = vmatpush1.msra.mxu0 0.0
        %7540 = vmatprep.subr.mxu0 0.0
        %7541 = vmatpush1.msra.mxu0 0.0
        %7542 = vmatprep.subr.mxu0 0.0
        %7543 = vmatpush1.msra.mxu0 0.0
        %7544 = vmatprep.subr.mxu0 0.0
        %7545 = vmatpush1.msra.mxu0 0.0
        %7546 = vmatprep.subr.mxu0 %v5940
        %7547 = vmatpush1.msra.mxu0 %v5836
        %7548 = vmatprep.subr.mxu0 %v4276
        %7549 = vmatpush1.msra.mxu0 %v4172
        %7550 = vmatprep.subr.mxu0 %v2612
        %7551 = vmatpush1.msra.mxu0 %v2508
        %7552 = vmatprep.subr.mxu0 0.0
        %7553 = vmatpush2.msra.mxu0 0.0
        %7554 = vmatprep.subr.mxu0 0.0
        %7555 = vmatpush2.msra.mxu0 0.0
        %7556 = vmatprep.subr.mxu0 0.0
        %7557 = vmatpush2.msra.mxu0 0.0
        %7558 = vmatprep.subr.mxu0 0.0
        %7559 = vmatpush2.msra.mxu0 0.0
        %7560 = vmatprep.subr.mxu0 0.0
        %7561 = vmatpush2.msra.mxu0 0.0
        %7562 = vmatprep.subr.mxu0 0.0
        %7563 = vmatpush2.msra.mxu0 0.0
        %7564 = vmatprep.subr.mxu0 0.0
        %7565 = vmatpush2.msra.mxu0 0.0
        %7566 = vmatprep.subr.mxu0 0.0
        %7567 = vmatpush2.msra.mxu0 0.0
        %7568 = vmatprep.subr.mxu0 0.0
        %7569 = vmatpush2.msra.mxu0 0.0
        %7570 = vmatprep.subr.mxu0 0.0
        %7571 = vmatpush2.msra.mxu0 0.0
        %7572 = vmatprep.subr.mxu0 0.0
        %7573 = vmatpush2.msra.mxu0 0.0
        %7574 = vmatprep.subr.mxu0 0.0
        %7575 = vmatpush2.msra.mxu0 0.0
        %7576 = vmatprep.subr.mxu0 0.0
        %7577 = vmatpush2.msra.mxu0 0.0
        %7578 = vmatprep.subr.mxu0 0.0
        %7579 = vmatpush2.msra.mxu0 0.0
        %7580 = vmatprep.subr.mxu0 0.0
        %7581 = vmatpush2.msra.mxu0 0.0
        %7582 = vmatprep.subr.mxu0 0.0
        %7583 = vmatpush2.msra.mxu0 0.0
        %7584 = vmatprep.mubr.f32.mxu0 0.0
        %7585 = vmatmul.mubr.f32.gmra.mxu0 %v6975
        %v7586 = vpop.f32.mrf.mxu0
        %v7587 = vadd.f32 0.0, %v7586
        %v7588 = vpop.f32.mrf.mxu0
        %v7589 = vadd.f32 0.0, %v7588
        %7590 = vmatprep.mubr.f32.mxu0 0.0
        %7591 = vmatmul.mubr.f32.gmra.mxu0 %v6978
        %v7592 = vpop.f32.mrf.mxu0
        %v7593 = vadd.f32 0.0, %v7592
        %v7594 = vpop.f32.mrf.mxu0
        %v7595 = vadd.f32 0.0, %v7594
        %7596 = vmatprep.mubr.f32.mxu0 0.0
        %7597 = vmatmul.mubr.f32.gmra.mxu0 %v6981
        %v7598 = vpop.f32.mrf.mxu0
        %v7599 = vadd.f32 0.0, %v7598
        %v7600 = vpop.f32.mrf.mxu0
        %v7601 = vadd.f32 0.0, %v7600
        %7602 = vmatprep.mubr.f32.mxu0 0.0
        %7603 = vmatmul.mubr.f32.gmra.mxu0 %v6984
        %v7604 = vpop.f32.mrf.mxu0
        %v7605 = vadd.f32 0.0, %v7604
        %v7606 = vpop.f32.mrf.mxu0
        %v7607 = vadd.f32 0.0, %v7606
        %7608 = vdwg.mxu0
        %7609 = vmatprep.subr.mxu0 0.0
        %7610 = vmatpush1.msra.mxu0 0.0
        %7611 = vmatprep.subr.mxu0 0.0
        %7612 = vmatpush1.msra.mxu0 0.0
        %7613 = vmatprep.subr.mxu0 0.0
        %7614 = vmatpush1.msra.mxu0 0.0
        %7615 = vmatprep.subr.mxu0 0.0
        %7616 = vmatpush1.msra.mxu0 0.0
        %7617 = vmatprep.subr.mxu0 0.0
        %7618 = vmatpush1.msra.mxu0 0.0
        %7619 = vmatprep.subr.mxu0 0.0
        %7620 = vmatpush1.msra.mxu0 0.0
        %7621 = vmatprep.subr.mxu0 0.0
        %7622 = vmatpush1.msra.mxu0 0.0
        %7623 = vmatprep.subr.mxu0 0.0
        %7624 = vmatpush1.msra.mxu0 0.0
        %7625 = vmatprep.subr.mxu0 0.0
        %7626 = vmatpush1.msra.mxu0 0.0
        %7627 = vmatprep.subr.mxu0 0.0
        %7628 = vmatpush1.msra.mxu0 0.0
        %7629 = vmatprep.subr.mxu0 0.0
        %7630 = vmatpush1.msra.mxu0 0.0
        %7631 = vmatprep.subr.mxu0 0.0
        %7632 = vmatpush1.msra.mxu0 0.0
        %7633 = vmatprep.subr.mxu0 0.0
        %7634 = vmatpush1.msra.mxu0 0.0
        %7635 = vmatprep.subr.mxu0 %v6148
        %7636 = vmatpush1.msra.mxu0 %v6044
        %7637 = vmatprep.subr.mxu0 %v4484
        %7638 = vmatpush1.msra.mxu0 %v4380
        %7639 = vmatprep.subr.mxu0 %v2820
        %7640 = vmatpush1.msra.mxu0 %v2716
        %7641 = vmatprep.subr.mxu0 0.0
        %7642 = vmatpush2.msra.mxu0 0.0
        %7643 = vmatprep.subr.mxu0 0.0
        %7644 = vmatpush2.msra.mxu0 0.0
        %7645 = vmatprep.subr.mxu0 0.0
        %7646 = vmatpush2.msra.mxu0 0.0
        %7647 = vmatprep.subr.mxu0 0.0
        %7648 = vmatpush2.msra.mxu0 0.0
        %7649 = vmatprep.subr.mxu0 0.0
        %7650 = vmatpush2.msra.mxu0 0.0
        %7651 = vmatprep.subr.mxu0 0.0
        %7652 = vmatpush2.msra.mxu0 0.0
        %7653 = vmatprep.subr.mxu0 0.0
        %7654 = vmatpush2.msra.mxu0 0.0
        %7655 = vmatprep.subr.mxu0 0.0
        %7656 = vmatpush2.msra.mxu0 0.0
        %7657 = vmatprep.subr.mxu0 0.0
        %7658 = vmatpush2.msra.mxu0 0.0
        %7659 = vmatprep.subr.mxu0 0.0
        %7660 = vmatpush2.msra.mxu0 0.0
        %7661 = vmatprep.subr.mxu0 0.0
        %7662 = vmatpush2.msra.mxu0 0.0
        %7663 = vmatprep.subr.mxu0 0.0
        %7664 = vmatpush2.msra.mxu0 0.0
        %7665 = vmatprep.subr.mxu0 0.0
        %7666 = vmatpush2.msra.mxu0 0.0
        %7667 = vmatprep.subr.mxu0 0.0
        %7668 = vmatpush2.msra.mxu0 0.0
        %7669 = vmatprep.subr.mxu0 0.0
        %7670 = vmatpush2.msra.mxu0 0.0
        %7671 = vmatprep.subr.mxu0 0.0
        %7672 = vmatpush2.msra.mxu0 0.0
        %7673 = vmatprep.mubr.f32.mxu0 0.0
        %7674 = vmatmul.mubr.f32.gmra.mxu0 %v6975
        %v7675 = vpop.f32.mrf.mxu0
        %v7676 = vadd.f32 0.0, %v7675
        %v7677 = vpop.f32.mrf.mxu0
        %v7678 = vadd.f32 0.0, %v7677
        %7679 = vmatprep.mubr.f32.mxu0 0.0
        %7680 = vmatmul.mubr.f32.gmra.mxu0 %v6978
        %v7681 = vpop.f32.mrf.mxu0
        %v7682 = vadd.f32 0.0, %v7681
        %v7683 = vpop.f32.mrf.mxu0
        %v7684 = vadd.f32 0.0, %v7683
        %7685 = vmatprep.mubr.f32.mxu0 0.0
        %7686 = vmatmul.mubr.f32.gmra.mxu0 %v6981
        %v7687 = vpop.f32.mrf.mxu0
        %v7688 = vadd.f32 0.0, %v7687
        %v7689 = vpop.f32.mrf.mxu0
        %v7690 = vadd.f32 0.0, %v7689
        %7691 = vmatprep.mubr.f32.mxu0 0.0
        %7692 = vmatmul.mubr.f32.gmra.mxu0 %v6984
        %v7693 = vpop.f32.mrf.mxu0
        %v7694 = vadd.f32 0.0, %v7693
        %v7695 = vpop.f32.mrf.mxu0
        %v7696 = vadd.f32 0.0, %v7695
        %7697 = vdwg.mxu0
        %vm7698 = vcmask 261120
        %v7700 = vsel %vm7698, %v6966, 0
        %v7703 = vsel %vm7698, %v6967, 0
        %v7706 = vsel %vm7698, %v6968, 0
        %v7709 = vsel %vm7698, %v6969, 0
        %7711 = vmatprep.subr.mxu0 0.0
        %7712 = vmatpush1.msra.mxu0 0.0
        %7713 = vmatprep.subr.mxu0 0.0
        %7714 = vmatpush1.msra.mxu0 0.0
        %7715 = vmatprep.subr.mxu0 0.0
        %7716 = vmatpush1.msra.mxu0 0.0
        %7717 = vmatprep.subr.mxu0 0.0
        %7718 = vmatpush1.msra.mxu0 0.0
        %7719 = vmatprep.subr.mxu0 0.0
        %7720 = vmatpush1.msra.mxu0 0.0
        %7721 = vmatprep.subr.mxu0 0.0
        %7722 = vmatpush1.msra.mxu0 0.0
        %7723 = vmatprep.subr.mxu0 0.0
        %7724 = vmatpush1.msra.mxu0 0.0
        %7725 = vmatprep.subr.mxu0 0.0
        %7726 = vmatpush1.msra.mxu0 0.0
        %7727 = vmatprep.subr.mxu0 0.0
        %7728 = vmatpush1.msra.mxu0 0.0
        %7729 = vmatprep.subr.mxu0 0.0
        %7730 = vmatpush1.msra.mxu0 0.0
        %7731 = vmatprep.subr.mxu0 0.0
        %7732 = vmatpush1.msra.mxu0 0.0
        %7733 = vmatprep.subr.mxu0 0.0
        %7734 = vmatpush1.msra.mxu0 0.0
        %7735 = vmatprep.subr.mxu0 %v6951
        %7736 = vmatpush1.msra.mxu0 %v6950
        %7737 = vmatprep.subr.mxu0 %v6935
        %7738 = vmatpush1.msra.mxu0 %v6934
        %7739 = vmatprep.subr.mxu0 %v6919
        %7740 = vmatpush1.msra.mxu0 %v6918
        %7741 = vmatprep.subr.mxu0 %v6903
        %7742 = vmatpush1.msra.mxu0 %v6902
        %7743 = vmatprep.subr.mxu0 0.0
        %7744 = vmatpush2.msra.mxu0 0.0
        %7745 = vmatprep.subr.mxu0 0.0
        %7746 = vmatpush2.msra.mxu0 0.0
        %7747 = vmatprep.subr.mxu0 0.0
        %7748 = vmatpush2.msra.mxu0 0.0
        %7749 = vmatprep.subr.mxu0 0.0
        %7750 = vmatpush2.msra.mxu0 0.0
        %7751 = vmatprep.subr.mxu0 0.0
        %7752 = vmatpush2.msra.mxu0 0.0
        %7753 = vmatprep.subr.mxu0 0.0
        %7754 = vmatpush2.msra.mxu0 0.0
        %7755 = vmatprep.subr.mxu0 0.0
        %7756 = vmatpush2.msra.mxu0 0.0
        %7757 = vmatprep.subr.mxu0 0.0
        %7758 = vmatpush2.msra.mxu0 0.0
        %7759 = vmatprep.subr.mxu0 0.0
        %7760 = vmatpush2.msra.mxu0 0.0
        %7761 = vmatprep.subr.mxu0 0.0
        %7762 = vmatpush2.msra.mxu0 0.0
        %7763 = vmatprep.subr.mxu0 0.0
        %7764 = vmatpush2.msra.mxu0 0.0
        %7765 = vmatprep.subr.mxu0 0.0
        %7766 = vmatpush2.msra.mxu0 0.0
        %7767 = vmatprep.subr.mxu0 0.0
        %7768 = vmatpush2.msra.mxu0 0.0
        %7769 = vmatprep.subr.mxu0 0.0
        %7770 = vmatpush2.msra.mxu0 0.0
        %7771 = vmatprep.subr.mxu0 0.0
        %7772 = vmatpush2.msra.mxu0 0.0
        %7773 = vmatprep.subr.mxu0 0.0
        %7774 = vmatpush2.msra.mxu0 0.0
        %7775 = vmatprep.mubr.f32.mxu0 0.0
        %7776 = vmatmul.mubr.f32.gmra.mxu0 %v7700
        %v7777 = vpop.f32.mrf.mxu0
        %v7778 = vadd.f32 %v7053, %v7777
        %v7779 = vpop.f32.mrf.mxu0
        %v7780 = vadd.f32 %v7055, %v7779
        %7781 = vmatprep.mubr.f32.mxu0 0.0
        %7782 = vmatmul.mubr.f32.gmra.mxu0 %v7703
        %v7783 = vpop.f32.mrf.mxu0
        %v7784 = vadd.f32 %v7059, %v7783
        %v7785 = vpop.f32.mrf.mxu0
        %v7786 = vadd.f32 %v7061, %v7785
        %7787 = vmatprep.mubr.f32.mxu0 0.0
        %7788 = vmatmul.mubr.f32.gmra.mxu0 %v7706
        %v7789 = vpop.f32.mrf.mxu0
        %v7790 = vadd.f32 %v7065, %v7789
        %v7791 = vpop.f32.mrf.mxu0
        %v7792 = vadd.f32 %v7067, %v7791
        %7793 = vmatprep.mubr.f32.mxu0 0.0
        %7794 = vmatmul.mubr.f32.gmra.mxu0 %v7709
        %v7795 = vpop.f32.mrf.mxu0
        %v7796 = vadd.f32 %v7071, %v7795
        %v7797 = vpop.f32.mrf.mxu0
        %v7798 = vadd.f32 %v7073, %v7797
        %7799 = vdwg.mxu0
        %7800 = vmatprep.subr.mxu0 0.0
        %7801 = vmatpush1.msra.mxu0 0.0
        %7802 = vmatprep.subr.mxu0 0.0
        %7803 = vmatpush1.msra.mxu0 0.0
        %7804 = vmatprep.subr.mxu0 0.0
        %7805 = vmatpush1.msra.mxu0 0.0
        %7806 = vmatprep.subr.mxu0 0.0
        %7807 = vmatpush1.msra.mxu0 0.0
        %7808 = vmatprep.subr.mxu0 0.0
        %7809 = vmatpush1.msra.mxu0 0.0
        %7810 = vmatprep.subr.mxu0 0.0
        %7811 = vmatpush1.msra.mxu0 0.0
        %7812 = vmatprep.subr.mxu0 0.0
        %7813 = vmatpush1.msra.mxu0 0.0
        %7814 = vmatprep.subr.mxu0 0.0
        %7815 = vmatpush1.msra.mxu0 0.0
        %7816 = vmatprep.subr.mxu0 0.0
        %7817 = vmatpush1.msra.mxu0 0.0
        %7818 = vmatprep.subr.mxu0 0.0
        %7819 = vmatpush1.msra.mxu0 0.0
        %7820 = vmatprep.subr.mxu0 0.0
        %7821 = vmatpush1.msra.mxu0 0.0
        %7822 = vmatprep.subr.mxu0 0.0
        %7823 = vmatpush1.msra.mxu0 0.0
        %7824 = vmatprep.subr.mxu0 %v6953
        %7825 = vmatpush1.msra.mxu0 %v6952
        %7826 = vmatprep.subr.mxu0 %v6937
        %7827 = vmatpush1.msra.mxu0 %v6936
        %7828 = vmatprep.subr.mxu0 %v6921
        %7829 = vmatpush1.msra.mxu0 %v6920
        %7830 = vmatprep.subr.mxu0 %v6905
        %7831 = vmatpush1.msra.mxu0 %v6904
        %7832 = vmatprep.subr.mxu0 0.0
        %7833 = vmatpush2.msra.mxu0 0.0
        %7834 = vmatprep.subr.mxu0 0.0
        %7835 = vmatpush2.msra.mxu0 0.0
        %7836 = vmatprep.subr.mxu0 0.0
        %7837 = vmatpush2.msra.mxu0 0.0
        %7838 = vmatprep.subr.mxu0 0.0
        %7839 = vmatpush2.msra.mxu0 0.0
        %7840 = vmatprep.subr.mxu0 0.0
        %7841 = vmatpush2.msra.mxu0 0.0
        %7842 = vmatprep.subr.mxu0 0.0
        %7843 = vmatpush2.msra.mxu0 0.0
        %7844 = vmatprep.subr.mxu0 0.0
        %7845 = vmatpush2.msra.mxu0 0.0
        %7846 = vmatprep.subr.mxu0 0.0
        %7847 = vmatpush2.msra.mxu0 0.0
        %7848 = vmatprep.subr.mxu0 0.0
        %7849 = vmatpush2.msra.mxu0 0.0
        %7850 = vmatprep.subr.mxu0 0.0
        %7851 = vmatpush2.msra.mxu0 0.0
        %7852 = vmatprep.subr.mxu0 0.0
        %7853 = vmatpush2.msra.mxu0 0.0
        %7854 = vmatprep.subr.mxu0 0.0
        %7855 = vmatpush2.msra.mxu0 0.0
        %7856 = vmatprep.subr.mxu0 0.0
        %7857 = vmatpush2.msra.mxu0 0.0
        %7858 = vmatprep.subr.mxu0 0.0
        %7859 = vmatpush2.msra.mxu0 0.0
        %7860 = vmatprep.subr.mxu0 0.0
        %7861 = vmatpush2.msra.mxu0 0.0
        %7862 = vmatprep.subr.mxu0 0.0
        %7863 = vmatpush2.msra.mxu0 0.0
        %7864 = vmatprep.mubr.f32.mxu0 0.0
        %7865 = vmatmul.mubr.f32.gmra.mxu0 %v7700
        %v7866 = vpop.f32.mrf.mxu0
        %v7867 = vadd.f32 %v7142, %v7866
        %v7868 = vpop.f32.mrf.mxu0
        %v7869 = vadd.f32 %v7144, %v7868
        %7870 = vmatprep.mubr.f32.mxu0 0.0
        %7871 = vmatmul.mubr.f32.gmra.mxu0 %v7703
        %v7872 = vpop.f32.mrf.mxu0
        %v7873 = vadd.f32 %v7148, %v7872
        %v7874 = vpop.f32.mrf.mxu0
        %v7875 = vadd.f32 %v7150, %v7874
        %7876 = vmatprep.mubr.f32.mxu0 0.0
        %7877 = vmatmul.mubr.f32.gmra.mxu0 %v7706
        %v7878 = vpop.f32.mrf.mxu0
        %v7879 = vadd.f32 %v7154, %v7878
        %v7880 = vpop.f32.mrf.mxu0
        %v7881 = vadd.f32 %v7156, %v7880
        %7882 = vmatprep.mubr.f32.mxu0 0.0
        %7883 = vmatmul.mubr.f32.gmra.mxu0 %v7709
        %v7884 = vpop.f32.mrf.mxu0
        %v7885 = vadd.f32 %v7160, %v7884
        %v7886 = vpop.f32.mrf.mxu0
        %v7887 = vadd.f32 %v7162, %v7886
        %7888 = vdwg.mxu0
        %7889 = vmatprep.subr.mxu0 0.0
        %7890 = vmatpush1.msra.mxu0 0.0
        %7891 = vmatprep.subr.mxu0 0.0
        %7892 = vmatpush1.msra.mxu0 0.0
        %7893 = vmatprep.subr.mxu0 0.0
        %7894 = vmatpush1.msra.mxu0 0.0
        %7895 = vmatprep.subr.mxu0 0.0
        %7896 = vmatpush1.msra.mxu0 0.0
        %7897 = vmatprep.subr.mxu0 0.0
        %7898 = vmatpush1.msra.mxu0 0.0
        %7899 = vmatprep.subr.mxu0 0.0
        %7900 = vmatpush1.msra.mxu0 0.0
        %7901 = vmatprep.subr.mxu0 0.0
        %7902 = vmatpush1.msra.mxu0 0.0
        %7903 = vmatprep.subr.mxu0 0.0
        %7904 = vmatpush1.msra.mxu0 0.0
        %7905 = vmatprep.subr.mxu0 0.0
        %7906 = vmatpush1.msra.mxu0 0.0
        %7907 = vmatprep.subr.mxu0 0.0
        %7908 = vmatpush1.msra.mxu0 0.0
        %7909 = vmatprep.subr.mxu0 0.0
        %7910 = vmatpush1.msra.mxu0 0.0
        %7911 = vmatprep.subr.mxu0 0.0
        %7912 = vmatpush1.msra.mxu0 0.0
        %7913 = vmatprep.subr.mxu0 %v6955
        %7914 = vmatpush1.msra.mxu0 %v6954
        %7915 = vmatprep.subr.mxu0 %v6939
        %7916 = vmatpush1.msra.mxu0 %v6938
        %7917 = vmatprep.subr.mxu0 %v6923
        %7918 = vmatpush1.msra.mxu0 %v6922
        %7919 = vmatprep.subr.mxu0 %v6907
        %7920 = vmatpush1.msra.mxu0 %v6906
        %7921 = vmatprep.subr.mxu0 0.0
        %7922 = vmatpush2.msra.mxu0 0.0
        %7923 = vmatprep.subr.mxu0 0.0
        %7924 = vmatpush2.msra.mxu0 0.0
        %7925 = vmatprep.subr.mxu0 0.0
        %7926 = vmatpush2.msra.mxu0 0.0
        %7927 = vmatprep.subr.mxu0 0.0
        %7928 = vmatpush2.msra.mxu0 0.0
        %7929 = vmatprep.subr.mxu0 0.0
        %7930 = vmatpush2.msra.mxu0 0.0
        %7931 = vmatprep.subr.mxu0 0.0
        %7932 = vmatpush2.msra.mxu0 0.0
        %7933 = vmatprep.subr.mxu0 0.0
        %7934 = vmatpush2.msra.mxu0 0.0
        %7935 = vmatprep.subr.mxu0 0.0
        %7936 = vmatpush2.msra.mxu0 0.0
        %7937 = vmatprep.subr.mxu0 0.0
        %7938 = vmatpush2.msra.mxu0 0.0
        %7939 = vmatprep.subr.mxu0 0.0
        %7940 = vmatpush2.msra.mxu0 0.0
        %7941 = vmatprep.subr.mxu0 0.0
        %7942 = vmatpush2.msra.mxu0 0.0
        %7943 = vmatprep.subr.mxu0 0.0
        %7944 = vmatpush2.msra.mxu0 0.0
        %7945 = vmatprep.subr.mxu0 0.0
        %7946 = vmatpush2.msra.mxu0 0.0
        %7947 = vmatprep.subr.mxu0 0.0
        %7948 = vmatpush2.msra.mxu0 0.0
        %7949 = vmatprep.subr.mxu0 0.0
        %7950 = vmatpush2.msra.mxu0 0.0
        %7951 = vmatprep.subr.mxu0 0.0
        %7952 = vmatpush2.msra.mxu0 0.0
        %7953 = vmatprep.mubr.f32.mxu0 0.0
        %7954 = vmatmul.mubr.f32.gmra.mxu0 %v7700
        %v7955 = vpop.f32.mrf.mxu0
        %v7956 = vadd.f32 %v7231, %v7955
        %v7957 = vpop.f32.mrf.mxu0
        %v7958 = vadd.f32 %v7233, %v7957
        %7959 = vmatprep.mubr.f32.mxu0 0.0
        %7960 = vmatmul.mubr.f32.gmra.mxu0 %v7703
        %v7961 = vpop.f32.mrf.mxu0
        %v7962 = vadd.f32 %v7237, %v7961
        %v7963 = vpop.f32.mrf.mxu0
        %v7964 = vadd.f32 %v7239, %v7963
        %7965 = vmatprep.mubr.f32.mxu0 0.0
        %7966 = vmatmul.mubr.f32.gmra.mxu0 %v7706
        %v7967 = vpop.f32.mrf.mxu0
        %v7968 = vadd.f32 %v7243, %v7967
        %v7969 = vpop.f32.mrf.mxu0
        %v7970 = vadd.f32 %v7245, %v7969
        %7971 = vmatprep.mubr.f32.mxu0 0.0
        %7972 = vmatmul.mubr.f32.gmra.mxu0 %v7709
        %v7973 = vpop.f32.mrf.mxu0
        %v7974 = vadd.f32 %v7249, %v7973
        %v7975 = vpop.f32.mrf.mxu0
        %v7976 = vadd.f32 %v7251, %v7975
        %7977 = vdwg.mxu0
        %7978 = vmatprep.subr.mxu0 0.0
        %7979 = vmatpush1.msra.mxu0 0.0
        %7980 = vmatprep.subr.mxu0 0.0
        %7981 = vmatpush1.msra.mxu0 0.0
        %7982 = vmatprep.subr.mxu0 0.0
        %7983 = vmatpush1.msra.mxu0 0.0
        %7984 = vmatprep.subr.mxu0 0.0
        %7985 = vmatpush1.msra.mxu0 0.0
        %7986 = vmatprep.subr.mxu0 0.0
        %7987 = vmatpush1.msra.mxu0 0.0
        %7988 = vmatprep.subr.mxu0 0.0
        %7989 = vmatpush1.msra.mxu0 0.0
        %7990 = vmatprep.subr.mxu0 0.0
        %7991 = vmatpush1.msra.mxu0 0.0
        %7992 = vmatprep.subr.mxu0 0.0
        %7993 = vmatpush1.msra.mxu0 0.0
        %7994 = vmatprep.subr.mxu0 0.0
        %7995 = vmatpush1.msra.mxu0 0.0
        %7996 = vmatprep.subr.mxu0 0.0
        %7997 = vmatpush1.msra.mxu0 0.0
        %7998 = vmatprep.subr.mxu0 0.0
        %7999 = vmatpush1.msra.mxu0 0.0
        %8000 = vmatprep.subr.mxu0 0.0
        %8001 = vmatpush1.msra.mxu0 0.0
        %8002 = vmatprep.subr.mxu0 %v6957
        %8003 = vmatpush1.msra.mxu0 %v6956
        %8004 = vmatprep.subr.mxu0 %v6941
        %8005 = vmatpush1.msra.mxu0 %v6940
        %8006 = vmatprep.subr.mxu0 %v6925
        %8007 = vmatpush1.msra.mxu0 %v6924
        %8008 = vmatprep.subr.mxu0 %v6909
        %8009 = vmatpush1.msra.mxu0 %v6908
        %8010 = vmatprep.subr.mxu0 0.0
        %8011 = vmatpush2.msra.mxu0 0.0
        %8012 = vmatprep.subr.mxu0 0.0
        %8013 = vmatpush2.msra.mxu0 0.0
        %8014 = vmatprep.subr.mxu0 0.0
        %8015 = vmatpush2.msra.mxu0 0.0
        %8016 = vmatprep.subr.mxu0 0.0
        %8017 = vmatpush2.msra.mxu0 0.0
        %8018 = vmatprep.subr.mxu0 0.0
        %8019 = vmatpush2.msra.mxu0 0.0
        %8020 = vmatprep.subr.mxu0 0.0
        %8021 = vmatpush2.msra.mxu0 0.0
        %8022 = vmatprep.subr.mxu0 0.0
        %8023 = vmatpush2.msra.mxu0 0.0
        %8024 = vmatprep.subr.mxu0 0.0
        %8025 = vmatpush2.msra.mxu0 0.0
        %8026 = vmatprep.subr.mxu0 0.0
        %8027 = vmatpush2.msra.mxu0 0.0
        %8028 = vmatprep.subr.mxu0 0.0
        %8029 = vmatpush2.msra.mxu0 0.0
        %8030 = vmatprep.subr.mxu0 0.0
        %8031 = vmatpush2.msra.mxu0 0.0
        %8032 = vmatprep.subr.mxu0 0.0
        %8033 = vmatpush2.msra.mxu0 0.0
        %8034 = vmatprep.subr.mxu0 0.0
        %8035 = vmatpush2.msra.mxu0 0.0
        %8036 = vmatprep.subr.mxu0 0.0
        %8037 = vmatpush2.msra.mxu0 0.0
        %8038 = vmatprep.subr.mxu0 0.0
        %8039 = vmatpush2.msra.mxu0 0.0
        %8040 = vmatprep.subr.mxu0 0.0
        %8041 = vmatpush2.msra.mxu0 0.0
        %8042 = vmatprep.mubr.f32.mxu0 0.0
        %8043 = vmatmul.mubr.f32.gmra.mxu0 %v7700
        %v8044 = vpop.f32.mrf.mxu0
        %v8045 = vadd.f32 %v7320, %v8044
        %v8046 = vpop.f32.mrf.mxu0
        %v8047 = vadd.f32 %v7322, %v8046
        %8048 = vmatprep.mubr.f32.mxu0 0.0
        %8049 = vmatmul.mubr.f32.gmra.mxu0 %v7703
        %v8050 = vpop.f32.mrf.mxu0
        %v8051 = vadd.f32 %v7326, %v8050
        %v8052 = vpop.f32.mrf.mxu0
        %v8053 = vadd.f32 %v7328, %v8052
        %8054 = vmatprep.mubr.f32.mxu0 0.0
        %8055 = vmatmul.mubr.f32.gmra.mxu0 %v7706
        %v8056 = vpop.f32.mrf.mxu0
        %v8057 = vadd.f32 %v7332, %v8056
        %v8058 = vpop.f32.mrf.mxu0
        %v8059 = vadd.f32 %v7334, %v8058
        %8060 = vmatprep.mubr.f32.mxu0 0.0
        %8061 = vmatmul.mubr.f32.gmra.mxu0 %v7709
        %v8062 = vpop.f32.mrf.mxu0
        %v8063 = vadd.f32 %v7338, %v8062
        %v8064 = vpop.f32.mrf.mxu0
        %v8065 = vadd.f32 %v7340, %v8064
        %8066 = vdwg.mxu0
        %8067 = vmatprep.subr.mxu0 0.0
        %8068 = vmatpush1.msra.mxu0 0.0
        %8069 = vmatprep.subr.mxu0 0.0
        %8070 = vmatpush1.msra.mxu0 0.0
        %8071 = vmatprep.subr.mxu0 0.0
        %8072 = vmatpush1.msra.mxu0 0.0
        %8073 = vmatprep.subr.mxu0 0.0
        %8074 = vmatpush1.msra.mxu0 0.0
        %8075 = vmatprep.subr.mxu0 0.0
        %8076 = vmatpush1.msra.mxu0 0.0
        %8077 = vmatprep.subr.mxu0 0.0
        %8078 = vmatpush1.msra.mxu0 0.0
        %8079 = vmatprep.subr.mxu0 0.0
        %8080 = vmatpush1.msra.mxu0 0.0
        %8081 = vmatprep.subr.mxu0 0.0
        %8082 = vmatpush1.msra.mxu0 0.0
        %8083 = vmatprep.subr.mxu0 0.0
        %8084 = vmatpush1.msra.mxu0 0.0
        %8085 = vmatprep.subr.mxu0 0.0
        %8086 = vmatpush1.msra.mxu0 0.0
        %8087 = vmatprep.subr.mxu0 0.0
        %8088 = vmatpush1.msra.mxu0 0.0
        %8089 = vmatprep.subr.mxu0 0.0
        %8090 = vmatpush1.msra.mxu0 0.0
        %8091 = vmatprep.subr.mxu0 %v6959
        %8092 = vmatpush1.msra.mxu0 %v6958
        %8093 = vmatprep.subr.mxu0 %v6943
        %8094 = vmatpush1.msra.mxu0 %v6942
        %8095 = vmatprep.subr.mxu0 %v6927
        %8096 = vmatpush1.msra.mxu0 %v6926
        %8097 = vmatprep.subr.mxu0 %v6911
        %8098 = vmatpush1.msra.mxu0 %v6910
        %8099 = vmatprep.subr.mxu0 0.0
        %8100 = vmatpush2.msra.mxu0 0.0
        %8101 = vmatprep.subr.mxu0 0.0
        %8102 = vmatpush2.msra.mxu0 0.0
        %8103 = vmatprep.subr.mxu0 0.0
        %8104 = vmatpush2.msra.mxu0 0.0
        %8105 = vmatprep.subr.mxu0 0.0
        %8106 = vmatpush2.msra.mxu0 0.0
        %8107 = vmatprep.subr.mxu0 0.0
        %8108 = vmatpush2.msra.mxu0 0.0
        %8109 = vmatprep.subr.mxu0 0.0
        %8110 = vmatpush2.msra.mxu0 0.0
        %8111 = vmatprep.subr.mxu0 0.0
        %8112 = vmatpush2.msra.mxu0 0.0
        %8113 = vmatprep.subr.mxu0 0.0
        %8114 = vmatpush2.msra.mxu0 0.0
        %8115 = vmatprep.subr.mxu0 0.0
        %8116 = vmatpush2.msra.mxu0 0.0
        %8117 = vmatprep.subr.mxu0 0.0
        %8118 = vmatpush2.msra.mxu0 0.0
        %8119 = vmatprep.subr.mxu0 0.0
        %8120 = vmatpush2.msra.mxu0 0.0
        %8121 = vmatprep.subr.mxu0 0.0
        %8122 = vmatpush2.msra.mxu0 0.0
        %8123 = vmatprep.subr.mxu0 0.0
        %8124 = vmatpush2.msra.mxu0 0.0
        %8125 = vmatprep.subr.mxu0 0.0
        %8126 = vmatpush2.msra.mxu0 0.0
        %8127 = vmatprep.subr.mxu0 0.0
        %8128 = vmatpush2.msra.mxu0 0.0
        %8129 = vmatprep.subr.mxu0 0.0
        %8130 = vmatpush2.msra.mxu0 0.0
        %8131 = vmatprep.mubr.f32.mxu0 0.0
        %8132 = vmatmul.mubr.f32.gmra.mxu0 %v7700
        %v8133 = vpop.f32.mrf.mxu0
        %v8134 = vadd.f32 %v7409, %v8133
        %v8135 = vpop.f32.mrf.mxu0
        %v8136 = vadd.f32 %v7411, %v8135
        %8137 = vmatprep.mubr.f32.mxu0 0.0
        %8138 = vmatmul.mubr.f32.gmra.mxu0 %v7703
        %v8139 = vpop.f32.mrf.mxu0
        %v8140 = vadd.f32 %v7415, %v8139
        %v8141 = vpop.f32.mrf.mxu0
        %v8142 = vadd.f32 %v7417, %v8141
        %8143 = vmatprep.mubr.f32.mxu0 0.0
        %8144 = vmatmul.mubr.f32.gmra.mxu0 %v7706
        %v8145 = vpop.f32.mrf.mxu0
        %v8146 = vadd.f32 %v7421, %v8145
        %v8147 = vpop.f32.mrf.mxu0
        %v8148 = vadd.f32 %v7423, %v8147
        %8149 = vmatprep.mubr.f32.mxu0 0.0
        %8150 = vmatmul.mubr.f32.gmra.mxu0 %v7709
        %v8151 = vpop.f32.mrf.mxu0
        %v8152 = vadd.f32 %v7427, %v8151
        %v8153 = vpop.f32.mrf.mxu0
        %v8154 = vadd.f32 %v7429, %v8153
        %8155 = vdwg.mxu0
        %8156 = vmatprep.subr.mxu0 0.0
        %8157 = vmatpush1.msra.mxu0 0.0
        %8158 = vmatprep.subr.mxu0 0.0
        %8159 = vmatpush1.msra.mxu0 0.0
        %8160 = vmatprep.subr.mxu0 0.0
        %8161 = vmatpush1.msra.mxu0 0.0
        %8162 = vmatprep.subr.mxu0 0.0
        %8163 = vmatpush1.msra.mxu0 0.0
        %8164 = vmatprep.subr.mxu0 0.0
        %8165 = vmatpush1.msra.mxu0 0.0
        %8166 = vmatprep.subr.mxu0 0.0
        %8167 = vmatpush1.msra.mxu0 0.0
        %8168 = vmatprep.subr.mxu0 0.0
        %8169 = vmatpush1.msra.mxu0 0.0
        %8170 = vmatprep.subr.mxu0 0.0
        %8171 = vmatpush1.msra.mxu0 0.0
        %8172 = vmatprep.subr.mxu0 0.0
        %8173 = vmatpush1.msra.mxu0 0.0
        %8174 = vmatprep.subr.mxu0 0.0
        %8175 = vmatpush1.msra.mxu0 0.0
        %8176 = vmatprep.subr.mxu0 0.0
        %8177 = vmatpush1.msra.mxu0 0.0
        %8178 = vmatprep.subr.mxu0 0.0
        %8179 = vmatpush1.msra.mxu0 0.0
        %8180 = vmatprep.subr.mxu0 %v6961
        %8181 = vmatpush1.msra.mxu0 %v6960
        %8182 = vmatprep.subr.mxu0 %v6945
        %8183 = vmatpush1.msra.mxu0 %v6944
        %8184 = vmatprep.subr.mxu0 %v6929
        %8185 = vmatpush1.msra.mxu0 %v6928
        %8186 = vmatprep.subr.mxu0 %v6913
        %8187 = vmatpush1.msra.mxu0 %v6912
        %8188 = vmatprep.subr.mxu0 0.0
        %8189 = vmatpush2.msra.mxu0 0.0
        %8190 = vmatprep.subr.mxu0 0.0
        %8191 = vmatpush2.msra.mxu0 0.0
        %8192 = vmatprep.subr.mxu0 0.0
        %8193 = vmatpush2.msra.mxu0 0.0
        %8194 = vmatprep.subr.mxu0 0.0
        %8195 = vmatpush2.msra.mxu0 0.0
        %8196 = vmatprep.subr.mxu0 0.0
        %8197 = vmatpush2.msra.mxu0 0.0
        %8198 = vmatprep.subr.mxu0 0.0
        %8199 = vmatpush2.msra.mxu0 0.0
        %8200 = vmatprep.subr.mxu0 0.0
        %8201 = vmatpush2.msra.mxu0 0.0
        %8202 = vmatprep.subr.mxu0 0.0
        %8203 = vmatpush2.msra.mxu0 0.0
        %8204 = vmatprep.subr.mxu0 0.0
        %8205 = vmatpush2.msra.mxu0 0.0
        %8206 = vmatprep.subr.mxu0 0.0
        %8207 = vmatpush2.msra.mxu0 0.0
        %8208 = vmatprep.subr.mxu0 0.0
        %8209 = vmatpush2.msra.mxu0 0.0
        %8210 = vmatprep.subr.mxu0 0.0
        %8211 = vmatpush2.msra.mxu0 0.0
        %8212 = vmatprep.subr.mxu0 0.0
        %8213 = vmatpush2.msra.mxu0 0.0
        %8214 = vmatprep.subr.mxu0 0.0
        %8215 = vmatpush2.msra.mxu0 0.0
        %8216 = vmatprep.subr.mxu0 0.0
        %8217 = vmatpush2.msra.mxu0 0.0
        %8218 = vmatprep.subr.mxu0 0.0
        %8219 = vmatpush2.msra.mxu0 0.0
        %8220 = vmatprep.mubr.f32.mxu0 0.0
        %8221 = vmatmul.mubr.f32.gmra.mxu0 %v7700
        %v8222 = vpop.f32.mrf.mxu0
        %v8223 = vadd.f32 %v7498, %v8222
        %v8224 = vpop.f32.mrf.mxu0
        %v8225 = vadd.f32 %v7500, %v8224
        %8226 = vmatprep.mubr.f32.mxu0 0.0
        %8227 = vmatmul.mubr.f32.gmra.mxu0 %v7703
        %v8228 = vpop.f32.mrf.mxu0
        %v8229 = vadd.f32 %v7504, %v8228
        %v8230 = vpop.f32.mrf.mxu0
        %v8231 = vadd.f32 %v7506, %v8230
        %8232 = vmatprep.mubr.f32.mxu0 0.0
        %8233 = vmatmul.mubr.f32.gmra.mxu0 %v7706
        %v8234 = vpop.f32.mrf.mxu0
        %v8235 = vadd.f32 %v7510, %v8234
        %v8236 = vpop.f32.mrf.mxu0
        %v8237 = vadd.f32 %v7512, %v8236
        %8238 = vmatprep.mubr.f32.mxu0 0.0
        %8239 = vmatmul.mubr.f32.gmra.mxu0 %v7709
        %v8240 = vpop.f32.mrf.mxu0
        %v8241 = vadd.f32 %v7516, %v8240
        %v8242 = vpop.f32.mrf.mxu0
        %v8243 = vadd.f32 %v7518, %v8242
        %8244 = vdwg.mxu0
        %8245 = vmatprep.subr.mxu0 0.0
        %8246 = vmatpush1.msra.mxu0 0.0
        %8247 = vmatprep.subr.mxu0 0.0
        %8248 = vmatpush1.msra.mxu0 0.0
        %8249 = vmatprep.subr.mxu0 0.0
        %8250 = vmatpush1.msra.mxu0 0.0
        %8251 = vmatprep.subr.mxu0 0.0
        %8252 = vmatpush1.msra.mxu0 0.0
        %8253 = vmatprep.subr.mxu0 0.0
        %8254 = vmatpush1.msra.mxu0 0.0
        %8255 = vmatprep.subr.mxu0 0.0
        %8256 = vmatpush1.msra.mxu0 0.0
        %8257 = vmatprep.subr.mxu0 0.0
        %8258 = vmatpush1.msra.mxu0 0.0
        %8259 = vmatprep.subr.mxu0 0.0
        %8260 = vmatpush1.msra.mxu0 0.0
        %8261 = vmatprep.subr.mxu0 0.0
        %8262 = vmatpush1.msra.mxu0 0.0
        %8263 = vmatprep.subr.mxu0 0.0
        %8264 = vmatpush1.msra.mxu0 0.0
        %8265 = vmatprep.subr.mxu0 0.0
        %8266 = vmatpush1.msra.mxu0 0.0
        %8267 = vmatprep.subr.mxu0 0.0
        %8268 = vmatpush1.msra.mxu0 0.0
        %8269 = vmatprep.subr.mxu0 %v6963
        %8270 = vmatpush1.msra.mxu0 %v6962
        %8271 = vmatprep.subr.mxu0 %v6947
        %8272 = vmatpush1.msra.mxu0 %v6946
        %8273 = vmatprep.subr.mxu0 %v6931
        %8274 = vmatpush1.msra.mxu0 %v6930
        %8275 = vmatprep.subr.mxu0 %v6915
        %8276 = vmatpush1.msra.mxu0 %v6914
        %8277 = vmatprep.subr.mxu0 0.0
        %8278 = vmatpush2.msra.mxu0 0.0
        %8279 = vmatprep.subr.mxu0 0.0
        %8280 = vmatpush2.msra.mxu0 0.0
        %8281 = vmatprep.subr.mxu0 0.0
        %8282 = vmatpush2.msra.mxu0 0.0
        %8283 = vmatprep.subr.mxu0 0.0
        %8284 = vmatpush2.msra.mxu0 0.0
        %8285 = vmatprep.subr.mxu0 0.0
        %8286 = vmatpush2.msra.mxu0 0.0
        %8287 = vmatprep.subr.mxu0 0.0
        %8288 = vmatpush2.msra.mxu0 0.0
        %8289 = vmatprep.subr.mxu0 0.0
        %8290 = vmatpush2.msra.mxu0 0.0
        %8291 = vmatprep.subr.mxu0 0.0
        %8292 = vmatpush2.msra.mxu0 0.0
        %8293 = vmatprep.subr.mxu0 0.0
        %8294 = vmatpush2.msra.mxu0 0.0
        %8295 = vmatprep.subr.mxu0 0.0
        %8296 = vmatpush2.msra.mxu0 0.0
        %8297 = vmatprep.subr.mxu0 0.0
        %8298 = vmatpush2.msra.mxu0 0.0
        %8299 = vmatprep.subr.mxu0 0.0
        %8300 = vmatpush2.msra.mxu0 0.0
        %8301 = vmatprep.subr.mxu0 0.0
        %8302 = vmatpush2.msra.mxu0 0.0
        %8303 = vmatprep.subr.mxu0 0.0
        %8304 = vmatpush2.msra.mxu0 0.0
        %8305 = vmatprep.subr.mxu0 0.0
        %8306 = vmatpush2.msra.mxu0 0.0
        %8307 = vmatprep.subr.mxu0 0.0
        %8308 = vmatpush2.msra.mxu0 0.0
        %8309 = vmatprep.mubr.f32.mxu0 0.0
        %8310 = vmatmul.mubr.f32.gmra.mxu0 %v7700
        %v8311 = vpop.f32.mrf.mxu0
        %v8312 = vadd.f32 %v7587, %v8311
        %v8313 = vpop.f32.mrf.mxu0
        %v8314 = vadd.f32 %v7589, %v8313
        %8315 = vmatprep.mubr.f32.mxu0 0.0
        %8316 = vmatmul.mubr.f32.gmra.mxu0 %v7703
        %v8317 = vpop.f32.mrf.mxu0
        %v8318 = vadd.f32 %v7593, %v8317
        %v8319 = vpop.f32.mrf.mxu0
        %v8320 = vadd.f32 %v7595, %v8319
        %8321 = vmatprep.mubr.f32.mxu0 0.0
        %8322 = vmatmul.mubr.f32.gmra.mxu0 %v7706
        %v8323 = vpop.f32.mrf.mxu0
        %v8324 = vadd.f32 %v7599, %v8323
        %v8325 = vpop.f32.mrf.mxu0
        %v8326 = vadd.f32 %v7601, %v8325
        %8327 = vmatprep.mubr.f32.mxu0 0.0
        %8328 = vmatmul.mubr.f32.gmra.mxu0 %v7709
        %v8329 = vpop.f32.mrf.mxu0
        %v8330 = vadd.f32 %v7605, %v8329
        %v8331 = vpop.f32.mrf.mxu0
        %v8332 = vadd.f32 %v7607, %v8331
        %8333 = vdwg.mxu0
        %8334 = vmatprep.subr.mxu0 0.0
        %8335 = vmatpush1.msra.mxu0 0.0
        %8336 = vmatprep.subr.mxu0 0.0
        %8337 = vmatpush1.msra.mxu0 0.0
        %8338 = vmatprep.subr.mxu0 0.0
        %8339 = vmatpush1.msra.mxu0 0.0
        %8340 = vmatprep.subr.mxu0 0.0
        %8341 = vmatpush1.msra.mxu0 0.0
        %8342 = vmatprep.subr.mxu0 0.0
        %8343 = vmatpush1.msra.mxu0 0.0
        %8344 = vmatprep.subr.mxu0 0.0
        %8345 = vmatpush1.msra.mxu0 0.0
        %8346 = vmatprep.subr.mxu0 0.0
        %8347 = vmatpush1.msra.mxu0 0.0
        %8348 = vmatprep.subr.mxu0 0.0
        %8349 = vmatpush1.msra.mxu0 0.0
        %8350 = vmatprep.subr.mxu0 0.0
        %8351 = vmatpush1.msra.mxu0 0.0
        %8352 = vmatprep.subr.mxu0 0.0
        %8353 = vmatpush1.msra.mxu0 0.0
        %8354 = vmatprep.subr.mxu0 0.0
        %8355 = vmatpush1.msra.mxu0 0.0
        %8356 = vmatprep.subr.mxu0 0.0
        %8357 = vmatpush1.msra.mxu0 0.0
        %8358 = vmatprep.subr.mxu0 %v6965
        %8359 = vmatpush1.msra.mxu0 %v6964
        %8360 = vmatprep.subr.mxu0 %v6949
        %8361 = vmatpush1.msra.mxu0 %v6948
        %8362 = vmatprep.subr.mxu0 %v6933
        %8363 = vmatpush1.msra.mxu0 %v6932
        %8364 = vmatprep.subr.mxu0 %v6917
        %8365 = vmatpush1.msra.mxu0 %v6916
        %8366 = vmatprep.subr.mxu0 0.0
        %8367 = vmatpush2.msra.mxu0 0.0
        %8368 = vmatprep.subr.mxu0 0.0
        %8369 = vmatpush2.msra.mxu0 0.0
        %8370 = vmatprep.subr.mxu0 0.0
        %8371 = vmatpush2.msra.mxu0 0.0
        %8372 = vmatprep.subr.mxu0 0.0
        %8373 = vmatpush2.msra.mxu0 0.0
        %8374 = vmatprep.subr.mxu0 0.0
        %8375 = vmatpush2.msra.mxu0 0.0
        %8376 = vmatprep.subr.mxu0 0.0
        %8377 = vmatpush2.msra.mxu0 0.0
        %8378 = vmatprep.subr.mxu0 0.0
        %8379 = vmatpush2.msra.mxu0 0.0
        %8380 = vmatprep.subr.mxu0 0.0
        %8381 = vmatpush2.msra.mxu0 0.0
        %8382 = vmatprep.subr.mxu0 0.0
        %8383 = vmatpush2.msra.mxu0 0.0
        %8384 = vmatprep.subr.mxu0 0.0
        %8385 = vmatpush2.msra.mxu0 0.0
        %8386 = vmatprep.subr.mxu0 0.0
        %8387 = vmatpush2.msra.mxu0 0.0
        %8388 = vmatprep.subr.mxu0 0.0
        %8389 = vmatpush2.msra.mxu0 0.0
        %8390 = vmatprep.subr.mxu0 0.0
        %8391 = vmatpush2.msra.mxu0 0.0
        %8392 = vmatprep.subr.mxu0 0.0
        %8393 = vmatpush2.msra.mxu0 0.0
        %8394 = vmatprep.subr.mxu0 0.0
        %8395 = vmatpush2.msra.mxu0 0.0
        %8396 = vmatprep.subr.mxu0 0.0
        %8397 = vmatpush2.msra.mxu0 0.0
        %8398 = vmatprep.mubr.f32.mxu0 0.0
        %8399 = vmatmul.mubr.f32.gmra.mxu0 %v7700
        %v8400 = vpop.f32.mrf.mxu0
        %v8401 = vadd.f32 %v7676, %v8400
        %v8402 = vpop.f32.mrf.mxu0
        %v8403 = vadd.f32 %v7678, %v8402
        %8404 = vmatprep.mubr.f32.mxu0 0.0
        %8405 = vmatmul.mubr.f32.gmra.mxu0 %v7703
        %v8406 = vpop.f32.mrf.mxu0
        %v8407 = vadd.f32 %v7682, %v8406
        %v8408 = vpop.f32.mrf.mxu0
        %v8409 = vadd.f32 %v7684, %v8408
        %8410 = vmatprep.mubr.f32.mxu0 0.0
        %8411 = vmatmul.mubr.f32.gmra.mxu0 %v7706
        %v8412 = vpop.f32.mrf.mxu0
        %v8413 = vadd.f32 %v7688, %v8412
        %v8414 = vpop.f32.mrf.mxu0
        %v8415 = vadd.f32 %v7690, %v8414
        %8416 = vmatprep.mubr.f32.mxu0 0.0
        %8417 = vmatmul.mubr.f32.gmra.mxu0 %v7709
        %v8418 = vpop.f32.mrf.mxu0
        %v8419 = vadd.f32 %v7694, %v8418
        %v8420 = vpop.f32.mrf.mxu0
        %v8421 = vadd.f32 %v7696, %v8420
        %8422 = vdwg.mxu0
        %v8423 = vld [vmem:[%s7] sm:$0xff]
        %v8424 = vld [vmem:[%s7 + $0x8] sm:$0xff]
        %v8425 = vld [vmem:[%s7 + $0x10] sm:$0xff]
        %v8426 = vld [vmem:[%s7 + $0x18] sm:$0xff]
        %8428 = vset.pattern.permute.xlu0 0
        %8429 = vperm.xlu0 %8428, %v8423
        %v8430 = vpop.permute.xlu0 %8429
        %8433 = vset.pattern.permute.xlu0 0
        %8434 = vperm.xlu0 %8433, %v8424
        %v8435 = vpop.permute.xlu0 %8434
        %8438 = vset.pattern.permute.xlu0 0
        %8439 = vperm.xlu0 %8438, %v8425
        %v8440 = vpop.permute.xlu0 %8439
        %8443 = vset.pattern.permute.xlu0 0
        %8444 = vperm.xlu0 %8443, %v8426
        %v8445 = vpop.permute.xlu0 %8444
        %v8447 = vadd.f32 %v7778, %v8430
        %v8448 = vadd.f32 %v7780, %v8430
        %v8449 = vadd.f32 %v7867, %v8430
        %v8450 = vadd.f32 %v7869, %v8430
        %v8451 = vadd.f32 %v7956, %v8430
        %v8452 = vadd.f32 %v7958, %v8430
        %v8453 = vadd.f32 %v8045, %v8430
        %v8454 = vadd.f32 %v8047, %v8430
        %v8455 = vadd.f32 %v8134, %v8430
        %v8456 = vadd.f32 %v8136, %v8430
        %v8457 = vadd.f32 %v8223, %v8430
        %v8458 = vadd.f32 %v8225, %v8430
        %v8459 = vadd.f32 %v8312, %v8430
        %v8460 = vadd.f32 %v8314, %v8430
        %v8461 = vadd.f32 %v8401, %v8430
        %v8462 = vadd.f32 %v8403, %v8430
        %v8463 = vadd.f32 %v7784, %v8435
        %v8464 = vadd.f32 %v7786, %v8435
        %v8465 = vadd.f32 %v7873, %v8435
        %v8466 = vadd.f32 %v7875, %v8435
        %v8467 = vadd.f32 %v7962, %v8435
        %v8468 = vadd.f32 %v7964, %v8435
        %v8469 = vadd.f32 %v8051, %v8435
        %v8470 = vadd.f32 %v8053, %v8435
        %v8471 = vadd.f32 %v8140, %v8435
        %v8472 = vadd.f32 %v8142, %v8435
        %v8473 = vadd.f32 %v8229, %v8435
        %v8474 = vadd.f32 %v8231, %v8435
        %v8475 = vadd.f32 %v8318, %v8435
        %v8476 = vadd.f32 %v8320, %v8435
        %v8477 = vadd.f32 %v8407, %v8435
        %v8478 = vadd.f32 %v8409, %v8435
        %v8479 = vadd.f32 %v7790, %v8440
        %v8480 = vadd.f32 %v7792, %v8440
        %v8481 = vadd.f32 %v7879, %v8440
        %v8482 = vadd.f32 %v7881, %v8440
        %v8483 = vadd.f32 %v7968, %v8440
        %v8484 = vadd.f32 %v7970, %v8440
        %v8485 = vadd.f32 %v8057, %v8440
        %v8486 = vadd.f32 %v8059, %v8440
        %v8487 = vadd.f32 %v8146, %v8440
        %v8488 = vadd.f32 %v8148, %v8440
        %v8489 = vadd.f32 %v8235, %v8440
        %v8490 = vadd.f32 %v8237, %v8440
        %v8491 = vadd.f32 %v8324, %v8440
        %v8492 = vadd.f32 %v8326, %v8440
        %v8493 = vadd.f32 %v8413, %v8440
        %v8494 = vadd.f32 %v8415, %v8440
        %v8495 = vadd.f32 %v7796, %v8445
        %v8496 = vadd.f32 %v7798, %v8445
        %v8497 = vadd.f32 %v7885, %v8445
        %v8498 = vadd.f32 %v7887, %v8445
        %v8499 = vadd.f32 %v7974, %v8445
        %v8500 = vadd.f32 %v7976, %v8445
        %v8501 = vadd.f32 %v8063, %v8445
        %v8502 = vadd.f32 %v8065, %v8445
        %v8503 = vadd.f32 %v8152, %v8445
        %v8504 = vadd.f32 %v8154, %v8445
        %v8505 = vadd.f32 %v8241, %v8445
        %v8506 = vadd.f32 %v8243, %v8445
        %v8507 = vadd.f32 %v8330, %v8445
        %v8508 = vadd.f32 %v8332, %v8445
        %v8509 = vadd.f32 %v8419, %v8445
        %v8510 = vadd.f32 %v8421, %v8445
        %v8511 = vmax.f32 %v8447, 0.0
        %v8512 = vmax.f32 %v8448, 0.0
        %v8513 = vmax.f32 %v8449, 0.0
        %v8514 = vmax.f32 %v8450, 0.0
        %v8515 = vmax.f32 %v8451, 0.0
        %v8516 = vmax.f32 %v8452, 0.0
        %v8517 = vmax.f32 %v8453, 0.0
        %v8518 = vmax.f32 %v8454, 0.0
        %v8519 = vmax.f32 %v8455, 0.0
        %v8520 = vmax.f32 %v8456, 0.0
        %v8521 = vmax.f32 %v8457, 0.0
        %v8522 = vmax.f32 %v8458, 0.0
        %v8523 = vmax.f32 %v8459, 0.0
        %v8524 = vmax.f32 %v8460, 0.0
        %v8525 = vmax.f32 %v8461, 0.0
        %v8526 = vmax.f32 %v8462, 0.0
        %v8527 = vmax.f32 %v8463, 0.0
        %v8528 = vmax.f32 %v8464, 0.0
        %v8529 = vmax.f32 %v8465, 0.0
        %v8530 = vmax.f32 %v8466, 0.0
        %v8531 = vmax.f32 %v8467, 0.0
        %v8532 = vmax.f32 %v8468, 0.0
        %v8533 = vmax.f32 %v8469, 0.0
        %v8534 = vmax.f32 %v8470, 0.0
        %v8535 = vmax.f32 %v8471, 0.0
        %v8536 = vmax.f32 %v8472, 0.0
        %v8537 = vmax.f32 %v8473, 0.0
        %v8538 = vmax.f32 %v8474, 0.0
        %v8539 = vmax.f32 %v8475, 0.0
        %v8540 = vmax.f32 %v8476, 0.0
        %v8541 = vmax.f32 %v8477, 0.0
        %v8542 = vmax.f32 %v8478, 0.0
        %v8543 = vmax.f32 %v8479, 0.0
        %v8544 = vmax.f32 %v8480, 0.0
        %v8545 = vmax.f32 %v8481, 0.0
        %v8546 = vmax.f32 %v8482, 0.0
        %v8547 = vmax.f32 %v8483, 0.0
        %v8548 = vmax.f32 %v8484, 0.0
        %v8549 = vmax.f32 %v8485, 0.0
        %v8550 = vmax.f32 %v8486, 0.0
        %v8551 = vmax.f32 %v8487, 0.0
        %v8552 = vmax.f32 %v8488, 0.0
        %v8553 = vmax.f32 %v8489, 0.0
        %v8554 = vmax.f32 %v8490, 0.0
        %v8555 = vmax.f32 %v8491, 0.0
        %v8556 = vmax.f32 %v8492, 0.0
        %v8557 = vmax.f32 %v8493, 0.0
        %v8558 = vmax.f32 %v8494, 0.0
        %v8559 = vmax.f32 %v8495, 0.0
        %v8560 = vmax.f32 %v8496, 0.0
        %v8561 = vmax.f32 %v8497, 0.0
        %v8562 = vmax.f32 %v8498, 0.0
        %v8563 = vmax.f32 %v8499, 0.0
        %v8564 = vmax.f32 %v8500, 0.0
        %v8565 = vmax.f32 %v8501, 0.0
        %v8566 = vmax.f32 %v8502, 0.0
        %v8567 = vmax.f32 %v8503, 0.0
        %v8568 = vmax.f32 %v8504, 0.0
        %v8569 = vmax.f32 %v8505, 0.0
        %v8570 = vmax.f32 %v8506, 0.0
        %v8571 = vmax.f32 %v8507, 0.0
        %v8572 = vmax.f32 %v8508, 0.0
        %v8573 = vmax.f32 %v8509, 0.0
        %v8574 = vmax.f32 %v8510, 0.0
        %v8575 = vld [vmem:[%s8] sm:$0xf]
        %v8576 = vld [vmem:[%s9] sm:$0xf]
        %v8578 = vsel %vm6177, %v8576, 0
        %8580 = vmatprep.subr.mxu0 0.0
        %8581 = vmatpush1.msra.mxu0 0.0
        %8582 = vmatprep.subr.mxu0 0.0
        %8583 = vmatpush1.msra.mxu0 0.0
        %8584 = vmatprep.subr.mxu0 0.0
        %8585 = vmatpush1.msra.mxu0 0.0
        %8586 = vmatprep.subr.mxu0 0.0
        %8587 = vmatpush1.msra.mxu0 0.0
        %8588 = vmatprep.subr.mxu0 0.0
        %8589 = vmatpush1.msra.mxu0 0.0
        %8590 = vmatprep.subr.mxu0 0.0
        %8591 = vmatpush1.msra.mxu0 0.0
        %8592 = vmatprep.subr.mxu0 0.0
        %8593 = vmatpush1.msra.mxu0 0.0
        %8594 = vmatprep.subr.mxu0 0.0
        %8595 = vmatpush1.msra.mxu0 0.0
        %8596 = vmatprep.subr.mxu0 0.0
        %8597 = vmatpush1.msra.mxu0 0.0
        %8598 = vmatprep.subr.mxu0 0.0
        %8599 = vmatpush1.msra.mxu0 0.0
        %8600 = vmatprep.subr.mxu0 0.0
        %8601 = vmatpush1.msra.mxu0 0.0
        %8602 = vmatprep.subr.mxu0 0.0
        %8603 = vmatpush1.msra.mxu0 0.0
        %8604 = vmatprep.subr.mxu0 0.0
        %8605 = vmatpush1.msra.mxu0 0.0
        %8606 = vmatprep.subr.mxu0 %v4692
        %8607 = vmatpush1.msra.mxu0 %v4588
        %8608 = vmatprep.subr.mxu0 %v3028
        %8609 = vmatpush1.msra.mxu0 %v2924
        %8610 = vmatprep.subr.mxu0 %v1364
        %8611 = vmatpush1.msra.mxu0 %v1260
        %8612 = vmatprep.subr.mxu0 0.0
        %8613 = vmatpush2.msra.mxu0 0.0
        %8614 = vmatprep.subr.mxu0 0.0
        %8615 = vmatpush2.msra.mxu0 0.0
        %8616 = vmatprep.subr.mxu0 0.0
        %8617 = vmatpush2.msra.mxu0 0.0
        %8618 = vmatprep.subr.mxu0 0.0
        %8619 = vmatpush2.msra.mxu0 0.0
        %8620 = vmatprep.subr.mxu0 0.0
        %8621 = vmatpush2.msra.mxu0 0.0
        %8622 = vmatprep.subr.mxu0 0.0
        %8623 = vmatpush2.msra.mxu0 0.0
        %8624 = vmatprep.subr.mxu0 0.0
        %8625 = vmatpush2.msra.mxu0 0.0
        %8626 = vmatprep.subr.mxu0 0.0
        %8627 = vmatpush2.msra.mxu0 0.0
        %8628 = vmatprep.subr.mxu0 0.0
        %8629 = vmatpush2.msra.mxu0 0.0
        %8630 = vmatprep.subr.mxu0 0.0
        %8631 = vmatpush2.msra.mxu0 0.0
        %8632 = vmatprep.subr.mxu0 0.0
        %8633 = vmatpush2.msra.mxu0 0.0
        %8634 = vmatprep.subr.mxu0 0.0
        %8635 = vmatpush2.msra.mxu0 0.0
        %8636 = vmatprep.subr.mxu0 0.0
        %8637 = vmatpush2.msra.mxu0 0.0
        %8638 = vmatprep.subr.mxu0 0.0
        %8639 = vmatpush2.msra.mxu0 0.0
        %8640 = vmatprep.subr.mxu0 0.0
        %8641 = vmatpush2.msra.mxu0 0.0
        %8642 = vmatprep.subr.mxu0 0.0
        %8643 = vmatpush2.msra.mxu0 0.0
        %8644 = vmatprep.mubr.f32.mxu0 0.0
        %8645 = vmatmul.mubr.f32.gmra.mxu0 %v8578
        %v8646 = vpop.f32.mrf.mxu0
        %v8647 = vadd.f32 0.0, %v8646
        %v8648 = vpop.f32.mrf.mxu0
        %v8649 = vadd.f32 0.0, %v8648
        %8650 = vdwg.mxu0
        %8651 = vmatprep.subr.mxu0 0.0
        %8652 = vmatpush1.msra.mxu0 0.0
        %8653 = vmatprep.subr.mxu0 0.0
        %8654 = vmatpush1.msra.mxu0 0.0
        %8655 = vmatprep.subr.mxu0 0.0
        %8656 = vmatpush1.msra.mxu0 0.0
        %8657 = vmatprep.subr.mxu0 0.0
        %8658 = vmatpush1.msra.mxu0 0.0
        %8659 = vmatprep.subr.mxu0 0.0
        %8660 = vmatpush1.msra.mxu0 0.0
        %8661 = vmatprep.subr.mxu0 0.0
        %8662 = vmatpush1.msra.mxu0 0.0
        %8663 = vmatprep.subr.mxu0 0.0
        %8664 = vmatpush1.msra.mxu0 0.0
        %8665 = vmatprep.subr.mxu0 0.0
        %8666 = vmatpush1.msra.mxu0 0.0
        %8667 = vmatprep.subr.mxu0 0.0
        %8668 = vmatpush1.msra.mxu0 0.0
        %8669 = vmatprep.subr.mxu0 0.0
        %8670 = vmatpush1.msra.mxu0 0.0
        %8671 = vmatprep.subr.mxu0 0.0
        %8672 = vmatpush1.msra.mxu0 0.0
        %8673 = vmatprep.subr.mxu0 0.0
        %8674 = vmatpush1.msra.mxu0 0.0
        %8675 = vmatprep.subr.mxu0 0.0
        %8676 = vmatpush1.msra.mxu0 0.0
        %8677 = vmatprep.subr.mxu0 %v4900
        %8678 = vmatpush1.msra.mxu0 %v4796
        %8679 = vmatprep.subr.mxu0 %v3236
        %8680 = vmatpush1.msra.mxu0 %v3132
        %8681 = vmatprep.subr.mxu0 %v1572
        %8682 = vmatpush1.msra.mxu0 %v1468
        %8683 = vmatprep.subr.mxu0 0.0
        %8684 = vmatpush2.msra.mxu0 0.0
        %8685 = vmatprep.subr.mxu0 0.0
        %8686 = vmatpush2.msra.mxu0 0.0
        %8687 = vmatprep.subr.mxu0 0.0
        %8688 = vmatpush2.msra.mxu0 0.0
        %8689 = vmatprep.subr.mxu0 0.0
        %8690 = vmatpush2.msra.mxu0 0.0
        %8691 = vmatprep.subr.mxu0 0.0
        %8692 = vmatpush2.msra.mxu0 0.0
        %8693 = vmatprep.subr.mxu0 0.0
        %8694 = vmatpush2.msra.mxu0 0.0
        %8695 = vmatprep.subr.mxu0 0.0
        %8696 = vmatpush2.msra.mxu0 0.0
        %8697 = vmatprep.subr.mxu0 0.0
        %8698 = vmatpush2.msra.mxu0 0.0
        %8699 = vmatprep.subr.mxu0 0.0
        %8700 = vmatpush2.msra.mxu0 0.0
        %8701 = vmatprep.subr.mxu0 0.0
        %8702 = vmatpush2.msra.mxu0 0.0
        %8703 = vmatprep.subr.mxu0 0.0
        %8704 = vmatpush2.msra.mxu0 0.0
        %8705 = vmatprep.subr.mxu0 0.0
        %8706 = vmatpush2.msra.mxu0 0.0
        %8707 = vmatprep.subr.mxu0 0.0
        %8708 = vmatpush2.msra.mxu0 0.0
        %8709 = vmatprep.subr.mxu0 0.0
        %8710 = vmatpush2.msra.mxu0 0.0
        %8711 = vmatprep.subr.mxu0 0.0
        %8712 = vmatpush2.msra.mxu0 0.0
        %8713 = vmatprep.subr.mxu0 0.0
        %8714 = vmatpush2.msra.mxu0 0.0
        %8715 = vmatprep.mubr.f32.mxu0 0.0
        %8716 = vmatmul.mubr.f32.gmra.mxu0 %v8578
        %v8717 = vpop.f32.mrf.mxu0
        %v8718 = vadd.f32 0.0, %v8717
        %v8719 = vpop.f32.mrf.mxu0
        %v8720 = vadd.f32 0.0, %v8719
        %8721 = vdwg.mxu0
        %8722 = vmatprep.subr.mxu0 0.0
        %8723 = vmatpush1.msra.mxu0 0.0
        %8724 = vmatprep.subr.mxu0 0.0
        %8725 = vmatpush1.msra.mxu0 0.0
        %8726 = vmatprep.subr.mxu0 0.0
        %8727 = vmatpush1.msra.mxu0 0.0
        %8728 = vmatprep.subr.mxu0 0.0
        %8729 = vmatpush1.msra.mxu0 0.0
        %8730 = vmatprep.subr.mxu0 0.0
        %8731 = vmatpush1.msra.mxu0 0.0
        %8732 = vmatprep.subr.mxu0 0.0
        %8733 = vmatpush1.msra.mxu0 0.0
        %8734 = vmatprep.subr.mxu0 0.0
        %8735 = vmatpush1.msra.mxu0 0.0
        %8736 = vmatprep.subr.mxu0 0.0
        %8737 = vmatpush1.msra.mxu0 0.0
        %8738 = vmatprep.subr.mxu0 0.0
        %8739 = vmatpush1.msra.mxu0 0.0
        %8740 = vmatprep.subr.mxu0 0.0
        %8741 = vmatpush1.msra.mxu0 0.0
        %8742 = vmatprep.subr.mxu0 0.0
        %8743 = vmatpush1.msra.mxu0 0.0
        %8744 = vmatprep.subr.mxu0 0.0
        %8745 = vmatpush1.msra.mxu0 0.0
        %8746 = vmatprep.subr.mxu0 0.0
        %8747 = vmatpush1.msra.mxu0 0.0
        %8748 = vmatprep.subr.mxu0 %v5108
        %8749 = vmatpush1.msra.mxu0 %v5004
        %8750 = vmatprep.subr.mxu0 %v3444
        %8751 = vmatpush1.msra.mxu0 %v3340
        %8752 = vmatprep.subr.mxu0 %v1780
        %8753 = vmatpush1.msra.mxu0 %v1676
        %8754 = vmatprep.subr.mxu0 0.0
        %8755 = vmatpush2.msra.mxu0 0.0
        %8756 = vmatprep.subr.mxu0 0.0
        %8757 = vmatpush2.msra.mxu0 0.0
        %8758 = vmatprep.subr.mxu0 0.0
        %8759 = vmatpush2.msra.mxu0 0.0
        %8760 = vmatprep.subr.mxu0 0.0
        %8761 = vmatpush2.msra.mxu0 0.0
        %8762 = vmatprep.subr.mxu0 0.0
        %8763 = vmatpush2.msra.mxu0 0.0
        %8764 = vmatprep.subr.mxu0 0.0
        %8765 = vmatpush2.msra.mxu0 0.0
        %8766 = vmatprep.subr.mxu0 0.0
        %8767 = vmatpush2.msra.mxu0 0.0
        %8768 = vmatprep.subr.mxu0 0.0
        %8769 = vmatpush2.msra.mxu0 0.0
        %8770 = vmatprep.subr.mxu0 0.0
        %8771 = vmatpush2.msra.mxu0 0.0
        %8772 = vmatprep.subr.mxu0 0.0
        %8773 = vmatpush2.msra.mxu0 0.0
        %8774 = vmatprep.subr.mxu0 0.0
        %8775 = vmatpush2.msra.mxu0 0.0
        %8776 = vmatprep.subr.mxu0 0.0
        %8777 = vmatpush2.msra.mxu0 0.0
        %8778 = vmatprep.subr.mxu0 0.0
        %8779 = vmatpush2.msra.mxu0 0.0
        %8780 = vmatprep.subr.mxu0 0.0
        %8781 = vmatpush2.msra.mxu0 0.0
        %8782 = vmatprep.subr.mxu0 0.0
        %8783 = vmatpush2.msra.mxu0 0.0
        %8784 = vmatprep.subr.mxu0 0.0
        %8785 = vmatpush2.msra.mxu0 0.0
        %8786 = vmatprep.mubr.f32.mxu0 0.0
        %8787 = vmatmul.mubr.f32.gmra.mxu0 %v8578
        %v8788 = vpop.f32.mrf.mxu0
        %v8789 = vadd.f32 0.0, %v8788
        %v8790 = vpop.f32.mrf.mxu0
        %v8791 = vadd.f32 0.0, %v8790
        %8792 = vdwg.mxu0
        %8793 = vmatprep.subr.mxu0 0.0
        %8794 = vmatpush1.msra.mxu0 0.0
        %8795 = vmatprep.subr.mxu0 0.0
        %8796 = vmatpush1.msra.mxu0 0.0
        %8797 = vmatprep.subr.mxu0 0.0
        %8798 = vmatpush1.msra.mxu0 0.0
        %8799 = vmatprep.subr.mxu0 0.0
        %8800 = vmatpush1.msra.mxu0 0.0
        %8801 = vmatprep.subr.mxu0 0.0
        %8802 = vmatpush1.msra.mxu0 0.0
        %8803 = vmatprep.subr.mxu0 0.0
        %8804 = vmatpush1.msra.mxu0 0.0
        %8805 = vmatprep.subr.mxu0 0.0
        %8806 = vmatpush1.msra.mxu0 0.0
        %8807 = vmatprep.subr.mxu0 0.0
        %8808 = vmatpush1.msra.mxu0 0.0
        %8809 = vmatprep.subr.mxu0 0.0
        %8810 = vmatpush1.msra.mxu0 0.0
        %8811 = vmatprep.subr.mxu0 0.0
        %8812 = vmatpush1.msra.mxu0 0.0
        %8813 = vmatprep.subr.mxu0 0.0
        %8814 = vmatpush1.msra.mxu0 0.0
        %8815 = vmatprep.subr.mxu0 0.0
        %8816 = vmatpush1.msra.mxu0 0.0
        %8817 = vmatprep.subr.mxu0 0.0
        %8818 = vmatpush1.msra.mxu0 0.0
        %8819 = vmatprep.subr.mxu0 %v5316
        %8820 = vmatpush1.msra.mxu0 %v5212
        %8821 = vmatprep.subr.mxu0 %v3652
        %8822 = vmatpush1.msra.mxu0 %v3548
        %8823 = vmatprep.subr.mxu0 %v1988
        %8824 = vmatpush1.msra.mxu0 %v1884
        %8825 = vmatprep.subr.mxu0 0.0
        %8826 = vmatpush2.msra.mxu0 0.0
        %8827 = vmatprep.subr.mxu0 0.0
        %8828 = vmatpush2.msra.mxu0 0.0
        %8829 = vmatprep.subr.mxu0 0.0
        %8830 = vmatpush2.msra.mxu0 0.0
        %8831 = vmatprep.subr.mxu0 0.0
        %8832 = vmatpush2.msra.mxu0 0.0
        %8833 = vmatprep.subr.mxu0 0.0
        %8834 = vmatpush2.msra.mxu0 0.0
        %8835 = vmatprep.subr.mxu0 0.0
        %8836 = vmatpush2.msra.mxu0 0.0
        %8837 = vmatprep.subr.mxu0 0.0
        %8838 = vmatpush2.msra.mxu0 0.0
        %8839 = vmatprep.subr.mxu0 0.0
        %8840 = vmatpush2.msra.mxu0 0.0
        %8841 = vmatprep.subr.mxu0 0.0
        %8842 = vmatpush2.msra.mxu0 0.0
        %8843 = vmatprep.subr.mxu0 0.0
        %8844 = vmatpush2.msra.mxu0 0.0
        %8845 = vmatprep.subr.mxu0 0.0
        %8846 = vmatpush2.msra.mxu0 0.0
        %8847 = vmatprep.subr.mxu0 0.0
        %8848 = vmatpush2.msra.mxu0 0.0
        %8849 = vmatprep.subr.mxu0 0.0
        %8850 = vmatpush2.msra.mxu0 0.0
        %8851 = vmatprep.subr.mxu0 0.0
        %8852 = vmatpush2.msra.mxu0 0.0
        %8853 = vmatprep.subr.mxu0 0.0
        %8854 = vmatpush2.msra.mxu0 0.0
        %8855 = vmatprep.subr.mxu0 0.0
        %8856 = vmatpush2.msra.mxu0 0.0
        %8857 = vmatprep.mubr.f32.mxu0 0.0
        %8858 = vmatmul.mubr.f32.gmra.mxu0 %v8578
        %v8859 = vpop.f32.mrf.mxu0
        %v8860 = vadd.f32 0.0, %v8859
        %v8861 = vpop.f32.mrf.mxu0
        %v8862 = vadd.f32 0.0, %v8861
        %8863 = vdwg.mxu0
        %8864 = vmatprep.subr.mxu0 0.0
        %8865 = vmatpush1.msra.mxu0 0.0
        %8866 = vmatprep.subr.mxu0 0.0
        %8867 = vmatpush1.msra.mxu0 0.0
        %8868 = vmatprep.subr.mxu0 0.0
        %8869 = vmatpush1.msra.mxu0 0.0
        %8870 = vmatprep.subr.mxu0 0.0
        %8871 = vmatpush1.msra.mxu0 0.0
        %8872 = vmatprep.subr.mxu0 0.0
        %8873 = vmatpush1.msra.mxu0 0.0
        %8874 = vmatprep.subr.mxu0 0.0
        %8875 = vmatpush1.msra.mxu0 0.0
        %8876 = vmatprep.subr.mxu0 0.0
        %8877 = vmatpush1.msra.mxu0 0.0
        %8878 = vmatprep.subr.mxu0 0.0
        %8879 = vmatpush1.msra.mxu0 0.0
        %8880 = vmatprep.subr.mxu0 0.0
        %8881 = vmatpush1.msra.mxu0 0.0
        %8882 = vmatprep.subr.mxu0 0.0
        %8883 = vmatpush1.msra.mxu0 0.0
        %8884 = vmatprep.subr.mxu0 0.0
        %8885 = vmatpush1.msra.mxu0 0.0
        %8886 = vmatprep.subr.mxu0 0.0
        %8887 = vmatpush1.msra.mxu0 0.0
        %8888 = vmatprep.subr.mxu0 0.0
        %8889 = vmatpush1.msra.mxu0 0.0
        %8890 = vmatprep.subr.mxu0 %v5524
        %8891 = vmatpush1.msra.mxu0 %v5420
        %8892 = vmatprep.subr.mxu0 %v3860
        %8893 = vmatpush1.msra.mxu0 %v3756
        %8894 = vmatprep.subr.mxu0 %v2196
        %8895 = vmatpush1.msra.mxu0 %v2092
        %8896 = vmatprep.subr.mxu0 0.0
        %8897 = vmatpush2.msra.mxu0 0.0
        %8898 = vmatprep.subr.mxu0 0.0
        %8899 = vmatpush2.msra.mxu0 0.0
        %8900 = vmatprep.subr.mxu0 0.0
        %8901 = vmatpush2.msra.mxu0 0.0
        %8902 = vmatprep.subr.mxu0 0.0
        %8903 = vmatpush2.msra.mxu0 0.0
        %8904 = vmatprep.subr.mxu0 0.0
        %8905 = vmatpush2.msra.mxu0 0.0
        %8906 = vmatprep.subr.mxu0 0.0
        %8907 = vmatpush2.msra.mxu0 0.0
        %8908 = vmatprep.subr.mxu0 0.0
        %8909 = vmatpush2.msra.mxu0 0.0
        %8910 = vmatprep.subr.mxu0 0.0
        %8911 = vmatpush2.msra.mxu0 0.0
        %8912 = vmatprep.subr.mxu0 0.0
        %8913 = vmatpush2.msra.mxu0 0.0
        %8914 = vmatprep.subr.mxu0 0.0
        %8915 = vmatpush2.msra.mxu0 0.0
        %8916 = vmatprep.subr.mxu0 0.0
        %8917 = vmatpush2.msra.mxu0 0.0
        %8918 = vmatprep.subr.mxu0 0.0
        %8919 = vmatpush2.msra.mxu0 0.0
        %8920 = vmatprep.subr.mxu0 0.0
        %8921 = vmatpush2.msra.mxu0 0.0
        %8922 = vmatprep.subr.mxu0 0.0
        %8923 = vmatpush2.msra.mxu0 0.0
        %8924 = vmatprep.subr.mxu0 0.0
        %8925 = vmatpush2.msra.mxu0 0.0
        %8926 = vmatprep.subr.mxu0 0.0
        %8927 = vmatpush2.msra.mxu0 0.0
        %8928 = vmatprep.mubr.f32.mxu0 0.0
        %8929 = vmatmul.mubr.f32.gmra.mxu0 %v8578
        %v8930 = vpop.f32.mrf.mxu0
        %v8931 = vadd.f32 0.0, %v8930
        %v8932 = vpop.f32.mrf.mxu0
        %v8933 = vadd.f32 0.0, %v8932
        %8934 = vdwg.mxu0
        %8935 = vmatprep.subr.mxu0 0.0
        %8936 = vmatpush1.msra.mxu0 0.0
        %8937 = vmatprep.subr.mxu0 0.0
        %8938 = vmatpush1.msra.mxu0 0.0
        %8939 = vmatprep.subr.mxu0 0.0
        %8940 = vmatpush1.msra.mxu0 0.0
        %8941 = vmatprep.subr.mxu0 0.0
        %8942 = vmatpush1.msra.mxu0 0.0
        %8943 = vmatprep.subr.mxu0 0.0
        %8944 = vmatpush1.msra.mxu0 0.0
        %8945 = vmatprep.subr.mxu0 0.0
        %8946 = vmatpush1.msra.mxu0 0.0
        %8947 = vmatprep.subr.mxu0 0.0
        %8948 = vmatpush1.msra.mxu0 0.0
        %8949 = vmatprep.subr.mxu0 0.0
        %8950 = vmatpush1.msra.mxu0 0.0
        %8951 = vmatprep.subr.mxu0 0.0
        %8952 = vmatpush1.msra.mxu0 0.0
        %8953 = vmatprep.subr.mxu0 0.0
        %8954 = vmatpush1.msra.mxu0 0.0
        %8955 = vmatprep.subr.mxu0 0.0
        %8956 = vmatpush1.msra.mxu0 0.0
        %8957 = vmatprep.subr.mxu0 0.0
        %8958 = vmatpush1.msra.mxu0 0.0
        %8959 = vmatprep.subr.mxu0 0.0
        %8960 = vmatpush1.msra.mxu0 0.0
        %8961 = vmatprep.subr.mxu0 %v5732
        %8962 = vmatpush1.msra.mxu0 %v5628
        %8963 = vmatprep.subr.mxu0 %v4068
        %8964 = vmatpush1.msra.mxu0 %v3964
        %8965 = vmatprep.subr.mxu0 %v2404
        %8966 = vmatpush1.msra.mxu0 %v2300
        %8967 = vmatprep.subr.mxu0 0.0
        %8968 = vmatpush2.msra.mxu0 0.0
        %8969 = vmatprep.subr.mxu0 0.0
        %8970 = vmatpush2.msra.mxu0 0.0
        %8971 = vmatprep.subr.mxu0 0.0
        %8972 = vmatpush2.msra.mxu0 0.0
        %8973 = vmatprep.subr.mxu0 0.0
        %8974 = vmatpush2.msra.mxu0 0.0
        %8975 = vmatprep.subr.mxu0 0.0
        %8976 = vmatpush2.msra.mxu0 0.0
        %8977 = vmatprep.subr.mxu0 0.0
        %8978 = vmatpush2.msra.mxu0 0.0
        %8979 = vmatprep.subr.mxu0 0.0
        %8980 = vmatpush2.msra.mxu0 0.0
        %8981 = vmatprep.subr.mxu0 0.0
        %8982 = vmatpush2.msra.mxu0 0.0
        %8983 = vmatprep.subr.mxu0 0.0
        %8984 = vmatpush2.msra.mxu0 0.0
        %8985 = vmatprep.subr.mxu0 0.0
        %8986 = vmatpush2.msra.mxu0 0.0
        %8987 = vmatprep.subr.mxu0 0.0
        %8988 = vmatpush2.msra.mxu0 0.0
        %8989 = vmatprep.subr.mxu0 0.0
        %8990 = vmatpush2.msra.mxu0 0.0
        %8991 = vmatprep.subr.mxu0 0.0
        %8992 = vmatpush2.msra.mxu0 0.0
        %8993 = vmatprep.subr.mxu0 0.0
        %8994 = vmatpush2.msra.mxu0 0.0
        %8995 = vmatprep.subr.mxu0 0.0
        %8996 = vmatpush2.msra.mxu0 0.0
        %8997 = vmatprep.subr.mxu0 0.0
        %8998 = vmatpush2.msra.mxu0 0.0
        %8999 = vmatprep.mubr.f32.mxu0 0.0
        %9000 = vmatmul.mubr.f32.gmra.mxu0 %v8578
        %v9001 = vpop.f32.mrf.mxu0
        %v9002 = vadd.f32 0.0, %v9001
        %v9003 = vpop.f32.mrf.mxu0
        %v9004 = vadd.f32 0.0, %v9003
        %9005 = vdwg.mxu0
        %9006 = vmatprep.subr.mxu0 0.0
        %9007 = vmatpush1.msra.mxu0 0.0
        %9008 = vmatprep.subr.mxu0 0.0
        %9009 = vmatpush1.msra.mxu0 0.0
        %9010 = vmatprep.subr.mxu0 0.0
        %9011 = vmatpush1.msra.mxu0 0.0
        %9012 = vmatprep.subr.mxu0 0.0
        %9013 = vmatpush1.msra.mxu0 0.0
        %9014 = vmatprep.subr.mxu0 0.0
        %9015 = vmatpush1.msra.mxu0 0.0
        %9016 = vmatprep.subr.mxu0 0.0
        %9017 = vmatpush1.msra.mxu0 0.0
        %9018 = vmatprep.subr.mxu0 0.0
        %9019 = vmatpush1.msra.mxu0 0.0
        %9020 = vmatprep.subr.mxu0 0.0
        %9021 = vmatpush1.msra.mxu0 0.0
        %9022 = vmatprep.subr.mxu0 0.0
        %9023 = vmatpush1.msra.mxu0 0.0
        %9024 = vmatprep.subr.mxu0 0.0
        %9025 = vmatpush1.msra.mxu0 0.0
        %9026 = vmatprep.subr.mxu0 0.0
        %9027 = vmatpush1.msra.mxu0 0.0
        %9028 = vmatprep.subr.mxu0 0.0
        %9029 = vmatpush1.msra.mxu0 0.0
        %9030 = vmatprep.subr.mxu0 0.0
        %9031 = vmatpush1.msra.mxu0 0.0
        %9032 = vmatprep.subr.mxu0 %v5940
        %9033 = vmatpush1.msra.mxu0 %v5836
        %9034 = vmatprep.subr.mxu0 %v4276
        %9035 = vmatpush1.msra.mxu0 %v4172
        %9036 = vmatprep.subr.mxu0 %v2612
        %9037 = vmatpush1.msra.mxu0 %v2508
        %9038 = vmatprep.subr.mxu0 0.0
        %9039 = vmatpush2.msra.mxu0 0.0
        %9040 = vmatprep.subr.mxu0 0.0
        %9041 = vmatpush2.msra.mxu0 0.0
        %9042 = vmatprep.subr.mxu0 0.0
        %9043 = vmatpush2.msra.mxu0 0.0
        %9044 = vmatprep.subr.mxu0 0.0
        %9045 = vmatpush2.msra.mxu0 0.0
        %9046 = vmatprep.subr.mxu0 0.0
        %9047 = vmatpush2.msra.mxu0 0.0
        %9048 = vmatprep.subr.mxu0 0.0
        %9049 = vmatpush2.msra.mxu0 0.0
        %9050 = vmatprep.subr.mxu0 0.0
        %9051 = vmatpush2.msra.mxu0 0.0
        %9052 = vmatprep.subr.mxu0 0.0
        %9053 = vmatpush2.msra.mxu0 0.0
        %9054 = vmatprep.subr.mxu0 0.0
        %9055 = vmatpush2.msra.mxu0 0.0
        %9056 = vmatprep.subr.mxu0 0.0
        %9057 = vmatpush2.msra.mxu0 0.0
        %9058 = vmatprep.subr.mxu0 0.0
        %9059 = vmatpush2.msra.mxu0 0.0
        %9060 = vmatprep.subr.mxu0 0.0
        %9061 = vmatpush2.msra.mxu0 0.0
        %9062 = vmatprep.subr.mxu0 0.0
        %9063 = vmatpush2.msra.mxu0 0.0
        %9064 = vmatprep.subr.mxu0 0.0
        %9065 = vmatpush2.msra.mxu0 0.0
        %9066 = vmatprep.subr.mxu0 0.0
        %9067 = vmatpush2.msra.mxu0 0.0
        %9068 = vmatprep.subr.mxu0 0.0
        %9069 = vmatpush2.msra.mxu0 0.0
        %9070 = vmatprep.mubr.f32.mxu0 0.0
        %9071 = vmatmul.mubr.f32.gmra.mxu0 %v8578
        %v9072 = vpop.f32.mrf.mxu0
        %v9073 = vadd.f32 0.0, %v9072
        %v9074 = vpop.f32.mrf.mxu0
        %v9075 = vadd.f32 0.0, %v9074
        %9076 = vdwg.mxu0
        %9077 = vmatprep.subr.mxu0 0.0
        %9078 = vmatpush1.msra.mxu0 0.0
        %9079 = vmatprep.subr.mxu0 0.0
        %9080 = vmatpush1.msra.mxu0 0.0
        %9081 = vmatprep.subr.mxu0 0.0
        %9082 = vmatpush1.msra.mxu0 0.0
        %9083 = vmatprep.subr.mxu0 0.0
        %9084 = vmatpush1.msra.mxu0 0.0
        %9085 = vmatprep.subr.mxu0 0.0
        %9086 = vmatpush1.msra.mxu0 0.0
        %9087 = vmatprep.subr.mxu0 0.0
        %9088 = vmatpush1.msra.mxu0 0.0
        %9089 = vmatprep.subr.mxu0 0.0
        %9090 = vmatpush1.msra.mxu0 0.0
        %9091 = vmatprep.subr.mxu0 0.0
        %9092 = vmatpush1.msra.mxu0 0.0
        %9093 = vmatprep.subr.mxu0 0.0
        %9094 = vmatpush1.msra.mxu0 0.0
        %9095 = vmatprep.subr.mxu0 0.0
        %9096 = vmatpush1.msra.mxu0 0.0
        %9097 = vmatprep.subr.mxu0 0.0
        %9098 = vmatpush1.msra.mxu0 0.0
        %9099 = vmatprep.subr.mxu0 0.0
        %9100 = vmatpush1.msra.mxu0 0.0
        %9101 = vmatprep.subr.mxu0 0.0
        %9102 = vmatpush1.msra.mxu0 0.0
        %9103 = vmatprep.subr.mxu0 %v6148
        %9104 = vmatpush1.msra.mxu0 %v6044
        %9105 = vmatprep.subr.mxu0 %v4484
        %9106 = vmatpush1.msra.mxu0 %v4380
        %9107 = vmatprep.subr.mxu0 %v2820
        %9108 = vmatpush1.msra.mxu0 %v2716
        %9109 = vmatprep.subr.mxu0 0.0
        %9110 = vmatpush2.msra.mxu0 0.0
        %9111 = vmatprep.subr.mxu0 0.0
        %9112 = vmatpush2.msra.mxu0 0.0
        %9113 = vmatprep.subr.mxu0 0.0
        %9114 = vmatpush2.msra.mxu0 0.0
        %9115 = vmatprep.subr.mxu0 0.0
        %9116 = vmatpush2.msra.mxu0 0.0
        %9117 = vmatprep.subr.mxu0 0.0
        %9118 = vmatpush2.msra.mxu0 0.0
        %9119 = vmatprep.subr.mxu0 0.0
        %9120 = vmatpush2.msra.mxu0 0.0
        %9121 = vmatprep.subr.mxu0 0.0
        %9122 = vmatpush2.msra.mxu0 0.0
        %9123 = vmatprep.subr.mxu0 0.0
        %9124 = vmatpush2.msra.mxu0 0.0
        %9125 = vmatprep.subr.mxu0 0.0
        %9126 = vmatpush2.msra.mxu0 0.0
        %9127 = vmatprep.subr.mxu0 0.0
        %9128 = vmatpush2.msra.mxu0 0.0
        %9129 = vmatprep.subr.mxu0 0.0
        %9130 = vmatpush2.msra.mxu0 0.0
        %9131 = vmatprep.subr.mxu0 0.0
        %9132 = vmatpush2.msra.mxu0 0.0
        %9133 = vmatprep.subr.mxu0 0.0
        %9134 = vmatpush2.msra.mxu0 0.0
        %9135 = vmatprep.subr.mxu0 0.0
        %9136 = vmatpush2.msra.mxu0 0.0
        %9137 = vmatprep.subr.mxu0 0.0
        %9138 = vmatpush2.msra.mxu0 0.0
        %9139 = vmatprep.subr.mxu0 0.0
        %9140 = vmatpush2.msra.mxu0 0.0
        %9141 = vmatprep.mubr.f32.mxu0 0.0
        %9142 = vmatmul.mubr.f32.gmra.mxu0 %v8578
        %v9143 = vpop.f32.mrf.mxu0
        %v9144 = vadd.f32 0.0, %v9143
        %v9145 = vpop.f32.mrf.mxu0
        %v9146 = vadd.f32 0.0, %v9145
        %9147 = vdwg.mxu0
        %v9149 = vsel %vm7698, %v8575, 0
        %9151 = vmatprep.subr.mxu0 0.0
        %9152 = vmatpush1.msra.mxu0 0.0
        %9153 = vmatprep.subr.mxu0 0.0
        %9154 = vmatpush1.msra.mxu0 0.0
        %9155 = vmatprep.subr.mxu0 0.0
        %9156 = vmatpush1.msra.mxu0 0.0
        %9157 = vmatprep.subr.mxu0 0.0
        %9158 = vmatpush1.msra.mxu0 0.0
        %9159 = vmatprep.subr.mxu0 0.0
        %9160 = vmatpush1.msra.mxu0 0.0
        %9161 = vmatprep.subr.mxu0 0.0
        %9162 = vmatpush1.msra.mxu0 0.0
        %9163 = vmatprep.subr.mxu0 0.0
        %9164 = vmatpush1.msra.mxu0 0.0
        %9165 = vmatprep.subr.mxu0 0.0
        %9166 = vmatpush1.msra.mxu0 0.0
        %9167 = vmatprep.subr.mxu0 0.0
        %9168 = vmatpush1.msra.mxu0 0.0
        %9169 = vmatprep.subr.mxu0 0.0
        %9170 = vmatpush1.msra.mxu0 0.0
        %9171 = vmatprep.subr.mxu0 0.0
        %9172 = vmatpush1.msra.mxu0 0.0
        %9173 = vmatprep.subr.mxu0 0.0
        %9174 = vmatpush1.msra.mxu0 0.0
        %9175 = vmatprep.subr.mxu0 %v8560
        %9176 = vmatpush1.msra.mxu0 %v8559
        %9177 = vmatprep.subr.mxu0 %v8544
        %9178 = vmatpush1.msra.mxu0 %v8543
        %9179 = vmatprep.subr.mxu0 %v8528
        %9180 = vmatpush1.msra.mxu0 %v8527
        %9181 = vmatprep.subr.mxu0 %v8512
        %9182 = vmatpush1.msra.mxu0 %v8511
        %9183 = vmatprep.subr.mxu0 0.0
        %9184 = vmatpush2.msra.mxu0 0.0
        %9185 = vmatprep.subr.mxu0 0.0
        %9186 = vmatpush2.msra.mxu0 0.0
        %9187 = vmatprep.subr.mxu0 0.0
        %9188 = vmatpush2.msra.mxu0 0.0
        %9189 = vmatprep.subr.mxu0 0.0
        %9190 = vmatpush2.msra.mxu0 0.0
        %9191 = vmatprep.subr.mxu0 0.0
        %9192 = vmatpush2.msra.mxu0 0.0
        %9193 = vmatprep.subr.mxu0 0.0
        %9194 = vmatpush2.msra.mxu0 0.0
        %9195 = vmatprep.subr.mxu0 0.0
        %9196 = vmatpush2.msra.mxu0 0.0
        %9197 = vmatprep.subr.mxu0 0.0
        %9198 = vmatpush2.msra.mxu0 0.0
        %9199 = vmatprep.subr.mxu0 0.0
        %9200 = vmatpush2.msra.mxu0 0.0
        %9201 = vmatprep.subr.mxu0 0.0
        %9202 = vmatpush2.msra.mxu0 0.0
        %9203 = vmatprep.subr.mxu0 0.0
        %9204 = vmatpush2.msra.mxu0 0.0
        %9205 = vmatprep.subr.mxu0 0.0
        %9206 = vmatpush2.msra.mxu0 0.0
        %9207 = vmatprep.subr.mxu0 0.0
        %9208 = vmatpush2.msra.mxu0 0.0
        %9209 = vmatprep.subr.mxu0 0.0
        %9210 = vmatpush2.msra.mxu0 0.0
        %9211 = vmatprep.subr.mxu0 0.0
        %9212 = vmatpush2.msra.mxu0 0.0
        %9213 = vmatprep.subr.mxu0 0.0
        %9214 = vmatpush2.msra.mxu0 0.0
        %9215 = vmatprep.mubr.f32.mxu0 0.0
        %9216 = vmatmul.mubr.f32.gmra.mxu0 %v9149
        %v9217 = vpop.f32.mrf.mxu0
        %v9218 = vadd.f32 %v8647, %v9217
        %v9219 = vpop.f32.mrf.mxu0
        %v9220 = vadd.f32 %v8649, %v9219
        %9221 = vdwg.mxu0
        %9222 = vmatprep.subr.mxu0 0.0
        %9223 = vmatpush1.msra.mxu0 0.0
        %9224 = vmatprep.subr.mxu0 0.0
        %9225 = vmatpush1.msra.mxu0 0.0
        %9226 = vmatprep.subr.mxu0 0.0
        %9227 = vmatpush1.msra.mxu0 0.0
        %9228 = vmatprep.subr.mxu0 0.0
        %9229 = vmatpush1.msra.mxu0 0.0
        %9230 = vmatprep.subr.mxu0 0.0
        %9231 = vmatpush1.msra.mxu0 0.0
        %9232 = vmatprep.subr.mxu0 0.0
        %9233 = vmatpush1.msra.mxu0 0.0
        %9234 = vmatprep.subr.mxu0 0.0
        %9235 = vmatpush1.msra.mxu0 0.0
        %9236 = vmatprep.subr.mxu0 0.0
        %9237 = vmatpush1.msra.mxu0 0.0
        %9238 = vmatprep.subr.mxu0 0.0
        %9239 = vmatpush1.msra.mxu0 0.0
        %9240 = vmatprep.subr.mxu0 0.0
        %9241 = vmatpush1.msra.mxu0 0.0
        %9242 = vmatprep.subr.mxu0 0.0
        %9243 = vmatpush1.msra.mxu0 0.0
        %9244 = vmatprep.subr.mxu0 0.0
        %9245 = vmatpush1.msra.mxu0 0.0
        %9246 = vmatprep.subr.mxu0 %v8562
        %9247 = vmatpush1.msra.mxu0 %v8561
        %9248 = vmatprep.subr.mxu0 %v8546
        %9249 = vmatpush1.msra.mxu0 %v8545
        %9250 = vmatprep.subr.mxu0 %v8530
        %9251 = vmatpush1.msra.mxu0 %v8529
        %9252 = vmatprep.subr.mxu0 %v8514
        %9253 = vmatpush1.msra.mxu0 %v8513
        %9254 = vmatprep.subr.mxu0 0.0
        %9255 = vmatpush2.msra.mxu0 0.0
        %9256 = vmatprep.subr.mxu0 0.0
        %9257 = vmatpush2.msra.mxu0 0.0
        %9258 = vmatprep.subr.mxu0 0.0
        %9259 = vmatpush2.msra.mxu0 0.0
        %9260 = vmatprep.subr.mxu0 0.0
        %9261 = vmatpush2.msra.mxu0 0.0
        %9262 = vmatprep.subr.mxu0 0.0
        %9263 = vmatpush2.msra.mxu0 0.0
        %9264 = vmatprep.subr.mxu0 0.0
        %9265 = vmatpush2.msra.mxu0 0.0
        %9266 = vmatprep.subr.mxu0 0.0
        %9267 = vmatpush2.msra.mxu0 0.0
        %9268 = vmatprep.subr.mxu0 0.0
        %9269 = vmatpush2.msra.mxu0 0.0
        %9270 = vmatprep.subr.mxu0 0.0
        %9271 = vmatpush2.msra.mxu0 0.0
        %9272 = vmatprep.subr.mxu0 0.0
        %9273 = vmatpush2.msra.mxu0 0.0
        %9274 = vmatprep.subr.mxu0 0.0
        %9275 = vmatpush2.msra.mxu0 0.0
        %9276 = vmatprep.subr.mxu0 0.0
        %9277 = vmatpush2.msra.mxu0 0.0
        %9278 = vmatprep.subr.mxu0 0.0
        %9279 = vmatpush2.msra.mxu0 0.0
        %9280 = vmatprep.subr.mxu0 0.0
        %9281 = vmatpush2.msra.mxu0 0.0
        %9282 = vmatprep.subr.mxu0 0.0
        %9283 = vmatpush2.msra.mxu0 0.0
        %9284 = vmatprep.subr.mxu0 0.0
        %9285 = vmatpush2.msra.mxu0 0.0
        %9286 = vmatprep.mubr.f32.mxu0 0.0
        %9287 = vmatmul.mubr.f32.gmra.mxu0 %v9149
        %v9288 = vpop.f32.mrf.mxu0
        %v9289 = vadd.f32 %v8718, %v9288
        %v9290 = vpop.f32.mrf.mxu0
        %v9291 = vadd.f32 %v8720, %v9290
        %9292 = vdwg.mxu0
        %9293 = vmatprep.subr.mxu0 0.0
        %9294 = vmatpush1.msra.mxu0 0.0
        %9295 = vmatprep.subr.mxu0 0.0
        %9296 = vmatpush1.msra.mxu0 0.0
        %9297 = vmatprep.subr.mxu0 0.0
        %9298 = vmatpush1.msra.mxu0 0.0
        %9299 = vmatprep.subr.mxu0 0.0
        %9300 = vmatpush1.msra.mxu0 0.0
        %9301 = vmatprep.subr.mxu0 0.0
        %9302 = vmatpush1.msra.mxu0 0.0
        %9303 = vmatprep.subr.mxu0 0.0
        %9304 = vmatpush1.msra.mxu0 0.0
        %9305 = vmatprep.subr.mxu0 0.0
        %9306 = vmatpush1.msra.mxu0 0.0
        %9307 = vmatprep.subr.mxu0 0.0
        %9308 = vmatpush1.msra.mxu0 0.0
        %9309 = vmatprep.subr.mxu0 0.0
        %9310 = vmatpush1.msra.mxu0 0.0
        %9311 = vmatprep.subr.mxu0 0.0
        %9312 = vmatpush1.msra.mxu0 0.0
        %9313 = vmatprep.subr.mxu0 0.0
        %9314 = vmatpush1.msra.mxu0 0.0
        %9315 = vmatprep.subr.mxu0 0.0
        %9316 = vmatpush1.msra.mxu0 0.0
        %9317 = vmatprep.subr.mxu0 %v8564
        %9318 = vmatpush1.msra.mxu0 %v8563
        %9319 = vmatprep.subr.mxu0 %v8548
        %9320 = vmatpush1.msra.mxu0 %v8547
        %9321 = vmatprep.subr.mxu0 %v8532
        %9322 = vmatpush1.msra.mxu0 %v8531
        %9323 = vmatprep.subr.mxu0 %v8516
        %9324 = vmatpush1.msra.mxu0 %v8515
        %9325 = vmatprep.subr.mxu0 0.0
        %9326 = vmatpush2.msra.mxu0 0.0
        %9327 = vmatprep.subr.mxu0 0.0
        %9328 = vmatpush2.msra.mxu0 0.0
        %9329 = vmatprep.subr.mxu0 0.0
        %9330 = vmatpush2.msra.mxu0 0.0
        %9331 = vmatprep.subr.mxu0 0.0
        %9332 = vmatpush2.msra.mxu0 0.0
        %9333 = vmatprep.subr.mxu0 0.0
        %9334 = vmatpush2.msra.mxu0 0.0
        %9335 = vmatprep.subr.mxu0 0.0
        %9336 = vmatpush2.msra.mxu0 0.0
        %9337 = vmatprep.subr.mxu0 0.0
        %9338 = vmatpush2.msra.mxu0 0.0
        %9339 = vmatprep.subr.mxu0 0.0
        %9340 = vmatpush2.msra.mxu0 0.0
        %9341 = vmatprep.subr.mxu0 0.0
        %9342 = vmatpush2.msra.mxu0 0.0
        %9343 = vmatprep.subr.mxu0 0.0
        %9344 = vmatpush2.msra.mxu0 0.0
        %9345 = vmatprep.subr.mxu0 0.0
        %9346 = vmatpush2.msra.mxu0 0.0
        %9347 = vmatprep.subr.mxu0 0.0
        %9348 = vmatpush2.msra.mxu0 0.0
        %9349 = vmatprep.subr.mxu0 0.0
        %9350 = vmatpush2.msra.mxu0 0.0
        %9351 = vmatprep.subr.mxu0 0.0
        %9352 = vmatpush2.msra.mxu0 0.0
        %9353 = vmatprep.subr.mxu0 0.0
        %9354 = vmatpush2.msra.mxu0 0.0
        %9355 = vmatprep.subr.mxu0 0.0
        %9356 = vmatpush2.msra.mxu0 0.0
        %9357 = vmatprep.mubr.f32.mxu0 0.0
        %9358 = vmatmul.mubr.f32.gmra.mxu0 %v9149
        %v9359 = vpop.f32.mrf.mxu0
        %v9360 = vadd.f32 %v8789, %v9359
        %v9361 = vpop.f32.mrf.mxu0
        %v9362 = vadd.f32 %v8791, %v9361
        %9363 = vdwg.mxu0
        %9364 = vmatprep.subr.mxu0 0.0
        %9365 = vmatpush1.msra.mxu0 0.0
        %9366 = vmatprep.subr.mxu0 0.0
        %9367 = vmatpush1.msra.mxu0 0.0
        %9368 = vmatprep.subr.mxu0 0.0
        %9369 = vmatpush1.msra.mxu0 0.0
        %9370 = vmatprep.subr.mxu0 0.0
        %9371 = vmatpush1.msra.mxu0 0.0
        %9372 = vmatprep.subr.mxu0 0.0
        %9373 = vmatpush1.msra.mxu0 0.0
        %9374 = vmatprep.subr.mxu0 0.0
        %9375 = vmatpush1.msra.mxu0 0.0
        %9376 = vmatprep.subr.mxu0 0.0
        %9377 = vmatpush1.msra.mxu0 0.0
        %9378 = vmatprep.subr.mxu0 0.0
        %9379 = vmatpush1.msra.mxu0 0.0
        %9380 = vmatprep.subr.mxu0 0.0
        %9381 = vmatpush1.msra.mxu0 0.0
        %9382 = vmatprep.subr.mxu0 0.0
        %9383 = vmatpush1.msra.mxu0 0.0
        %9384 = vmatprep.subr.mxu0 0.0
        %9385 = vmatpush1.msra.mxu0 0.0
        %9386 = vmatprep.subr.mxu0 0.0
        %9387 = vmatpush1.msra.mxu0 0.0
        %9388 = vmatprep.subr.mxu0 %v8566
        %9389 = vmatpush1.msra.mxu0 %v8565
        %9390 = vmatprep.subr.mxu0 %v8550
        %9391 = vmatpush1.msra.mxu0 %v8549
        %9392 = vmatprep.subr.mxu0 %v8534
        %9393 = vmatpush1.msra.mxu0 %v8533
        %9394 = vmatprep.subr.mxu0 %v8518
        %9395 = vmatpush1.msra.mxu0 %v8517
        %9396 = vmatprep.subr.mxu0 0.0
        %9397 = vmatpush2.msra.mxu0 0.0
        %9398 = vmatprep.subr.mxu0 0.0
        %9399 = vmatpush2.msra.mxu0 0.0
        %9400 = vmatprep.subr.mxu0 0.0
        %9401 = vmatpush2.msra.mxu0 0.0
        %9402 = vmatprep.subr.mxu0 0.0
        %9403 = vmatpush2.msra.mxu0 0.0
        %9404 = vmatprep.subr.mxu0 0.0
        %9405 = vmatpush2.msra.mxu0 0.0
        %9406 = vmatprep.subr.mxu0 0.0
        %9407 = vmatpush2.msra.mxu0 0.0
        %9408 = vmatprep.subr.mxu0 0.0
        %9409 = vmatpush2.msra.mxu0 0.0
        %9410 = vmatprep.subr.mxu0 0.0
        %9411 = vmatpush2.msra.mxu0 0.0
        %9412 = vmatprep.subr.mxu0 0.0
        %9413 = vmatpush2.msra.mxu0 0.0
        %9414 = vmatprep.subr.mxu0 0.0
        %9415 = vmatpush2.msra.mxu0 0.0
        %9416 = vmatprep.subr.mxu0 0.0
        %9417 = vmatpush2.msra.mxu0 0.0
        %9418 = vmatprep.subr.mxu0 0.0
        %9419 = vmatpush2.msra.mxu0 0.0
        %9420 = vmatprep.subr.mxu0 0.0
        %9421 = vmatpush2.msra.mxu0 0.0
        %9422 = vmatprep.subr.mxu0 0.0
        %9423 = vmatpush2.msra.mxu0 0.0
        %9424 = vmatprep.subr.mxu0 0.0
        %9425 = vmatpush2.msra.mxu0 0.0
        %9426 = vmatprep.subr.mxu0 0.0
        %9427 = vmatpush2.msra.mxu0 0.0
        %9428 = vmatprep.mubr.f32.mxu0 0.0
        %9429 = vmatmul.mubr.f32.gmra.mxu0 %v9149
        %v9430 = vpop.f32.mrf.mxu0
        %v9431 = vadd.f32 %v8860, %v9430
        %v9432 = vpop.f32.mrf.mxu0
        %v9433 = vadd.f32 %v8862, %v9432
        %9434 = vdwg.mxu0
        %9435 = vmatprep.subr.mxu0 0.0
        %9436 = vmatpush1.msra.mxu0 0.0
        %9437 = vmatprep.subr.mxu0 0.0
        %9438 = vmatpush1.msra.mxu0 0.0
        %9439 = vmatprep.subr.mxu0 0.0
        %9440 = vmatpush1.msra.mxu0 0.0
        %9441 = vmatprep.subr.mxu0 0.0
        %9442 = vmatpush1.msra.mxu0 0.0
        %9443 = vmatprep.subr.mxu0 0.0
        %9444 = vmatpush1.msra.mxu0 0.0
        %9445 = vmatprep.subr.mxu0 0.0
        %9446 = vmatpush1.msra.mxu0 0.0
        %9447 = vmatprep.subr.mxu0 0.0
        %9448 = vmatpush1.msra.mxu0 0.0
        %9449 = vmatprep.subr.mxu0 0.0
        %9450 = vmatpush1.msra.mxu0 0.0
        %9451 = vmatprep.subr.mxu0 0.0
        %9452 = vmatpush1.msra.mxu0 0.0
        %9453 = vmatprep.subr.mxu0 0.0
        %9454 = vmatpush1.msra.mxu0 0.0
        %9455 = vmatprep.subr.mxu0 0.0
        %9456 = vmatpush1.msra.mxu0 0.0
        %9457 = vmatprep.subr.mxu0 0.0
        %9458 = vmatpush1.msra.mxu0 0.0
        %9459 = vmatprep.subr.mxu0 %v8568
        %9460 = vmatpush1.msra.mxu0 %v8567
        %9461 = vmatprep.subr.mxu0 %v8552
        %9462 = vmatpush1.msra.mxu0 %v8551
        %9463 = vmatprep.subr.mxu0 %v8536
        %9464 = vmatpush1.msra.mxu0 %v8535
        %9465 = vmatprep.subr.mxu0 %v8520
        %9466 = vmatpush1.msra.mxu0 %v8519
        %9467 = vmatprep.subr.mxu0 0.0
        %9468 = vmatpush2.msra.mxu0 0.0
        %9469 = vmatprep.subr.mxu0 0.0
        %9470 = vmatpush2.msra.mxu0 0.0
        %9471 = vmatprep.subr.mxu0 0.0
        %9472 = vmatpush2.msra.mxu0 0.0
        %9473 = vmatprep.subr.mxu0 0.0
        %9474 = vmatpush2.msra.mxu0 0.0
        %9475 = vmatprep.subr.mxu0 0.0
        %9476 = vmatpush2.msra.mxu0 0.0
        %9477 = vmatprep.subr.mxu0 0.0
        %9478 = vmatpush2.msra.mxu0 0.0
        %9479 = vmatprep.subr.mxu0 0.0
        %9480 = vmatpush2.msra.mxu0 0.0
        %9481 = vmatprep.subr.mxu0 0.0
        %9482 = vmatpush2.msra.mxu0 0.0
        %9483 = vmatprep.subr.mxu0 0.0
        %9484 = vmatpush2.msra.mxu0 0.0
        %9485 = vmatprep.subr.mxu0 0.0
        %9486 = vmatpush2.msra.mxu0 0.0
        %9487 = vmatprep.subr.mxu0 0.0
        %9488 = vmatpush2.msra.mxu0 0.0
        %9489 = vmatprep.subr.mxu0 0.0
        %9490 = vmatpush2.msra.mxu0 0.0
        %9491 = vmatprep.subr.mxu0 0.0
        %9492 = vmatpush2.msra.mxu0 0.0
        %9493 = vmatprep.subr.mxu0 0.0
        %9494 = vmatpush2.msra.mxu0 0.0
        %9495 = vmatprep.subr.mxu0 0.0
        %9496 = vmatpush2.msra.mxu0 0.0
        %9497 = vmatprep.subr.mxu0 0.0
        %9498 = vmatpush2.msra.mxu0 0.0
        %9499 = vmatprep.mubr.f32.mxu0 0.0
        %9500 = vmatmul.mubr.f32.gmra.mxu0 %v9149
        %v9501 = vpop.f32.mrf.mxu0
        %v9502 = vadd.f32 %v8931, %v9501
        %v9503 = vpop.f32.mrf.mxu0
        %v9504 = vadd.f32 %v8933, %v9503
        %9505 = vdwg.mxu0
        %9506 = vmatprep.subr.mxu0 0.0
        %9507 = vmatpush1.msra.mxu0 0.0
        %9508 = vmatprep.subr.mxu0 0.0
        %9509 = vmatpush1.msra.mxu0 0.0
        %9510 = vmatprep.subr.mxu0 0.0
        %9511 = vmatpush1.msra.mxu0 0.0
        %9512 = vmatprep.subr.mxu0 0.0
        %9513 = vmatpush1.msra.mxu0 0.0
        %9514 = vmatprep.subr.mxu0 0.0
        %9515 = vmatpush1.msra.mxu0 0.0
        %9516 = vmatprep.subr.mxu0 0.0
        %9517 = vmatpush1.msra.mxu0 0.0
        %9518 = vmatprep.subr.mxu0 0.0
        %9519 = vmatpush1.msra.mxu0 0.0
        %9520 = vmatprep.subr.mxu0 0.0
        %9521 = vmatpush1.msra.mxu0 0.0
        %9522 = vmatprep.subr.mxu0 0.0
        %9523 = vmatpush1.msra.mxu0 0.0
        %9524 = vmatprep.subr.mxu0 0.0
        %9525 = vmatpush1.msra.mxu0 0.0
        %9526 = vmatprep.subr.mxu0 0.0
        %9527 = vmatpush1.msra.mxu0 0.0
        %9528 = vmatprep.subr.mxu0 0.0
        %9529 = vmatpush1.msra.mxu0 0.0
        %9530 = vmatprep.subr.mxu0 %v8570
        %9531 = vmatpush1.msra.mxu0 %v8569
        %9532 = vmatprep.subr.mxu0 %v8554
        %9533 = vmatpush1.msra.mxu0 %v8553
        %9534 = vmatprep.subr.mxu0 %v8538
        %9535 = vmatpush1.msra.mxu0 %v8537
        %9536 = vmatprep.subr.mxu0 %v8522
        %9537 = vmatpush1.msra.mxu0 %v8521
        %9538 = vmatprep.subr.mxu0 0.0
        %9539 = vmatpush2.msra.mxu0 0.0
        %9540 = vmatprep.subr.mxu0 0.0
        %9541 = vmatpush2.msra.mxu0 0.0
        %9542 = vmatprep.subr.mxu0 0.0
        %9543 = vmatpush2.msra.mxu0 0.0
        %9544 = vmatprep.subr.mxu0 0.0
        %9545 = vmatpush2.msra.mxu0 0.0
        %9546 = vmatprep.subr.mxu0 0.0
        %9547 = vmatpush2.msra.mxu0 0.0
        %9548 = vmatprep.subr.mxu0 0.0
        %9549 = vmatpush2.msra.mxu0 0.0
        %9550 = vmatprep.subr.mxu0 0.0
        %9551 = vmatpush2.msra.mxu0 0.0
        %9552 = vmatprep.subr.mxu0 0.0
        %9553 = vmatpush2.msra.mxu0 0.0
        %9554 = vmatprep.subr.mxu0 0.0
        %9555 = vmatpush2.msra.mxu0 0.0
        %9556 = vmatprep.subr.mxu0 0.0
        %9557 = vmatpush2.msra.mxu0 0.0
        %9558 = vmatprep.subr.mxu0 0.0
        %9559 = vmatpush2.msra.mxu0 0.0
        %9560 = vmatprep.subr.mxu0 0.0
        %9561 = vmatpush2.msra.mxu0 0.0
        %9562 = vmatprep.subr.mxu0 0.0
        %9563 = vmatpush2.msra.mxu0 0.0
        %9564 = vmatprep.subr.mxu0 0.0
        %9565 = vmatpush2.msra.mxu0 0.0
        %9566 = vmatprep.subr.mxu0 0.0
        %9567 = vmatpush2.msra.mxu0 0.0
        %9568 = vmatprep.subr.mxu0 0.0
        %9569 = vmatpush2.msra.mxu0 0.0
        %9570 = vmatprep.mubr.f32.mxu0 0.0
        %9571 = vmatmul.mubr.f32.gmra.mxu0 %v9149
        %v9572 = vpop.f32.mrf.mxu0
        %v9573 = vadd.f32 %v9002, %v9572
        %v9574 = vpop.f32.mrf.mxu0
        %v9575 = vadd.f32 %v9004, %v9574
        %9576 = vdwg.mxu0
        %9577 = vmatprep.subr.mxu0 0.0
        %9578 = vmatpush1.msra.mxu0 0.0
        %9579 = vmatprep.subr.mxu0 0.0
        %9580 = vmatpush1.msra.mxu0 0.0
        %9581 = vmatprep.subr.mxu0 0.0
        %9582 = vmatpush1.msra.mxu0 0.0
        %9583 = vmatprep.subr.mxu0 0.0
        %9584 = vmatpush1.msra.mxu0 0.0
        %9585 = vmatprep.subr.mxu0 0.0
        %9586 = vmatpush1.msra.mxu0 0.0
        %9587 = vmatprep.subr.mxu0 0.0
        %9588 = vmatpush1.msra.mxu0 0.0
        %9589 = vmatprep.subr.mxu0 0.0
        %9590 = vmatpush1.msra.mxu0 0.0
        %9591 = vmatprep.subr.mxu0 0.0
        %9592 = vmatpush1.msra.mxu0 0.0
        %9593 = vmatprep.subr.mxu0 0.0
        %9594 = vmatpush1.msra.mxu0 0.0
        %9595 = vmatprep.subr.mxu0 0.0
        %9596 = vmatpush1.msra.mxu0 0.0
        %9597 = vmatprep.subr.mxu0 0.0
        %9598 = vmatpush1.msra.mxu0 0.0
        %9599 = vmatprep.subr.mxu0 0.0
        %9600 = vmatpush1.msra.mxu0 0.0
        %9601 = vmatprep.subr.mxu0 %v8572
        %9602 = vmatpush1.msra.mxu0 %v8571
        %9603 = vmatprep.subr.mxu0 %v8556
        %9604 = vmatpush1.msra.mxu0 %v8555
        %9605 = vmatprep.subr.mxu0 %v8540
        %9606 = vmatpush1.msra.mxu0 %v8539
        %9607 = vmatprep.subr.mxu0 %v8524
        %9608 = vmatpush1.msra.mxu0 %v8523
        %9609 = vmatprep.subr.mxu0 0.0
        %9610 = vmatpush2.msra.mxu0 0.0
        %9611 = vmatprep.subr.mxu0 0.0
        %9612 = vmatpush2.msra.mxu0 0.0
        %9613 = vmatprep.subr.mxu0 0.0
        %9614 = vmatpush2.msra.mxu0 0.0
        %9615 = vmatprep.subr.mxu0 0.0
        %9616 = vmatpush2.msra.mxu0 0.0
        %9617 = vmatprep.subr.mxu0 0.0
        %9618 = vmatpush2.msra.mxu0 0.0
        %9619 = vmatprep.subr.mxu0 0.0
        %9620 = vmatpush2.msra.mxu0 0.0
        %9621 = vmatprep.subr.mxu0 0.0
        %9622 = vmatpush2.msra.mxu0 0.0
        %9623 = vmatprep.subr.mxu0 0.0
        %9624 = vmatpush2.msra.mxu0 0.0
        %9625 = vmatprep.subr.mxu0 0.0
        %9626 = vmatpush2.msra.mxu0 0.0
        %9627 = vmatprep.subr.mxu0 0.0
        %9628 = vmatpush2.msra.mxu0 0.0
        %9629 = vmatprep.subr.mxu0 0.0
        %9630 = vmatpush2.msra.mxu0 0.0
        %9631 = vmatprep.subr.mxu0 0.0
        %9632 = vmatpush2.msra.mxu0 0.0
        %9633 = vmatprep.subr.mxu0 0.0
        %9634 = vmatpush2.msra.mxu0 0.0
        %9635 = vmatprep.subr.mxu0 0.0
        %9636 = vmatpush2.msra.mxu0 0.0
        %9637 = vmatprep.subr.mxu0 0.0
        %9638 = vmatpush2.msra.mxu0 0.0
        %9639 = vmatprep.subr.mxu0 0.0
        %9640 = vmatpush2.msra.mxu0 0.0
        %9641 = vmatprep.mubr.f32.mxu0 0.0
        %9642 = vmatmul.mubr.f32.gmra.mxu0 %v9149
        %v9643 = vpop.f32.mrf.mxu0
        %v9644 = vadd.f32 %v9073, %v9643
        %v9645 = vpop.f32.mrf.mxu0
        %v9646 = vadd.f32 %v9075, %v9645
        %9647 = vdwg.mxu0
        %9648 = vmatprep.subr.mxu0 0.0
        %9649 = vmatpush1.msra.mxu0 0.0
        %9650 = vmatprep.subr.mxu0 0.0
        %9651 = vmatpush1.msra.mxu0 0.0
        %9652 = vmatprep.subr.mxu0 0.0
        %9653 = vmatpush1.msra.mxu0 0.0
        %9654 = vmatprep.subr.mxu0 0.0
        %9655 = vmatpush1.msra.mxu0 0.0
        %9656 = vmatprep.subr.mxu0 0.0
        %9657 = vmatpush1.msra.mxu0 0.0
        %9658 = vmatprep.subr.mxu0 0.0
        %9659 = vmatpush1.msra.mxu0 0.0
        %9660 = vmatprep.subr.mxu0 0.0
        %9661 = vmatpush1.msra.mxu0 0.0
        %9662 = vmatprep.subr.mxu0 0.0
        %9663 = vmatpush1.msra.mxu0 0.0
        %9664 = vmatprep.subr.mxu0 0.0
        %9665 = vmatpush1.msra.mxu0 0.0
        %9666 = vmatprep.subr.mxu0 0.0
        %9667 = vmatpush1.msra.mxu0 0.0
        %9668 = vmatprep.subr.mxu0 0.0
        %9669 = vmatpush1.msra.mxu0 0.0
        %9670 = vmatprep.subr.mxu0 0.0
        %9671 = vmatpush1.msra.mxu0 0.0
        %9672 = vmatprep.subr.mxu0 %v8574
        %9673 = vmatpush1.msra.mxu0 %v8573
        %9674 = vmatprep.subr.mxu0 %v8558
        %9675 = vmatpush1.msra.mxu0 %v8557
        %9676 = vmatprep.subr.mxu0 %v8542
        %9677 = vmatpush1.msra.mxu0 %v8541
        %9678 = vmatprep.subr.mxu0 %v8526
        %9679 = vmatpush1.msra.mxu0 %v8525
        %9680 = vmatprep.subr.mxu0 0.0
        %9681 = vmatpush2.msra.mxu0 0.0
        %9682 = vmatprep.subr.mxu0 0.0
        %9683 = vmatpush2.msra.mxu0 0.0
        %9684 = vmatprep.subr.mxu0 0.0
        %9685 = vmatpush2.msra.mxu0 0.0
        %9686 = vmatprep.subr.mxu0 0.0
        %9687 = vmatpush2.msra.mxu0 0.0
        %9688 = vmatprep.subr.mxu0 0.0
        %9689 = vmatpush2.msra.mxu0 0.0
        %9690 = vmatprep.subr.mxu0 0.0
        %9691 = vmatpush2.msra.mxu0 0.0
        %9692 = vmatprep.subr.mxu0 0.0
        %9693 = vmatpush2.msra.mxu0 0.0
        %9694 = vmatprep.subr.mxu0 0.0
        %9695 = vmatpush2.msra.mxu0 0.0
        %9696 = vmatprep.subr.mxu0 0.0
        %9697 = vmatpush2.msra.mxu0 0.0
        %9698 = vmatprep.subr.mxu0 0.0
        %9699 = vmatpush2.msra.mxu0 0.0
        %9700 = vmatprep.subr.mxu0 0.0
        %9701 = vmatpush2.msra.mxu0 0.0
        %9702 = vmatprep.subr.mxu0 0.0
        %9703 = vmatpush2.msra.mxu0 0.0
        %9704 = vmatprep.subr.mxu0 0.0
        %9705 = vmatpush2.msra.mxu0 0.0
        %9706 = vmatprep.subr.mxu0 0.0
        %9707 = vmatpush2.msra.mxu0 0.0
        %9708 = vmatprep.subr.mxu0 0.0
        %9709 = vmatpush2.msra.mxu0 0.0
        %9710 = vmatprep.subr.mxu0 0.0
        %9711 = vmatpush2.msra.mxu0 0.0
        %9712 = vmatprep.mubr.f32.mxu0 0.0
        %9713 = vmatmul.mubr.f32.gmra.mxu0 %v9149
        %v9714 = vpop.f32.mrf.mxu0
        %v9715 = vadd.f32 %v9144, %v9714
        %v9716 = vpop.f32.mrf.mxu0
        %v9717 = vadd.f32 %v9146, %v9716
        %9718 = vdwg.mxu0
        %v9719 = vld [vmem:[%s10] sm:$0xf]
        %9721 = vset.pattern.permute.xlu0 0
        %9722 = vperm.xlu0 %9721, %v9719
        %v9723 = vpop.permute.xlu0 %9722
        %v9725 = vadd.f32 %v9218, %v9723
        %v9726 = vadd.f32 %v9220, %v9723
        %v9727 = vadd.f32 %v9289, %v9723
        %v9728 = vadd.f32 %v9291, %v9723
        %v9729 = vadd.f32 %v9360, %v9723
        %v9730 = vadd.f32 %v9362, %v9723
        %v9731 = vadd.f32 %v9431, %v9723
        %v9732 = vadd.f32 %v9433, %v9723
        %v9733 = vadd.f32 %v9502, %v9723
        %v9734 = vadd.f32 %v9504, %v9723
        %v9735 = vadd.f32 %v9573, %v9723
        %v9736 = vadd.f32 %v9575, %v9723
        %v9737 = vadd.f32 %v9644, %v9723
        %v9738 = vadd.f32 %v9646, %v9723
        %v9739 = vadd.f32 %v9715, %v9723
        %v9740 = vadd.f32 %v9717, %v9723
        %v9757 = vcombine.low %v9725, %v9726
        %v9758 = vcombine.low %v9727, %v9728
        %v9759 = vcombine.low %v9729, %v9730
        %v9760 = vcombine.low %v9731, %v9732
        %v9761 = vcombine.low %v9733, %v9734
        %v9762 = vcombine.low %v9735, %v9736
        %v9763 = vcombine.low %v9737, %v9738
        %v9764 = vcombine.low %v9739, %v9740
        %9773 = vst [vmem:[%s402] sm:$0xff] %v9757
        %9774 = vst [vmem:[%s402 + $0x8] sm:$0xff] %v9758
        %9775 = vst [vmem:[%s402 + $0x10] sm:$0xff] %v9759
        %9776 = vst [vmem:[%s402 + $0x18] sm:$0xff] %v9760
        %9777 = vst [vmem:[%s402 + $0x20] sm:$0xff] %v9761
        %9778 = vst [vmem:[%s402 + $0x28] sm:$0xff] %v9762
        %9779 = vst [vmem:[%s402 + $0x30] sm:$0xff] %v9763
        %9780 = vst [vmem:[%s402 + $0x38] sm:$0xff] %v9764
        %s9781 = sand.u32 %s272, 1
        %s9782 = scalar_lea.sflag [#allocation4], %s9781
        %s9783 = sand.u32 %s272, 1
        %s9784 = smul.addr %s9783, 64
        %s9785 = scalar_lea.vmem [#allocation5], %s9784
        // Predicated region
        $region69: #{tpu_custom_call.1} parent=63 // pred_check
          %p9786 = pneg %p282
        $region70: #{tpu_custom_call.1} parent=63 // pred_check_branch
          %9788 = sbr.rel (%p9786) target = $region72
        $region71: #{tpu_custom_call.1} parent=63 // pred_region
          %s9789 = smul.u32 16, %s28
          %s9791 = ssub.s32 1024, 1024
          %9792 = vsyncadd %s9782, %s9791
          %s9793 = smul.addr %s9789, 64
          %s9794 = scalar_lea.hbm %s11, %s9793
          %s9796 = sshll.u32 %s9785, 4
          %s9797 = int_to_ptr.vmem [resolvable:$true] %s9796
          %9799 = dma.vmem_to_hbm [thread:$0]  %s9797, 1024, %s9794, %s9782
        $region72: #{tpu_custom_call.1} parent=63 // pred_fallthru
          _
      $region64: #{tpu_custom_call.1} parent=5 // pred_fallthru
        _
      %p9800 = scmp.le.s32.totalorder 2, %s23
      // Predicated region
      $region73: #{tpu_custom_call.1} parent=5 // pred_check
        %p9801 = pneg %p9800
      $region74: #{tpu_custom_call.1} parent=5 // pred_check_branch
        %9803 = sbr.rel (%p9801) target = $region76
      $region75: #{tpu_custom_call.1} parent=5 // pred_region
        %s9804 = ssub.s32 %s23, 2
        // Predicated region
        $region77: #{tpu_custom_call.1} parent=75 // pred_check
          %p9805 = pneg %p288
        $region78: #{tpu_custom_call.1} parent=75 // pred_check_branch
          %9807 = sbr.rel (%p9805) target = $region80
        $region79: #{tpu_custom_call.1} parent=75 // pred_region
          %s9808 = sand.u32 %s273, 1
          %s9809 = scalar_lea.sflag [#allocation4], %s9808
          %s9810 = sand.u32 %s273, 1
          %s9811 = smul.addr %s9810, 64
          %s9812 = scalar_lea.vmem [#allocation5], %s9811
          %9813 = dma.done %s9809, 1024
        $region80: #{tpu_custom_call.1} parent=75 // pred_fallthru
          _
      $region76: #{tpu_custom_call.1} parent=5 // pred_fallthru
        _
    $region6: #{tpu_custom_call.1} parent=1 // loop_footer
      %s27 = sadd.s32 1, %s23
    $region7: #{tpu_custom_call.1} parent=1 // loop_footer_branch
      %22 = sbr.rel target = $region3
    $region8: #{tpu_custom_call.1} parent=1 // loop_exit
      _
    %9814 = vsyncpa [#allocation3], 1
    %s9815 = scalar_lea.sflag [#allocation3], 1
    %9816 = vsyncpa %s9815, 1
    %9817 = vsyncpa [#allocation4], 1
    %s9818 = scalar_lea.sflag [#allocation4], 1
    %9819 = vsyncpa %s9818, 1

</llo_original>
